<compile_context>
chip_gen: v6e
topology: v6e:2x2x1
jax: 0.10.0
libtpu: 0.0.40
codegen_flags: <defaults>
</compile_context>

<pallas_src>
import jax
import jax.numpy as jnp
from jax.experimental import pallas as pl
from jax.experimental.pallas import tpu as pltpu

# ---------------- model config (small, DETR-like) ----------------
PATCH = 2            # patch-embedding "conv" kernel/stride (stands in for ResNet backbone)
D_MODEL = 32
N_HEADS = 4
D_HEAD = D_MODEL // N_HEADS
D_FFN = 64
NUM_QUERIES = 8
NUM_LABELS = 4       # class head emits NUM_LABELS + 1 logits (incl. "no object")
LN_EPS = 1e-5
LANES = 128          # every activation / slab row is lane-padded to this
MAT_BLK = 128        # each weight matrix occupies one [128, 128] block in the matrix slab

# Matrix-slab block order (each entry -> one [128,128] bf16 block).
MAT_NAMES = (
    "patch_w",
    "enc_q_w", "enc_k_w", "enc_v_w", "enc_o_w",
    "enc_ffn_w1", "enc_ffn_w2",
    "dec_sq_w", "dec_sk_w", "dec_sv_w", "dec_so_w",
    "dec_cq_w", "dec_ck_w", "dec_cv_w", "dec_co_w",
    "dec_ffn_w1", "dec_ffn_w2",
    "cls_w", "box_w1", "box_w2", "box_w3",
)
MAT_IDX = {n: i for i, n in enumerate(MAT_NAMES)}

# Vector-slab single-row params (after pos_emb rows [0,S) and query_emb rows [S,S+Q)).
VEC_NAMES = (
    "patch_b",
    "enc_q_b", "enc_k_b", "enc_v_b", "enc_o_b",
    "enc_ln1_g", "enc_ln1_b",
    "enc_ffn_b1", "enc_ffn_b2",
    "enc_ln2_g", "enc_ln2_b",
    "dec_sq_b", "dec_sk_b", "dec_sv_b", "dec_so_b",
    "dec_ln1_g", "dec_ln1_b",
    "dec_cq_b", "dec_ck_b", "dec_cv_b", "dec_co_b",
    "dec_ln2_g", "dec_ln2_b",
    "dec_ffn_b1", "dec_ffn_b2",
    "dec_ln3_g", "dec_ln3_b",
    "cls_b", "box_b1", "box_b2", "box_b3",
)


# ---------------- parameter init (deterministic, synthetic) ----------------
def init_params(H, W, seed=42):
    key = jax.random.PRNGKey(seed)

    def nxt():
        nonlocal key
        key, sub = jax.random.split(key)
        return sub

    def dense(din, dout, scale=0.05):
        return (jax.random.normal(nxt(), (din, dout), jnp.float32) * scale,
                jnp.zeros((1, dout), jnp.float32))

    def ln(d):
        return jnp.ones((1, d), jnp.float32), jnp.zeros((1, d), jnp.float32)

    S = (H // PATCH) * (W // PATCH)
    p = {}
    p["patch_w"], p["patch_b"] = dense(3 * PATCH * PATCH, D_MODEL)
    p["pos_emb"] = jax.random.normal(nxt(), (S, D_MODEL), jnp.float32) * 0.05
    for nm in ("enc_q", "enc_k", "enc_v", "enc_o"):
        p[nm + "_w"], p[nm + "_b"] = dense(D_MODEL, D_MODEL)
    p["enc_ln1_g"], p["enc_ln1_b"] = ln(D_MODEL)
    p["enc_ffn_w1"], p["enc_ffn_b1"] = dense(D_MODEL, D_FFN)
    p["enc_ffn_w2"], p["enc_ffn_b2"] = dense(D_FFN, D_MODEL)
    p["enc_ln2_g"], p["enc_ln2_b"] = ln(D_MODEL)
    p["query_emb"] = jax.random.normal(nxt(), (NUM_QUERIES, D_MODEL), jnp.float32) * 0.05
    for nm in ("dec_sq", "dec_sk", "dec_sv", "dec_so",
               "dec_cq", "dec_ck", "dec_cv", "dec_co"):
        p[nm + "_w"], p[nm + "_b"] = dense(D_MODEL, D_MODEL)
    p["dec_ln1_g"], p["dec_ln1_b"] = ln(D_MODEL)
    p["dec_ln2_g"], p["dec_ln2_b"] = ln(D_MODEL)
    p["dec_ffn_w1"], p["dec_ffn_b1"] = dense(D_MODEL, D_FFN)
    p["dec_ffn_w2"], p["dec_ffn_b2"] = dense(D_FFN, D_MODEL)
    p["dec_ln3_g"], p["dec_ln3_b"] = ln(D_MODEL)
    p["cls_w"], p["cls_b"] = dense(D_MODEL, NUM_LABELS + 1)
    p["box_w1"], p["box_b1"] = dense(D_MODEL, D_MODEL)
    p["box_w2"], p["box_b2"] = dense(D_MODEL, D_MODEL)
    p["box_w3"], p["box_b3"] = dense(D_MODEL, 4)
    return p


def pack_params(p, S):
    """Pack all params into two lane-dense slabs; fold 1/sqrt(dh) into Q projections."""
    scale = 1.0 / (D_HEAD ** 0.5)
    sp = dict(p)
    for nm in ("enc_q", "dec_sq", "dec_cq"):
        sp[nm + "_w"] = p[nm + "_w"] * scale
        sp[nm + "_b"] = p[nm + "_b"] * scale

    # --- matrix slab: one [128,128] block per weight, zero padded, bf16 ---
    blocks = []
    for name in MAT_NAMES:
        w = sp[name]
        din, dout = w.shape
        blk = jnp.zeros((MAT_BLK, LANES), jnp.float32).at[:din, :dout].set(w)
        blocks.append(blk)
    mat_slab = jnp.concatenate(blocks, axis=0).astype(jnp.bfloat16)

    # --- vector slab: pos_emb rows, query_emb rows, then one row per bias/LN param ---
    n_rows = S + NUM_QUERIES + len(VEC_NAMES)
    n_rows_pad = ((n_rows + 7) // 8) * 8
    vec = jnp.zeros((n_rows_pad, LANES), jnp.float32)
    vec = vec.at[:S, :D_MODEL].set(p["pos_emb"])
    vec = vec.at[S:S + NUM_QUERIES, :D_MODEL].set(p["query_emb"])
    for i, name in enumerate(VEC_NAMES):
        b = sp[name]                        # [1, d]
        vec = vec.at[S + NUM_QUERIES + i, :b.shape[1]].set(b[0])
    return mat_slab, vec


def _patchify(pixel_values):
    """[B,C,H,W] -> lane-padded token matrix [B*S, 128]. Pure layout op, done once in XLA."""
    B, C, H, W = pixel_values.shape
    ph, pw = H // PATCH, W // PATCH
    S = ph * pw
    pdim = C * PATCH * PATCH
    assert pdim <= LANES
    x = pixel_values.reshape(B, C, ph, PATCH, pw, PATCH)
    x = x.transpose(0, 2, 4, 1, 3, 5).reshape(B * S, pdim)
    x = jnp.pad(x, ((0, 0), (0, LANES - pdim)))
    return x, S


# ---------------- forward pass (single fused pallas_call) ----------------
def detr_forward(mat_slab, vec_slab, pixel_values, pixel_mask, *, block_b=None):
    """Returns (logits [B, Q, NUM_LABELS+1], pred_boxes [B, Q, 4])."""
    del pixel_mask  # all-ones mask (no padding) -> attention masking is a no-op
    # TODO(synk): honour pixel_mask inside the attention if real padding masks appear.
    B = pixel_values.shape[0]
    tokens, S = _patchify(pixel_values)                    # [B*S, 128]
    Q = NUM_QUERIES
    bb = B if block_b is None else block_b                 # images per grid step
    assert B % bb == 0
    n_steps = B // bb                                      # default 1 (v5e/v6e); use B//2 per step on v7x
    vrow = {n: S + Q + i for i, n in enumerate(VEC_NAMES)}

    def kernel(x_ref, mat_ref, vec_ref, out_ref):
        # ---- point-of-use slab accessors (static, tile-aligned slices) ----
        def W(name, rows=MAT_BLK):
            r0 = MAT_IDX[name] * MAT_BLK
            return mat_ref[r0:r0 + rows, :]                # bf16 [rows, 128]

        def V(name):
            r = vrow[name]
            return vec_ref[r:r + 1, :]                     # f32 [1, 128]

        def dense(x, wname, bname):                        # [M,128] f32 -> [M,128] f32
            y = jnp.dot(x.astype(jnp.bfloat16), W(wname),
                        preferred_element_type=jnp.float32)
            return y + V(bname)

        def ln(x, gname, bname):
            # pad lanes of x are zero, so lane sums over 128 == sums over D_MODEL
            mu = jnp.sum(x, axis=-1, keepdims=True) * (1.0 / D_MODEL)
            var = jnp.sum(x * x, axis=-1, keepdims=True) * (1.0 / D_MODEL) - mu * mu
            return (x - mu) * jax.lax.rsqrt(var + LN_EPS) * V(gname) + V(bname)

        def ffn(x, w1, b1, w2, b2):
            h = jnp.maximum(dense(x, w1, b1), 0.0)
            return dense(h, w2, b2)

        def mha(q, k, v, wo_name, bo_name, sq, sk):
            """q: [bb*sq,128], k/v: [bb*sk,128]; 1/sqrt(dh) already folded into q.
            Per-(image,head) scores stacked on sublanes -> ONE softmax for all heads;
            head outputs concatenated -> ONE output projection."""
            qb = q.astype(jnp.bfloat16)
            kb = k.astype(jnp.bfloat16)
            vb = v.astype(jnp.bfloat16)
            scores = []
            for b in range(bb):
                for h in range(N_HEADS):
                    lo = h * D_HEAD
                    qh = qb[b * sq:(b + 1) * sq, lo:lo + D_HEAD]
                    kh = kb[b * sk:(b + 1) * sk, lo:lo + D_HEAD]
                    scores.append(jax.lax.dot_general(
                        qh, kh, (((1,), (1,)), ((), ())),
                        preferred_element_type=jnp.float32))
            s = jnp.concatenate(scores, axis=0)            # [bb*H*sq, sk]
            s = s - jnp.max(s, axis=-1, keepdims=True)
            p = jnp.exp(s)
            p = p * pl.reciprocal(jnp.sum(p, axis=-1, keepdims=True), approx=False)
            p = p.astype(jnp.bfloat16)
            imgs = []
            for b in range(bb):
                heads = []
                for h in range(N_HEADS):
                    lo = h * D_HEAD
                    r0 = (b * N_HEADS + h) * sq
                    ph = p[r0:r0 + sq, :]
                    vh = vb[b * sk:(b + 1) * sk, lo:lo + D_HEAD]
                    heads.append(jnp.dot(ph, vh, preferred_element_type=jnp.float32))
                imgs.append(jnp.concatenate(heads, axis=1))        # [sq, D_MODEL]
            o = jnp.concatenate(imgs, axis=0).astype(jnp.bfloat16)  # [bb*sq, D_MODEL]
            return (jnp.dot(o, W(wo_name, rows=D_MODEL),
                            preferred_element_type=jnp.float32) + V(bo_name))

        # ---- backbone: patch projection + positional embedding ----
        x = dense(x_ref[...], "patch_w", "patch_b")                 # [bb*S, 128]
        pe = vec_ref[0:S, :]
        x = x + jnp.concatenate([pe] * bb, axis=0)

        # ---- encoder layer (post-norm) ----
        q = dense(x, "enc_q_w", "enc_q_b")
        k = dense(x, "enc_k_w", "enc_k_b")
        v = dense(x, "enc_v_w", "enc_v_b")
        x = ln(x + mha(q, k, v, "enc_o_w", "enc_o_b", S, S),
               "enc_ln1_g", "enc_ln1_b")
        x = ln(x + ffn(x, "enc_ffn_w1", "enc_ffn_b1", "enc_ffn_w2", "enc_ffn_b2"),
               "enc_ln2_g", "enc_ln2_b")
        memory = x                                                  # [bb*S, 128]

        # ---- decoder layer: self-attn over queries, cross-attn to memory, FFN ----
        qe = vec_ref[S:S + Q, :]
        tgt = jnp.concatenate([qe] * bb, axis=0)                    # [bb*Q, 128]
        sq_ = dense(tgt, "dec_sq_w", "dec_sq_b")
        sk_ = dense(tgt, "dec_sk_w", "dec_sk_b")
        sv_ = dense(tgt, "dec_sv_w", "dec_sv_b")
        tgt = ln(tgt + mha(sq_, sk_, sv_, "dec_so_w", "dec_so_b", Q, Q),
                 "dec_ln1_g", "dec_ln1_b")

        cq = dense(tgt, "dec_cq_w", "dec_cq_b")
        ck = dense(memory, "dec_ck_w", "dec_ck_b")
        cv = dense(memory, "dec_cv_w", "dec_cv_b")
        tgt = ln(tgt + mha(cq, ck, cv, "dec_co_w", "dec_co_b", Q, S),
                 "dec_ln2_g", "dec_ln2_b")

        tgt = ln(tgt + ffn(tgt, "dec_ffn_w1", "dec_ffn_b1",
                           "dec_ffn_w2", "dec_ffn_b2"),
                 "dec_ln3_g", "dec_ln3_b")                          # [bb*Q, 128]

        # ---- prediction heads -> single lane-dense output slab ----
        logits = dense(tgt, "cls_w", "cls_b")                       # lanes 0:5 valid
        h1 = jnp.maximum(dense(tgt, "box_w1", "box_b1"), 0.0)
        h2 = jnp.maximum(dense(h1, "box_w2", "box_b2"), 0.0)
        boxes = jax.nn.sigmoid(dense(h2, "box_w3", "box_b3"))       # lanes 0:4 valid
        out_ref[0] = logits.astype(out_ref.dtype)
        out_ref[1] = boxes.astype(out_ref.dtype)

    out = pl.pallas_call(
        kernel,
        out_shape=jax.ShapeDtypeStruct((2, B * Q, LANES), jnp.float32),
        grid=(n_steps,),
        in_specs=[
            pl.BlockSpec((bb * S, LANES), lambda i: (i, 0)),        # token block per step
            pl.BlockSpec(mat_slab.shape, lambda i: (0, 0)),         # whole weight slab
            pl.BlockSpec(vec_slab.shape, lambda i: (0, 0)),         # whole vector slab
        ],
        out_specs=pl.BlockSpec((2, bb * Q, LANES), lambda i: (0, i, 0)),
        compiler_params=pltpu.CompilerParams(
            dimension_semantics=("parallel",)),   # shards steps across v7x TensorCores if n_steps > 1
    )(tokens, mat_slab, vec_slab)

    out = out.reshape(2, B, Q, LANES)
    logits = out[0, :, :, :NUM_LABELS + 1]
    boxes = out[1, :, :, :4]                      # (cx, cy, w, h) in [0, 1]
    # TODO(synk): post_process_object_detection (threshold filtering, label==1 mask,
    # cxcywh->xyxy scaling to (720,1280)) produces data-dependent output shapes and is
    # left to host-side JAX/numpy; this matches the train=True return path.
    return logits, boxes


# ---------------- driver ----------------
if __name__ == "__main__":
    B, C, H, W = 2, 3, 16, 16
    key = jax.random.PRNGKey(0)
    k_pix, _ = jax.random.split(key)
    pixel_values = jax.random.normal(k_pix, (B, C, H, W), jnp.float32)
    pixel_mask = jnp.ones((B, H, W), jnp.int32)

    S = (H // PATCH) * (W // PATCH)
    params = init_params(H, W, seed=42)
    mat_slab, vec_slab = pack_params(params, S)

    fwd = jax.jit(lambda pv, pm: detr_forward(mat_slab, vec_slab, pv, pm))
    logits, boxes = fwd(pixel_values, pixel_mask)
    jax.block_until_ready((logits, boxes))

    assert logits.shape == (B, NUM_QUERIES, NUM_LABELS + 1)
    assert boxes.shape == (B, NUM_QUERIES, 4)
    assert bool(jnp.all(jnp.isfinite(logits))) and bool(jnp.all(jnp.isfinite(boxes)))
    assert bool(jnp.all((boxes >= 0.0) & (boxes <= 1.0)))
    print("KERNEL_OK")
</pallas_src>

<mosaic_0001>
module attributes {stable_mosaic.version = 11 : i64} {
  func.func @kernel(%arg0: i32, %arg1: memref<128x128xf32, #tpu.memory_space<vmem>>, %arg2: memref<2688x128xbf16, #tpu.memory_space<vmem>>, %arg3: memref<104x128xf32, #tpu.memory_space<vmem>>, %arg4: memref<2x16x128xf32, #tpu.memory_space<vmem>>) attributes {dimension_semantics = [#tpu.dimension_semantics<parallel>], iteration_bounds = array<i64: 1>, scalar_prefetch = 0 : i64, scratch_operands = 0 : i64, tpu.core_type = #tpu.core_type<tc>, window_params = [{transform_indices = @transform_0, window_bounds = array<i64: 128, 128>}, {pipeline_mode = #tpu.pipeline_mode<synchronous>, transform_indices = @transform_1, window_bounds = array<i64: 2688, 128>}, {pipeline_mode = #tpu.pipeline_mode<synchronous>, transform_indices = @transform_2, window_bounds = array<i64: 104, 128>}, {transform_indices = @transform_3, window_bounds = array<i64: 2, 16, 128>}]} {
    %c0 = arith.constant 0 : index
    %c0_0 = arith.constant 0 : index
    %0 = vector.load %arg1[%c0, %c0_0] : memref<128x128xf32, #tpu.memory_space<vmem>>, vector<128x128xf32>
    %1 = arith.truncf %0 : vector<128x128xf32> to vector<128x128xbf16>
    %c0_1 = arith.constant 0 : index
    %c0_2 = arith.constant 0 : index
    %2 = vector.load %arg2[%c0_1, %c0_2] : memref<2688x128xbf16, #tpu.memory_space<vmem>>, vector<128x128xbf16>
    %cst = arith.constant dense<0.000000e+00> : vector<128x128xf32>
    %3 = tpu.matmul %1, %2, %cst {dimension_numbers = #tpu.dot_dimension_numbers<[1], [0], [0], [1], [0, 0, 1, 1], [], []>} : vector<128x128xbf16>, vector<128x128xbf16>, vector<128x128xf32> -> vector<128x128xf32>
    %c72 = arith.constant 72 : index
    %c0_3 = arith.constant 0 : index
    %4 = vector.load %arg3[%c72, %c0_3] : memref<104x128xf32, #tpu.memory_space<vmem>>, vector<1x128xf32>
    %5 = vector.broadcast %4 : vector<1x128xf32> to vector<128x128xf32>
    %6 = arith.addf %3, %5 : vector<128x128xf32>
    %c0_4 = arith.constant 0 : index
    %c0_5 = arith.constant 0 : index
    %7 = vector.load %arg3[%c0_4, %c0_5] : memref<104x128xf32, #tpu.memory_space<vmem>>, vector<64x128xf32>
    %8 = tpu.concatenate %7, %7 in 0 : vector<64x128xf32>, vector<64x128xf32> -> vector<128x128xf32>
    %9 = arith.addf %6, %8 : vector<128x128xf32>
    %10 = arith.truncf %9 : vector<128x128xf32> to vector<128x128xbf16>
    %c128 = arith.constant 128 : index
    %c0_6 = arith.constant 0 : index
    %11 = vector.load %arg2[%c128, %c0_6] : memref<2688x128xbf16, #tpu.memory_space<vmem>>, vector<128x128xbf16>
    %cst_7 = arith.constant dense<0.000000e+00> : vector<128x128xf32>
    %12 = tpu.matmul %10, %11, %cst_7 {dimension_numbers = #tpu.dot_dimension_numbers<[1], [0], [0], [1], [0, 0, 1, 1], [], []>} : vector<128x128xbf16>, vector<128x128xbf16>, vector<128x128xf32> -> vector<128x128xf32>
    %c73 = arith.constant 73 : index
    %c0_8 = arith.constant 0 : index
    %13 = vector.load %arg3[%c73, %c0_8] : memref<104x128xf32, #tpu.memory_space<vmem>>, vector<1x128xf32>
    %14 = vector.broadcast %13 : vector<1x128xf32> to vector<128x128xf32>
    %15 = arith.addf %12, %14 : vector<128x128xf32>
    %16 = arith.truncf %9 : vector<128x128xf32> to vector<128x128xbf16>
    %c256 = arith.constant 256 : index
    %c0_9 = arith.constant 0 : index
    %17 = vector.load %arg2[%c256, %c0_9] : memref<2688x128xbf16, #tpu.memory_space<vmem>>, vector<128x128xbf16>
    %cst_10 = arith.constant dense<0.000000e+00> : vector<128x128xf32>
    %18 = tpu.matmul %16, %17, %cst_10 {dimension_numbers = #tpu.dot_dimension_numbers<[1], [0], [0], [1], [0, 0, 1, 1], [], []>} : vector<128x128xbf16>, vector<128x128xbf16>, vector<128x128xf32> -> vector<128x128xf32>
    %c74 = arith.constant 74 : index
    %c0_11 = arith.constant 0 : index
    %19 = vector.load %arg3[%c74, %c0_11] : memref<104x128xf32, #tpu.memory_space<vmem>>, vector<1x128xf32>
    %20 = vector.broadcast %19 : vector<1x128xf32> to vector<128x128xf32>
    %21 = arith.addf %18, %20 : vector<128x128xf32>
    %22 = arith.truncf %9 : vector<128x128xf32> to vector<128x128xbf16>
    %c384 = arith.constant 384 : index
    %c0_12 = arith.constant 0 : index
    %23 = vector.load %arg2[%c384, %c0_12] : memref<2688x128xbf16, #tpu.memory_space<vmem>>, vector<128x128xbf16>
    %cst_13 = arith.constant dense<0.000000e+00> : vector<128x128xf32>
    %24 = tpu.matmul %22, %23, %cst_13 {dimension_numbers = #tpu.dot_dimension_numbers<[1], [0], [0], [1], [0, 0, 1, 1], [], []>} : vector<128x128xbf16>, vector<128x128xbf16>, vector<128x128xf32> -> vector<128x128xf32>
    %c75 = arith.constant 75 : index
    %c0_14 = arith.constant 0 : index
    %25 = vector.load %arg3[%c75, %c0_14] : memref<104x128xf32, #tpu.memory_space<vmem>>, vector<1x128xf32>
    %26 = vector.broadcast %25 : vector<1x128xf32> to vector<128x128xf32>
    %27 = arith.addf %24, %26 : vector<128x128xf32>
    %28 = arith.truncf %15 : vector<128x128xf32> to vector<128x128xbf16>
    %29 = arith.truncf %21 : vector<128x128xf32> to vector<128x128xbf16>
    %30 = arith.truncf %27 : vector<128x128xf32> to vector<128x128xbf16>
    %31 = vector.extract_strided_slice %28 {offsets = [0, 0], sizes = [64, 8], strides = [1, 1]} : vector<128x128xbf16> to vector<64x8xbf16>
    %32 = vector.extract_strided_slice %29 {offsets = [0, 0], sizes = [64, 8], strides = [1, 1]} : vector<128x128xbf16> to vector<64x8xbf16>
    %cst_15 = arith.constant dense<0.000000e+00> : vector<64x64xf32>
    %33 = tpu.matmul %31, %32, %cst_15 {dimension_numbers = #tpu.dot_dimension_numbers<[1], [1], [0], [0], [0, 0, 1, 0], [], []>} : vector<64x8xbf16>, vector<64x8xbf16>, vector<64x64xf32> -> vector<64x64xf32>
    %34 = vector.extract_strided_slice %28 {offsets = [0, 8], sizes = [64, 8], strides = [1, 1]} : vector<128x128xbf16> to vector<64x8xbf16>
    %35 = vector.extract_strided_slice %29 {offsets = [0, 8], sizes = [64, 8], strides = [1, 1]} : vector<128x128xbf16> to vector<64x8xbf16>
    %cst_16 = arith.constant dense<0.000000e+00> : vector<64x64xf32>
    %36 = tpu.matmul %34, %35, %cst_16 {dimension_numbers = #tpu.dot_dimension_numbers<[1], [1], [0], [0], [0, 0, 1, 0], [], []>} : vector<64x8xbf16>, vector<64x8xbf16>, vector<64x64xf32> -> vector<64x64xf32>
    %37 = vector.extract_strided_slice %28 {offsets = [0, 16], sizes = [64, 8], strides = [1, 1]} : vector<128x128xbf16> to vector<64x8xbf16>
    %38 = vector.extract_strided_slice %29 {offsets = [0, 16], sizes = [64, 8], strides = [1, 1]} : vector<128x128xbf16> to vector<64x8xbf16>
    %cst_17 = arith.constant dense<0.000000e+00> : vector<64x64xf32>
    %39 = tpu.matmul %37, %38, %cst_17 {dimension_numbers = #tpu.dot_dimension_numbers<[1], [1], [0], [0], [0, 0, 1, 0], [], []>} : vector<64x8xbf16>, vector<64x8xbf16>, vector<64x64xf32> -> vector<64x64xf32>
    %40 = vector.extract_strided_slice %28 {offsets = [0, 24], sizes = [64, 8], strides = [1, 1]} : vector<128x128xbf16> to vector<64x8xbf16>
    %41 = vector.extract_strided_slice %29 {offsets = [0, 24], sizes = [64, 8], strides = [1, 1]} : vector<128x128xbf16> to vector<64x8xbf16>
    %cst_18 = arith.constant dense<0.000000e+00> : vector<64x64xf32>
    %42 = tpu.matmul %40, %41, %cst_18 {dimension_numbers = #tpu.dot_dimension_numbers<[1], [1], [0], [0], [0, 0, 1, 0], [], []>} : vector<64x8xbf16>, vector<64x8xbf16>, vector<64x64xf32> -> vector<64x64xf32>
    %43 = vector.extract_strided_slice %28 {offsets = [64, 0], sizes = [64, 8], strides = [1, 1]} : vector<128x128xbf16> to vector<64x8xbf16>
    %44 = vector.extract_strided_slice %29 {offsets = [64, 0], sizes = [64, 8], strides = [1, 1]} : vector<128x128xbf16> to vector<64x8xbf16>
    %cst_19 = arith.constant dense<0.000000e+00> : vector<64x64xf32>
    %45 = tpu.matmul %43, %44, %cst_19 {dimension_numbers = #tpu.dot_dimension_numbers<[1], [1], [0], [0], [0, 0, 1, 0], [], []>} : vector<64x8xbf16>, vector<64x8xbf16>, vector<64x64xf32> -> vector<64x64xf32>
    %46 = vector.extract_strided_slice %28 {offsets = [64, 8], sizes = [64, 8], strides = [1, 1]} : vector<128x128xbf16> to vector<64x8xbf16>
    %47 = vector.extract_strided_slice %29 {offsets = [64, 8], sizes = [64, 8], strides = [1, 1]} : vector<128x128xbf16> to vector<64x8xbf16>
    %cst_20 = arith.constant dense<0.000000e+00> : vector<64x64xf32>
    %48 = tpu.matmul %46, %47, %cst_20 {dimension_numbers = #tpu.dot_dimension_numbers<[1], [1], [0], [0], [0, 0, 1, 0], [], []>} : vector<64x8xbf16>, vector<64x8xbf16>, vector<64x64xf32> -> vector<64x64xf32>
    %49 = vector.extract_strided_slice %28 {offsets = [64, 16], sizes = [64, 8], strides = [1, 1]} : vector<128x128xbf16> to vector<64x8xbf16>
    %50 = vector.extract_strided_slice %29 {offsets = [64, 16], sizes = [64, 8], strides = [1, 1]} : vector<128x128xbf16> to vector<64x8xbf16>
    %cst_21 = arith.constant dense<0.000000e+00> : vector<64x64xf32>
    %51 = tpu.matmul %49, %50, %cst_21 {dimension_numbers = #tpu.dot_dimension_numbers<[1], [1], [0], [0], [0, 0, 1, 0], [], []>} : vector<64x8xbf16>, vector<64x8xbf16>, vector<64x64xf32> -> vector<64x64xf32>
    %52 = vector.extract_strided_slice %28 {offsets = [64, 24], sizes = [64, 8], strides = [1, 1]} : vector<128x128xbf16> to vector<64x8xbf16>
    %53 = vector.extract_strided_slice %29 {offsets = [64, 24], sizes = [64, 8], strides = [1, 1]} : vector<128x128xbf16> to vector<64x8xbf16>
    %cst_22 = arith.constant dense<0.000000e+00> : vector<64x64xf32>
    %54 = tpu.matmul %52, %53, %cst_22 {dimension_numbers = #tpu.dot_dimension_numbers<[1], [1], [0], [0], [0, 0, 1, 0], [], []>} : vector<64x8xbf16>, vector<64x8xbf16>, vector<64x64xf32> -> vector<64x64xf32>
    %55 = tpu.concatenate %33, %36, %39, %42, %45, %48, %51, %54 in 0 : vector<64x64xf32>, vector<64x64xf32>, vector<64x64xf32>, vector<64x64xf32>, vector<64x64xf32>, vector<64x64xf32>, vector<64x64xf32>, vector<64x64xf32> -> vector<512x64xf32>
    %cst_23 = arith.constant dense<0xFF800000> : vector<512xf32>
    %56 = vector.multi_reduction <maximumf>, %55, %cst_23 [1] : vector<512x64xf32> to vector<512xf32>
    %57 = vector.shape_cast %56 : vector<512xf32> to vector<512x1xf32>
    %58 = vector.broadcast %57 : vector<512x1xf32> to vector<512x64xf32>
    %59 = arith.subf %55, %58 : vector<512x64xf32>
    %60 = math.exp %59 : vector<512x64xf32>
    %cst_24 = arith.constant dense<0.000000e+00> : vector<512xf32>
    %61 = vector.multi_reduction <add>, %60, %cst_24 [1] : vector<512x64xf32> to vector<512xf32>
    %62 = vector.shape_cast %61 : vector<512xf32> to vector<512x1xf32>
    %63 = tpu.reciprocal %62 : vector<512x1xf32> -> vector<512x1xf32>
    %64 = vector.broadcast %63 : vector<512x1xf32> to vector<512x64xf32>
    %65 = arith.mulf %60, %64 : vector<512x64xf32>
    %66 = arith.truncf %65 : vector<512x64xf32> to vector<512x64xbf16>
    %67 = vector.extract_strided_slice %66 {offsets = [0, 0], sizes = [64, 64], strides = [1, 1]} : vector<512x64xbf16> to vector<64x64xbf16>
    %68 = vector.extract_strided_slice %30 {offsets = [0, 0], sizes = [64, 8], strides = [1, 1]} : vector<128x128xbf16> to vector<64x8xbf16>
    %cst_25 = arith.constant dense<0.000000e+00> : vector<64x8xf32>
    %69 = tpu.matmul %67, %68, %cst_25 {dimension_numbers = #tpu.dot_dimension_numbers<[1], [0], [0], [1], [0, 0, 1, 1], [], []>} : vector<64x64xbf16>, vector<64x8xbf16>, vector<64x8xf32> -> vector<64x8xf32>
    %70 = vector.extract_strided_slice %66 {offsets = [64, 0], sizes = [64, 64], strides = [1, 1]} : vector<512x64xbf16> to vector<64x64xbf16>
    %71 = vector.extract_strided_slice %30 {offsets = [0, 8], sizes = [64, 8], strides = [1, 1]} : vector<128x128xbf16> to vector<64x8xbf16>
    %cst_26 = arith.constant dense<0.000000e+00> : vector<64x8xf32>
    %72 = tpu.matmul %70, %71, %cst_26 {dimension_numbers = #tpu.dot_dimension_numbers<[1], [0], [0], [1], [0, 0, 1, 1], [], []>} : vector<64x64xbf16>, vector<64x8xbf16>, vector<64x8xf32> -> vector<64x8xf32>
    %73 = vector.extract_strided_slice %66 {offsets = [128, 0], sizes = [64, 64], strides = [1, 1]} : vector<512x64xbf16> to vector<64x64xbf16>
    %74 = vector.extract_strided_slice %30 {offsets = [0, 16], sizes = [64, 8], strides = [1, 1]} : vector<128x128xbf16> to vector<64x8xbf16>
    %cst_27 = arith.constant dense<0.000000e+00> : vector<64x8xf32>
    %75 = tpu.matmul %73, %74, %cst_27 {dimension_numbers = #tpu.dot_dimension_numbers<[1], [0], [0], [1], [0, 0, 1, 1], [], []>} : vector<64x64xbf16>, vector<64x8xbf16>, vector<64x8xf32> -> vector<64x8xf32>
    %76 = vector.extract_strided_slice %66 {offsets = [192, 0], sizes = [64, 64], strides = [1, 1]} : vector<512x64xbf16> to vector<64x64xbf16>
    %77 = vector.extract_strided_slice %30 {offsets = [0, 24], sizes = [64, 8], strides = [1, 1]} : vector<128x128xbf16> to vector<64x8xbf16>
    %cst_28 = arith.constant dense<0.000000e+00> : vector<64x8xf32>
    %78 = tpu.matmul %76, %77, %cst_28 {dimension_numbers = #tpu.dot_dimension_numbers<[1], [0], [0], [1], [0, 0, 1, 1], [], []>} : vector<64x64xbf16>, vector<64x8xbf16>, vector<64x8xf32> -> vector<64x8xf32>
    %79 = tpu.concatenate %69, %72, %75, %78 in 1 : vector<64x8xf32>, vector<64x8xf32>, vector<64x8xf32>, vector<64x8xf32> -> vector<64x32xf32>
    %80 = vector.extract_strided_slice %66 {offsets = [256, 0], sizes = [64, 64], strides = [1, 1]} : vector<512x64xbf16> to vector<64x64xbf16>
    %81 = vector.extract_strided_slice %30 {offsets = [64, 0], sizes = [64, 8], strides = [1, 1]} : vector<128x128xbf16> to vector<64x8xbf16>
    %cst_29 = arith.constant dense<0.000000e+00> : vector<64x8xf32>
    %82 = tpu.matmul %80, %81, %cst_29 {dimension_numbers = #tpu.dot_dimension_numbers<[1], [0], [0], [1], [0, 0, 1, 1], [], []>} : vector<64x64xbf16>, vector<64x8xbf16>, vector<64x8xf32> -> vector<64x8xf32>
    %83 = vector.extract_strided_slice %66 {offsets = [320, 0], sizes = [64, 64], strides = [1, 1]} : vector<512x64xbf16> to vector<64x64xbf16>
    %84 = vector.extract_strided_slice %30 {offsets = [64, 8], sizes = [64, 8], strides = [1, 1]} : vector<128x128xbf16> to vector<64x8xbf16>
    %cst_30 = arith.constant dense<0.000000e+00> : vector<64x8xf32>
    %85 = tpu.matmul %83, %84, %cst_30 {dimension_numbers = #tpu.dot_dimension_numbers<[1], [0], [0], [1], [0, 0, 1, 1], [], []>} : vector<64x64xbf16>, vector<64x8xbf16>, vector<64x8xf32> -> vector<64x8xf32>
    %86 = vector.extract_strided_slice %66 {offsets = [384, 0], sizes = [64, 64], strides = [1, 1]} : vector<512x64xbf16> to vector<64x64xbf16>
    %87 = vector.extract_strided_slice %30 {offsets = [64, 16], sizes = [64, 8], strides = [1, 1]} : vector<128x128xbf16> to vector<64x8xbf16>
    %cst_31 = arith.constant dense<0.000000e+00> : vector<64x8xf32>
    %88 = tpu.matmul %86, %87, %cst_31 {dimension_numbers = #tpu.dot_dimension_numbers<[1], [0], [0], [1], [0, 0, 1, 1], [], []>} : vector<64x64xbf16>, vector<64x8xbf16>, vector<64x8xf32> -> vector<64x8xf32>
    %89 = vector.extract_strided_slice %66 {offsets = [448, 0], sizes = [64, 64], strides = [1, 1]} : vector<512x64xbf16> to vector<64x64xbf16>
    %90 = vector.extract_strided_slice %30 {offsets = [64, 24], sizes = [64, 8], strides = [1, 1]} : vector<128x128xbf16> to vector<64x8xbf16>
    %cst_32 = arith.constant dense<0.000000e+00> : vector<64x8xf32>
    %91 = tpu.matmul %89, %90, %cst_32 {dimension_numbers = #tpu.dot_dimension_numbers<[1], [0], [0], [1], [0, 0, 1, 1], [], []>} : vector<64x64xbf16>, vector<64x8xbf16>, vector<64x8xf32> -> vector<64x8xf32>
    %92 = tpu.concatenate %82, %85, %88, %91 in 1 : vector<64x8xf32>, vector<64x8xf32>, vector<64x8xf32>, vector<64x8xf32> -> vector<64x32xf32>
    %93 = tpu.concatenate %79, %92 in 0 : vector<64x32xf32>, vector<64x32xf32> -> vector<128x32xf32>
    %94 = arith.truncf %93 : vector<128x32xf32> to vector<128x32xbf16>
    %c512 = arith.constant 512 : index
    %c0_33 = arith.constant 0 : index
    %95 = vector.load %arg2[%c512, %c0_33] : memref<2688x128xbf16, #tpu.memory_space<vmem>>, vector<32x128xbf16>
    %cst_34 = arith.constant dense<0.000000e+00> : vector<128x128xf32>
    %96 = tpu.matmul %94, %95, %cst_34 {dimension_numbers = #tpu.dot_dimension_numbers<[1], [0], [0], [1], [0, 0, 1, 1], [], []>} : vector<128x32xbf16>, vector<32x128xbf16>, vector<128x128xf32> -> vector<128x128xf32>
    %c76 = arith.constant 76 : index
    %c0_35 = arith.constant 0 : index
    %97 = vector.load %arg3[%c76, %c0_35] : memref<104x128xf32, #tpu.memory_space<vmem>>, vector<1x128xf32>
    %98 = vector.broadcast %97 : vector<1x128xf32> to vector<128x128xf32>
    %99 = arith.addf %96, %98 : vector<128x128xf32>
    %100 = arith.addf %9, %99 : vector<128x128xf32>
    %cst_36 = arith.constant dense<0.000000e+00> : vector<128xf32>
    %101 = vector.multi_reduction <add>, %100, %cst_36 [1] : vector<128x128xf32> to vector<128xf32>
    %102 = vector.shape_cast %101 : vector<128xf32> to vector<128x1xf32>
    %cst_37 = arith.constant 3.125000e-02 : f32
    %103 = vector.broadcast %cst_37 : f32 to vector<128x1xf32>
    %104 = arith.mulf %102, %103 : vector<128x1xf32>
    %105 = arith.mulf %100, %100 : vector<128x128xf32>
    %cst_38 = arith.constant dense<0.000000e+00> : vector<128xf32>
    %106 = vector.multi_reduction <add>, %105, %cst_38 [1] : vector<128x128xf32> to vector<128xf32>
    %107 = vector.shape_cast %106 : vector<128xf32> to vector<128x1xf32>
    %cst_39 = arith.constant 3.125000e-02 : f32
    %108 = vector.broadcast %cst_39 : f32 to vector<128x1xf32>
    %109 = arith.mulf %107, %108 : vector<128x1xf32>
    %110 = arith.mulf %104, %104 : vector<128x1xf32>
    %111 = arith.subf %109, %110 : vector<128x1xf32>
    %112 = vector.broadcast %104 : vector<128x1xf32> to vector<128x128xf32>
    %113 = arith.subf %100, %112 : vector<128x128xf32>
    %cst_40 = arith.constant 9.99999974E-6 : f32
    %114 = vector.broadcast %cst_40 : f32 to vector<128x1xf32>
    %115 = arith.addf %111, %114 : vector<128x1xf32>
    %116 = math.rsqrt %115 : vector<128x1xf32>
    %117 = vector.broadcast %116 : vector<128x1xf32> to vector<128x128xf32>
    %118 = arith.mulf %113, %117 : vector<128x128xf32>
    %c77 = arith.constant 77 : index
    %c0_41 = arith.constant 0 : index
    %119 = vector.load %arg3[%c77, %c0_41] : memref<104x128xf32, #tpu.memory_space<vmem>>, vector<1x128xf32>
    %120 = vector.broadcast %119 : vector<1x128xf32> to vector<128x128xf32>
    %121 = arith.mulf %118, %120 : vector<128x128xf32>
    %c78 = arith.constant 78 : index
    %c0_42 = arith.constant 0 : index
    %122 = vector.load %arg3[%c78, %c0_42] : memref<104x128xf32, #tpu.memory_space<vmem>>, vector<1x128xf32>
    %123 = vector.broadcast %122 : vector<1x128xf32> to vector<128x128xf32>
    %124 = arith.addf %121, %123 : vector<128x128xf32>
    %125 = arith.truncf %124 : vector<128x128xf32> to vector<128x128xbf16>
    %c640 = arith.constant 640 : index
    %c0_43 = arith.constant 0 : index
    %126 = vector.load %arg2[%c640, %c0_43] : memref<2688x128xbf16, #tpu.memory_space<vmem>>, vector<128x128xbf16>
    %cst_44 = arith.constant dense<0.000000e+00> : vector<128x128xf32>
    %127 = tpu.matmul %125, %126, %cst_44 {dimension_numbers = #tpu.dot_dimension_numbers<[1], [0], [0], [1], [0, 0, 1, 1], [], []>} : vector<128x128xbf16>, vector<128x128xbf16>, vector<128x128xf32> -> vector<128x128xf32>
    %c79 = arith.constant 79 : index
    %c0_45 = arith.constant 0 : index
    %128 = vector.load %arg3[%c79, %c0_45] : memref<104x128xf32, #tpu.memory_space<vmem>>, vector<1x128xf32>
    %129 = vector.broadcast %128 : vector<1x128xf32> to vector<128x128xf32>
    %130 = arith.addf %127, %129 : vector<128x128xf32>
    %cst_46 = arith.constant 0.000000e+00 : f32
    %131 = vector.broadcast %cst_46 : f32 to vector<128x128xf32>
    %132 = arith.maximumf %130, %131 : vector<128x128xf32>
    %133 = arith.truncf %132 : vector<128x128xf32> to vector<128x128xbf16>
    %c768 = arith.constant 768 : index
    %c0_47 = arith.constant 0 : index
    %134 = vector.load %arg2[%c768, %c0_47] : memref<2688x128xbf16, #tpu.memory_space<vmem>>, vector<128x128xbf16>
    %cst_48 = arith.constant dense<0.000000e+00> : vector<128x128xf32>
    %135 = tpu.matmul %133, %134, %cst_48 {dimension_numbers = #tpu.dot_dimension_numbers<[1], [0], [0], [1], [0, 0, 1, 1], [], []>} : vector<128x128xbf16>, vector<128x128xbf16>, vector<128x128xf32> -> vector<128x128xf32>
    %c80 = arith.constant 80 : index
    %c0_49 = arith.constant 0 : index
    %136 = vector.load %arg3[%c80, %c0_49] : memref<104x128xf32, #tpu.memory_space<vmem>>, vector<1x128xf32>
    %137 = vector.broadcast %136 : vector<1x128xf32> to vector<128x128xf32>
    %138 = arith.addf %135, %137 : vector<128x128xf32>
    %139 = arith.addf %124, %138 : vector<128x128xf32>
    %cst_50 = arith.constant dense<0.000000e+00> : vector<128xf32>
    %140 = vector.multi_reduction <add>, %139, %cst_50 [1] : vector<128x128xf32> to vector<128xf32>
    %141 = vector.shape_cast %140 : vector<128xf32> to vector<128x1xf32>
    %cst_51 = arith.constant 3.125000e-02 : f32
    %142 = vector.broadcast %cst_51 : f32 to vector<128x1xf32>
    %143 = arith.mulf %141, %142 : vector<128x1xf32>
    %144 = arith.mulf %139, %139 : vector<128x128xf32>
    %cst_52 = arith.constant dense<0.000000e+00> : vector<128xf32>
    %145 = vector.multi_reduction <add>, %144, %cst_52 [1] : vector<128x128xf32> to vector<128xf32>
    %146 = vector.shape_cast %145 : vector<128xf32> to vector<128x1xf32>
    %cst_53 = arith.constant 3.125000e-02 : f32
    %147 = vector.broadcast %cst_53 : f32 to vector<128x1xf32>
    %148 = arith.mulf %146, %147 : vector<128x1xf32>
    %149 = arith.mulf %143, %143 : vector<128x1xf32>
    %150 = arith.subf %148, %149 : vector<128x1xf32>
    %151 = vector.broadcast %143 : vector<128x1xf32> to vector<128x128xf32>
    %152 = arith.subf %139, %151 : vector<128x128xf32>
    %cst_54 = arith.constant 9.99999974E-6 : f32
    %153 = vector.broadcast %cst_54 : f32 to vector<128x1xf32>
    %154 = arith.addf %150, %153 : vector<128x1xf32>
    %155 = math.rsqrt %154 : vector<128x1xf32>
    %156 = vector.broadcast %155 : vector<128x1xf32> to vector<128x128xf32>
    %157 = arith.mulf %152, %156 : vector<128x128xf32>
    %c81 = arith.constant 81 : index
    %c0_55 = arith.constant 0 : index
    %158 = vector.load %arg3[%c81, %c0_55] : memref<104x128xf32, #tpu.memory_space<vmem>>, vector<1x128xf32>
    %159 = vector.broadcast %158 : vector<1x128xf32> to vector<128x128xf32>
    %160 = arith.mulf %157, %159 : vector<128x128xf32>
    %c82 = arith.constant 82 : index
    %c0_56 = arith.constant 0 : index
    %161 = vector.load %arg3[%c82, %c0_56] : memref<104x128xf32, #tpu.memory_space<vmem>>, vector<1x128xf32>
    %162 = vector.broadcast %161 : vector<1x128xf32> to vector<128x128xf32>
    %163 = arith.addf %160, %162 : vector<128x128xf32>
    %c64 = arith.constant 64 : index
    %c0_57 = arith.constant 0 : index
    %164 = vector.load %arg3[%c64, %c0_57] : memref<104x128xf32, #tpu.memory_space<vmem>>, vector<8x128xf32>
    %165 = tpu.concatenate %164, %164 in 0 : vector<8x128xf32>, vector<8x128xf32> -> vector<16x128xf32>
    %166 = arith.truncf %165 : vector<16x128xf32> to vector<16x128xbf16>
    %c896 = arith.constant 896 : index
    %c0_58 = arith.constant 0 : index
    %167 = vector.load %arg2[%c896, %c0_58] : memref<2688x128xbf16, #tpu.memory_space<vmem>>, vector<128x128xbf16>
    %cst_59 = arith.constant dense<0.000000e+00> : vector<16x128xf32>
    %168 = tpu.matmul %166, %167, %cst_59 {dimension_numbers = #tpu.dot_dimension_numbers<[1], [0], [0], [1], [0, 0, 1, 1], [], []>} : vector<16x128xbf16>, vector<128x128xbf16>, vector<16x128xf32> -> vector<16x128xf32>
    %c83 = arith.constant 83 : index
    %c0_60 = arith.constant 0 : index
    %169 = vector.load %arg3[%c83, %c0_60] : memref<104x128xf32, #tpu.memory_space<vmem>>, vector<1x128xf32>
    %170 = vector.broadcast %169 : vector<1x128xf32> to vector<16x128xf32>
    %171 = arith.addf %168, %170 : vector<16x128xf32>
    %172 = arith.truncf %165 : vector<16x128xf32> to vector<16x128xbf16>
    %c1024 = arith.constant 1024 : index
    %c0_61 = arith.constant 0 : index
    %173 = vector.load %arg2[%c1024, %c0_61] : memref<2688x128xbf16, #tpu.memory_space<vmem>>, vector<128x128xbf16>
    %cst_62 = arith.constant dense<0.000000e+00> : vector<16x128xf32>
    %174 = tpu.matmul %172, %173, %cst_62 {dimension_numbers = #tpu.dot_dimension_numbers<[1], [0], [0], [1], [0, 0, 1, 1], [], []>} : vector<16x128xbf16>, vector<128x128xbf16>, vector<16x128xf32> -> vector<16x128xf32>
    %c84 = arith.constant 84 : index
    %c0_63 = arith.constant 0 : index
    %175 = vector.load %arg3[%c84, %c0_63] : memref<104x128xf32, #tpu.memory_space<vmem>>, vector<1x128xf32>
    %176 = vector.broadcast %175 : vector<1x128xf32> to vector<16x128xf32>
    %177 = arith.addf %174, %176 : vector<16x128xf32>
    %178 = arith.truncf %165 : vector<16x128xf32> to vector<16x128xbf16>
    %c1152 = arith.constant 1152 : index
    %c0_64 = arith.constant 0 : index
    %179 = vector.load %arg2[%c1152, %c0_64] : memref<2688x128xbf16, #tpu.memory_space<vmem>>, vector<128x128xbf16>
    %cst_65 = arith.constant dense<0.000000e+00> : vector<16x128xf32>
    %180 = tpu.matmul %178, %179, %cst_65 {dimension_numbers = #tpu.dot_dimension_numbers<[1], [0], [0], [1], [0, 0, 1, 1], [], []>} : vector<16x128xbf16>, vector<128x128xbf16>, vector<16x128xf32> -> vector<16x128xf32>
    %c85 = arith.constant 85 : index
    %c0_66 = arith.constant 0 : index
    %181 = vector.load %arg3[%c85, %c0_66] : memref<104x128xf32, #tpu.memory_space<vmem>>, vector<1x128xf32>
    %182 = vector.broadcast %181 : vector<1x128xf32> to vector<16x128xf32>
    %183 = arith.addf %180, %182 : vector<16x128xf32>
    %184 = arith.truncf %171 : vector<16x128xf32> to vector<16x128xbf16>
    %185 = arith.truncf %177 : vector<16x128xf32> to vector<16x128xbf16>
    %186 = arith.truncf %183 : vector<16x128xf32> to vector<16x128xbf16>
    %187 = vector.extract_strided_slice %184 {offsets = [0, 0], sizes = [8, 8], strides = [1, 1]} : vector<16x128xbf16> to vector<8x8xbf16>
    %188 = vector.extract_strided_slice %185 {offsets = [0, 0], sizes = [8, 8], strides = [1, 1]} : vector<16x128xbf16> to vector<8x8xbf16>
    %cst_67 = arith.constant dense<0.000000e+00> : vector<8x8xf32>
    %189 = tpu.matmul %187, %188, %cst_67 {dimension_numbers = #tpu.dot_dimension_numbers<[1], [1], [0], [0], [0, 0, 1, 0], [], []>} : vector<8x8xbf16>, vector<8x8xbf16>, vector<8x8xf32> -> vector<8x8xf32>
    %190 = vector.extract_strided_slice %184 {offsets = [0, 8], sizes = [8, 8], strides = [1, 1]} : vector<16x128xbf16> to vector<8x8xbf16>
    %191 = vector.extract_strided_slice %185 {offsets = [0, 8], sizes = [8, 8], strides = [1, 1]} : vector<16x128xbf16> to vector<8x8xbf16>
    %cst_68 = arith.constant dense<0.000000e+00> : vector<8x8xf32>
    %192 = tpu.matmul %190, %191, %cst_68 {dimension_numbers = #tpu.dot_dimension_numbers<[1], [1], [0], [0], [0, 0, 1, 0], [], []>} : vector<8x8xbf16>, vector<8x8xbf16>, vector<8x8xf32> -> vector<8x8xf32>
    %193 = vector.extract_strided_slice %184 {offsets = [0, 16], sizes = [8, 8], strides = [1, 1]} : vector<16x128xbf16> to vector<8x8xbf16>
    %194 = vector.extract_strided_slice %185 {offsets = [0, 16], sizes = [8, 8], strides = [1, 1]} : vector<16x128xbf16> to vector<8x8xbf16>
    %cst_69 = arith.constant dense<0.000000e+00> : vector<8x8xf32>
    %195 = tpu.matmul %193, %194, %cst_69 {dimension_numbers = #tpu.dot_dimension_numbers<[1], [1], [0], [0], [0, 0, 1, 0], [], []>} : vector<8x8xbf16>, vector<8x8xbf16>, vector<8x8xf32> -> vector<8x8xf32>
    %196 = vector.extract_strided_slice %184 {offsets = [0, 24], sizes = [8, 8], strides = [1, 1]} : vector<16x128xbf16> to vector<8x8xbf16>
    %197 = vector.extract_strided_slice %185 {offsets = [0, 24], sizes = [8, 8], strides = [1, 1]} : vector<16x128xbf16> to vector<8x8xbf16>
    %cst_70 = arith.constant dense<0.000000e+00> : vector<8x8xf32>
    %198 = tpu.matmul %196, %197, %cst_70 {dimension_numbers = #tpu.dot_dimension_numbers<[1], [1], [0], [0], [0, 0, 1, 0], [], []>} : vector<8x8xbf16>, vector<8x8xbf16>, vector<8x8xf32> -> vector<8x8xf32>
    %199 = vector.extract_strided_slice %184 {offsets = [8, 0], sizes = [8, 8], strides = [1, 1]} : vector<16x128xbf16> to vector<8x8xbf16>
    %200 = vector.extract_strided_slice %185 {offsets = [8, 0], sizes = [8, 8], strides = [1, 1]} : vector<16x128xbf16> to vector<8x8xbf16>
    %cst_71 = arith.constant dense<0.000000e+00> : vector<8x8xf32>
    %201 = tpu.matmul %199, %200, %cst_71 {dimension_numbers = #tpu.dot_dimension_numbers<[1], [1], [0], [0], [0, 0, 1, 0], [], []>} : vector<8x8xbf16>, vector<8x8xbf16>, vector<8x8xf32> -> vector<8x8xf32>
    %202 = vector.extract_strided_slice %184 {offsets = [8, 8], sizes = [8, 8], strides = [1, 1]} : vector<16x128xbf16> to vector<8x8xbf16>
    %203 = vector.extract_strided_slice %185 {offsets = [8, 8], sizes = [8, 8], strides = [1, 1]} : vector<16x128xbf16> to vector<8x8xbf16>
    %cst_72 = arith.constant dense<0.000000e+00> : vector<8x8xf32>
    %204 = tpu.matmul %202, %203, %cst_72 {dimension_numbers = #tpu.dot_dimension_numbers<[1], [1], [0], [0], [0, 0, 1, 0], [], []>} : vector<8x8xbf16>, vector<8x8xbf16>, vector<8x8xf32> -> vector<8x8xf32>
    %205 = vector.extract_strided_slice %184 {offsets = [8, 16], sizes = [8, 8], strides = [1, 1]} : vector<16x128xbf16> to vector<8x8xbf16>
    %206 = vector.extract_strided_slice %185 {offsets = [8, 16], sizes = [8, 8], strides = [1, 1]} : vector<16x128xbf16> to vector<8x8xbf16>
    %cst_73 = arith.constant dense<0.000000e+00> : vector<8x8xf32>
    %207 = tpu.matmul %205, %206, %cst_73 {dimension_numbers = #tpu.dot_dimension_numbers<[1], [1], [0], [0], [0, 0, 1, 0], [], []>} : vector<8x8xbf16>, vector<8x8xbf16>, vector<8x8xf32> -> vector<8x8xf32>
    %208 = vector.extract_strided_slice %184 {offsets = [8, 24], sizes = [8, 8], strides = [1, 1]} : vector<16x128xbf16> to vector<8x8xbf16>
    %209 = vector.extract_strided_slice %185 {offsets = [8, 24], sizes = [8, 8], strides = [1, 1]} : vector<16x128xbf16> to vector<8x8xbf16>
    %cst_74 = arith.constant dense<0.000000e+00> : vector<8x8xf32>
    %210 = tpu.matmul %208, %209, %cst_74 {dimension_numbers = #tpu.dot_dimension_numbers<[1], [1], [0], [0], [0, 0, 1, 0], [], []>} : vector<8x8xbf16>, vector<8x8xbf16>, vector<8x8xf32> -> vector<8x8xf32>
    %211 = tpu.concatenate %189, %192, %195, %198, %201, %204, %207, %210 in 0 : vector<8x8xf32>, vector<8x8xf32>, vector<8x8xf32>, vector<8x8xf32>, vector<8x8xf32>, vector<8x8xf32>, vector<8x8xf32>, vector<8x8xf32> -> vector<64x8xf32>
    %cst_75 = arith.constant dense<0xFF800000> : vector<64xf32>
    %212 = vector.multi_reduction <maximumf>, %211, %cst_75 [1] : vector<64x8xf32> to vector<64xf32>
    %213 = vector.shape_cast %212 : vector<64xf32> to vector<64x1xf32>
    %214 = vector.broadcast %213 : vector<64x1xf32> to vector<64x8xf32>
    %215 = arith.subf %211, %214 : vector<64x8xf32>
    %216 = math.exp %215 : vector<64x8xf32>
    %cst_76 = arith.constant dense<0.000000e+00> : vector<64xf32>
    %217 = vector.multi_reduction <add>, %216, %cst_76 [1] : vector<64x8xf32> to vector<64xf32>
    %218 = vector.shape_cast %217 : vector<64xf32> to vector<64x1xf32>
    %219 = tpu.reciprocal %218 : vector<64x1xf32> -> vector<64x1xf32>
    %220 = vector.broadcast %219 : vector<64x1xf32> to vector<64x8xf32>
    %221 = arith.mulf %216, %220 : vector<64x8xf32>
    %222 = arith.truncf %221 : vector<64x8xf32> to vector<64x8xbf16>
    %223 = vector.extract_strided_slice %222 {offsets = [0, 0], sizes = [8, 8], strides = [1, 1]} : vector<64x8xbf16> to vector<8x8xbf16>
    %224 = vector.extract_strided_slice %186 {offsets = [0, 0], sizes = [8, 8], strides = [1, 1]} : vector<16x128xbf16> to vector<8x8xbf16>
    %cst_77 = arith.constant dense<0.000000e+00> : vector<8x8xf32>
    %225 = tpu.matmul %223, %224, %cst_77 {dimension_numbers = #tpu.dot_dimension_numbers<[1], [0], [0], [1], [0, 0, 1, 1], [], []>} : vector<8x8xbf16>, vector<8x8xbf16>, vector<8x8xf32> -> vector<8x8xf32>
    %226 = vector.extract_strided_slice %222 {offsets = [8, 0], sizes = [8, 8], strides = [1, 1]} : vector<64x8xbf16> to vector<8x8xbf16>
    %227 = vector.extract_strided_slice %186 {offsets = [0, 8], sizes = [8, 8], strides = [1, 1]} : vector<16x128xbf16> to vector<8x8xbf16>
    %cst_78 = arith.constant dense<0.000000e+00> : vector<8x8xf32>
    %228 = tpu.matmul %226, %227, %cst_78 {dimension_numbers = #tpu.dot_dimension_numbers<[1], [0], [0], [1], [0, 0, 1, 1], [], []>} : vector<8x8xbf16>, vector<8x8xbf16>, vector<8x8xf32> -> vector<8x8xf32>
    %229 = vector.extract_strided_slice %222 {offsets = [16, 0], sizes = [8, 8], strides = [1, 1]} : vector<64x8xbf16> to vector<8x8xbf16>
    %230 = vector.extract_strided_slice %186 {offsets = [0, 16], sizes = [8, 8], strides = [1, 1]} : vector<16x128xbf16> to vector<8x8xbf16>
    %cst_79 = arith.constant dense<0.000000e+00> : vector<8x8xf32>
    %231 = tpu.matmul %229, %230, %cst_79 {dimension_numbers = #tpu.dot_dimension_numbers<[1], [0], [0], [1], [0, 0, 1, 1], [], []>} : vector<8x8xbf16>, vector<8x8xbf16>, vector<8x8xf32> -> vector<8x8xf32>
    %232 = vector.extract_strided_slice %222 {offsets = [24, 0], sizes = [8, 8], strides = [1, 1]} : vector<64x8xbf16> to vector<8x8xbf16>
    %233 = vector.extract_strided_slice %186 {offsets = [0, 24], sizes = [8, 8], strides = [1, 1]} : vector<16x128xbf16> to vector<8x8xbf16>
    %cst_80 = arith.constant dense<0.000000e+00> : vector<8x8xf32>
    %234 = tpu.matmul %232, %233, %cst_80 {dimension_numbers = #tpu.dot_dimension_numbers<[1], [0], [0], [1], [0, 0, 1, 1], [], []>} : vector<8x8xbf16>, vector<8x8xbf16>, vector<8x8xf32> -> vector<8x8xf32>
    %235 = tpu.concatenate %225, %228, %231, %234 in 1 : vector<8x8xf32>, vector<8x8xf32>, vector<8x8xf32>, vector<8x8xf32> -> vector<8x32xf32>
    %236 = vector.extract_strided_slice %222 {offsets = [32, 0], sizes = [8, 8], strides = [1, 1]} : vector<64x8xbf16> to vector<8x8xbf16>
    %237 = vector.extract_strided_slice %186 {offsets = [8, 0], sizes = [8, 8], strides = [1, 1]} : vector<16x128xbf16> to vector<8x8xbf16>
    %cst_81 = arith.constant dense<0.000000e+00> : vector<8x8xf32>
    %238 = tpu.matmul %236, %237, %cst_81 {dimension_numbers = #tpu.dot_dimension_numbers<[1], [0], [0], [1], [0, 0, 1, 1], [], []>} : vector<8x8xbf16>, vector<8x8xbf16>, vector<8x8xf32> -> vector<8x8xf32>
    %239 = vector.extract_strided_slice %222 {offsets = [40, 0], sizes = [8, 8], strides = [1, 1]} : vector<64x8xbf16> to vector<8x8xbf16>
    %240 = vector.extract_strided_slice %186 {offsets = [8, 8], sizes = [8, 8], strides = [1, 1]} : vector<16x128xbf16> to vector<8x8xbf16>
    %cst_82 = arith.constant dense<0.000000e+00> : vector<8x8xf32>
    %241 = tpu.matmul %239, %240, %cst_82 {dimension_numbers = #tpu.dot_dimension_numbers<[1], [0], [0], [1], [0, 0, 1, 1], [], []>} : vector<8x8xbf16>, vector<8x8xbf16>, vector<8x8xf32> -> vector<8x8xf32>
    %242 = vector.extract_strided_slice %222 {offsets = [48, 0], sizes = [8, 8], strides = [1, 1]} : vector<64x8xbf16> to vector<8x8xbf16>
    %243 = vector.extract_strided_slice %186 {offsets = [8, 16], sizes = [8, 8], strides = [1, 1]} : vector<16x128xbf16> to vector<8x8xbf16>
    %cst_83 = arith.constant dense<0.000000e+00> : vector<8x8xf32>
    %244 = tpu.matmul %242, %243, %cst_83 {dimension_numbers = #tpu.dot_dimension_numbers<[1], [0], [0], [1], [0, 0, 1, 1], [], []>} : vector<8x8xbf16>, vector<8x8xbf16>, vector<8x8xf32> -> vector<8x8xf32>
    %245 = vector.extract_strided_slice %222 {offsets = [56, 0], sizes = [8, 8], strides = [1, 1]} : vector<64x8xbf16> to vector<8x8xbf16>
    %246 = vector.extract_strided_slice %186 {offsets = [8, 24], sizes = [8, 8], strides = [1, 1]} : vector<16x128xbf16> to vector<8x8xbf16>
    %cst_84 = arith.constant dense<0.000000e+00> : vector<8x8xf32>
    %247 = tpu.matmul %245, %246, %cst_84 {dimension_numbers = #tpu.dot_dimension_numbers<[1], [0], [0], [1], [0, 0, 1, 1], [], []>} : vector<8x8xbf16>, vector<8x8xbf16>, vector<8x8xf32> -> vector<8x8xf32>
    %248 = tpu.concatenate %238, %241, %244, %247 in 1 : vector<8x8xf32>, vector<8x8xf32>, vector<8x8xf32>, vector<8x8xf32> -> vector<8x32xf32>
    %249 = tpu.concatenate %235, %248 in 0 : vector<8x32xf32>, vector<8x32xf32> -> vector<16x32xf32>
    %250 = arith.truncf %249 : vector<16x32xf32> to vector<16x32xbf16>
    %c1280 = arith.constant 1280 : index
    %c0_85 = arith.constant 0 : index
    %251 = vector.load %arg2[%c1280, %c0_85] : memref<2688x128xbf16, #tpu.memory_space<vmem>>, vector<32x128xbf16>
    %cst_86 = arith.constant dense<0.000000e+00> : vector<16x128xf32>
    %252 = tpu.matmul %250, %251, %cst_86 {dimension_numbers = #tpu.dot_dimension_numbers<[1], [0], [0], [1], [0, 0, 1, 1], [], []>} : vector<16x32xbf16>, vector<32x128xbf16>, vector<16x128xf32> -> vector<16x128xf32>
    %c86 = arith.constant 86 : index
    %c0_87 = arith.constant 0 : index
    %253 = vector.load %arg3[%c86, %c0_87] : memref<104x128xf32, #tpu.memory_space<vmem>>, vector<1x128xf32>
    %254 = vector.broadcast %253 : vector<1x128xf32> to vector<16x128xf32>
    %255 = arith.addf %252, %254 : vector<16x128xf32>
    %256 = arith.addf %165, %255 : vector<16x128xf32>
    %cst_88 = arith.constant dense<0.000000e+00> : vector<16xf32>
    %257 = vector.multi_reduction <add>, %256, %cst_88 [1] : vector<16x128xf32> to vector<16xf32>
    %258 = vector.shape_cast %257 : vector<16xf32> to vector<16x1xf32>
    %cst_89 = arith.constant 3.125000e-02 : f32
    %259 = vector.broadcast %cst_89 : f32 to vector<16x1xf32>
    %260 = arith.mulf %258, %259 : vector<16x1xf32>
    %261 = arith.mulf %256, %256 : vector<16x128xf32>
    %cst_90 = arith.constant dense<0.000000e+00> : vector<16xf32>
    %262 = vector.multi_reduction <add>, %261, %cst_90 [1] : vector<16x128xf32> to vector<16xf32>
    %263 = vector.shape_cast %262 : vector<16xf32> to vector<16x1xf32>
    %cst_91 = arith.constant 3.125000e-02 : f32
    %264 = vector.broadcast %cst_91 : f32 to vector<16x1xf32>
    %265 = arith.mulf %263, %264 : vector<16x1xf32>
    %266 = arith.mulf %260, %260 : vector<16x1xf32>
    %267 = arith.subf %265, %266 : vector<16x1xf32>
    %268 = vector.broadcast %260 : vector<16x1xf32> to vector<16x128xf32>
    %269 = arith.subf %256, %268 : vector<16x128xf32>
    %cst_92 = arith.constant 9.99999974E-6 : f32
    %270 = vector.broadcast %cst_92 : f32 to vector<16x1xf32>
    %271 = arith.addf %267, %270 : vector<16x1xf32>
    %272 = math.rsqrt %271 : vector<16x1xf32>
    %273 = vector.broadcast %272 : vector<16x1xf32> to vector<16x128xf32>
    %274 = arith.mulf %269, %273 : vector<16x128xf32>
    %c87 = arith.constant 87 : index
    %c0_93 = arith.constant 0 : index
    %275 = vector.load %arg3[%c87, %c0_93] : memref<104x128xf32, #tpu.memory_space<vmem>>, vector<1x128xf32>
    %276 = vector.broadcast %275 : vector<1x128xf32> to vector<16x128xf32>
    %277 = arith.mulf %274, %276 : vector<16x128xf32>
    %c88 = arith.constant 88 : index
    %c0_94 = arith.constant 0 : index
    %278 = vector.load %arg3[%c88, %c0_94] : memref<104x128xf32, #tpu.memory_space<vmem>>, vector<1x128xf32>
    %279 = vector.broadcast %278 : vector<1x128xf32> to vector<16x128xf32>
    %280 = arith.addf %277, %279 : vector<16x128xf32>
    %281 = arith.truncf %280 : vector<16x128xf32> to vector<16x128xbf16>
    %c1408 = arith.constant 1408 : index
    %c0_95 = arith.constant 0 : index
    %282 = vector.load %arg2[%c1408, %c0_95] : memref<2688x128xbf16, #tpu.memory_space<vmem>>, vector<128x128xbf16>
    %cst_96 = arith.constant dense<0.000000e+00> : vector<16x128xf32>
    %283 = tpu.matmul %281, %282, %cst_96 {dimension_numbers = #tpu.dot_dimension_numbers<[1], [0], [0], [1], [0, 0, 1, 1], [], []>} : vector<16x128xbf16>, vector<128x128xbf16>, vector<16x128xf32> -> vector<16x128xf32>
    %c89 = arith.constant 89 : index
    %c0_97 = arith.constant 0 : index
    %284 = vector.load %arg3[%c89, %c0_97] : memref<104x128xf32, #tpu.memory_space<vmem>>, vector<1x128xf32>
    %285 = vector.broadcast %284 : vector<1x128xf32> to vector<16x128xf32>
    %286 = arith.addf %283, %285 : vector<16x128xf32>
    %287 = arith.truncf %163 : vector<128x128xf32> to vector<128x128xbf16>
    %c1536 = arith.constant 1536 : index
    %c0_98 = arith.constant 0 : index
    %288 = vector.load %arg2[%c1536, %c0_98] : memref<2688x128xbf16, #tpu.memory_space<vmem>>, vector<128x128xbf16>
    %cst_99 = arith.constant dense<0.000000e+00> : vector<128x128xf32>
    %289 = tpu.matmul %287, %288, %cst_99 {dimension_numbers = #tpu.dot_dimension_numbers<[1], [0], [0], [1], [0, 0, 1, 1], [], []>} : vector<128x128xbf16>, vector<128x128xbf16>, vector<128x128xf32> -> vector<128x128xf32>
    %c90 = arith.constant 90 : index
    %c0_100 = arith.constant 0 : index
    %290 = vector.load %arg3[%c90, %c0_100] : memref<104x128xf32, #tpu.memory_space<vmem>>, vector<1x128xf32>
    %291 = vector.broadcast %290 : vector<1x128xf32> to vector<128x128xf32>
    %292 = arith.addf %289, %291 : vector<128x128xf32>
    %293 = arith.truncf %163 : vector<128x128xf32> to vector<128x128xbf16>
    %c1664 = arith.constant 1664 : index
    %c0_101 = arith.constant 0 : index
    %294 = vector.load %arg2[%c1664, %c0_101] : memref<2688x128xbf16, #tpu.memory_space<vmem>>, vector<128x128xbf16>
    %cst_102 = arith.constant dense<0.000000e+00> : vector<128x128xf32>
    %295 = tpu.matmul %293, %294, %cst_102 {dimension_numbers = #tpu.dot_dimension_numbers<[1], [0], [0], [1], [0, 0, 1, 1], [], []>} : vector<128x128xbf16>, vector<128x128xbf16>, vector<128x128xf32> -> vector<128x128xf32>
    %c91 = arith.constant 91 : index
    %c0_103 = arith.constant 0 : index
    %296 = vector.load %arg3[%c91, %c0_103] : memref<104x128xf32, #tpu.memory_space<vmem>>, vector<1x128xf32>
    %297 = vector.broadcast %296 : vector<1x128xf32> to vector<128x128xf32>
    %298 = arith.addf %295, %297 : vector<128x128xf32>
    %299 = arith.truncf %286 : vector<16x128xf32> to vector<16x128xbf16>
    %300 = arith.truncf %292 : vector<128x128xf32> to vector<128x128xbf16>
    %301 = arith.truncf %298 : vector<128x128xf32> to vector<128x128xbf16>
    %302 = vector.extract_strided_slice %299 {offsets = [0, 0], sizes = [8, 8], strides = [1, 1]} : vector<16x128xbf16> to vector<8x8xbf16>
    %303 = vector.extract_strided_slice %300 {offsets = [0, 0], sizes = [64, 8], strides = [1, 1]} : vector<128x128xbf16> to vector<64x8xbf16>
    %cst_104 = arith.constant dense<0.000000e+00> : vector<8x64xf32>
    %304 = tpu.matmul %302, %303, %cst_104 {dimension_numbers = #tpu.dot_dimension_numbers<[1], [1], [0], [0], [0, 0, 1, 0], [], []>} : vector<8x8xbf16>, vector<64x8xbf16>, vector<8x64xf32> -> vector<8x64xf32>
    %305 = vector.extract_strided_slice %299 {offsets = [0, 8], sizes = [8, 8], strides = [1, 1]} : vector<16x128xbf16> to vector<8x8xbf16>
    %306 = vector.extract_strided_slice %300 {offsets = [0, 8], sizes = [64, 8], strides = [1, 1]} : vector<128x128xbf16> to vector<64x8xbf16>
    %cst_105 = arith.constant dense<0.000000e+00> : vector<8x64xf32>
    %307 = tpu.matmul %305, %306, %cst_105 {dimension_numbers = #tpu.dot_dimension_numbers<[1], [1], [0], [0], [0, 0, 1, 0], [], []>} : vector<8x8xbf16>, vector<64x8xbf16>, vector<8x64xf32> -> vector<8x64xf32>
    %308 = vector.extract_strided_slice %299 {offsets = [0, 16], sizes = [8, 8], strides = [1, 1]} : vector<16x128xbf16> to vector<8x8xbf16>
    %309 = vector.extract_strided_slice %300 {offsets = [0, 16], sizes = [64, 8], strides = [1, 1]} : vector<128x128xbf16> to vector<64x8xbf16>
    %cst_106 = arith.constant dense<0.000000e+00> : vector<8x64xf32>
    %310 = tpu.matmul %308, %309, %cst_106 {dimension_numbers = #tpu.dot_dimension_numbers<[1], [1], [0], [0], [0, 0, 1, 0], [], []>} : vector<8x8xbf16>, vector<64x8xbf16>, vector<8x64xf32> -> vector<8x64xf32>
    %311 = vector.extract_strided_slice %299 {offsets = [0, 24], sizes = [8, 8], strides = [1, 1]} : vector<16x128xbf16> to vector<8x8xbf16>
    %312 = vector.extract_strided_slice %300 {offsets = [0, 24], sizes = [64, 8], strides = [1, 1]} : vector<128x128xbf16> to vector<64x8xbf16>
    %cst_107 = arith.constant dense<0.000000e+00> : vector<8x64xf32>
    %313 = tpu.matmul %311, %312, %cst_107 {dimension_numbers = #tpu.dot_dimension_numbers<[1], [1], [0], [0], [0, 0, 1, 0], [], []>} : vector<8x8xbf16>, vector<64x8xbf16>, vector<8x64xf32> -> vector<8x64xf32>
    %314 = vector.extract_strided_slice %299 {offsets = [8, 0], sizes = [8, 8], strides = [1, 1]} : vector<16x128xbf16> to vector<8x8xbf16>
    %315 = vector.extract_strided_slice %300 {offsets = [64, 0], sizes = [64, 8], strides = [1, 1]} : vector<128x128xbf16> to vector<64x8xbf16>
    %cst_108 = arith.constant dense<0.000000e+00> : vector<8x64xf32>
    %316 = tpu.matmul %314, %315, %cst_108 {dimension_numbers = #tpu.dot_dimension_numbers<[1], [1], [0], [0], [0, 0, 1, 0], [], []>} : vector<8x8xbf16>, vector<64x8xbf16>, vector<8x64xf32> -> vector<8x64xf32>
    %317 = vector.extract_strided_slice %299 {offsets = [8, 8], sizes = [8, 8], strides = [1, 1]} : vector<16x128xbf16> to vector<8x8xbf16>
    %318 = vector.extract_strided_slice %300 {offsets = [64, 8], sizes = [64, 8], strides = [1, 1]} : vector<128x128xbf16> to vector<64x8xbf16>
    %cst_109 = arith.constant dense<0.000000e+00> : vector<8x64xf32>
    %319 = tpu.matmul %317, %318, %cst_109 {dimension_numbers = #tpu.dot_dimension_numbers<[1], [1], [0], [0], [0, 0, 1, 0], [], []>} : vector<8x8xbf16>, vector<64x8xbf16>, vector<8x64xf32> -> vector<8x64xf32>
    %320 = vector.extract_strided_slice %299 {offsets = [8, 16], sizes = [8, 8], strides = [1, 1]} : vector<16x128xbf16> to vector<8x8xbf16>
    %321 = vector.extract_strided_slice %300 {offsets = [64, 16], sizes = [64, 8], strides = [1, 1]} : vector<128x128xbf16> to vector<64x8xbf16>
    %cst_110 = arith.constant dense<0.000000e+00> : vector<8x64xf32>
    %322 = tpu.matmul %320, %321, %cst_110 {dimension_numbers = #tpu.dot_dimension_numbers<[1], [1], [0], [0], [0, 0, 1, 0], [], []>} : vector<8x8xbf16>, vector<64x8xbf16>, vector<8x64xf32> -> vector<8x64xf32>
    %323 = vector.extract_strided_slice %299 {offsets = [8, 24], sizes = [8, 8], strides = [1, 1]} : vector<16x128xbf16> to vector<8x8xbf16>
    %324 = vector.extract_strided_slice %300 {offsets = [64, 24], sizes = [64, 8], strides = [1, 1]} : vector<128x128xbf16> to vector<64x8xbf16>
    %cst_111 = arith.constant dense<0.000000e+00> : vector<8x64xf32>
    %325 = tpu.matmul %323, %324, %cst_111 {dimension_numbers = #tpu.dot_dimension_numbers<[1], [1], [0], [0], [0, 0, 1, 0], [], []>} : vector<8x8xbf16>, vector<64x8xbf16>, vector<8x64xf32> -> vector<8x64xf32>
    %326 = tpu.concatenate %304, %307, %310, %313, %316, %319, %322, %325 in 0 : vector<8x64xf32>, vector<8x64xf32>, vector<8x64xf32>, vector<8x64xf32>, vector<8x64xf32>, vector<8x64xf32>, vector<8x64xf32>, vector<8x64xf32> -> vector<64x64xf32>
    %cst_112 = arith.constant dense<0xFF800000> : vector<64xf32>
    %327 = vector.multi_reduction <maximumf>, %326, %cst_112 [1] : vector<64x64xf32> to vector<64xf32>
    %328 = vector.shape_cast %327 : vector<64xf32> to vector<64x1xf32>
    %329 = vector.broadcast %328 : vector<64x1xf32> to vector<64x64xf32>
    %330 = arith.subf %326, %329 : vector<64x64xf32>
    %331 = math.exp %330 : vector<64x64xf32>
    %cst_113 = arith.constant dense<0.000000e+00> : vector<64xf32>
    %332 = vector.multi_reduction <add>, %331, %cst_113 [1] : vector<64x64xf32> to vector<64xf32>
    %333 = vector.shape_cast %332 : vector<64xf32> to vector<64x1xf32>
    %334 = tpu.reciprocal %333 : vector<64x1xf32> -> vector<64x1xf32>
    %335 = vector.broadcast %334 : vector<64x1xf32> to vector<64x64xf32>
    %336 = arith.mulf %331, %335 : vector<64x64xf32>
    %337 = arith.truncf %336 : vector<64x64xf32> to vector<64x64xbf16>
    %338 = vector.extract_strided_slice %337 {offsets = [0, 0], sizes = [8, 64], strides = [1, 1]} : vector<64x64xbf16> to vector<8x64xbf16>
    %339 = vector.extract_strided_slice %301 {offsets = [0, 0], sizes = [64, 8], strides = [1, 1]} : vector<128x128xbf16> to vector<64x8xbf16>
    %cst_114 = arith.constant dense<0.000000e+00> : vector<8x8xf32>
    %340 = tpu.matmul %338, %339, %cst_114 {dimension_numbers = #tpu.dot_dimension_numbers<[1], [0], [0], [1], [0, 0, 1, 1], [], []>} : vector<8x64xbf16>, vector<64x8xbf16>, vector<8x8xf32> -> vector<8x8xf32>
    %341 = vector.extract_strided_slice %337 {offsets = [8, 0], sizes = [8, 64], strides = [1, 1]} : vector<64x64xbf16> to vector<8x64xbf16>
    %342 = vector.extract_strided_slice %301 {offsets = [0, 8], sizes = [64, 8], strides = [1, 1]} : vector<128x128xbf16> to vector<64x8xbf16>
    %cst_115 = arith.constant dense<0.000000e+00> : vector<8x8xf32>
    %343 = tpu.matmul %341, %342, %cst_115 {dimension_numbers = #tpu.dot_dimension_numbers<[1], [0], [0], [1], [0, 0, 1, 1], [], []>} : vector<8x64xbf16>, vector<64x8xbf16>, vector<8x8xf32> -> vector<8x8xf32>
    %344 = vector.extract_strided_slice %337 {offsets = [16, 0], sizes = [8, 64], strides = [1, 1]} : vector<64x64xbf16> to vector<8x64xbf16>
    %345 = vector.extract_strided_slice %301 {offsets = [0, 16], sizes = [64, 8], strides = [1, 1]} : vector<128x128xbf16> to vector<64x8xbf16>
    %cst_116 = arith.constant dense<0.000000e+00> : vector<8x8xf32>
    %346 = tpu.matmul %344, %345, %cst_116 {dimension_numbers = #tpu.dot_dimension_numbers<[1], [0], [0], [1], [0, 0, 1, 1], [], []>} : vector<8x64xbf16>, vector<64x8xbf16>, vector<8x8xf32> -> vector<8x8xf32>
    %347 = vector.extract_strided_slice %337 {offsets = [24, 0], sizes = [8, 64], strides = [1, 1]} : vector<64x64xbf16> to vector<8x64xbf16>
    %348 = vector.extract_strided_slice %301 {offsets = [0, 24], sizes = [64, 8], strides = [1, 1]} : vector<128x128xbf16> to vector<64x8xbf16>
    %cst_117 = arith.constant dense<0.000000e+00> : vector<8x8xf32>
    %349 = tpu.matmul %347, %348, %cst_117 {dimension_numbers = #tpu.dot_dimension_numbers<[1], [0], [0], [1], [0, 0, 1, 1], [], []>} : vector<8x64xbf16>, vector<64x8xbf16>, vector<8x8xf32> -> vector<8x8xf32>
    %350 = tpu.concatenate %340, %343, %346, %349 in 1 : vector<8x8xf32>, vector<8x8xf32>, vector<8x8xf32>, vector<8x8xf32> -> vector<8x32xf32>
    %351 = vector.extract_strided_slice %337 {offsets = [32, 0], sizes = [8, 64], strides = [1, 1]} : vector<64x64xbf16> to vector<8x64xbf16>
    %352 = vector.extract_strided_slice %301 {offsets = [64, 0], sizes = [64, 8], strides = [1, 1]} : vector<128x128xbf16> to vector<64x8xbf16>
    %cst_118 = arith.constant dense<0.000000e+00> : vector<8x8xf32>
    %353 = tpu.matmul %351, %352, %cst_118 {dimension_numbers = #tpu.dot_dimension_numbers<[1], [0], [0], [1], [0, 0, 1, 1], [], []>} : vector<8x64xbf16>, vector<64x8xbf16>, vector<8x8xf32> -> vector<8x8xf32>
    %354 = vector.extract_strided_slice %337 {offsets = [40, 0], sizes = [8, 64], strides = [1, 1]} : vector<64x64xbf16> to vector<8x64xbf16>
    %355 = vector.extract_strided_slice %301 {offsets = [64, 8], sizes = [64, 8], strides = [1, 1]} : vector<128x128xbf16> to vector<64x8xbf16>
    %cst_119 = arith.constant dense<0.000000e+00> : vector<8x8xf32>
    %356 = tpu.matmul %354, %355, %cst_119 {dimension_numbers = #tpu.dot_dimension_numbers<[1], [0], [0], [1], [0, 0, 1, 1], [], []>} : vector<8x64xbf16>, vector<64x8xbf16>, vector<8x8xf32> -> vector<8x8xf32>
    %357 = vector.extract_strided_slice %337 {offsets = [48, 0], sizes = [8, 64], strides = [1, 1]} : vector<64x64xbf16> to vector<8x64xbf16>
    %358 = vector.extract_strided_slice %301 {offsets = [64, 16], sizes = [64, 8], strides = [1, 1]} : vector<128x128xbf16> to vector<64x8xbf16>
    %cst_120 = arith.constant dense<0.000000e+00> : vector<8x8xf32>
    %359 = tpu.matmul %357, %358, %cst_120 {dimension_numbers = #tpu.dot_dimension_numbers<[1], [0], [0], [1], [0, 0, 1, 1], [], []>} : vector<8x64xbf16>, vector<64x8xbf16>, vector<8x8xf32> -> vector<8x8xf32>
    %360 = vector.extract_strided_slice %337 {offsets = [56, 0], sizes = [8, 64], strides = [1, 1]} : vector<64x64xbf16> to vector<8x64xbf16>
    %361 = vector.extract_strided_slice %301 {offsets = [64, 24], sizes = [64, 8], strides = [1, 1]} : vector<128x128xbf16> to vector<64x8xbf16>
    %cst_121 = arith.constant dense<0.000000e+00> : vector<8x8xf32>
    %362 = tpu.matmul %360, %361, %cst_121 {dimension_numbers = #tpu.dot_dimension_numbers<[1], [0], [0], [1], [0, 0, 1, 1], [], []>} : vector<8x64xbf16>, vector<64x8xbf16>, vector<8x8xf32> -> vector<8x8xf32>
    %363 = tpu.concatenate %353, %356, %359, %362 in 1 : vector<8x8xf32>, vector<8x8xf32>, vector<8x8xf32>, vector<8x8xf32> -> vector<8x32xf32>
    %364 = tpu.concatenate %350, %363 in 0 : vector<8x32xf32>, vector<8x32xf32> -> vector<16x32xf32>
    %365 = arith.truncf %364 : vector<16x32xf32> to vector<16x32xbf16>
    %c1792 = arith.constant 1792 : index
    %c0_122 = arith.constant 0 : index
    %366 = vector.load %arg2[%c1792, %c0_122] : memref<2688x128xbf16, #tpu.memory_space<vmem>>, vector<32x128xbf16>
    %cst_123 = arith.constant dense<0.000000e+00> : vector<16x128xf32>
    %367 = tpu.matmul %365, %366, %cst_123 {dimension_numbers = #tpu.dot_dimension_numbers<[1], [0], [0], [1], [0, 0, 1, 1], [], []>} : vector<16x32xbf16>, vector<32x128xbf16>, vector<16x128xf32> -> vector<16x128xf32>
    %c92 = arith.constant 92 : index
    %c0_124 = arith.constant 0 : index
    %368 = vector.load %arg3[%c92, %c0_124] : memref<104x128xf32, #tpu.memory_space<vmem>>, vector<1x128xf32>
    %369 = vector.broadcast %368 : vector<1x128xf32> to vector<16x128xf32>
    %370 = arith.addf %367, %369 : vector<16x128xf32>
    %371 = arith.addf %280, %370 : vector<16x128xf32>
    %cst_125 = arith.constant dense<0.000000e+00> : vector<16xf32>
    %372 = vector.multi_reduction <add>, %371, %cst_125 [1] : vector<16x128xf32> to vector<16xf32>
    %373 = vector.shape_cast %372 : vector<16xf32> to vector<16x1xf32>
    %cst_126 = arith.constant 3.125000e-02 : f32
    %374 = vector.broadcast %cst_126 : f32 to vector<16x1xf32>
    %375 = arith.mulf %373, %374 : vector<16x1xf32>
    %376 = arith.mulf %371, %371 : vector<16x128xf32>
    %cst_127 = arith.constant dense<0.000000e+00> : vector<16xf32>
    %377 = vector.multi_reduction <add>, %376, %cst_127 [1] : vector<16x128xf32> to vector<16xf32>
    %378 = vector.shape_cast %377 : vector<16xf32> to vector<16x1xf32>
    %cst_128 = arith.constant 3.125000e-02 : f32
    %379 = vector.broadcast %cst_128 : f32 to vector<16x1xf32>
    %380 = arith.mulf %378, %379 : vector<16x1xf32>
    %381 = arith.mulf %375, %375 : vector<16x1xf32>
    %382 = arith.subf %380, %381 : vector<16x1xf32>
    %383 = vector.broadcast %375 : vector<16x1xf32> to vector<16x128xf32>
    %384 = arith.subf %371, %383 : vector<16x128xf32>
    %cst_129 = arith.constant 9.99999974E-6 : f32
    %385 = vector.broadcast %cst_129 : f32 to vector<16x1xf32>
    %386 = arith.addf %382, %385 : vector<16x1xf32>
    %387 = math.rsqrt %386 : vector<16x1xf32>
    %388 = vector.broadcast %387 : vector<16x1xf32> to vector<16x128xf32>
    %389 = arith.mulf %384, %388 : vector<16x128xf32>
    %c93 = arith.constant 93 : index
    %c0_130 = arith.constant 0 : index
    %390 = vector.load %arg3[%c93, %c0_130] : memref<104x128xf32, #tpu.memory_space<vmem>>, vector<1x128xf32>
    %391 = vector.broadcast %390 : vector<1x128xf32> to vector<16x128xf32>
    %392 = arith.mulf %389, %391 : vector<16x128xf32>
    %c94 = arith.constant 94 : index
    %c0_131 = arith.constant 0 : index
    %393 = vector.load %arg3[%c94, %c0_131] : memref<104x128xf32, #tpu.memory_space<vmem>>, vector<1x128xf32>
    %394 = vector.broadcast %393 : vector<1x128xf32> to vector<16x128xf32>
    %395 = arith.addf %392, %394 : vector<16x128xf32>
    %396 = arith.truncf %395 : vector<16x128xf32> to vector<16x128xbf16>
    %c1920 = arith.constant 1920 : index
    %c0_132 = arith.constant 0 : index
    %397 = vector.load %arg2[%c1920, %c0_132] : memref<2688x128xbf16, #tpu.memory_space<vmem>>, vector<128x128xbf16>
    %cst_133 = arith.constant dense<0.000000e+00> : vector<16x128xf32>
    %398 = tpu.matmul %396, %397, %cst_133 {dimension_numbers = #tpu.dot_dimension_numbers<[1], [0], [0], [1], [0, 0, 1, 1], [], []>} : vector<16x128xbf16>, vector<128x128xbf16>, vector<16x128xf32> -> vector<16x128xf32>
    %c95 = arith.constant 95 : index
    %c0_134 = arith.constant 0 : index
    %399 = vector.load %arg3[%c95, %c0_134] : memref<104x128xf32, #tpu.memory_space<vmem>>, vector<1x128xf32>
    %400 = vector.broadcast %399 : vector<1x128xf32> to vector<16x128xf32>
    %401 = arith.addf %398, %400 : vector<16x128xf32>
    %cst_135 = arith.constant 0.000000e+00 : f32
    %402 = vector.broadcast %cst_135 : f32 to vector<16x128xf32>
    %403 = arith.maximumf %401, %402 : vector<16x128xf32>
    %404 = arith.truncf %403 : vector<16x128xf32> to vector<16x128xbf16>
    %c2048 = arith.constant 2048 : index
    %c0_136 = arith.constant 0 : index
    %405 = vector.load %arg2[%c2048, %c0_136] : memref<2688x128xbf16, #tpu.memory_space<vmem>>, vector<128x128xbf16>
    %cst_137 = arith.constant dense<0.000000e+00> : vector<16x128xf32>
    %406 = tpu.matmul %404, %405, %cst_137 {dimension_numbers = #tpu.dot_dimension_numbers<[1], [0], [0], [1], [0, 0, 1, 1], [], []>} : vector<16x128xbf16>, vector<128x128xbf16>, vector<16x128xf32> -> vector<16x128xf32>
    %c96 = arith.constant 96 : index
    %c0_138 = arith.constant 0 : index
    %407 = vector.load %arg3[%c96, %c0_138] : memref<104x128xf32, #tpu.memory_space<vmem>>, vector<1x128xf32>
    %408 = vector.broadcast %407 : vector<1x128xf32> to vector<16x128xf32>
    %409 = arith.addf %406, %408 : vector<16x128xf32>
    %410 = arith.addf %395, %409 : vector<16x128xf32>
    %cst_139 = arith.constant dense<0.000000e+00> : vector<16xf32>
    %411 = vector.multi_reduction <add>, %410, %cst_139 [1] : vector<16x128xf32> to vector<16xf32>
    %412 = vector.shape_cast %411 : vector<16xf32> to vector<16x1xf32>
    %cst_140 = arith.constant 3.125000e-02 : f32
    %413 = vector.broadcast %cst_140 : f32 to vector<16x1xf32>
    %414 = arith.mulf %412, %413 : vector<16x1xf32>
    %415 = arith.mulf %410, %410 : vector<16x128xf32>
    %cst_141 = arith.constant dense<0.000000e+00> : vector<16xf32>
    %416 = vector.multi_reduction <add>, %415, %cst_141 [1] : vector<16x128xf32> to vector<16xf32>
    %417 = vector.shape_cast %416 : vector<16xf32> to vector<16x1xf32>
    %cst_142 = arith.constant 3.125000e-02 : f32
    %418 = vector.broadcast %cst_142 : f32 to vector<16x1xf32>
    %419 = arith.mulf %417, %418 : vector<16x1xf32>
    %420 = arith.mulf %414, %414 : vector<16x1xf32>
    %421 = arith.subf %419, %420 : vector<16x1xf32>
    %422 = vector.broadcast %414 : vector<16x1xf32> to vector<16x128xf32>
    %423 = arith.subf %410, %422 : vector<16x128xf32>
    %cst_143 = arith.constant 9.99999974E-6 : f32
    %424 = vector.broadcast %cst_143 : f32 to vector<16x1xf32>
    %425 = arith.addf %421, %424 : vector<16x1xf32>
    %426 = math.rsqrt %425 : vector<16x1xf32>
    %427 = vector.broadcast %426 : vector<16x1xf32> to vector<16x128xf32>
    %428 = arith.mulf %423, %427 : vector<16x128xf32>
    %c97 = arith.constant 97 : index
    %c0_144 = arith.constant 0 : index
    %429 = vector.load %arg3[%c97, %c0_144] : memref<104x128xf32, #tpu.memory_space<vmem>>, vector<1x128xf32>
    %430 = vector.broadcast %429 : vector<1x128xf32> to vector<16x128xf32>
    %431 = arith.mulf %428, %430 : vector<16x128xf32>
    %c98 = arith.constant 98 : index
    %c0_145 = arith.constant 0 : index
    %432 = vector.load %arg3[%c98, %c0_145] : memref<104x128xf32, #tpu.memory_space<vmem>>, vector<1x128xf32>
    %433 = vector.broadcast %432 : vector<1x128xf32> to vector<16x128xf32>
    %434 = arith.addf %431, %433 : vector<16x128xf32>
    %435 = arith.truncf %434 : vector<16x128xf32> to vector<16x128xbf16>
    %c2176 = arith.constant 2176 : index
    %c0_146 = arith.constant 0 : index
    %436 = vector.load %arg2[%c2176, %c0_146] : memref<2688x128xbf16, #tpu.memory_space<vmem>>, vector<128x128xbf16>
    %cst_147 = arith.constant dense<0.000000e+00> : vector<16x128xf32>
    %437 = tpu.matmul %435, %436, %cst_147 {dimension_numbers = #tpu.dot_dimension_numbers<[1], [0], [0], [1], [0, 0, 1, 1], [], []>} : vector<16x128xbf16>, vector<128x128xbf16>, vector<16x128xf32> -> vector<16x128xf32>
    %c99 = arith.constant 99 : index
    %c0_148 = arith.constant 0 : index
    %438 = vector.load %arg3[%c99, %c0_148] : memref<104x128xf32, #tpu.memory_space<vmem>>, vector<1x128xf32>
    %439 = vector.broadcast %438 : vector<1x128xf32> to vector<16x128xf32>
    %440 = arith.addf %437, %439 : vector<16x128xf32>
    %441 = arith.truncf %434 : vector<16x128xf32> to vector<16x128xbf16>
    %c2304 = arith.constant 2304 : index
    %c0_149 = arith.constant 0 : index
    %442 = vector.load %arg2[%c2304, %c0_149] : memref<2688x128xbf16, #tpu.memory_space<vmem>>, vector<128x128xbf16>
    %cst_150 = arith.constant dense<0.000000e+00> : vector<16x128xf32>
    %443 = tpu.matmul %441, %442, %cst_150 {dimension_numbers = #tpu.dot_dimension_numbers<[1], [0], [0], [1], [0, 0, 1, 1], [], []>} : vector<16x128xbf16>, vector<128x128xbf16>, vector<16x128xf32> -> vector<16x128xf32>
    %c100 = arith.constant 100 : index
    %c0_151 = arith.constant 0 : index
    %444 = vector.load %arg3[%c100, %c0_151] : memref<104x128xf32, #tpu.memory_space<vmem>>, vector<1x128xf32>
    %445 = vector.broadcast %444 : vector<1x128xf32> to vector<16x128xf32>
    %446 = arith.addf %443, %445 : vector<16x128xf32>
    %cst_152 = arith.constant 0.000000e+00 : f32
    %447 = vector.broadcast %cst_152 : f32 to vector<16x128xf32>
    %448 = arith.maximumf %446, %447 : vector<16x128xf32>
    %449 = arith.truncf %448 : vector<16x128xf32> to vector<16x128xbf16>
    %c2432 = arith.constant 2432 : index
    %c0_153 = arith.constant 0 : index
    %450 = vector.load %arg2[%c2432, %c0_153] : memref<2688x128xbf16, #tpu.memory_space<vmem>>, vector<128x128xbf16>
    %cst_154 = arith.constant dense<0.000000e+00> : vector<16x128xf32>
    %451 = tpu.matmul %449, %450, %cst_154 {dimension_numbers = #tpu.dot_dimension_numbers<[1], [0], [0], [1], [0, 0, 1, 1], [], []>} : vector<16x128xbf16>, vector<128x128xbf16>, vector<16x128xf32> -> vector<16x128xf32>
    %c101 = arith.constant 101 : index
    %c0_155 = arith.constant 0 : index
    %452 = vector.load %arg3[%c101, %c0_155] : memref<104x128xf32, #tpu.memory_space<vmem>>, vector<1x128xf32>
    %453 = vector.broadcast %452 : vector<1x128xf32> to vector<16x128xf32>
    %454 = arith.addf %451, %453 : vector<16x128xf32>
    %cst_156 = arith.constant 0.000000e+00 : f32
    %455 = vector.broadcast %cst_156 : f32 to vector<16x128xf32>
    %456 = arith.maximumf %454, %455 : vector<16x128xf32>
    %457 = arith.truncf %456 : vector<16x128xf32> to vector<16x128xbf16>
    %c2560 = arith.constant 2560 : index
    %c0_157 = arith.constant 0 : index
    %458 = vector.load %arg2[%c2560, %c0_157] : memref<2688x128xbf16, #tpu.memory_space<vmem>>, vector<128x128xbf16>
    %cst_158 = arith.constant dense<0.000000e+00> : vector<16x128xf32>
    %459 = tpu.matmul %457, %458, %cst_158 {dimension_numbers = #tpu.dot_dimension_numbers<[1], [0], [0], [1], [0, 0, 1, 1], [], []>} : vector<16x128xbf16>, vector<128x128xbf16>, vector<16x128xf32> -> vector<16x128xf32>
    %c102 = arith.constant 102 : index
    %c0_159 = arith.constant 0 : index
    %460 = vector.load %arg3[%c102, %c0_159] : memref<104x128xf32, #tpu.memory_space<vmem>>, vector<1x128xf32>
    %461 = vector.broadcast %460 : vector<1x128xf32> to vector<16x128xf32>
    %462 = arith.addf %459, %461 : vector<16x128xf32>
    %463 = arith.negf %462 : vector<16x128xf32>
    %464 = math.exp %463 : vector<16x128xf32>
    %cst_160 = arith.constant 1.000000e+00 : f32
    %465 = vector.broadcast %cst_160 : f32 to vector<16x128xf32>
    %466 = arith.addf %465, %464 : vector<16x128xf32>
    %467 = arith.divf %465, %466 : vector<16x128xf32>
    %c0_161 = arith.constant 0 : index
    %c0_162 = arith.constant 0 : index
    %c0_163 = arith.constant 0 : index
    %468 = vector.load %arg4[%c0_161, %c0_162, %c0_163] : memref<2x16x128xf32, #tpu.memory_space<vmem>>, vector<1x16x128xf32>
    %469 = vector.shape_cast %468 : vector<1x16x128xf32> to vector<16x128xf32>
    %470 = vector.shape_cast %440 : vector<16x128xf32> to vector<1x16x128xf32>
    tpu.vector_store %arg4[%c0_161, %c0_162, %c0_163], %470 {strides = array<i32>} : memref<2x16x128xf32, #tpu.memory_space<vmem>>, vector<1x16x128xf32>,
    %c1 = arith.constant 1 : index
    %c0_164 = arith.constant 0 : index
    %c0_165 = arith.constant 0 : index
    %471 = vector.load %arg4[%c1, %c0_164, %c0_165] : memref<2x16x128xf32, #tpu.memory_space<vmem>>, vector<1x16x128xf32>
    %472 = vector.shape_cast %471 : vector<1x16x128xf32> to vector<16x128xf32>
    %473 = vector.shape_cast %467 : vector<16x128xf32> to vector<1x16x128xf32>
    tpu.vector_store %arg4[%c1, %c0_164, %c0_165], %473 {strides = array<i32>} : memref<2x16x128xf32, #tpu.memory_space<vmem>>, vector<1x16x128xf32>,
    return
  }
  func.func @transform_0(%arg0: i32) -> (i32, i32) {
    %c0_i32 = arith.constant 0 : i32
    %c0_i32_0 = arith.constant 0 : i32
    return %arg0, %c0_i32 : i32, i32
  }
  func.func @transform_1(%arg0: i32) -> (i32, i32) {
    %c0_i32 = arith.constant 0 : i32
    %c0_i32_0 = arith.constant 0 : i32
    %c0_i32_1 = arith.constant 0 : i32
    return %c0_i32, %c0_i32_0 : i32, i32
  }
  func.func @transform_2(%arg0: i32) -> (i32, i32) {
    %c0_i32 = arith.constant 0 : i32
    %c0_i32_0 = arith.constant 0 : i32
    %c0_i32_1 = arith.constant 0 : i32
    return %c0_i32, %c0_i32_0 : i32, i32
  }
  func.func @transform_3(%arg0: i32) -> (i32, i32, i32) {
    %c0_i32 = arith.constant 0 : i32
    %c0_i32_0 = arith.constant 0 : i32
    %c0_i32_1 = arith.constant 0 : i32
    return %c0_i32, %arg0, %c0_i32_0 : i32, i32, i32
  }
}

</mosaic_0001>

<llo_original>
// kernel: _lambda_.1
$region0: #{_lambda_.1}
  #allocation0 [shape = 'u32[]', space=smem, size = 0x4, offset = 0x4, fixed_abs, tag = 'smem constant byte address 0x4 - core index']
  #allocation1 [shape = 'u32[144,128]{1,0:T(1,128)}', space=vmem, size = 0x12000, scoped, tag = 'internal scratch']
  %s0 = inlined_call_operand.vmem [shape: f32[128,128], index: 0, kind: input, shape index: {}]
  %s1 = inlined_call_operand.vmem [shape: bf16[2688,128], index: 1, kind: input, shape index: {}]
  %s2 = inlined_call_operand.vmem [shape: f32[104,128], index: 2, kind: input, shape index: {}]
  %s3 = inlined_call_operand.vmem [shape: f32[2,16,128], index: 3, kind: output, shape index: {}]
  %s4 = sld [smem:[#allocation0]]
  $region22: #{_lambda_.1} parent=0
    _
  %s6 = ssub.s32 1, %s4
  %s7 = scalar_select 0, %s6, %s4
  // Predicated region
  $region2: #{_lambda_.1} parent=0 // pred_check
    _
  $region3: #{_lambda_.1} parent=0 // pred_check_branch
    %9 = sbr.rel (0) target = $region5
  $region4: #{_lambda_.1} parent=0 // pred_region
    _
  $region5: #{_lambda_.1} parent=0 // pred_fallthru
    _
  // Predicated region
  $region6: #{_lambda_.1} parent=0 // pred_check
    _
  $region7: #{_lambda_.1} parent=0 // pred_check_branch
    %11 = sbr.rel (0) target = $region9
  $region8: #{_lambda_.1} parent=0 // pred_region
    _
  $region9: #{_lambda_.1} parent=0 // pred_fallthru
    _
  // Predicated region
  $region10: #{_lambda_.1} parent=0 // pred_check
    _
  $region11: #{_lambda_.1} parent=0 // pred_check_branch
    %13 = sbr.rel (0) target = $region13
  $region12: #{_lambda_.1} parent=0 // pred_region
    _
  $region13: #{_lambda_.1} parent=0 // pred_fallthru
    _
  %v15 = vld [vmem:[%s0] sm:$0xff]
  %v16 = vld [vmem:[%s0 + $0x8] sm:$0xff]
  %v17 = vld [vmem:[%s0 + $0x10] sm:$0xff]
  %v18 = vld [vmem:[%s0 + $0x18] sm:$0xff]
  %v19 = vld [vmem:[%s0 + $0x20] sm:$0xff]
  %v20 = vld [vmem:[%s0 + $0x28] sm:$0xff]
  %v21 = vld [vmem:[%s0 + $0x30] sm:$0xff]
  %v22 = vld [vmem:[%s0 + $0x38] sm:$0xff]
  %v23 = vld [vmem:[%s0 + $0x40] sm:$0xff]
  %v24 = vld [vmem:[%s0 + $0x48] sm:$0xff]
  %v25 = vld [vmem:[%s0 + $0x50] sm:$0xff]
  %v26 = vld [vmem:[%s0 + $0x58] sm:$0xff]
  %v27 = vld [vmem:[%s0 + $0x60] sm:$0xff]
  %v28 = vld [vmem:[%s0 + $0x68] sm:$0xff]
  %v29 = vld [vmem:[%s0 + $0x70] sm:$0xff]
  %v30 = vld [vmem:[%s0 + $0x78] sm:$0xff]
  %v31 = vpack.c.bf16 %v16, %v15
  %v32 = vpack.c.bf16 %v18, %v17
  %v33 = vpack.c.bf16 %v20, %v19
  %v34 = vpack.c.bf16 %v22, %v21
  %v35 = vpack.c.bf16 %v24, %v23
  %v36 = vpack.c.bf16 %v26, %v25
  %v37 = vpack.c.bf16 %v28, %v27
  %v38 = vpack.c.bf16 %v30, %v29
  %v39 = vld [vmem:[%s1] sm:$0xf]
  %v40 = vld [vmem:[%s1 + $0x4] sm:$0xf]
  %v41 = vld [vmem:[%s1 + $0x8] sm:$0xf]
  %v42 = vld [vmem:[%s1 + $0xc] sm:$0xf]
  %v43 = vld [vmem:[%s1 + $0x10] sm:$0xf]
  %v44 = vld [vmem:[%s1 + $0x14] sm:$0xf]
  %v45 = vld [vmem:[%s1 + $0x18] sm:$0xf]
  %v46 = vld [vmem:[%s1 + $0x1c] sm:$0xf]
  %v47 = vld [vmem:[%s1 + $0x20] sm:$0xf]
  %v48 = vld [vmem:[%s1 + $0x24] sm:$0xf]
  %v49 = vld [vmem:[%s1 + $0x28] sm:$0xf]
  %v50 = vld [vmem:[%s1 + $0x2c] sm:$0xf]
  %v51 = vld [vmem:[%s1 + $0x30] sm:$0xf]
  %v52 = vld [vmem:[%s1 + $0x34] sm:$0xf]
  %v53 = vld [vmem:[%s1 + $0x38] sm:$0xf]
  %v54 = vld [vmem:[%s1 + $0x3c] sm:$0xf]
  %v55 = vld [vmem:[%s2 + $0x48] sm:$0x1]
  %v56 = vlaneseq
  %v57 = vshrl.u32 %v56, 7
  %v58 = vsub.s32 0, %v57
  %v59 = vrot.slane %v55, %v58
  %v76 = vunpack.c.l.b16 %v39
  %v77 = vunpack.c.l.b16 %v40
  %v78 = vunpack.c.l.b16 %v41
  %v79 = vunpack.c.l.b16 %v42
  %v80 = vunpack.c.l.b16 %v43
  %v81 = vunpack.c.l.b16 %v44
  %v82 = vunpack.c.l.b16 %v45
  %v83 = vunpack.c.l.b16 %v46
  %v84 = vunpack.c.l.b16 %v47
  %v85 = vunpack.c.l.b16 %v48
  %v86 = vunpack.c.l.b16 %v49
  %v87 = vunpack.c.l.b16 %v50
  %v88 = vunpack.c.l.b16 %v51
  %v89 = vunpack.c.l.b16 %v52
  %v90 = vunpack.c.l.b16 %v53
  %v91 = vunpack.c.l.b16 %v54
  %v92 = vpack.c.b16 %v77, %v76
  %v93 = vpack.c.b16 %v79, %v78
  %v94 = vpack.c.b16 %v81, %v80
  %v95 = vpack.c.b16 %v83, %v82
  %v96 = vpack.c.b16 %v85, %v84
  %v97 = vpack.c.b16 %v87, %v86
  %v98 = vpack.c.b16 %v89, %v88
  %v99 = vpack.c.b16 %v91, %v90
  %108 = vmatprep.subr.bf16.mxu0 0
  %109 = vmatpush1.bf16.msra.mxu0 %v99
  %110 = vmatprep.subr.bf16.mxu0 0
  %111 = vmatpush1.bf16.msra.mxu0 %v98
  %112 = vmatprep.subr.bf16.mxu0 0
  %113 = vmatpush1.bf16.msra.mxu0 %v97
  %114 = vmatprep.subr.bf16.mxu0 0
  %115 = vmatpush1.bf16.msra.mxu0 %v96
  %116 = vmatprep.subr.bf16.mxu0 0
  %117 = vmatpush1.bf16.msra.mxu0 %v95
  %118 = vmatprep.subr.bf16.mxu0 0
  %119 = vmatpush1.bf16.msra.mxu0 %v94
  %120 = vmatprep.subr.bf16.mxu0 0
  %121 = vmatpush1.bf16.msra.mxu0 %v93
  %122 = vmatprep.subr.bf16.mxu0 0
  %123 = vmatpush1.bf16.msra.mxu0 %v92
  %124 = vmatprep.subr.bf16.mxu0 0
  %125 = vmatpush2.bf16.msra.mxu0 0
  %126 = vmatprep.subr.bf16.mxu0 0
  %127 = vmatpush2.bf16.msra.mxu0 0
  %128 = vmatprep.subr.bf16.mxu0 0
  %129 = vmatpush2.bf16.msra.mxu0 0
  %130 = vmatprep.subr.bf16.mxu0 0
  %131 = vmatpush2.bf16.msra.mxu0 0
  %132 = vmatprep.subr.bf16.mxu0 0
  %133 = vmatpush2.bf16.msra.mxu0 0
  %134 = vmatprep.subr.bf16.mxu0 0
  %135 = vmatpush2.bf16.msra.mxu0 0
  %136 = vmatprep.subr.bf16.mxu0 0
  %137 = vmatpush2.bf16.msra.mxu0 0
  %138 = vmatprep.subr.bf16.mxu0 0
  %139 = vmatpush2.bf16.msra.mxu0 0
  %140 = vmatprep.mubr.bf16.mxu0 0
  %141 = vmatmul.mubr.bf16.gmra.mxu0 %v31
  %v142 = vpop.f32.mrf.mxu0
  %v143 = vadd.f32 %v59, %v142
  %v144 = vpop.f32.mrf.mxu0
  %v145 = vpop.f32.mrf.mxu0
  %v146 = vadd.f32 %v59, %v145
  %v147 = vpop.f32.mrf.mxu0
  %148 = vmatprep.mubr.bf16.mxu0 0
  %149 = vmatmul.mubr.bf16.gmra.mxu0 %v32
  %v150 = vpop.f32.mrf.mxu0
  %v151 = vadd.f32 %v59, %v150
  %v152 = vpop.f32.mrf.mxu0
  %v153 = vpop.f32.mrf.mxu0
  %v154 = vadd.f32 %v59, %v153
  %v155 = vpop.f32.mrf.mxu0
  %156 = vmatprep.mubr.bf16.mxu0 0
  %157 = vmatmul.mubr.bf16.gmra.mxu0 %v33
  %v158 = vpop.f32.mrf.mxu0
  %v159 = vadd.f32 %v59, %v158
  %v160 = vpop.f32.mrf.mxu0
  %v161 = vpop.f32.mrf.mxu0
  %v162 = vadd.f32 %v59, %v161
  %v163 = vpop.f32.mrf.mxu0
  %164 = vmatprep.mubr.bf16.mxu0 0
  %165 = vmatmul.mubr.bf16.gmra.mxu0 %v34
  %v166 = vpop.f32.mrf.mxu0
  %v167 = vadd.f32 %v59, %v166
  %v168 = vpop.f32.mrf.mxu0
  %v169 = vpop.f32.mrf.mxu0
  %v170 = vadd.f32 %v59, %v169
  %v171 = vpop.f32.mrf.mxu0
  %172 = vmatprep.mubr.bf16.mxu0 0
  %173 = vmatmul.mubr.bf16.gmra.mxu0 %v35
  %v174 = vpop.f32.mrf.mxu0
  %v175 = vadd.f32 %v59, %v174
  %v176 = vpop.f32.mrf.mxu0
  %v177 = vpop.f32.mrf.mxu0
  %v178 = vadd.f32 %v59, %v177
  %v179 = vpop.f32.mrf.mxu0
  %180 = vmatprep.mubr.bf16.mxu0 0
  %181 = vmatmul.mubr.bf16.gmra.mxu0 %v36
  %v182 = vpop.f32.mrf.mxu0
  %v183 = vadd.f32 %v59, %v182
  %v184 = vpop.f32.mrf.mxu0
  %v185 = vpop.f32.mrf.mxu0
  %v186 = vadd.f32 %v59, %v185
  %v187 = vpop.f32.mrf.mxu0
  %188 = vmatprep.mubr.bf16.mxu0 0
  %189 = vmatmul.mubr.bf16.gmra.mxu0 %v37
  %v190 = vpop.f32.mrf.mxu0
  %v191 = vadd.f32 %v59, %v190
  %v192 = vpop.f32.mrf.mxu0
  %v193 = vpop.f32.mrf.mxu0
  %v194 = vadd.f32 %v59, %v193
  %v195 = vpop.f32.mrf.mxu0
  %196 = vmatprep.mubr.bf16.mxu0 0
  %197 = vmatmul.mubr.bf16.gmra.mxu0 %v38
  %v198 = vpop.f32.mrf.mxu0
  %v199 = vadd.f32 %v59, %v198
  %v200 = vpop.f32.mrf.mxu0
  %v201 = vpop.f32.mrf.mxu0
  %v202 = vadd.f32 %v59, %v201
  %v203 = vpop.f32.mrf.mxu0
  %204 = vdwg.mxu0
  %v205 = vld [vmem:[%s2] sm:$0xff]
  %v206 = vld [vmem:[%s2 + $0x8] sm:$0xff]
  %v207 = vld [vmem:[%s2 + $0x10] sm:$0xff]
  %v208 = vld [vmem:[%s2 + $0x18] sm:$0xff]
  %v209 = vld [vmem:[%s2 + $0x20] sm:$0xff]
  %v210 = vld [vmem:[%s2 + $0x28] sm:$0xff]
  %v211 = vld [vmem:[%s2 + $0x30] sm:$0xff]
  %v212 = vld [vmem:[%s2 + $0x38] sm:$0xff]
  %v213 = vadd.f32 %v143, %v205
  %v214 = vadd.f32 %v146, %v206
  %v215 = vadd.f32 %v151, %v207
  %v216 = vadd.f32 %v154, %v208
  %v217 = vadd.f32 %v159, %v209
  %v218 = vadd.f32 %v162, %v210
  %v219 = vadd.f32 %v167, %v211
  %v220 = vadd.f32 %v170, %v212
  %v221 = vadd.f32 %v175, %v205
  %v222 = vadd.f32 %v178, %v206
  %v223 = vadd.f32 %v183, %v207
  %v224 = vadd.f32 %v186, %v208
  %v225 = vadd.f32 %v191, %v209
  %v226 = vadd.f32 %v194, %v210
  %v227 = vadd.f32 %v199, %v211
  %v228 = vadd.f32 %v202, %v212
  %v229 = vpack.c.bf16 %v214, %v213
  %v230 = vpack.c.bf16 %v216, %v215
  %v231 = vpack.c.bf16 %v218, %v217
  %v232 = vpack.c.bf16 %v220, %v219
  %v233 = vpack.c.bf16 %v222, %v221
  %v234 = vpack.c.bf16 %v224, %v223
  %v235 = vpack.c.bf16 %v226, %v225
  %v236 = vpack.c.bf16 %v228, %v227
  %v237 = vld [vmem:[%s1 + $0x40] sm:$0xf]
  %v238 = vld [vmem:[%s1 + $0x44] sm:$0xf]
  %v239 = vld [vmem:[%s1 + $0x48] sm:$0xf]
  %v240 = vld [vmem:[%s1 + $0x4c] sm:$0xf]
  %v241 = vld [vmem:[%s1 + $0x50] sm:$0xf]
  %v242 = vld [vmem:[%s1 + $0x54] sm:$0xf]
  %v243 = vld [vmem:[%s1 + $0x58] sm:$0xf]
  %v244 = vld [vmem:[%s1 + $0x5c] sm:$0xf]
  %v245 = vld [vmem:[%s1 + $0x60] sm:$0xf]
  %v246 = vld [vmem:[%s1 + $0x64] sm:$0xf]
  %v247 = vld [vmem:[%s1 + $0x68] sm:$0xf]
  %v248 = vld [vmem:[%s1 + $0x6c] sm:$0xf]
  %v249 = vld [vmem:[%s1 + $0x70] sm:$0xf]
  %v250 = vld [vmem:[%s1 + $0x74] sm:$0xf]
  %v251 = vld [vmem:[%s1 + $0x78] sm:$0xf]
  %v252 = vld [vmem:[%s1 + $0x7c] sm:$0xf]
  %v253 = vld [vmem:[%s2 + $0x49] sm:$0x1]
  %v254 = vlaneseq
  %v255 = vshrl.u32 %v254, 7
  %v256 = vsub.s32 0, %v255
  %v257 = vrot.slane %v253, %v256
  %v274 = vunpack.c.l.b16 %v237
  %v275 = vunpack.c.l.b16 %v238
  %v276 = vunpack.c.l.b16 %v239
  %v277 = vunpack.c.l.b16 %v240
  %v278 = vunpack.c.l.b16 %v241
  %v279 = vunpack.c.l.b16 %v242
  %v280 = vunpack.c.l.b16 %v243
  %v281 = vunpack.c.l.b16 %v244
  %v282 = vunpack.c.l.b16 %v245
  %v283 = vunpack.c.l.b16 %v246
  %v284 = vunpack.c.l.b16 %v247
  %v285 = vunpack.c.l.b16 %v248
  %v286 = vunpack.c.l.b16 %v249
  %v287 = vunpack.c.l.b16 %v250
  %v288 = vunpack.c.l.b16 %v251
  %v289 = vunpack.c.l.b16 %v252
  %v290 = vpack.c.b16 %v275, %v274
  %v291 = vpack.c.b16 %v277, %v276
  %v292 = vpack.c.b16 %v279, %v278
  %v293 = vpack.c.b16 %v281, %v280
  %v294 = vpack.c.b16 %v283, %v282
  %v295 = vpack.c.b16 %v285, %v284
  %v296 = vpack.c.b16 %v287, %v286
  %v297 = vpack.c.b16 %v289, %v288
  %306 = vmatprep.subr.bf16.mxu0 0
  %307 = vmatpush1.bf16.msra.mxu0 %v297
  %308 = vmatprep.subr.bf16.mxu0 0
  %309 = vmatpush1.bf16.msra.mxu0 %v296
  %310 = vmatprep.subr.bf16.mxu0 0
  %311 = vmatpush1.bf16.msra.mxu0 %v295
  %312 = vmatprep.subr.bf16.mxu0 0
  %313 = vmatpush1.bf16.msra.mxu0 %v294
  %314 = vmatprep.subr.bf16.mxu0 0
  %315 = vmatpush1.bf16.msra.mxu0 %v293
  %316 = vmatprep.subr.bf16.mxu0 0
  %317 = vmatpush1.bf16.msra.mxu0 %v292
  %318 = vmatprep.subr.bf16.mxu0 0
  %319 = vmatpush1.bf16.msra.mxu0 %v291
  %320 = vmatprep.subr.bf16.mxu0 0
  %321 = vmatpush1.bf16.msra.mxu0 %v290
  %322 = vmatprep.subr.bf16.mxu0 0
  %323 = vmatpush2.bf16.msra.mxu0 0
  %324 = vmatprep.subr.bf16.mxu0 0
  %325 = vmatpush2.bf16.msra.mxu0 0
  %326 = vmatprep.subr.bf16.mxu0 0
  %327 = vmatpush2.bf16.msra.mxu0 0
  %328 = vmatprep.subr.bf16.mxu0 0
  %329 = vmatpush2.bf16.msra.mxu0 0
  %330 = vmatprep.subr.bf16.mxu0 0
  %331 = vmatpush2.bf16.msra.mxu0 0
  %332 = vmatprep.subr.bf16.mxu0 0
  %333 = vmatpush2.bf16.msra.mxu0 0
  %334 = vmatprep.subr.bf16.mxu0 0
  %335 = vmatpush2.bf16.msra.mxu0 0
  %336 = vmatprep.subr.bf16.mxu0 0
  %337 = vmatpush2.bf16.msra.mxu0 0
  %338 = vmatprep.mubr.bf16.mxu0 0
  %339 = vmatmul.mubr.bf16.gmra.mxu0 %v229
  %v340 = vpop.f32.mrf.mxu0
  %v341 = vadd.f32 %v257, %v340
  %v342 = vpop.f32.mrf.mxu0
  %v343 = vpop.f32.mrf.mxu0
  %v344 = vadd.f32 %v257, %v343
  %v345 = vpop.f32.mrf.mxu0
  %346 = vmatprep.mubr.bf16.mxu0 0
  %347 = vmatmul.mubr.bf16.gmra.mxu0 %v230
  %v348 = vpop.f32.mrf.mxu0
  %v349 = vadd.f32 %v257, %v348
  %v350 = vpop.f32.mrf.mxu0
  %v351 = vpop.f32.mrf.mxu0
  %v352 = vadd.f32 %v257, %v351
  %v353 = vpop.f32.mrf.mxu0
  %354 = vmatprep.mubr.bf16.mxu0 0
  %355 = vmatmul.mubr.bf16.gmra.mxu0 %v231
  %v356 = vpop.f32.mrf.mxu0
  %v357 = vadd.f32 %v257, %v356
  %v358 = vpop.f32.mrf.mxu0
  %v359 = vpop.f32.mrf.mxu0
  %v360 = vadd.f32 %v257, %v359
  %v361 = vpop.f32.mrf.mxu0
  %362 = vmatprep.mubr.bf16.mxu0 0
  %363 = vmatmul.mubr.bf16.gmra.mxu0 %v232
  %v364 = vpop.f32.mrf.mxu0
  %v365 = vadd.f32 %v257, %v364
  %v366 = vpop.f32.mrf.mxu0
  %v367 = vpop.f32.mrf.mxu0
  %v368 = vadd.f32 %v257, %v367
  %v369 = vpop.f32.mrf.mxu0
  %370 = vmatprep.mubr.bf16.mxu0 0
  %371 = vmatmul.mubr.bf16.gmra.mxu0 %v233
  %v372 = vpop.f32.mrf.mxu0
  %v373 = vadd.f32 %v257, %v372
  %v374 = vpop.f32.mrf.mxu0
  %v375 = vpop.f32.mrf.mxu0
  %v376 = vadd.f32 %v257, %v375
  %v377 = vpop.f32.mrf.mxu0
  %378 = vmatprep.mubr.bf16.mxu0 0
  %379 = vmatmul.mubr.bf16.gmra.mxu0 %v234
  %v380 = vpop.f32.mrf.mxu0
  %v381 = vadd.f32 %v257, %v380
  %v382 = vpop.f32.mrf.mxu0
  %v383 = vpop.f32.mrf.mxu0
  %v384 = vadd.f32 %v257, %v383
  %v385 = vpop.f32.mrf.mxu0
  %386 = vmatprep.mubr.bf16.mxu0 0
  %387 = vmatmul.mubr.bf16.gmra.mxu0 %v235
  %v388 = vpop.f32.mrf.mxu0
  %v389 = vadd.f32 %v257, %v388
  %v390 = vpop.f32.mrf.mxu0
  %v391 = vpop.f32.mrf.mxu0
  %v392 = vadd.f32 %v257, %v391
  %v393 = vpop.f32.mrf.mxu0
  %394 = vmatprep.mubr.bf16.mxu0 0
  %395 = vmatmul.mubr.bf16.gmra.mxu0 %v236
  %v396 = vpop.f32.mrf.mxu0
  %v397 = vadd.f32 %v257, %v396
  %v398 = vpop.f32.mrf.mxu0
  %v399 = vpop.f32.mrf.mxu0
  %v400 = vadd.f32 %v257, %v399
  %v401 = vpop.f32.mrf.mxu0
  %402 = vdwg.mxu0
  %v403 = vld [vmem:[%s1 + $0x80] sm:$0xf]
  %v404 = vld [vmem:[%s1 + $0x84] sm:$0xf]
  %v405 = vld [vmem:[%s1 + $0x88] sm:$0xf]
  %v406 = vld [vmem:[%s1 + $0x8c] sm:$0xf]
  %v407 = vld [vmem:[%s1 + $0x90] sm:$0xf]
  %v408 = vld [vmem:[%s1 + $0x94] sm:$0xf]
  %v409 = vld [vmem:[%s1 + $0x98] sm:$0xf]
  %v410 = vld [vmem:[%s1 + $0x9c] sm:$0xf]
  %v411 = vld [vmem:[%s1 + $0xa0] sm:$0xf]
  %v412 = vld [vmem:[%s1 + $0xa4] sm:$0xf]
  %v413 = vld [vmem:[%s1 + $0xa8] sm:$0xf]
  %v414 = vld [vmem:[%s1 + $0xac] sm:$0xf]
  %v415 = vld [vmem:[%s1 + $0xb0] sm:$0xf]
  %v416 = vld [vmem:[%s1 + $0xb4] sm:$0xf]
  %v417 = vld [vmem:[%s1 + $0xb8] sm:$0xf]
  %v418 = vld [vmem:[%s1 + $0xbc] sm:$0xf]
  %v419 = vld [vmem:[%s2 + $0x4a] sm:$0x1]
  %v420 = vlaneseq
  %v421 = vshrl.u32 %v420, 7
  %v422 = vsub.s32 0, %v421
  %v423 = vrot.slane %v419, %v422
  %v440 = vunpack.c.l.b16 %v403
  %v441 = vunpack.c.l.b16 %v404
  %v442 = vunpack.c.l.b16 %v405
  %v443 = vunpack.c.l.b16 %v406
  %v444 = vunpack.c.l.b16 %v407
  %v445 = vunpack.c.l.b16 %v408
  %v446 = vunpack.c.l.b16 %v409
  %v447 = vunpack.c.l.b16 %v410
  %v448 = vunpack.c.l.b16 %v411
  %v449 = vunpack.c.l.b16 %v412
  %v450 = vunpack.c.l.b16 %v413
  %v451 = vunpack.c.l.b16 %v414
  %v452 = vunpack.c.l.b16 %v415
  %v453 = vunpack.c.l.b16 %v416
  %v454 = vunpack.c.l.b16 %v417
  %v455 = vunpack.c.l.b16 %v418
  %v456 = vpack.c.b16 %v441, %v440
  %v457 = vpack.c.b16 %v443, %v442
  %v458 = vpack.c.b16 %v445, %v444
  %v459 = vpack.c.b16 %v447, %v446
  %v460 = vpack.c.b16 %v449, %v448
  %v461 = vpack.c.b16 %v451, %v450
  %v462 = vpack.c.b16 %v453, %v452
  %v463 = vpack.c.b16 %v455, %v454
  %472 = vmatprep.subr.bf16.mxu0 0
  %473 = vmatpush1.bf16.msra.mxu0 %v463
  %474 = vmatprep.subr.bf16.mxu0 0
  %475 = vmatpush1.bf16.msra.mxu0 %v462
  %476 = vmatprep.subr.bf16.mxu0 0
  %477 = vmatpush1.bf16.msra.mxu0 %v461
  %478 = vmatprep.subr.bf16.mxu0 0
  %479 = vmatpush1.bf16.msra.mxu0 %v460
  %480 = vmatprep.subr.bf16.mxu0 0
  %481 = vmatpush1.bf16.msra.mxu0 %v459
  %482 = vmatprep.subr.bf16.mxu0 0
  %483 = vmatpush1.bf16.msra.mxu0 %v458
  %484 = vmatprep.subr.bf16.mxu0 0
  %485 = vmatpush1.bf16.msra.mxu0 %v457
  %486 = vmatprep.subr.bf16.mxu0 0
  %487 = vmatpush1.bf16.msra.mxu0 %v456
  %488 = vmatprep.subr.bf16.mxu0 0
  %489 = vmatpush2.bf16.msra.mxu0 0
  %490 = vmatprep.subr.bf16.mxu0 0
  %491 = vmatpush2.bf16.msra.mxu0 0
  %492 = vmatprep.subr.bf16.mxu0 0
  %493 = vmatpush2.bf16.msra.mxu0 0
  %494 = vmatprep.subr.bf16.mxu0 0
  %495 = vmatpush2.bf16.msra.mxu0 0
  %496 = vmatprep.subr.bf16.mxu0 0
  %497 = vmatpush2.bf16.msra.mxu0 0
  %498 = vmatprep.subr.bf16.mxu0 0
  %499 = vmatpush2.bf16.msra.mxu0 0
  %500 = vmatprep.subr.bf16.mxu0 0
  %501 = vmatpush2.bf16.msra.mxu0 0
  %502 = vmatprep.subr.bf16.mxu0 0
  %503 = vmatpush2.bf16.msra.mxu0 0
  %504 = vmatprep.mubr.bf16.mxu0 0
  %505 = vmatmul.mubr.bf16.gmra.mxu0 %v229
  %v506 = vpop.f32.mrf.mxu0
  %v507 = vadd.f32 %v423, %v506
  %v508 = vpop.f32.mrf.mxu0
  %v509 = vpop.f32.mrf.mxu0
  %v510 = vadd.f32 %v423, %v509
  %v511 = vpop.f32.mrf.mxu0
  %512 = vmatprep.mubr.bf16.mxu0 0
  %513 = vmatmul.mubr.bf16.gmra.mxu0 %v230
  %v514 = vpop.f32.mrf.mxu0
  %v515 = vadd.f32 %v423, %v514
  %v516 = vpop.f32.mrf.mxu0
  %v517 = vpop.f32.mrf.mxu0
  %v518 = vadd.f32 %v423, %v517
  %v519 = vpop.f32.mrf.mxu0
  %520 = vmatprep.mubr.bf16.mxu0 0
  %521 = vmatmul.mubr.bf16.gmra.mxu0 %v231
  %v522 = vpop.f32.mrf.mxu0
  %v523 = vadd.f32 %v423, %v522
  %v524 = vpop.f32.mrf.mxu0
  %v525 = vpop.f32.mrf.mxu0
  %v526 = vadd.f32 %v423, %v525
  %v527 = vpop.f32.mrf.mxu0
  %528 = vmatprep.mubr.bf16.mxu0 0
  %529 = vmatmul.mubr.bf16.gmra.mxu0 %v232
  %v530 = vpop.f32.mrf.mxu0
  %v531 = vadd.f32 %v423, %v530
  %v532 = vpop.f32.mrf.mxu0
  %v533 = vpop.f32.mrf.mxu0
  %v534 = vadd.f32 %v423, %v533
  %v535 = vpop.f32.mrf.mxu0
  %536 = vmatprep.mubr.bf16.mxu0 0
  %537 = vmatmul.mubr.bf16.gmra.mxu0 %v233
  %v538 = vpop.f32.mrf.mxu0
  %v539 = vadd.f32 %v423, %v538
  %v540 = vpop.f32.mrf.mxu0
  %v541 = vpop.f32.mrf.mxu0
  %v542 = vadd.f32 %v423, %v541
  %v543 = vpop.f32.mrf.mxu0
  %544 = vmatprep.mubr.bf16.mxu0 0
  %545 = vmatmul.mubr.bf16.gmra.mxu0 %v234
  %v546 = vpop.f32.mrf.mxu0
  %v547 = vadd.f32 %v423, %v546
  %v548 = vpop.f32.mrf.mxu0
  %v549 = vpop.f32.mrf.mxu0
  %v550 = vadd.f32 %v423, %v549
  %v551 = vpop.f32.mrf.mxu0
  %552 = vmatprep.mubr.bf16.mxu0 0
  %553 = vmatmul.mubr.bf16.gmra.mxu0 %v235
  %v554 = vpop.f32.mrf.mxu0
  %v555 = vadd.f32 %v423, %v554
  %v556 = vpop.f32.mrf.mxu0
  %v557 = vpop.f32.mrf.mxu0
  %v558 = vadd.f32 %v423, %v557
  %v559 = vpop.f32.mrf.mxu0
  %560 = vmatprep.mubr.bf16.mxu0 0
  %561 = vmatmul.mubr.bf16.gmra.mxu0 %v236
  %v562 = vpop.f32.mrf.mxu0
  %v563 = vadd.f32 %v423, %v562
  %v564 = vpop.f32.mrf.mxu0
  %v565 = vpop.f32.mrf.mxu0
  %v566 = vadd.f32 %v423, %v565
  %v567 = vpop.f32.mrf.mxu0
  %568 = vdwg.mxu0
  %v569 = vld [vmem:[%s1 + $0xc0] sm:$0xf]
  %v570 = vld [vmem:[%s1 + $0xc4] sm:$0xf]
  %v571 = vld [vmem:[%s1 + $0xc8] sm:$0xf]
  %v572 = vld [vmem:[%s1 + $0xcc] sm:$0xf]
  %v573 = vld [vmem:[%s1 + $0xd0] sm:$0xf]
  %v574 = vld [vmem:[%s1 + $0xd4] sm:$0xf]
  %v575 = vld [vmem:[%s1 + $0xd8] sm:$0xf]
  %v576 = vld [vmem:[%s1 + $0xdc] sm:$0xf]
  %v577 = vld [vmem:[%s1 + $0xe0] sm:$0xf]
  %v578 = vld [vmem:[%s1 + $0xe4] sm:$0xf]
  %v579 = vld [vmem:[%s1 + $0xe8] sm:$0xf]
  %v580 = vld [vmem:[%s1 + $0xec] sm:$0xf]
  %v581 = vld [vmem:[%s1 + $0xf0] sm:$0xf]
  %v582 = vld [vmem:[%s1 + $0xf4] sm:$0xf]
  %v583 = vld [vmem:[%s1 + $0xf8] sm:$0xf]
  %v584 = vld [vmem:[%s1 + $0xfc] sm:$0xf]
  %v585 = vld [vmem:[%s2 + $0x4b] sm:$0x1]
  %v586 = vlaneseq
  %v587 = vshrl.u32 %v586, 7
  %v588 = vsub.s32 0, %v587
  %v589 = vrot.slane %v585, %v588
  %v606 = vunpack.c.l.b16 %v569
  %v607 = vunpack.c.l.b16 %v570
  %v608 = vunpack.c.l.b16 %v571
  %v609 = vunpack.c.l.b16 %v572
  %v610 = vunpack.c.l.b16 %v573
  %v611 = vunpack.c.l.b16 %v574
  %v612 = vunpack.c.l.b16 %v575
  %v613 = vunpack.c.l.b16 %v576
  %v614 = vunpack.c.l.b16 %v577
  %v615 = vunpack.c.l.b16 %v578
  %v616 = vunpack.c.l.b16 %v579
  %v617 = vunpack.c.l.b16 %v580
  %v618 = vunpack.c.l.b16 %v581
  %v619 = vunpack.c.l.b16 %v582
  %v620 = vunpack.c.l.b16 %v583
  %v621 = vunpack.c.l.b16 %v584
  %v622 = vpack.c.b16 %v607, %v606
  %v623 = vpack.c.b16 %v609, %v608
  %v624 = vpack.c.b16 %v611, %v610
  %v625 = vpack.c.b16 %v613, %v612
  %v626 = vpack.c.b16 %v615, %v614
  %v627 = vpack.c.b16 %v617, %v616
  %v628 = vpack.c.b16 %v619, %v618
  %v629 = vpack.c.b16 %v621, %v620
  %638 = vmatprep.subr.bf16.mxu0 0
  %639 = vmatpush1.bf16.msra.mxu0 %v629
  %640 = vmatprep.subr.bf16.mxu0 0
  %641 = vmatpush1.bf16.msra.mxu0 %v628
  %642 = vmatprep.subr.bf16.mxu0 0
  %643 = vmatpush1.bf16.msra.mxu0 %v627
  %644 = vmatprep.subr.bf16.mxu0 0
  %645 = vmatpush1.bf16.msra.mxu0 %v626
  %646 = vmatprep.subr.bf16.mxu0 0
  %647 = vmatpush1.bf16.msra.mxu0 %v625
  %648 = vmatprep.subr.bf16.mxu0 0
  %649 = vmatpush1.bf16.msra.mxu0 %v624
  %650 = vmatprep.subr.bf16.mxu0 0
  %651 = vmatpush1.bf16.msra.mxu0 %v623
  %652 = vmatprep.subr.bf16.mxu0 0
  %653 = vmatpush1.bf16.msra.mxu0 %v622
  %654 = vmatprep.subr.bf16.mxu0 0
  %655 = vmatpush2.bf16.msra.mxu0 0
  %656 = vmatprep.subr.bf16.mxu0 0
  %657 = vmatpush2.bf16.msra.mxu0 0
  %658 = vmatprep.subr.bf16.mxu0 0
  %659 = vmatpush2.bf16.msra.mxu0 0
  %660 = vmatprep.subr.bf16.mxu0 0
  %661 = vmatpush2.bf16.msra.mxu0 0
  %662 = vmatprep.subr.bf16.mxu0 0
  %663 = vmatpush2.bf16.msra.mxu0 0
  %664 = vmatprep.subr.bf16.mxu0 0
  %665 = vmatpush2.bf16.msra.mxu0 0
  %666 = vmatprep.subr.bf16.mxu0 0
  %667 = vmatpush2.bf16.msra.mxu0 0
  %668 = vmatprep.subr.bf16.mxu0 0
  %669 = vmatpush2.bf16.msra.mxu0 0
  %670 = vmatprep.mubr.bf16.mxu0 0
  %671 = vmatmul.mubr.bf16.gmra.mxu0 %v229
  %v672 = vpop.f32.mrf.mxu0
  %v673 = vadd.f32 %v589, %v672
  %v674 = vpop.f32.mrf.mxu0
  %v675 = vpop.f32.mrf.mxu0
  %v676 = vadd.f32 %v589, %v675
  %v677 = vpop.f32.mrf.mxu0
  %678 = vmatprep.mubr.bf16.mxu0 0
  %679 = vmatmul.mubr.bf16.gmra.mxu0 %v230
  %v680 = vpop.f32.mrf.mxu0
  %v681 = vadd.f32 %v589, %v680
  %v682 = vpop.f32.mrf.mxu0
  %v683 = vpop.f32.mrf.mxu0
  %v684 = vadd.f32 %v589, %v683
  %v685 = vpop.f32.mrf.mxu0
  %686 = vmatprep.mubr.bf16.mxu0 0
  %687 = vmatmul.mubr.bf16.gmra.mxu0 %v231
  %v688 = vpop.f32.mrf.mxu0
  %v689 = vadd.f32 %v589, %v688
  %v690 = vpop.f32.mrf.mxu0
  %v691 = vpop.f32.mrf.mxu0
  %v692 = vadd.f32 %v589, %v691
  %v693 = vpop.f32.mrf.mxu0
  %694 = vmatprep.mubr.bf16.mxu0 0
  %695 = vmatmul.mubr.bf16.gmra.mxu0 %v232
  %v696 = vpop.f32.mrf.mxu0
  %v697 = vadd.f32 %v589, %v696
  %v698 = vpop.f32.mrf.mxu0
  %v699 = vpop.f32.mrf.mxu0
  %v700 = vadd.f32 %v589, %v699
  %v701 = vpop.f32.mrf.mxu0
  %702 = vmatprep.mubr.bf16.mxu0 0
  %703 = vmatmul.mubr.bf16.gmra.mxu0 %v233
  %v704 = vpop.f32.mrf.mxu0
  %v705 = vadd.f32 %v589, %v704
  %v706 = vpop.f32.mrf.mxu0
  %v707 = vpop.f32.mrf.mxu0
  %v708 = vadd.f32 %v589, %v707
  %v709 = vpop.f32.mrf.mxu0
  %710 = vmatprep.mubr.bf16.mxu0 0
  %711 = vmatmul.mubr.bf16.gmra.mxu0 %v234
  %v712 = vpop.f32.mrf.mxu0
  %v713 = vadd.f32 %v589, %v712
  %v714 = vpop.f32.mrf.mxu0
  %v715 = vpop.f32.mrf.mxu0
  %v716 = vadd.f32 %v589, %v715
  %v717 = vpop.f32.mrf.mxu0
  %718 = vmatprep.mubr.bf16.mxu0 0
  %719 = vmatmul.mubr.bf16.gmra.mxu0 %v235
  %v720 = vpop.f32.mrf.mxu0
  %v721 = vadd.f32 %v589, %v720
  %v722 = vpop.f32.mrf.mxu0
  %v723 = vpop.f32.mrf.mxu0
  %v724 = vadd.f32 %v589, %v723
  %v725 = vpop.f32.mrf.mxu0
  %726 = vmatprep.mubr.bf16.mxu0 0
  %727 = vmatmul.mubr.bf16.gmra.mxu0 %v236
  %v728 = vpop.f32.mrf.mxu0
  %v729 = vadd.f32 %v589, %v728
  %v730 = vpop.f32.mrf.mxu0
  %v731 = vpop.f32.mrf.mxu0
  %v732 = vadd.f32 %v589, %v731
  %v733 = vpop.f32.mrf.mxu0
  %734 = vdwg.mxu0
  %v735 = vpack.c.bf16 %v344, %v341
  %v736 = vpack.c.bf16 %v352, %v349
  %v737 = vpack.c.bf16 %v360, %v357
  %v738 = vpack.c.bf16 %v368, %v365
  %v739 = vpack.c.bf16 %v376, %v373
  %v740 = vpack.c.bf16 %v384, %v381
  %v741 = vpack.c.bf16 %v392, %v389
  %v742 = vpack.c.bf16 %v400, %v397
  %v743 = vpack.c.bf16 %v510, %v507
  %v744 = vpack.c.bf16 %v518, %v515
  %v745 = vpack.c.bf16 %v526, %v523
  %v746 = vpack.c.bf16 %v534, %v531
  %v747 = vpack.c.bf16 %v542, %v539
  %v748 = vpack.c.bf16 %v550, %v547
  %v749 = vpack.c.bf16 %v558, %v555
  %v750 = vpack.c.bf16 %v566, %v563
  %v751 = vpack.c.bf16 %v676, %v673
  %v752 = vpack.c.bf16 %v684, %v681
  %v753 = vpack.c.bf16 %v692, %v689
  %v754 = vpack.c.bf16 %v700, %v697
  %v755 = vpack.c.bf16 %v708, %v705
  %v756 = vpack.c.bf16 %v716, %v713
  %v757 = vpack.c.bf16 %v724, %v721
  %v758 = vpack.c.bf16 %v732, %v729
  %vm759 = vcmask 64512
  %v761 = vsel %vm759, %v735, 0
  %v764 = vsel %vm759, %v736, 0
  %v767 = vsel %vm759, %v737, 0
  %v770 = vsel %vm759, %v738, 0
  %v773 = vsel %vm759, %v743, 0
  %v776 = vsel %vm759, %v744, 0
  %v779 = vsel %vm759, %v745, 0
  %v782 = vsel %vm759, %v746, 0
  %784 = vmatprep.subr.bf16.mxu0 0
  %785 = vmatpush1.bf16.xpose.msra.mxu0 0
  %786 = vmatprep.subr.bf16.mxu0 0
  %787 = vmatpush1.bf16.xpose.msra.mxu0 0
  %788 = vmatprep.subr.bf16.mxu0 0
  %789 = vmatpush1.bf16.xpose.msra.mxu0 0
  %790 = vmatprep.subr.bf16.mxu0 0
  %791 = vmatpush1.bf16.xpose.msra.mxu0 0
  %792 = vmatprep.subr.bf16.mxu0 0
  %793 = vmatpush1.bf16.xpose.msra.mxu0 %v782
  %794 = vmatprep.subr.bf16.mxu0 0
  %795 = vmatpush1.bf16.xpose.msra.mxu0 %v779
  %796 = vmatprep.subr.bf16.mxu0 0
  %797 = vmatpush1.bf16.xpose.msra.mxu0 %v776
  %798 = vmatprep.subr.bf16.mxu0 0
  %799 = vmatpush1.bf16.xpose.msra.mxu0 %v773
  %800 = vmatprep.subr.bf16.mxu0 0
  %801 = vmatpush2.bf16.xpose.msra.mxu0 0
  %802 = vmatprep.subr.bf16.mxu0 0
  %803 = vmatpush2.bf16.xpose.msra.mxu0 0
  %804 = vmatprep.subr.bf16.mxu0 0
  %805 = vmatpush2.bf16.xpose.msra.mxu0 0
  %806 = vmatprep.subr.bf16.mxu0 0
  %807 = vmatpush2.bf16.xpose.msra.mxu0 0
  %808 = vmatprep.subr.bf16.mxu0 0
  %809 = vmatpush2.bf16.xpose.msra.mxu0 0
  %810 = vmatprep.subr.bf16.mxu0 0
  %811 = vmatpush2.bf16.xpose.msra.mxu0 0
  %812 = vmatprep.subr.bf16.mxu0 0
  %813 = vmatpush2.bf16.xpose.msra.mxu0 0
  %814 = vmatprep.subr.bf16.mxu0 0
  %815 = vmatpush2.bf16.xpose.msra.mxu0 0
  %816 = vmatprep.mubr.bf16.mxu0 0
  %817 = vmatmul.mubr.bf16.gmra.mxu0 %v761
  %v818 = vpop.f32.mrf.mxu0
  %v819 = vadd.f32 0.0, %v818
  %v820 = vpop.f32.mrf.mxu0
  %v821 = vpop.f32.mrf.mxu0
  %v822 = vadd.f32 0.0, %v821
  %v823 = vpop.f32.mrf.mxu0
  %824 = vmatprep.mubr.bf16.mxu0 0
  %825 = vmatmul.mubr.bf16.gmra.mxu0 %v764
  %v826 = vpop.f32.mrf.mxu0
  %v827 = vadd.f32 0.0, %v826
  %v828 = vpop.f32.mrf.mxu0
  %v829 = vpop.f32.mrf.mxu0
  %v830 = vadd.f32 0.0, %v829
  %v831 = vpop.f32.mrf.mxu0
  %832 = vmatprep.mubr.bf16.mxu0 0
  %833 = vmatmul.mubr.bf16.gmra.mxu0 %v767
  %v834 = vpop.f32.mrf.mxu0
  %v835 = vadd.f32 0.0, %v834
  %v836 = vpop.f32.mrf.mxu0
  %v837 = vpop.f32.mrf.mxu0
  %v838 = vadd.f32 0.0, %v837
  %v839 = vpop.f32.mrf.mxu0
  %840 = vmatprep.mubr.bf16.mxu0 0
  %841 = vmatmul.mubr.bf16.gmra.mxu0 %v770
  %v842 = vpop.f32.mrf.mxu0
  %v843 = vadd.f32 0.0, %v842
  %v844 = vpop.f32.mrf.mxu0
  %v845 = vpop.f32.mrf.mxu0
  %v846 = vadd.f32 0.0, %v845
  %v847 = vpop.f32.mrf.mxu0
  %848 = vdwg.mxu0
  %853 = vrot.lane.b32.xlu0 %v735, 120
  %v854 = vpop.permute.xlu0 %853
  %855 = vrot.lane.b32.xlu0 %v736, 120
  %v856 = vpop.permute.xlu0 %855
  %857 = vrot.lane.b32.xlu0 %v737, 120
  %v858 = vpop.permute.xlu0 %857
  %859 = vrot.lane.b32.xlu0 %v738, 120
  %v860 = vpop.permute.xlu0 %859
  %865 = vrot.lane.b32.xlu0 %v743, 120
  %v866 = vpop.permute.xlu0 %865
  %867 = vrot.lane.b32.xlu0 %v744, 120
  %v868 = vpop.permute.xlu0 %867
  %869 = vrot.lane.b32.xlu0 %v745, 120
  %v870 = vpop.permute.xlu0 %869
  %871 = vrot.lane.b32.xlu0 %v746, 120
  %v872 = vpop.permute.xlu0 %871
  %v874 = vsel %vm759, %v854, 0
  %v877 = vsel %vm759, %v856, 0
  %v880 = vsel %vm759, %v858, 0
  %v883 = vsel %vm759, %v860, 0
  %v886 = vsel %vm759, %v866, 0
  %v889 = vsel %vm759, %v868, 0
  %v892 = vsel %vm759, %v870, 0
  %v895 = vsel %vm759, %v872, 0
  %897 = vmatprep.subr.bf16.mxu0 0
  %898 = vmatpush1.bf16.xpose.msra.mxu0 0
  %899 = vmatprep.subr.bf16.mxu0 0
  %900 = vmatpush1.bf16.xpose.msra.mxu0 0
  %901 = vmatprep.subr.bf16.mxu0 0
  %902 = vmatpush1.bf16.xpose.msra.mxu0 0
  %903 = vmatprep.subr.bf16.mxu0 0
  %904 = vmatpush1.bf16.xpose.msra.mxu0 0
  %905 = vmatprep.subr.bf16.mxu0 0
  %906 = vmatpush1.bf16.xpose.msra.mxu0 %v895
  %907 = vmatprep.subr.bf16.mxu0 0
  %908 = vmatpush1.bf16.xpose.msra.mxu0 %v892
  %909 = vmatprep.subr.bf16.mxu0 0
  %910 = vmatpush1.bf16.xpose.msra.mxu0 %v889
  %911 = vmatprep.subr.bf16.mxu0 0
  %912 = vmatpush1.bf16.xpose.msra.mxu0 %v886
  %913 = vmatprep.subr.bf16.mxu0 0
  %914 = vmatpush2.bf16.xpose.msra.mxu0 0
  %915 = vmatprep.subr.bf16.mxu0 0
  %916 = vmatpush2.bf16.xpose.msra.mxu0 0
  %917 = vmatprep.subr.bf16.mxu0 0
  %918 = vmatpush2.bf16.xpose.msra.mxu0 0
  %919 = vmatprep.subr.bf16.mxu0 0
  %920 = vmatpush2.bf16.xpose.msra.mxu0 0
  %921 = vmatprep.subr.bf16.mxu0 0
  %922 = vmatpush2.bf16.xpose.msra.mxu0 0
  %923 = vmatprep.subr.bf16.mxu0 0
  %924 = vmatpush2.bf16.xpose.msra.mxu0 0
  %925 = vmatprep.subr.bf16.mxu0 0
  %926 = vmatpush2.bf16.xpose.msra.mxu0 0
  %927 = vmatprep.subr.bf16.mxu0 0
  %928 = vmatpush2.bf16.xpose.msra.mxu0 0
  %929 = vmatprep.mubr.bf16.mxu0 0
  %930 = vmatmul.mubr.bf16.gmra.mxu0 %v874
  %v931 = vpop.f32.mrf.mxu0
  %v932 = vadd.f32 0.0, %v931
  %v933 = vpop.f32.mrf.mxu0
  %v934 = vpop.f32.mrf.mxu0
  %v935 = vadd.f32 0.0, %v934
  %v936 = vpop.f32.mrf.mxu0
  %937 = vmatprep.mubr.bf16.mxu0 0
  %938 = vmatmul.mubr.bf16.gmra.mxu0 %v877
  %v939 = vpop.f32.mrf.mxu0
  %v940 = vadd.f32 0.0, %v939
  %v941 = vpop.f32.mrf.mxu0
  %v942 = vpop.f32.mrf.mxu0
  %v943 = vadd.f32 0.0, %v942
  %v944 = vpop.f32.mrf.mxu0
  %945 = vmatprep.mubr.bf16.mxu0 0
  %946 = vmatmul.mubr.bf16.gmra.mxu0 %v880
  %v947 = vpop.f32.mrf.mxu0
  %v948 = vadd.f32 0.0, %v947
  %v949 = vpop.f32.mrf.mxu0
  %v950 = vpop.f32.mrf.mxu0
  %v951 = vadd.f32 0.0, %v950
  %v952 = vpop.f32.mrf.mxu0
  %953 = vmatprep.mubr.bf16.mxu0 0
  %954 = vmatmul.mubr.bf16.gmra.mxu0 %v883
  %v955 = vpop.f32.mrf.mxu0
  %v956 = vadd.f32 0.0, %v955
  %v957 = vpop.f32.mrf.mxu0
  %v958 = vpop.f32.mrf.mxu0
  %v959 = vadd.f32 0.0, %v958
  %v960 = vpop.f32.mrf.mxu0
  %961 = vdwg.mxu0
  %962 = vrot.lane.b32.xlu0 %v735, 112
  %v963 = vpop.permute.xlu0 %962
  %964 = vrot.lane.b32.xlu0 %v736, 112
  %v965 = vpop.permute.xlu0 %964
  %966 = vrot.lane.b32.xlu0 %v737, 112
  %v967 = vpop.permute.xlu0 %966
  %968 = vrot.lane.b32.xlu0 %v738, 112
  %v969 = vpop.permute.xlu0 %968
  %970 = vrot.lane.b32.xlu0 %v743, 112
  %v971 = vpop.permute.xlu0 %970
  %972 = vrot.lane.b32.xlu0 %v744, 112
  %v973 = vpop.permute.xlu0 %972
  %974 = vrot.lane.b32.xlu0 %v745, 112
  %v975 = vpop.permute.xlu0 %974
  %976 = vrot.lane.b32.xlu0 %v746, 112
  %v977 = vpop.permute.xlu0 %976
  %v979 = vsel %vm759, %v963, 0
  %v982 = vsel %vm759, %v965, 0
  %v985 = vsel %vm759, %v967, 0
  %v988 = vsel %vm759, %v969, 0
  %v991 = vsel %vm759, %v971, 0
  %v994 = vsel %vm759, %v973, 0
  %v997 = vsel %vm759, %v975, 0
  %v1000 = vsel %vm759, %v977, 0
  %1002 = vmatprep.subr.bf16.mxu0 0
  %1003 = vmatpush1.bf16.xpose.msra.mxu0 0
  %1004 = vmatprep.subr.bf16.mxu0 0
  %1005 = vmatpush1.bf16.xpose.msra.mxu0 0
  %1006 = vmatprep.subr.bf16.mxu0 0
  %1007 = vmatpush1.bf16.xpose.msra.mxu0 0
  %1008 = vmatprep.subr.bf16.mxu0 0
  %1009 = vmatpush1.bf16.xpose.msra.mxu0 0
  %1010 = vmatprep.subr.bf16.mxu0 0
  %1011 = vmatpush1.bf16.xpose.msra.mxu0 %v1000
  %1012 = vmatprep.subr.bf16.mxu0 0
  %1013 = vmatpush1.bf16.xpose.msra.mxu0 %v997
  %1014 = vmatprep.subr.bf16.mxu0 0
  %1015 = vmatpush1.bf16.xpose.msra.mxu0 %v994
  %1016 = vmatprep.subr.bf16.mxu0 0
  %1017 = vmatpush1.bf16.xpose.msra.mxu0 %v991
  %1018 = vmatprep.subr.bf16.mxu0 0
  %1019 = vmatpush2.bf16.xpose.msra.mxu0 0
  %1020 = vmatprep.subr.bf16.mxu0 0
  %1021 = vmatpush2.bf16.xpose.msra.mxu0 0
  %1022 = vmatprep.subr.bf16.mxu0 0
  %1023 = vmatpush2.bf16.xpose.msra.mxu0 0
  %1024 = vmatprep.subr.bf16.mxu0 0
  %1025 = vmatpush2.bf16.xpose.msra.mxu0 0
  %1026 = vmatprep.subr.bf16.mxu0 0
  %1027 = vmatpush2.bf16.xpose.msra.mxu0 0
  %1028 = vmatprep.subr.bf16.mxu0 0
  %1029 = vmatpush2.bf16.xpose.msra.mxu0 0
  %1030 = vmatprep.subr.bf16.mxu0 0
  %1031 = vmatpush2.bf16.xpose.msra.mxu0 0
  %1032 = vmatprep.subr.bf16.mxu0 0
  %1033 = vmatpush2.bf16.xpose.msra.mxu0 0
  %1034 = vmatprep.mubr.bf16.mxu0 0
  %1035 = vmatmul.mubr.bf16.gmra.mxu0 %v979
  %v1036 = vpop.f32.mrf.mxu0
  %v1037 = vadd.f32 0.0, %v1036
  %v1038 = vpop.f32.mrf.mxu0
  %v1039 = vpop.f32.mrf.mxu0
  %v1040 = vadd.f32 0.0, %v1039
  %v1041 = vpop.f32.mrf.mxu0
  %1042 = vmatprep.mubr.bf16.mxu0 0
  %1043 = vmatmul.mubr.bf16.gmra.mxu0 %v982
  %v1044 = vpop.f32.mrf.mxu0
  %v1045 = vadd.f32 0.0, %v1044
  %v1046 = vpop.f32.mrf.mxu0
  %v1047 = vpop.f32.mrf.mxu0
  %v1048 = vadd.f32 0.0, %v1047
  %v1049 = vpop.f32.mrf.mxu0
  %1050 = vmatprep.mubr.bf16.mxu0 0
  %1051 = vmatmul.mubr.bf16.gmra.mxu0 %v985
  %v1052 = vpop.f32.mrf.mxu0
  %v1053 = vadd.f32 0.0, %v1052
  %v1054 = vpop.f32.mrf.mxu0
  %v1055 = vpop.f32.mrf.mxu0
  %v1056 = vadd.f32 0.0, %v1055
  %v1057 = vpop.f32.mrf.mxu0
  %1058 = vmatprep.mubr.bf16.mxu0 0
  %1059 = vmatmul.mubr.bf16.gmra.mxu0 %v988
  %v1060 = vpop.f32.mrf.mxu0
  %v1061 = vadd.f32 0.0, %v1060
  %v1062 = vpop.f32.mrf.mxu0
  %v1063 = vpop.f32.mrf.mxu0
  %v1064 = vadd.f32 0.0, %v1063
  %v1065 = vpop.f32.mrf.mxu0
  %1066 = vdwg.mxu0
  %1067 = vrot.lane.b32.xlu0 %v735, 104
  %v1068 = vpop.permute.xlu0 %1067
  %1069 = vrot.lane.b32.xlu0 %v736, 104
  %v1070 = vpop.permute.xlu0 %1069
  %1071 = vrot.lane.b32.xlu0 %v737, 104
  %v1072 = vpop.permute.xlu0 %1071
  %1073 = vrot.lane.b32.xlu0 %v738, 104
  %v1074 = vpop.permute.xlu0 %1073
  %1075 = vrot.lane.b32.xlu0 %v743, 104
  %v1076 = vpop.permute.xlu0 %1075
  %1077 = vrot.lane.b32.xlu0 %v744, 104
  %v1078 = vpop.permute.xlu0 %1077
  %1079 = vrot.lane.b32.xlu0 %v745, 104
  %v1080 = vpop.permute.xlu0 %1079
  %1081 = vrot.lane.b32.xlu0 %v746, 104
  %v1082 = vpop.permute.xlu0 %1081
  %v1084 = vsel %vm759, %v1068, 0
  %v1087 = vsel %vm759, %v1070, 0
  %v1090 = vsel %vm759, %v1072, 0
  %v1093 = vsel %vm759, %v1074, 0
  %v1096 = vsel %vm759, %v1076, 0
  %v1099 = vsel %vm759, %v1078, 0
  %v1102 = vsel %vm759, %v1080, 0
  %v1105 = vsel %vm759, %v1082, 0
  %1107 = vmatprep.subr.bf16.mxu0 0
  %1108 = vmatpush1.bf16.xpose.msra.mxu0 0
  %1109 = vmatprep.subr.bf16.mxu0 0
  %1110 = vmatpush1.bf16.xpose.msra.mxu0 0
  %1111 = vmatprep.subr.bf16.mxu0 0
  %1112 = vmatpush1.bf16.xpose.msra.mxu0 0
  %1113 = vmatprep.subr.bf16.mxu0 0
  %1114 = vmatpush1.bf16.xpose.msra.mxu0 0
  %1115 = vmatprep.subr.bf16.mxu0 0
  %1116 = vmatpush1.bf16.xpose.msra.mxu0 %v1105
  %1117 = vmatprep.subr.bf16.mxu0 0
  %1118 = vmatpush1.bf16.xpose.msra.mxu0 %v1102
  %1119 = vmatprep.subr.bf16.mxu0 0
  %1120 = vmatpush1.bf16.xpose.msra.mxu0 %v1099
  %1121 = vmatprep.subr.bf16.mxu0 0
  %1122 = vmatpush1.bf16.xpose.msra.mxu0 %v1096
  %1123 = vmatprep.subr.bf16.mxu0 0
  %1124 = vmatpush2.bf16.xpose.msra.mxu0 0
  %1125 = vmatprep.subr.bf16.mxu0 0
  %1126 = vmatpush2.bf16.xpose.msra.mxu0 0
  %1127 = vmatprep.subr.bf16.mxu0 0
  %1128 = vmatpush2.bf16.xpose.msra.mxu0 0
  %1129 = vmatprep.subr.bf16.mxu0 0
  %1130 = vmatpush2.bf16.xpose.msra.mxu0 0
  %1131 = vmatprep.subr.bf16.mxu0 0
  %1132 = vmatpush2.bf16.xpose.msra.mxu0 0
  %1133 = vmatprep.subr.bf16.mxu0 0
  %1134 = vmatpush2.bf16.xpose.msra.mxu0 0
  %1135 = vmatprep.subr.bf16.mxu0 0
  %1136 = vmatpush2.bf16.xpose.msra.mxu0 0
  %1137 = vmatprep.subr.bf16.mxu0 0
  %1138 = vmatpush2.bf16.xpose.msra.mxu0 0
  %1139 = vmatprep.mubr.bf16.mxu0 0
  %1140 = vmatmul.mubr.bf16.gmra.mxu0 %v1084
  %v1141 = vpop.f32.mrf.mxu0
  %v1142 = vadd.f32 0.0, %v1141
  %v1143 = vpop.f32.mrf.mxu0
  %v1144 = vpop.f32.mrf.mxu0
  %v1145 = vadd.f32 0.0, %v1144
  %v1146 = vpop.f32.mrf.mxu0
  %1147 = vmatprep.mubr.bf16.mxu0 0
  %1148 = vmatmul.mubr.bf16.gmra.mxu0 %v1087
  %v1149 = vpop.f32.mrf.mxu0
  %v1150 = vadd.f32 0.0, %v1149
  %v1151 = vpop.f32.mrf.mxu0
  %v1152 = vpop.f32.mrf.mxu0
  %v1153 = vadd.f32 0.0, %v1152
  %v1154 = vpop.f32.mrf.mxu0
  %1155 = vmatprep.mubr.bf16.mxu0 0
  %1156 = vmatmul.mubr.bf16.gmra.mxu0 %v1090
  %v1157 = vpop.f32.mrf.mxu0
  %v1158 = vadd.f32 0.0, %v1157
  %v1159 = vpop.f32.mrf.mxu0
  %v1160 = vpop.f32.mrf.mxu0
  %v1161 = vadd.f32 0.0, %v1160
  %v1162 = vpop.f32.mrf.mxu0
  %1163 = vmatprep.mubr.bf16.mxu0 0
  %1164 = vmatmul.mubr.bf16.gmra.mxu0 %v1093
  %v1165 = vpop.f32.mrf.mxu0
  %v1166 = vadd.f32 0.0, %v1165
  %v1167 = vpop.f32.mrf.mxu0
  %v1168 = vpop.f32.mrf.mxu0
  %v1169 = vadd.f32 0.0, %v1168
  %v1170 = vpop.f32.mrf.mxu0
  %1171 = vdwg.mxu0
  %v1173 = vsel %vm759, %v739, 0
  %v1176 = vsel %vm759, %v740, 0
  %v1179 = vsel %vm759, %v741, 0
  %v1182 = vsel %vm759, %v742, 0
  %v1185 = vsel %vm759, %v747, 0
  %v1188 = vsel %vm759, %v748, 0
  %v1191 = vsel %vm759, %v749, 0
  %v1194 = vsel %vm759, %v750, 0
  %1196 = vmatprep.subr.bf16.mxu0 0
  %1197 = vmatpush1.bf16.xpose.msra.mxu0 0
  %1198 = vmatprep.subr.bf16.mxu0 0
  %1199 = vmatpush1.bf16.xpose.msra.mxu0 0
  %1200 = vmatprep.subr.bf16.mxu0 0
  %1201 = vmatpush1.bf16.xpose.msra.mxu0 0
  %1202 = vmatprep.subr.bf16.mxu0 0
  %1203 = vmatpush1.bf16.xpose.msra.mxu0 0
  %1204 = vmatprep.subr.bf16.mxu0 0
  %1205 = vmatpush1.bf16.xpose.msra.mxu0 %v1194
  %1206 = vmatprep.subr.bf16.mxu0 0
  %1207 = vmatpush1.bf16.xpose.msra.mxu0 %v1191
  %1208 = vmatprep.subr.bf16.mxu0 0
  %1209 = vmatpush1.bf16.xpose.msra.mxu0 %v1188
  %1210 = vmatprep.subr.bf16.mxu0 0
  %1211 = vmatpush1.bf16.xpose.msra.mxu0 %v1185
  %1212 = vmatprep.subr.bf16.mxu0 0
  %1213 = vmatpush2.bf16.xpose.msra.mxu0 0
  %1214 = vmatprep.subr.bf16.mxu0 0
  %1215 = vmatpush2.bf16.xpose.msra.mxu0 0
  %1216 = vmatprep.subr.bf16.mxu0 0
  %1217 = vmatpush2.bf16.xpose.msra.mxu0 0
  %1218 = vmatprep.subr.bf16.mxu0 0
  %1219 = vmatpush2.bf16.xpose.msra.mxu0 0
  %1220 = vmatprep.subr.bf16.mxu0 0
  %1221 = vmatpush2.bf16.xpose.msra.mxu0 0
  %1222 = vmatprep.subr.bf16.mxu0 0
  %1223 = vmatpush2.bf16.xpose.msra.mxu0 0
  %1224 = vmatprep.subr.bf16.mxu0 0
  %1225 = vmatpush2.bf16.xpose.msra.mxu0 0
  %1226 = vmatprep.subr.bf16.mxu0 0
  %1227 = vmatpush2.bf16.xpose.msra.mxu0 0
  %1228 = vmatprep.mubr.bf16.mxu0 0
  %1229 = vmatmul.mubr.bf16.gmra.mxu0 %v1173
  %v1230 = vpop.f32.mrf.mxu0
  %v1231 = vadd.f32 0.0, %v1230
  %v1232 = vpop.f32.mrf.mxu0
  %v1233 = vpop.f32.mrf.mxu0
  %v1234 = vadd.f32 0.0, %v1233
  %v1235 = vpop.f32.mrf.mxu0
  %1236 = vmatprep.mubr.bf16.mxu0 0
  %1237 = vmatmul.mubr.bf16.gmra.mxu0 %v1176
  %v1238 = vpop.f32.mrf.mxu0
  %v1239 = vadd.f32 0.0, %v1238
  %v1240 = vpop.f32.mrf.mxu0
  %v1241 = vpop.f32.mrf.mxu0
  %v1242 = vadd.f32 0.0, %v1241
  %v1243 = vpop.f32.mrf.mxu0
  %1244 = vmatprep.mubr.bf16.mxu0 0
  %1245 = vmatmul.mubr.bf16.gmra.mxu0 %v1179
  %v1246 = vpop.f32.mrf.mxu0
  %v1247 = vadd.f32 0.0, %v1246
  %v1248 = vpop.f32.mrf.mxu0
  %v1249 = vpop.f32.mrf.mxu0
  %v1250 = vadd.f32 0.0, %v1249
  %v1251 = vpop.f32.mrf.mxu0
  %1252 = vmatprep.mubr.bf16.mxu0 0
  %1253 = vmatmul.mubr.bf16.gmra.mxu0 %v1182
  %v1254 = vpop.f32.mrf.mxu0
  %v1255 = vadd.f32 0.0, %v1254
  %v1256 = vpop.f32.mrf.mxu0
  %v1257 = vpop.f32.mrf.mxu0
  %v1258 = vadd.f32 0.0, %v1257
  %v1259 = vpop.f32.mrf.mxu0
  %1260 = vdwg.mxu0
  %1265 = vrot.lane.b32.xlu0 %v739, 120
  %v1266 = vpop.permute.xlu0 %1265
  %1267 = vrot.lane.b32.xlu0 %v740, 120
  %v1268 = vpop.permute.xlu0 %1267
  %1269 = vrot.lane.b32.xlu0 %v741, 120
  %v1270 = vpop.permute.xlu0 %1269
  %1271 = vrot.lane.b32.xlu0 %v742, 120
  %v1272 = vpop.permute.xlu0 %1271
  %1277 = vrot.lane.b32.xlu0 %v747, 120
  %v1278 = vpop.permute.xlu0 %1277
  %1279 = vrot.lane.b32.xlu0 %v748, 120
  %v1280 = vpop.permute.xlu0 %1279
  %1281 = vrot.lane.b32.xlu0 %v749, 120
  %v1282 = vpop.permute.xlu0 %1281
  %1283 = vrot.lane.b32.xlu0 %v750, 120
  %v1284 = vpop.permute.xlu0 %1283
  %v1286 = vsel %vm759, %v1266, 0
  %v1289 = vsel %vm759, %v1268, 0
  %v1292 = vsel %vm759, %v1270, 0
  %v1295 = vsel %vm759, %v1272, 0
  %v1298 = vsel %vm759, %v1278, 0
  %v1301 = vsel %vm759, %v1280, 0
  %v1304 = vsel %vm759, %v1282, 0
  %v1307 = vsel %vm759, %v1284, 0
  %1309 = vmatprep.subr.bf16.mxu0 0
  %1310 = vmatpush1.bf16.xpose.msra.mxu0 0
  %1311 = vmatprep.subr.bf16.mxu0 0
  %1312 = vmatpush1.bf16.xpose.msra.mxu0 0
  %1313 = vmatprep.subr.bf16.mxu0 0
  %1314 = vmatpush1.bf16.xpose.msra.mxu0 0
  %1315 = vmatprep.subr.bf16.mxu0 0
  %1316 = vmatpush1.bf16.xpose.msra.mxu0 0
  %1317 = vmatprep.subr.bf16.mxu0 0
  %1318 = vmatpush1.bf16.xpose.msra.mxu0 %v1307
  %1319 = vmatprep.subr.bf16.mxu0 0
  %1320 = vmatpush1.bf16.xpose.msra.mxu0 %v1304
  %1321 = vmatprep.subr.bf16.mxu0 0
  %1322 = vmatpush1.bf16.xpose.msra.mxu0 %v1301
  %1323 = vmatprep.subr.bf16.mxu0 0
  %1324 = vmatpush1.bf16.xpose.msra.mxu0 %v1298
  %1325 = vmatprep.subr.bf16.mxu0 0
  %1326 = vmatpush2.bf16.xpose.msra.mxu0 0
  %1327 = vmatprep.subr.bf16.mxu0 0
  %1328 = vmatpush2.bf16.xpose.msra.mxu0 0
  %1329 = vmatprep.subr.bf16.mxu0 0
  %1330 = vmatpush2.bf16.xpose.msra.mxu0 0
  %1331 = vmatprep.subr.bf16.mxu0 0
  %1332 = vmatpush2.bf16.xpose.msra.mxu0 0
  %1333 = vmatprep.subr.bf16.mxu0 0
  %1334 = vmatpush2.bf16.xpose.msra.mxu0 0
  %1335 = vmatprep.subr.bf16.mxu0 0
  %1336 = vmatpush2.bf16.xpose.msra.mxu0 0
  %1337 = vmatprep.subr.bf16.mxu0 0
  %1338 = vmatpush2.bf16.xpose.msra.mxu0 0
  %1339 = vmatprep.subr.bf16.mxu0 0
  %1340 = vmatpush2.bf16.xpose.msra.mxu0 0
  %1341 = vmatprep.mubr.bf16.mxu0 0
  %1342 = vmatmul.mubr.bf16.gmra.mxu0 %v1286
  %v1343 = vpop.f32.mrf.mxu0
  %v1344 = vadd.f32 0.0, %v1343
  %v1345 = vpop.f32.mrf.mxu0
  %v1346 = vpop.f32.mrf.mxu0
  %v1347 = vadd.f32 0.0, %v1346
  %v1348 = vpop.f32.mrf.mxu0
  %1349 = vmatprep.mubr.bf16.mxu0 0
  %1350 = vmatmul.mubr.bf16.gmra.mxu0 %v1289
  %v1351 = vpop.f32.mrf.mxu0
  %v1352 = vadd.f32 0.0, %v1351
  %v1353 = vpop.f32.mrf.mxu0
  %v1354 = vpop.f32.mrf.mxu0
  %v1355 = vadd.f32 0.0, %v1354
  %v1356 = vpop.f32.mrf.mxu0
  %1357 = vmatprep.mubr.bf16.mxu0 0
  %1358 = vmatmul.mubr.bf16.gmra.mxu0 %v1292
  %v1359 = vpop.f32.mrf.mxu0
  %v1360 = vadd.f32 0.0, %v1359
  %v1361 = vpop.f32.mrf.mxu0
  %v1362 = vpop.f32.mrf.mxu0
  %v1363 = vadd.f32 0.0, %v1362
  %v1364 = vpop.f32.mrf.mxu0
  %1365 = vmatprep.mubr.bf16.mxu0 0
  %1366 = vmatmul.mubr.bf16.gmra.mxu0 %v1295
  %v1367 = vpop.f32.mrf.mxu0
  %v1368 = vadd.f32 0.0, %v1367
  %v1369 = vpop.f32.mrf.mxu0
  %v1370 = vpop.f32.mrf.mxu0
  %v1371 = vadd.f32 0.0, %v1370
  %v1372 = vpop.f32.mrf.mxu0
  %1373 = vdwg.mxu0
  %1374 = vrot.lane.b32.xlu0 %v739, 112
  %v1375 = vpop.permute.xlu0 %1374
  %1376 = vrot.lane.b32.xlu0 %v740, 112
  %v1377 = vpop.permute.xlu0 %1376
  %1378 = vrot.lane.b32.xlu0 %v741, 112
  %v1379 = vpop.permute.xlu0 %1378
  %1380 = vrot.lane.b32.xlu0 %v742, 112
  %v1381 = vpop.permute.xlu0 %1380
  %1382 = vrot.lane.b32.xlu0 %v747, 112
  %v1383 = vpop.permute.xlu0 %1382
  %1384 = vrot.lane.b32.xlu0 %v748, 112
  %v1385 = vpop.permute.xlu0 %1384
  %1386 = vrot.lane.b32.xlu0 %v749, 112
  %v1387 = vpop.permute.xlu0 %1386
  %1388 = vrot.lane.b32.xlu0 %v750, 112
  %v1389 = vpop.permute.xlu0 %1388
  %v1391 = vsel %vm759, %v1375, 0
  %v1394 = vsel %vm759, %v1377, 0
  %v1397 = vsel %vm759, %v1379, 0
  %v1400 = vsel %vm759, %v1381, 0
  %v1403 = vsel %vm759, %v1383, 0
  %v1406 = vsel %vm759, %v1385, 0
  %v1409 = vsel %vm759, %v1387, 0
  %v1412 = vsel %vm759, %v1389, 0
  %1414 = vmatprep.subr.bf16.mxu0 0
  %1415 = vmatpush1.bf16.xpose.msra.mxu0 0
  %1416 = vmatprep.subr.bf16.mxu0 0
  %1417 = vmatpush1.bf16.xpose.msra.mxu0 0
  %1418 = vmatprep.subr.bf16.mxu0 0
  %1419 = vmatpush1.bf16.xpose.msra.mxu0 0
  %1420 = vmatprep.subr.bf16.mxu0 0
  %1421 = vmatpush1.bf16.xpose.msra.mxu0 0
  %1422 = vmatprep.subr.bf16.mxu0 0
  %1423 = vmatpush1.bf16.xpose.msra.mxu0 %v1412
  %1424 = vmatprep.subr.bf16.mxu0 0
  %1425 = vmatpush1.bf16.xpose.msra.mxu0 %v1409
  %1426 = vmatprep.subr.bf16.mxu0 0
  %1427 = vmatpush1.bf16.xpose.msra.mxu0 %v1406
  %1428 = vmatprep.subr.bf16.mxu0 0
  %1429 = vmatpush1.bf16.xpose.msra.mxu0 %v1403
  %1430 = vmatprep.subr.bf16.mxu0 0
  %1431 = vmatpush2.bf16.xpose.msra.mxu0 0
  %1432 = vmatprep.subr.bf16.mxu0 0
  %1433 = vmatpush2.bf16.xpose.msra.mxu0 0
  %1434 = vmatprep.subr.bf16.mxu0 0
  %1435 = vmatpush2.bf16.xpose.msra.mxu0 0
  %1436 = vmatprep.subr.bf16.mxu0 0
  %1437 = vmatpush2.bf16.xpose.msra.mxu0 0
  %1438 = vmatprep.subr.bf16.mxu0 0
  %1439 = vmatpush2.bf16.xpose.msra.mxu0 0
  %1440 = vmatprep.subr.bf16.mxu0 0
  %1441 = vmatpush2.bf16.xpose.msra.mxu0 0
  %1442 = vmatprep.subr.bf16.mxu0 0
  %1443 = vmatpush2.bf16.xpose.msra.mxu0 0
  %1444 = vmatprep.subr.bf16.mxu0 0
  %1445 = vmatpush2.bf16.xpose.msra.mxu0 0
  %1446 = vmatprep.mubr.bf16.mxu0 0
  %1447 = vmatmul.mubr.bf16.gmra.mxu0 %v1391
  %v1448 = vpop.f32.mrf.mxu0
  %v1449 = vadd.f32 0.0, %v1448
  %v1450 = vpop.f32.mrf.mxu0
  %v1451 = vpop.f32.mrf.mxu0
  %v1452 = vadd.f32 0.0, %v1451
  %v1453 = vpop.f32.mrf.mxu0
  %1454 = vmatprep.mubr.bf16.mxu0 0
  %1455 = vmatmul.mubr.bf16.gmra.mxu0 %v1394
  %v1456 = vpop.f32.mrf.mxu0
  %v1457 = vadd.f32 0.0, %v1456
  %v1458 = vpop.f32.mrf.mxu0
  %v1459 = vpop.f32.mrf.mxu0
  %v1460 = vadd.f32 0.0, %v1459
  %v1461 = vpop.f32.mrf.mxu0
  %1462 = vmatprep.mubr.bf16.mxu0 0
  %1463 = vmatmul.mubr.bf16.gmra.mxu0 %v1397
  %v1464 = vpop.f32.mrf.mxu0
  %v1465 = vadd.f32 0.0, %v1464
  %v1466 = vpop.f32.mrf.mxu0
  %v1467 = vpop.f32.mrf.mxu0
  %v1468 = vadd.f32 0.0, %v1467
  %v1469 = vpop.f32.mrf.mxu0
  %1470 = vmatprep.mubr.bf16.mxu0 0
  %1471 = vmatmul.mubr.bf16.gmra.mxu0 %v1400
  %v1472 = vpop.f32.mrf.mxu0
  %v1473 = vadd.f32 0.0, %v1472
  %v1474 = vpop.f32.mrf.mxu0
  %v1475 = vpop.f32.mrf.mxu0
  %v1476 = vadd.f32 0.0, %v1475
  %v1477 = vpop.f32.mrf.mxu0
  %1478 = vdwg.mxu0
  %1479 = vrot.lane.b32.xlu0 %v739, 104
  %v1480 = vpop.permute.xlu0 %1479
  %1481 = vrot.lane.b32.xlu0 %v740, 104
  %v1482 = vpop.permute.xlu0 %1481
  %1483 = vrot.lane.b32.xlu0 %v741, 104
  %v1484 = vpop.permute.xlu0 %1483
  %1485 = vrot.lane.b32.xlu0 %v742, 104
  %v1486 = vpop.permute.xlu0 %1485
  %1487 = vrot.lane.b32.xlu0 %v747, 104
  %v1488 = vpop.permute.xlu0 %1487
  %1489 = vrot.lane.b32.xlu0 %v748, 104
  %v1490 = vpop.permute.xlu0 %1489
  %1491 = vrot.lane.b32.xlu0 %v749, 104
  %v1492 = vpop.permute.xlu0 %1491
  %1493 = vrot.lane.b32.xlu0 %v750, 104
  %v1494 = vpop.permute.xlu0 %1493
  %v1496 = vsel %vm759, %v1480, 0
  %v1499 = vsel %vm759, %v1482, 0
  %v1502 = vsel %vm759, %v1484, 0
  %v1505 = vsel %vm759, %v1486, 0
  %v1508 = vsel %vm759, %v1488, 0
  %v1511 = vsel %vm759, %v1490, 0
  %v1514 = vsel %vm759, %v1492, 0
  %v1517 = vsel %vm759, %v1494, 0
  %1519 = vmatprep.subr.bf16.mxu0 0
  %1520 = vmatpush1.bf16.xpose.msra.mxu0 0
  %1521 = vmatprep.subr.bf16.mxu0 0
  %1522 = vmatpush1.bf16.xpose.msra.mxu0 0
  %1523 = vmatprep.subr.bf16.mxu0 0
  %1524 = vmatpush1.bf16.xpose.msra.mxu0 0
  %1525 = vmatprep.subr.bf16.mxu0 0
  %1526 = vmatpush1.bf16.xpose.msra.mxu0 0
  %1527 = vmatprep.subr.bf16.mxu0 0
  %1528 = vmatpush1.bf16.xpose.msra.mxu0 %v1517
  %1529 = vmatprep.subr.bf16.mxu0 0
  %1530 = vmatpush1.bf16.xpose.msra.mxu0 %v1514
  %1531 = vmatprep.subr.bf16.mxu0 0
  %1532 = vmatpush1.bf16.xpose.msra.mxu0 %v1511
  %1533 = vmatprep.subr.bf16.mxu0 0
  %1534 = vmatpush1.bf16.xpose.msra.mxu0 %v1508
  %1535 = vmatprep.subr.bf16.mxu0 0
  %1536 = vmatpush2.bf16.xpose.msra.mxu0 0
  %1537 = vmatprep.subr.bf16.mxu0 0
  %1538 = vmatpush2.bf16.xpose.msra.mxu0 0
  %1539 = vmatprep.subr.bf16.mxu0 0
  %1540 = vmatpush2.bf16.xpose.msra.mxu0 0
  %1541 = vmatprep.subr.bf16.mxu0 0
  %1542 = vmatpush2.bf16.xpose.msra.mxu0 0
  %1543 = vmatprep.subr.bf16.mxu0 0
  %1544 = vmatpush2.bf16.xpose.msra.mxu0 0
  %1545 = vmatprep.subr.bf16.mxu0 0
  %1546 = vmatpush2.bf16.xpose.msra.mxu0 0
  %1547 = vmatprep.subr.bf16.mxu0 0
  %1548 = vmatpush2.bf16.xpose.msra.mxu0 0
  %1549 = vmatprep.subr.bf16.mxu0 0
  %1550 = vmatpush2.bf16.xpose.msra.mxu0 0
  %1551 = vmatprep.mubr.bf16.mxu0 0
  %1552 = vmatmul.mubr.bf16.gmra.mxu0 %v1496
  %v1553 = vpop.f32.mrf.mxu0
  %v1554 = vadd.f32 0.0, %v1553
  %v1555 = vpop.f32.mrf.mxu0
  %v1556 = vpop.f32.mrf.mxu0
  %v1557 = vadd.f32 0.0, %v1556
  %v1558 = vpop.f32.mrf.mxu0
  %1559 = vmatprep.mubr.bf16.mxu0 0
  %1560 = vmatmul.mubr.bf16.gmra.mxu0 %v1499
  %v1561 = vpop.f32.mrf.mxu0
  %v1562 = vadd.f32 0.0, %v1561
  %v1563 = vpop.f32.mrf.mxu0
  %v1564 = vpop.f32.mrf.mxu0
  %v1565 = vadd.f32 0.0, %v1564
  %v1566 = vpop.f32.mrf.mxu0
  %1567 = vmatprep.mubr.bf16.mxu0 0
  %1568 = vmatmul.mubr.bf16.gmra.mxu0 %v1502
  %v1569 = vpop.f32.mrf.mxu0
  %v1570 = vadd.f32 0.0, %v1569
  %v1571 = vpop.f32.mrf.mxu0
  %v1572 = vpop.f32.mrf.mxu0
  %v1573 = vadd.f32 0.0, %v1572
  %v1574 = vpop.f32.mrf.mxu0
  %1575 = vmatprep.mubr.bf16.mxu0 0
  %1576 = vmatmul.mubr.bf16.gmra.mxu0 %v1505
  %v1577 = vpop.f32.mrf.mxu0
  %v1578 = vadd.f32 0.0, %v1577
  %v1579 = vpop.f32.mrf.mxu0
  %v1580 = vpop.f32.mrf.mxu0
  %v1581 = vadd.f32 0.0, %v1580
  %v1582 = vpop.f32.mrf.mxu0
  %1583 = vdwg.mxu0
  %vm1584 = vcmask 523264
  %v1585 = vsel %vm1584, %v819, -inf
  %1586 = vmax.xlane.f32.xlu0 %v1585
  %v1587 = vpop.xlane.xlu0 %1586
  %v1588 = vsel %vm1584, %v822, -inf
  %1589 = vmax.xlane.f32.xlu0 %v1588
  %v1590 = vpop.xlane.xlu0 %1589
  %v1591 = vsel %vm1584, %v827, -inf
  %1592 = vmax.xlane.f32.xlu0 %v1591
  %v1593 = vpop.xlane.xlu0 %1592
  %v1594 = vsel %vm1584, %v830, -inf
  %1595 = vmax.xlane.f32.xlu0 %v1594
  %v1596 = vpop.xlane.xlu0 %1595
  %v1597 = vsel %vm1584, %v835, -inf
  %1598 = vmax.xlane.f32.xlu0 %v1597
  %v1599 = vpop.xlane.xlu0 %1598
  %v1600 = vsel %vm1584, %v838, -inf
  %1601 = vmax.xlane.f32.xlu0 %v1600
  %v1602 = vpop.xlane.xlu0 %1601
  %v1603 = vsel %vm1584, %v843, -inf
  %1604 = vmax.xlane.f32.xlu0 %v1603
  %v1605 = vpop.xlane.xlu0 %1604
  %v1606 = vsel %vm1584, %v846, -inf
  %1607 = vmax.xlane.f32.xlu0 %v1606
  %v1608 = vpop.xlane.xlu0 %1607
  %v1609 = vsel %vm1584, %v932, -inf
  %1610 = vmax.xlane.f32.xlu0 %v1609
  %v1611 = vpop.xlane.xlu0 %1610
  %v1612 = vsel %vm1584, %v935, -inf
  %1613 = vmax.xlane.f32.xlu0 %v1612
  %v1614 = vpop.xlane.xlu0 %1613
  %v1615 = vsel %vm1584, %v940, -inf
  %1616 = vmax.xlane.f32.xlu0 %v1615
  %v1617 = vpop.xlane.xlu0 %1616
  %v1618 = vsel %vm1584, %v943, -inf
  %1619 = vmax.xlane.f32.xlu0 %v1618
  %v1620 = vpop.xlane.xlu0 %1619
  %v1621 = vsel %vm1584, %v948, -inf
  %1622 = vmax.xlane.f32.xlu0 %v1621
  %v1623 = vpop.xlane.xlu0 %1622
  %v1624 = vsel %vm1584, %v951, -inf
  %1625 = vmax.xlane.f32.xlu0 %v1624
  %v1626 = vpop.xlane.xlu0 %1625
  %v1627 = vsel %vm1584, %v956, -inf
  %1628 = vmax.xlane.f32.xlu0 %v1627
  %v1629 = vpop.xlane.xlu0 %1628
  %v1630 = vsel %vm1584, %v959, -inf
  %1631 = vmax.xlane.f32.xlu0 %v1630
  %v1632 = vpop.xlane.xlu0 %1631
  %v1633 = vsel %vm1584, %v1037, -inf
  %1634 = vmax.xlane.f32.xlu0 %v1633
  %v1635 = vpop.xlane.xlu0 %1634
  %v1636 = vsel %vm1584, %v1040, -inf
  %1637 = vmax.xlane.f32.xlu0 %v1636
  %v1638 = vpop.xlane.xlu0 %1637
  %v1639 = vsel %vm1584, %v1045, -inf
  %1640 = vmax.xlane.f32.xlu0 %v1639
  %v1641 = vpop.xlane.xlu0 %1640
  %v1642 = vsel %vm1584, %v1048, -inf
  %1643 = vmax.xlane.f32.xlu0 %v1642
  %v1644 = vpop.xlane.xlu0 %1643
  %v1645 = vsel %vm1584, %v1053, -inf
  %1646 = vmax.xlane.f32.xlu0 %v1645
  %v1647 = vpop.xlane.xlu0 %1646
  %v1648 = vsel %vm1584, %v1056, -inf
  %1649 = vmax.xlane.f32.xlu0 %v1648
  %v1650 = vpop.xlane.xlu0 %1649
  %v1651 = vsel %vm1584, %v1061, -inf
  %1652 = vmax.xlane.f32.xlu0 %v1651
  %v1653 = vpop.xlane.xlu0 %1652
  %v1654 = vsel %vm1584, %v1064, -inf
  %1655 = vmax.xlane.f32.xlu0 %v1654
  %v1656 = vpop.xlane.xlu0 %1655
  %v1657 = vsel %vm1584, %v1142, -inf
  %1658 = vmax.xlane.f32.xlu0 %v1657
  %v1659 = vpop.xlane.xlu0 %1658
  %v1660 = vsel %vm1584, %v1145, -inf
  %1661 = vmax.xlane.f32.xlu0 %v1660
  %v1662 = vpop.xlane.xlu0 %1661
  %v1663 = vsel %vm1584, %v1150, -inf
  %1664 = vmax.xlane.f32.xlu0 %v1663
  %v1665 = vpop.xlane.xlu0 %1664
  %v1666 = vsel %vm1584, %v1153, -inf
  %1667 = vmax.xlane.f32.xlu0 %v1666
  %v1668 = vpop.xlane.xlu0 %1667
  %v1669 = vsel %vm1584, %v1158, -inf
  %1670 = vmax.xlane.f32.xlu0 %v1669
  %v1671 = vpop.xlane.xlu0 %1670
  %v1672 = vsel %vm1584, %v1161, -inf
  %1673 = vmax.xlane.f32.xlu0 %v1672
  %v1674 = vpop.xlane.xlu0 %1673
  %v1675 = vsel %vm1584, %v1166, -inf
  %1676 = vmax.xlane.f32.xlu0 %v1675
  %v1677 = vpop.xlane.xlu0 %1676
  %v1678 = vsel %vm1584, %v1169, -inf
  %1679 = vmax.xlane.f32.xlu0 %v1678
  %v1680 = vpop.xlane.xlu0 %1679
  %v1681 = vsel %vm1584, %v1231, -inf
  %1682 = vmax.xlane.f32.xlu0 %v1681
  %v1683 = vpop.xlane.xlu0 %1682
  %v1684 = vsel %vm1584, %v1234, -inf
  %1685 = vmax.xlane.f32.xlu0 %v1684
  %v1686 = vpop.xlane.xlu0 %1685
  %v1687 = vsel %vm1584, %v1239, -inf
  %1688 = vmax.xlane.f32.xlu0 %v1687
  %v1689 = vpop.xlane.xlu0 %1688
  %v1690 = vsel %vm1584, %v1242, -inf
  %1691 = vmax.xlane.f32.xlu0 %v1690
  %v1692 = vpop.xlane.xlu0 %1691
  %v1693 = vsel %vm1584, %v1247, -inf
  %1694 = vmax.xlane.f32.xlu0 %v1693
  %v1695 = vpop.xlane.xlu0 %1694
  %v1696 = vsel %vm1584, %v1250, -inf
  %1697 = vmax.xlane.f32.xlu0 %v1696
  %v1698 = vpop.xlane.xlu0 %1697
  %v1699 = vsel %vm1584, %v1255, -inf
  %1700 = vmax.xlane.f32.xlu0 %v1699
  %v1701 = vpop.xlane.xlu0 %1700
  %v1702 = vsel %vm1584, %v1258, -inf
  %1703 = vmax.xlane.f32.xlu0 %v1702
  %v1704 = vpop.xlane.xlu0 %1703
  %v1705 = vsel %vm1584, %v1344, -inf
  %1706 = vmax.xlane.f32.xlu0 %v1705
  %v1707 = vpop.xlane.xlu0 %1706
  %v1708 = vsel %vm1584, %v1347, -inf
  %1709 = vmax.xlane.f32.xlu0 %v1708
  %v1710 = vpop.xlane.xlu0 %1709
  %v1711 = vsel %vm1584, %v1352, -inf
  %1712 = vmax.xlane.f32.xlu0 %v1711
  %v1713 = vpop.xlane.xlu0 %1712
  %v1714 = vsel %vm1584, %v1355, -inf
  %1715 = vmax.xlane.f32.xlu0 %v1714
  %v1716 = vpop.xlane.xlu0 %1715
  %v1717 = vsel %vm1584, %v1360, -inf
  %1718 = vmax.xlane.f32.xlu0 %v1717
  %v1719 = vpop.xlane.xlu0 %1718
  %v1720 = vsel %vm1584, %v1363, -inf
  %1721 = vmax.xlane.f32.xlu0 %v1720
  %v1722 = vpop.xlane.xlu0 %1721
  %v1723 = vsel %vm1584, %v1368, -inf
  %1724 = vmax.xlane.f32.xlu0 %v1723
  %v1725 = vpop.xlane.xlu0 %1724
  %v1726 = vsel %vm1584, %v1371, -inf
  %1727 = vmax.xlane.f32.xlu0 %v1726
  %v1728 = vpop.xlane.xlu0 %1727
  %v1729 = vsel %vm1584, %v1449, -inf
  %1730 = vmax.xlane.f32.xlu0 %v1729
  %v1731 = vpop.xlane.xlu0 %1730
  %v1732 = vsel %vm1584, %v1452, -inf
  %1733 = vmax.xlane.f32.xlu0 %v1732
  %v1734 = vpop.xlane.xlu0 %1733
  %v1735 = vsel %vm1584, %v1457, -inf
  %1736 = vmax.xlane.f32.xlu0 %v1735
  %v1737 = vpop.xlane.xlu0 %1736
  %v1738 = vsel %vm1584, %v1460, -inf
  %1739 = vmax.xlane.f32.xlu0 %v1738
  %v1740 = vpop.xlane.xlu0 %1739
  %v1741 = vsel %vm1584, %v1465, -inf
  %1742 = vmax.xlane.f32.xlu0 %v1741
  %v1743 = vpop.xlane.xlu0 %1742
  %v1744 = vsel %vm1584, %v1468, -inf
  %1745 = vmax.xlane.f32.xlu0 %v1744
  %v1746 = vpop.xlane.xlu0 %1745
  %v1747 = vsel %vm1584, %v1473, -inf
  %1748 = vmax.xlane.f32.xlu0 %v1747
  %v1749 = vpop.xlane.xlu0 %1748
  %v1750 = vsel %vm1584, %v1476, -inf
  %1751 = vmax.xlane.f32.xlu0 %v1750
  %v1752 = vpop.xlane.xlu0 %1751
  %v1753 = vsel %vm1584, %v1554, -inf
  %1754 = vmax.xlane.f32.xlu0 %v1753
  %v1755 = vpop.xlane.xlu0 %1754
  %v1756 = vsel %vm1584, %v1557, -inf
  %1757 = vmax.xlane.f32.xlu0 %v1756
  %v1758 = vpop.xlane.xlu0 %1757
  %v1759 = vsel %vm1584, %v1562, -inf
  %1760 = vmax.xlane.f32.xlu0 %v1759
  %v1761 = vpop.xlane.xlu0 %1760
  %v1762 = vsel %vm1584, %v1565, -inf
  %1763 = vmax.xlane.f32.xlu0 %v1762
  %v1764 = vpop.xlane.xlu0 %1763
  %v1765 = vsel %vm1584, %v1570, -inf
  %1766 = vmax.xlane.f32.xlu0 %v1765
  %v1767 = vpop.xlane.xlu0 %1766
  %v1768 = vsel %vm1584, %v1573, -inf
  %1769 = vmax.xlane.f32.xlu0 %v1768
  %v1770 = vpop.xlane.xlu0 %1769
  %v1771 = vsel %vm1584, %v1578, -inf
  %1772 = vmax.xlane.f32.xlu0 %v1771
  %v1773 = vpop.xlane.xlu0 %1772
  %v1774 = vsel %vm1584, %v1581, -inf
  %1775 = vmax.xlane.f32.xlu0 %v1774
  %v1776 = vpop.xlane.xlu0 %1775
  %v1777 = vsub.f32 %v819, %v1587
  %v1778 = vsub.f32 %v822, %v1590
  %v1779 = vsub.f32 %v827, %v1593
  %v1780 = vsub.f32 %v830, %v1596
  %v1781 = vsub.f32 %v835, %v1599
  %v1782 = vsub.f32 %v838, %v1602
  %v1783 = vsub.f32 %v843, %v1605
  %v1784 = vsub.f32 %v846, %v1608
  %v1785 = vsub.f32 %v932, %v1611
  %v1786 = vsub.f32 %v935, %v1614
  %v1787 = vsub.f32 %v940, %v1617
  %v1788 = vsub.f32 %v943, %v1620
  %v1789 = vsub.f32 %v948, %v1623
  %v1790 = vsub.f32 %v951, %v1626
  %v1791 = vsub.f32 %v956, %v1629
  %v1792 = vsub.f32 %v959, %v1632
  %v1793 = vsub.f32 %v1037, %v1635
  %v1794 = vsub.f32 %v1040, %v1638
  %v1795 = vsub.f32 %v1045, %v1641
  %v1796 = vsub.f32 %v1048, %v1644
  %v1797 = vsub.f32 %v1053, %v1647
  %v1798 = vsub.f32 %v1056, %v1650
  %v1799 = vsub.f32 %v1061, %v1653
  %v1800 = vsub.f32 %v1064, %v1656
  %v1801 = vsub.f32 %v1142, %v1659
  %v1802 = vsub.f32 %v1145, %v1662
  %v1803 = vsub.f32 %v1150, %v1665
  %v1804 = vsub.f32 %v1153, %v1668
  %v1805 = vsub.f32 %v1158, %v1671
  %v1806 = vsub.f32 %v1161, %v1674
  %v1807 = vsub.f32 %v1166, %v1677
  %v1808 = vsub.f32 %v1169, %v1680
  %v1809 = vsub.f32 %v1231, %v1683
  %v1810 = vsub.f32 %v1234, %v1686
  %v1811 = vsub.f32 %v1239, %v1689
  %v1812 = vsub.f32 %v1242, %v1692
  %v1813 = vsub.f32 %v1247, %v1695
  %v1814 = vsub.f32 %v1250, %v1698
  %v1815 = vsub.f32 %v1255, %v1701
  %v1816 = vsub.f32 %v1258, %v1704
  %v1817 = vsub.f32 %v1344, %v1707
  %v1818 = vsub.f32 %v1347, %v1710
  %v1819 = vsub.f32 %v1352, %v1713
  %v1820 = vsub.f32 %v1355, %v1716
  %v1821 = vsub.f32 %v1360, %v1719
  %v1822 = vsub.f32 %v1363, %v1722
  %v1823 = vsub.f32 %v1368, %v1725
  %v1824 = vsub.f32 %v1371, %v1728
  %v1825 = vsub.f32 %v1449, %v1731
  %v1826 = vsub.f32 %v1452, %v1734
  %v1827 = vsub.f32 %v1457, %v1737
  %v1828 = vsub.f32 %v1460, %v1740
  %v1829 = vsub.f32 %v1465, %v1743
  %v1830 = vsub.f32 %v1468, %v1746
  %v1831 = vsub.f32 %v1473, %v1749
  %v1832 = vsub.f32 %v1476, %v1752
  %v1833 = vsub.f32 %v1554, %v1755
  %v1834 = vsub.f32 %v1557, %v1758
  %v1835 = vsub.f32 %v1562, %v1761
  %v1836 = vsub.f32 %v1565, %v1764
  %v1837 = vsub.f32 %v1570, %v1767
  %v1838 = vsub.f32 %v1573, %v1770
  %v1839 = vsub.f32 %v1578, %v1773
  %v1840 = vsub.f32 %v1581, %v1776
  %v1841 = vmul.f32 %v1777, 1.442695
  %v1842 = vpow.pop %v1841
  %v1843 = vmul.f32 %v1778, 1.442695
  %v1844 = vpow.pop %v1843
  %v1845 = vmul.f32 %v1779, 1.442695
  %v1846 = vpow.pop %v1845
  %v1847 = vmul.f32 %v1780, 1.442695
  %v1848 = vpow.pop %v1847
  %v1849 = vmul.f32 %v1781, 1.442695
  %v1850 = vpow.pop %v1849
  %v1851 = vmul.f32 %v1782, 1.442695
  %v1852 = vpow.pop %v1851
  %v1853 = vmul.f32 %v1783, 1.442695
  %v1854 = vpow.pop %v1853
  %v1855 = vmul.f32 %v1784, 1.442695
  %v1856 = vpow.pop %v1855
  %v1857 = vmul.f32 %v1785, 1.442695
  %v1858 = vpow.pop %v1857
  %v1859 = vmul.f32 %v1786, 1.442695
  %v1860 = vpow.pop %v1859
  %v1861 = vmul.f32 %v1787, 1.442695
  %v1862 = vpow.pop %v1861
  %v1863 = vmul.f32 %v1788, 1.442695
  %v1864 = vpow.pop %v1863
  %v1865 = vmul.f32 %v1789, 1.442695
  %v1866 = vpow.pop %v1865
  %v1867 = vmul.f32 %v1790, 1.442695
  %v1868 = vpow.pop %v1867
  %v1869 = vmul.f32 %v1791, 1.442695
  %v1870 = vpow.pop %v1869
  %v1871 = vmul.f32 %v1792, 1.442695
  %v1872 = vpow.pop %v1871
  %v1873 = vmul.f32 %v1793, 1.442695
  %v1874 = vpow.pop %v1873
  %v1875 = vmul.f32 %v1794, 1.442695
  %v1876 = vpow.pop %v1875
  %v1877 = vmul.f32 %v1795, 1.442695
  %v1878 = vpow.pop %v1877
  %v1879 = vmul.f32 %v1796, 1.442695
  %v1880 = vpow.pop %v1879
  %v1881 = vmul.f32 %v1797, 1.442695
  %v1882 = vpow.pop %v1881
  %v1883 = vmul.f32 %v1798, 1.442695
  %v1884 = vpow.pop %v1883
  %v1885 = vmul.f32 %v1799, 1.442695
  %v1886 = vpow.pop %v1885
  %v1887 = vmul.f32 %v1800, 1.442695
  %v1888 = vpow.pop %v1887
  %v1889 = vmul.f32 %v1801, 1.442695
  %v1890 = vpow.pop %v1889
  %v1891 = vmul.f32 %v1802, 1.442695
  %v1892 = vpow.pop %v1891
  %v1893 = vmul.f32 %v1803, 1.442695
  %v1894 = vpow.pop %v1893
  %v1895 = vmul.f32 %v1804, 1.442695
  %v1896 = vpow.pop %v1895
  %v1897 = vmul.f32 %v1805, 1.442695
  %v1898 = vpow.pop %v1897
  %v1899 = vmul.f32 %v1806, 1.442695
  %v1900 = vpow.pop %v1899
  %v1901 = vmul.f32 %v1807, 1.442695
  %v1902 = vpow.pop %v1901
  %v1903 = vmul.f32 %v1808, 1.442695
  %v1904 = vpow.pop %v1903
  %v1905 = vmul.f32 %v1809, 1.442695
  %v1906 = vpow.pop %v1905
  %v1907 = vmul.f32 %v1810, 1.442695
  %v1908 = vpow.pop %v1907
  %v1909 = vmul.f32 %v1811, 1.442695
  %v1910 = vpow.pop %v1909
  %v1911 = vmul.f32 %v1812, 1.442695
  %v1912 = vpow.pop %v1911
  %v1913 = vmul.f32 %v1813, 1.442695
  %v1914 = vpow.pop %v1913
  %v1915 = vmul.f32 %v1814, 1.442695
  %v1916 = vpow.pop %v1915
  %v1917 = vmul.f32 %v1815, 1.442695
  %v1918 = vpow.pop %v1917
  %v1919 = vmul.f32 %v1816, 1.442695
  %v1920 = vpow.pop %v1919
  %v1921 = vmul.f32 %v1817, 1.442695
  %v1922 = vpow.pop %v1921
  %v1923 = vmul.f32 %v1818, 1.442695
  %v1924 = vpow.pop %v1923
  %v1925 = vmul.f32 %v1819, 1.442695
  %v1926 = vpow.pop %v1925
  %v1927 = vmul.f32 %v1820, 1.442695
  %v1928 = vpow.pop %v1927
  %v1929 = vmul.f32 %v1821, 1.442695
  %v1930 = vpow.pop %v1929
  %v1931 = vmul.f32 %v1822, 1.442695
  %v1932 = vpow.pop %v1931
  %v1933 = vmul.f32 %v1823, 1.442695
  %v1934 = vpow.pop %v1933
  %v1935 = vmul.f32 %v1824, 1.442695
  %v1936 = vpow.pop %v1935
  %v1937 = vmul.f32 %v1825, 1.442695
  %v1938 = vpow.pop %v1937
  %v1939 = vmul.f32 %v1826, 1.442695
  %v1940 = vpow.pop %v1939
  %v1941 = vmul.f32 %v1827, 1.442695
  %v1942 = vpow.pop %v1941
  %v1943 = vmul.f32 %v1828, 1.442695
  %v1944 = vpow.pop %v1943
  %v1945 = vmul.f32 %v1829, 1.442695
  %v1946 = vpow.pop %v1945
  %v1947 = vmul.f32 %v1830, 1.442695
  %v1948 = vpow.pop %v1947
  %v1949 = vmul.f32 %v1831, 1.442695
  %v1950 = vpow.pop %v1949
  %v1951 = vmul.f32 %v1832, 1.442695
  %v1952 = vpow.pop %v1951
  %v1953 = vmul.f32 %v1833, 1.442695
  %v1954 = vpow.pop %v1953
  %v1955 = vmul.f32 %v1834, 1.442695
  %v1956 = vpow.pop %v1955
  %v1957 = vmul.f32 %v1835, 1.442695
  %v1958 = vpow.pop %v1957
  %v1959 = vmul.f32 %v1836, 1.442695
  %v1960 = vpow.pop %v1959
  %v1961 = vmul.f32 %v1837, 1.442695
  %v1962 = vpow.pop %v1961
  %v1963 = vmul.f32 %v1838, 1.442695
  %v1964 = vpow.pop %v1963
  %v1965 = vmul.f32 %v1839, 1.442695
  %v1966 = vpow.pop %v1965
  %v1967 = vmul.f32 %v1840, 1.442695
  %v1968 = vpow.pop %v1967
  %v1969 = vsel %vm1584, %v1842, 0.0
  %1970 = vadd.xlane.f32.xlu0 %v1969
  %v1971 = vpop.xlane.xlu0 %1970
  %v1972 = vsel %vm1584, %v1844, 0.0
  %1973 = vadd.xlane.f32.xlu0 %v1972
  %v1974 = vpop.xlane.xlu0 %1973
  %v1975 = vsel %vm1584, %v1846, 0.0
  %1976 = vadd.xlane.f32.xlu0 %v1975
  %v1977 = vpop.xlane.xlu0 %1976
  %v1978 = vsel %vm1584, %v1848, 0.0
  %1979 = vadd.xlane.f32.xlu0 %v1978
  %v1980 = vpop.xlane.xlu0 %1979
  %v1981 = vsel %vm1584, %v1850, 0.0
  %1982 = vadd.xlane.f32.xlu0 %v1981
  %v1983 = vpop.xlane.xlu0 %1982
  %v1984 = vsel %vm1584, %v1852, 0.0
  %1985 = vadd.xlane.f32.xlu0 %v1984
  %v1986 = vpop.xlane.xlu0 %1985
  %v1987 = vsel %vm1584, %v1854, 0.0
  %1988 = vadd.xlane.f32.xlu0 %v1987
  %v1989 = vpop.xlane.xlu0 %1988
  %v1990 = vsel %vm1584, %v1856, 0.0
  %1991 = vadd.xlane.f32.xlu0 %v1990
  %v1992 = vpop.xlane.xlu0 %1991
  %v1993 = vsel %vm1584, %v1858, 0.0
  %1994 = vadd.xlane.f32.xlu0 %v1993
  %v1995 = vpop.xlane.xlu0 %1994
  %v1996 = vsel %vm1584, %v1860, 0.0
  %1997 = vadd.xlane.f32.xlu0 %v1996
  %v1998 = vpop.xlane.xlu0 %1997
  %v1999 = vsel %vm1584, %v1862, 0.0
  %2000 = vadd.xlane.f32.xlu0 %v1999
  %v2001 = vpop.xlane.xlu0 %2000
  %v2002 = vsel %vm1584, %v1864, 0.0
  %2003 = vadd.xlane.f32.xlu0 %v2002
  %v2004 = vpop.xlane.xlu0 %2003
  %v2005 = vsel %vm1584, %v1866, 0.0
  %2006 = vadd.xlane.f32.xlu0 %v2005
  %v2007 = vpop.xlane.xlu0 %2006
  %v2008 = vsel %vm1584, %v1868, 0.0
  %2009 = vadd.xlane.f32.xlu0 %v2008
  %v2010 = vpop.xlane.xlu0 %2009
  %v2011 = vsel %vm1584, %v1870, 0.0
  %2012 = vadd.xlane.f32.xlu0 %v2011
  %v2013 = vpop.xlane.xlu0 %2012
  %v2014 = vsel %vm1584, %v1872, 0.0
  %2015 = vadd.xlane.f32.xlu0 %v2014
  %v2016 = vpop.xlane.xlu0 %2015
  %v2017 = vsel %vm1584, %v1874, 0.0
  %2018 = vadd.xlane.f32.xlu0 %v2017
  %v2019 = vpop.xlane.xlu0 %2018
  %v2020 = vsel %vm1584, %v1876, 0.0
  %2021 = vadd.xlane.f32.xlu0 %v2020
  %v2022 = vpop.xlane.xlu0 %2021
  %v2023 = vsel %vm1584, %v1878, 0.0
  %2024 = vadd.xlane.f32.xlu0 %v2023
  %v2025 = vpop.xlane.xlu0 %2024
  %v2026 = vsel %vm1584, %v1880, 0.0
  %2027 = vadd.xlane.f32.xlu0 %v2026
  %v2028 = vpop.xlane.xlu0 %2027
  %v2029 = vsel %vm1584, %v1882, 0.0
  %2030 = vadd.xlane.f32.xlu0 %v2029
  %v2031 = vpop.xlane.xlu0 %2030
  %v2032 = vsel %vm1584, %v1884, 0.0
  %2033 = vadd.xlane.f32.xlu0 %v2032
  %v2034 = vpop.xlane.xlu0 %2033
  %v2035 = vsel %vm1584, %v1886, 0.0
  %2036 = vadd.xlane.f32.xlu0 %v2035
  %v2037 = vpop.xlane.xlu0 %2036
  %v2038 = vsel %vm1584, %v1888, 0.0
  %2039 = vadd.xlane.f32.xlu0 %v2038
  %v2040 = vpop.xlane.xlu0 %2039
  %v2041 = vsel %vm1584, %v1890, 0.0
  %2042 = vadd.xlane.f32.xlu0 %v2041
  %v2043 = vpop.xlane.xlu0 %2042
  %v2044 = vsel %vm1584, %v1892, 0.0
  %2045 = vadd.xlane.f32.xlu0 %v2044
  %v2046 = vpop.xlane.xlu0 %2045
  %v2047 = vsel %vm1584, %v1894, 0.0
  %2048 = vadd.xlane.f32.xlu0 %v2047
  %v2049 = vpop.xlane.xlu0 %2048
  %v2050 = vsel %vm1584, %v1896, 0.0
  %2051 = vadd.xlane.f32.xlu0 %v2050
  %v2052 = vpop.xlane.xlu0 %2051
  %v2053 = vsel %vm1584, %v1898, 0.0
  %2054 = vadd.xlane.f32.xlu0 %v2053
  %v2055 = vpop.xlane.xlu0 %2054
  %v2056 = vsel %vm1584, %v1900, 0.0
  %2057 = vadd.xlane.f32.xlu0 %v2056
  %v2058 = vpop.xlane.xlu0 %2057
  %v2059 = vsel %vm1584, %v1902, 0.0
  %2060 = vadd.xlane.f32.xlu0 %v2059
  %v2061 = vpop.xlane.xlu0 %2060
  %v2062 = vsel %vm1584, %v1904, 0.0
  %2063 = vadd.xlane.f32.xlu0 %v2062
  %v2064 = vpop.xlane.xlu0 %2063
  %v2065 = vsel %vm1584, %v1906, 0.0
  %2066 = vadd.xlane.f32.xlu0 %v2065
  %v2067 = vpop.xlane.xlu0 %2066
  %v2068 = vsel %vm1584, %v1908, 0.0
  %2069 = vadd.xlane.f32.xlu0 %v2068
  %v2070 = vpop.xlane.xlu0 %2069
  %v2071 = vsel %vm1584, %v1910, 0.0
  %2072 = vadd.xlane.f32.xlu0 %v2071
  %v2073 = vpop.xlane.xlu0 %2072
  %v2074 = vsel %vm1584, %v1912, 0.0
  %2075 = vadd.xlane.f32.xlu0 %v2074
  %v2076 = vpop.xlane.xlu0 %2075
  %v2077 = vsel %vm1584, %v1914, 0.0
  %2078 = vadd.xlane.f32.xlu0 %v2077
  %v2079 = vpop.xlane.xlu0 %2078
  %v2080 = vsel %vm1584, %v1916, 0.0
  %2081 = vadd.xlane.f32.xlu0 %v2080
  %v2082 = vpop.xlane.xlu0 %2081
  %v2083 = vsel %vm1584, %v1918, 0.0
  %2084 = vadd.xlane.f32.xlu0 %v2083
  %v2085 = vpop.xlane.xlu0 %2084
  %v2086 = vsel %vm1584, %v1920, 0.0
  %2087 = vadd.xlane.f32.xlu0 %v2086
  %v2088 = vpop.xlane.xlu0 %2087
  %v2089 = vsel %vm1584, %v1922, 0.0
  %2090 = vadd.xlane.f32.xlu0 %v2089
  %v2091 = vpop.xlane.xlu0 %2090
  %v2092 = vsel %vm1584, %v1924, 0.0
  %2093 = vadd.xlane.f32.xlu0 %v2092
  %v2094 = vpop.xlane.xlu0 %2093
  %v2095 = vsel %vm1584, %v1926, 0.0
  %2096 = vadd.xlane.f32.xlu0 %v2095
  %v2097 = vpop.xlane.xlu0 %2096
  %v2098 = vsel %vm1584, %v1928, 0.0
  %2099 = vadd.xlane.f32.xlu0 %v2098
  %v2100 = vpop.xlane.xlu0 %2099
  %v2101 = vsel %vm1584, %v1930, 0.0
  %2102 = vadd.xlane.f32.xlu0 %v2101
  %v2103 = vpop.xlane.xlu0 %2102
  %v2104 = vsel %vm1584, %v1932, 0.0
  %2105 = vadd.xlane.f32.xlu0 %v2104
  %v2106 = vpop.xlane.xlu0 %2105
  %v2107 = vsel %vm1584, %v1934, 0.0
  %2108 = vadd.xlane.f32.xlu0 %v2107
  %v2109 = vpop.xlane.xlu0 %2108
  %v2110 = vsel %vm1584, %v1936, 0.0
  %2111 = vadd.xlane.f32.xlu0 %v2110
  %v2112 = vpop.xlane.xlu0 %2111
  %v2113 = vsel %vm1584, %v1938, 0.0
  %2114 = vadd.xlane.f32.xlu0 %v2113
  %v2115 = vpop.xlane.xlu0 %2114
  %v2116 = vsel %vm1584, %v1940, 0.0
  %2117 = vadd.xlane.f32.xlu0 %v2116
  %v2118 = vpop.xlane.xlu0 %2117
  %v2119 = vsel %vm1584, %v1942, 0.0
  %2120 = vadd.xlane.f32.xlu0 %v2119
  %v2121 = vpop.xlane.xlu0 %2120
  %v2122 = vsel %vm1584, %v1944, 0.0
  %2123 = vadd.xlane.f32.xlu0 %v2122
  %v2124 = vpop.xlane.xlu0 %2123
  %v2125 = vsel %vm1584, %v1946, 0.0
  %2126 = vadd.xlane.f32.xlu0 %v2125
  %v2127 = vpop.xlane.xlu0 %2126
  %v2128 = vsel %vm1584, %v1948, 0.0
  %2129 = vadd.xlane.f32.xlu0 %v2128
  %v2130 = vpop.xlane.xlu0 %2129
  %v2131 = vsel %vm1584, %v1950, 0.0
  %2132 = vadd.xlane.f32.xlu0 %v2131
  %v2133 = vpop.xlane.xlu0 %2132
  %v2134 = vsel %vm1584, %v1952, 0.0
  %2135 = vadd.xlane.f32.xlu0 %v2134
  %v2136 = vpop.xlane.xlu0 %2135
  %v2137 = vsel %vm1584, %v1954, 0.0
  %2138 = vadd.xlane.f32.xlu0 %v2137
  %v2139 = vpop.xlane.xlu0 %2138
  %v2140 = vsel %vm1584, %v1956, 0.0
  %2141 = vadd.xlane.f32.xlu0 %v2140
  %v2142 = vpop.xlane.xlu0 %2141
  %v2143 = vsel %vm1584, %v1958, 0.0
  %2144 = vadd.xlane.f32.xlu0 %v2143
  %v2145 = vpop.xlane.xlu0 %2144
  %v2146 = vsel %vm1584, %v1960, 0.0
  %2147 = vadd.xlane.f32.xlu0 %v2146
  %v2148 = vpop.xlane.xlu0 %2147
  %v2149 = vsel %vm1584, %v1962, 0.0
  %2150 = vadd.xlane.f32.xlu0 %v2149
  %v2151 = vpop.xlane.xlu0 %2150
  %v2152 = vsel %vm1584, %v1964, 0.0
  %2153 = vadd.xlane.f32.xlu0 %v2152
  %v2154 = vpop.xlane.xlu0 %2153
  %v2155 = vsel %vm1584, %v1966, 0.0
  %2156 = vadd.xlane.f32.xlu0 %v2155
  %v2157 = vpop.xlane.xlu0 %2156
  %v2158 = vsel %vm1584, %v1968, 0.0
  %2159 = vadd.xlane.f32.xlu0 %v2158
  %v2160 = vpop.xlane.xlu0 %2159
  %v2161 = vrcp.pop %v1971
  %v2162 = vrcp.pop %v1974
  %v2163 = vrcp.pop %v1977
  %v2164 = vrcp.pop %v1980
  %v2165 = vrcp.pop %v1983
  %v2166 = vrcp.pop %v1986
  %v2167 = vrcp.pop %v1989
  %v2168 = vrcp.pop %v1992
  %v2169 = vrcp.pop %v1995
  %v2170 = vrcp.pop %v1998
  %v2171 = vrcp.pop %v2001
  %v2172 = vrcp.pop %v2004
  %v2173 = vrcp.pop %v2007
  %v2174 = vrcp.pop %v2010
  %v2175 = vrcp.pop %v2013
  %v2176 = vrcp.pop %v2016
  %v2177 = vrcp.pop %v2019
  %v2178 = vrcp.pop %v2022
  %v2179 = vrcp.pop %v2025
  %v2180 = vrcp.pop %v2028
  %v2181 = vrcp.pop %v2031
  %v2182 = vrcp.pop %v2034
  %v2183 = vrcp.pop %v2037
  %v2184 = vrcp.pop %v2040
  %v2185 = vrcp.pop %v2043
  %v2186 = vrcp.pop %v2046
  %v2187 = vrcp.pop %v2049
  %v2188 = vrcp.pop %v2052
  %v2189 = vrcp.pop %v2055
  %v2190 = vrcp.pop %v2058
  %v2191 = vrcp.pop %v2061
  %v2192 = vrcp.pop %v2064
  %v2193 = vrcp.pop %v2067
  %v2194 = vrcp.pop %v2070
  %v2195 = vrcp.pop %v2073
  %v2196 = vrcp.pop %v2076
  %v2197 = vrcp.pop %v2079
  %v2198 = vrcp.pop %v2082
  %v2199 = vrcp.pop %v2085
  %v2200 = vrcp.pop %v2088
  %v2201 = vrcp.pop %v2091
  %v2202 = vrcp.pop %v2094
  %v2203 = vrcp.pop %v2097
  %v2204 = vrcp.pop %v2100
  %v2205 = vrcp.pop %v2103
  %v2206 = vrcp.pop %v2106
  %v2207 = vrcp.pop %v2109
  %v2208 = vrcp.pop %v2112
  %v2209 = vrcp.pop %v2115
  %v2210 = vrcp.pop %v2118
  %v2211 = vrcp.pop %v2121
  %v2212 = vrcp.pop %v2124
  %v2213 = vrcp.pop %v2127
  %v2214 = vrcp.pop %v2130
  %v2215 = vrcp.pop %v2133
  %v2216 = vrcp.pop %v2136
  %v2217 = vrcp.pop %v2139
  %v2218 = vrcp.pop %v2142
  %v2219 = vrcp.pop %v2145
  %v2220 = vrcp.pop %v2148
  %v2221 = vrcp.pop %v2151
  %v2222 = vrcp.pop %v2154
  %v2223 = vrcp.pop %v2157
  %v2224 = vrcp.pop %v2160
  %v2225 = vmul.f32 %v1842, %v2161
  %v2226 = vmul.f32 %v1844, %v2162
  %v2227 = vmul.f32 %v1846, %v2163
  %v2228 = vmul.f32 %v1848, %v2164
  %v2229 = vmul.f32 %v1850, %v2165
  %v2230 = vmul.f32 %v1852, %v2166
  %v2231 = vmul.f32 %v1854, %v2167
  %v2232 = vmul.f32 %v1856, %v2168
  %v2233 = vmul.f32 %v1858, %v2169
  %v2234 = vmul.f32 %v1860, %v2170
  %v2235 = vmul.f32 %v1862, %v2171
  %v2236 = vmul.f32 %v1864, %v2172
  %v2237 = vmul.f32 %v1866, %v2173
  %v2238 = vmul.f32 %v1868, %v2174
  %v2239 = vmul.f32 %v1870, %v2175
  %v2240 = vmul.f32 %v1872, %v2176
  %v2241 = vmul.f32 %v1874, %v2177
  %v2242 = vmul.f32 %v1876, %v2178
  %v2243 = vmul.f32 %v1878, %v2179
  %v2244 = vmul.f32 %v1880, %v2180
  %v2245 = vmul.f32 %v1882, %v2181
  %v2246 = vmul.f32 %v1884, %v2182
  %v2247 = vmul.f32 %v1886, %v2183
  %v2248 = vmul.f32 %v1888, %v2184
  %v2249 = vmul.f32 %v1890, %v2185
  %v2250 = vmul.f32 %v1892, %v2186
  %v2251 = vmul.f32 %v1894, %v2187
  %v2252 = vmul.f32 %v1896, %v2188
  %v2253 = vmul.f32 %v1898, %v2189
  %v2254 = vmul.f32 %v1900, %v2190
  %v2255 = vmul.f32 %v1902, %v2191
  %v2256 = vmul.f32 %v1904, %v2192
  %v2257 = vmul.f32 %v1906, %v2193
  %v2258 = vmul.f32 %v1908, %v2194
  %v2259 = vmul.f32 %v1910, %v2195
  %v2260 = vmul.f32 %v1912, %v2196
  %v2261 = vmul.f32 %v1914, %v2197
  %v2262 = vmul.f32 %v1916, %v2198
  %v2263 = vmul.f32 %v1918, %v2199
  %v2264 = vmul.f32 %v1920, %v2200
  %v2265 = vmul.f32 %v1922, %v2201
  %v2266 = vmul.f32 %v1924, %v2202
  %v2267 = vmul.f32 %v1926, %v2203
  %v2268 = vmul.f32 %v1928, %v2204
  %v2269 = vmul.f32 %v1930, %v2205
  %v2270 = vmul.f32 %v1932, %v2206
  %v2271 = vmul.f32 %v1934, %v2207
  %v2272 = vmul.f32 %v1936, %v2208
  %v2273 = vmul.f32 %v1938, %v2209
  %v2274 = vmul.f32 %v1940, %v2210
  %v2275 = vmul.f32 %v1942, %v2211
  %v2276 = vmul.f32 %v1944, %v2212
  %v2277 = vmul.f32 %v1946, %v2213
  %v2278 = vmul.f32 %v1948, %v2214
  %v2279 = vmul.f32 %v1950, %v2215
  %v2280 = vmul.f32 %v1952, %v2216
  %v2281 = vmul.f32 %v1954, %v2217
  %v2282 = vmul.f32 %v1956, %v2218
  %v2283 = vmul.f32 %v1958, %v2219
  %v2284 = vmul.f32 %v1960, %v2220
  %v2285 = vmul.f32 %v1962, %v2221
  %v2286 = vmul.f32 %v1964, %v2222
  %v2287 = vmul.f32 %v1966, %v2223
  %v2288 = vmul.f32 %v1968, %v2224
  %v2289 = vpack.c.bf16 %v2226, %v2225
  %v2290 = vpack.c.bf16 %v2228, %v2227
  %v2291 = vpack.c.bf16 %v2230, %v2229
  %v2292 = vpack.c.bf16 %v2232, %v2231
  %v2293 = vpack.c.bf16 %v2234, %v2233
  %v2294 = vpack.c.bf16 %v2236, %v2235
  %v2295 = vpack.c.bf16 %v2238, %v2237
  %v2296 = vpack.c.bf16 %v2240, %v2239
  %v2297 = vpack.c.bf16 %v2242, %v2241
  %v2298 = vpack.c.bf16 %v2244, %v2243
  %v2299 = vpack.c.bf16 %v2246, %v2245
  %v2300 = vpack.c.bf16 %v2248, %v2247
  %v2301 = vpack.c.bf16 %v2250, %v2249
  %v2302 = vpack.c.bf16 %v2252, %v2251
  %v2303 = vpack.c.bf16 %v2254, %v2253
  %v2304 = vpack.c.bf16 %v2256, %v2255
  %v2305 = vpack.c.bf16 %v2258, %v2257
  %v2306 = vpack.c.bf16 %v2260, %v2259
  %v2307 = vpack.c.bf16 %v2262, %v2261
  %v2308 = vpack.c.bf16 %v2264, %v2263
  %v2309 = vpack.c.bf16 %v2266, %v2265
  %v2310 = vpack.c.bf16 %v2268, %v2267
  %v2311 = vpack.c.bf16 %v2270, %v2269
  %v2312 = vpack.c.bf16 %v2272, %v2271
  %v2313 = vpack.c.bf16 %v2274, %v2273
  %v2314 = vpack.c.bf16 %v2276, %v2275
  %v2315 = vpack.c.bf16 %v2278, %v2277
  %v2316 = vpack.c.bf16 %v2280, %v2279
  %v2317 = vpack.c.bf16 %v2282, %v2281
  %v2318 = vpack.c.bf16 %v2284, %v2283
  %v2319 = vpack.c.bf16 %v2286, %v2285
  %v2320 = vpack.c.bf16 %v2288, %v2287
  %v2322 = vsel %vm1584, %v2289, 0
  %v2325 = vsel %vm1584, %v2290, 0
  %v2328 = vsel %vm1584, %v2291, 0
  %v2331 = vsel %vm1584, %v2292, 0
  %2333 = vmatprep.subr.bf16.mxu0 0
  %2334 = vmatpush1.bf16.msra.mxu0 0
  %2335 = vmatprep.subr.bf16.mxu0 0
  %2336 = vmatpush1.bf16.msra.mxu0 0
  %2337 = vmatprep.subr.bf16.mxu0 0
  %2338 = vmatpush1.bf16.msra.mxu0 0
  %2339 = vmatprep.subr.bf16.mxu0 0
  %2340 = vmatpush1.bf16.msra.mxu0 0
  %2341 = vmatprep.subr.bf16.mxu0 0
  %2342 = vmatpush1.bf16.msra.mxu0 %v754
  %2343 = vmatprep.subr.bf16.mxu0 0
  %2344 = vmatpush1.bf16.msra.mxu0 %v753
  %2345 = vmatprep.subr.bf16.mxu0 0
  %2346 = vmatpush1.bf16.msra.mxu0 %v752
  %2347 = vmatprep.subr.bf16.mxu0 0
  %2348 = vmatpush1.bf16.msra.mxu0 %v751
  %2349 = vmatprep.subr.bf16.mxu0 0
  %2350 = vmatpush2.bf16.msra.mxu0 0
  %2351 = vmatprep.subr.bf16.mxu0 0
  %2352 = vmatpush2.bf16.msra.mxu0 0
  %2353 = vmatprep.subr.bf16.mxu0 0
  %2354 = vmatpush2.bf16.msra.mxu0 0
  %2355 = vmatprep.subr.bf16.mxu0 0
  %2356 = vmatpush2.bf16.msra.mxu0 0
  %2357 = vmatprep.subr.bf16.mxu0 0
  %2358 = vmatpush2.bf16.msra.mxu0 0
  %2359 = vmatprep.subr.bf16.mxu0 0
  %2360 = vmatpush2.bf16.msra.mxu0 0
  %2361 = vmatprep.subr.bf16.mxu0 0
  %2362 = vmatpush2.bf16.msra.mxu0 0
  %2363 = vmatprep.subr.bf16.mxu0 0
  %2364 = vmatpush2.bf16.msra.mxu0 0
  %2365 = vmatprep.mubr.bf16.mxu0 0
  %2366 = vmatmul.mubr.bf16.gmra.mxu0 %v2322
  %v2367 = vpop.f32.mrf.mxu0
  %v2368 = vadd.f32 0.0, %v2367
  %v2369 = vpop.f32.mrf.mxu0
  %v2370 = vpop.f32.mrf.mxu0
  %v2371 = vadd.f32 0.0, %v2370
  %v2372 = vpop.f32.mrf.mxu0
  %2373 = vmatprep.mubr.bf16.mxu0 0
  %2374 = vmatmul.mubr.bf16.gmra.mxu0 %v2325
  %v2375 = vpop.f32.mrf.mxu0
  %v2376 = vadd.f32 0.0, %v2375
  %v2377 = vpop.f32.mrf.mxu0
  %v2378 = vpop.f32.mrf.mxu0
  %v2379 = vadd.f32 0.0, %v2378
  %v2380 = vpop.f32.mrf.mxu0
  %2381 = vmatprep.mubr.bf16.mxu0 0
  %2382 = vmatmul.mubr.bf16.gmra.mxu0 %v2328
  %v2383 = vpop.f32.mrf.mxu0
  %v2384 = vadd.f32 0.0, %v2383
  %v2385 = vpop.f32.mrf.mxu0
  %v2386 = vpop.f32.mrf.mxu0
  %v2387 = vadd.f32 0.0, %v2386
  %v2388 = vpop.f32.mrf.mxu0
  %2389 = vmatprep.mubr.bf16.mxu0 0
  %2390 = vmatmul.mubr.bf16.gmra.mxu0 %v2331
  %v2391 = vpop.f32.mrf.mxu0
  %v2392 = vadd.f32 0.0, %v2391
  %v2393 = vpop.f32.mrf.mxu0
  %v2394 = vpop.f32.mrf.mxu0
  %v2395 = vadd.f32 0.0, %v2394
  %v2396 = vpop.f32.mrf.mxu0
  %2397 = vdwg.mxu0
  %2402 = vrot.lane.b32.xlu0 %v751, 120
  %v2403 = vpop.permute.xlu0 %2402
  %2404 = vrot.lane.b32.xlu0 %v752, 120
  %v2405 = vpop.permute.xlu0 %2404
  %2406 = vrot.lane.b32.xlu0 %v753, 120
  %v2407 = vpop.permute.xlu0 %2406
  %2408 = vrot.lane.b32.xlu0 %v754, 120
  %v2409 = vpop.permute.xlu0 %2408
  %v2415 = vsel %vm1584, %v2293, 0
  %v2418 = vsel %vm1584, %v2294, 0
  %v2421 = vsel %vm1584, %v2295, 0
  %v2424 = vsel %vm1584, %v2296, 0
  %2426 = vmatprep.subr.bf16.mxu0 0
  %2427 = vmatpush1.bf16.msra.mxu0 0
  %2428 = vmatprep.subr.bf16.mxu0 0
  %2429 = vmatpush1.bf16.msra.mxu0 0
  %2430 = vmatprep.subr.bf16.mxu0 0
  %2431 = vmatpush1.bf16.msra.mxu0 0
  %2432 = vmatprep.subr.bf16.mxu0 0
  %2433 = vmatpush1.bf16.msra.mxu0 0
  %2434 = vmatprep.subr.bf16.mxu0 0
  %2435 = vmatpush1.bf16.msra.mxu0 %v2409
  %2436 = vmatprep.subr.bf16.mxu0 0
  %2437 = vmatpush1.bf16.msra.mxu0 %v2407
  %2438 = vmatprep.subr.bf16.mxu0 0
  %2439 = vmatpush1.bf16.msra.mxu0 %v2405
  %2440 = vmatprep.subr.bf16.mxu0 0
  %2441 = vmatpush1.bf16.msra.mxu0 %v2403
  %2442 = vmatprep.subr.bf16.mxu0 0
  %2443 = vmatpush2.bf16.msra.mxu0 0
  %2444 = vmatprep.subr.bf16.mxu0 0
  %2445 = vmatpush2.bf16.msra.mxu0 0
  %2446 = vmatprep.subr.bf16.mxu0 0
  %2447 = vmatpush2.bf16.msra.mxu0 0
  %2448 = vmatprep.subr.bf16.mxu0 0
  %2449 = vmatpush2.bf16.msra.mxu0 0
  %2450 = vmatprep.subr.bf16.mxu0 0
  %2451 = vmatpush2.bf16.msra.mxu0 0
  %2452 = vmatprep.subr.bf16.mxu0 0
  %2453 = vmatpush2.bf16.msra.mxu0 0
  %2454 = vmatprep.subr.bf16.mxu0 0
  %2455 = vmatpush2.bf16.msra.mxu0 0
  %2456 = vmatprep.subr.bf16.mxu0 0
  %2457 = vmatpush2.bf16.msra.mxu0 0
  %2458 = vmatprep.mubr.bf16.mxu0 0
  %2459 = vmatmul.mubr.bf16.gmra.mxu0 %v2415
  %v2460 = vpop.f32.mrf.mxu0
  %v2461 = vadd.f32 0.0, %v2460
  %v2462 = vpop.f32.mrf.mxu0
  %v2463 = vpop.f32.mrf.mxu0
  %v2464 = vadd.f32 0.0, %v2463
  %v2465 = vpop.f32.mrf.mxu0
  %2466 = vmatprep.mubr.bf16.mxu0 0
  %2467 = vmatmul.mubr.bf16.gmra.mxu0 %v2418
  %v2468 = vpop.f32.mrf.mxu0
  %v2469 = vadd.f32 0.0, %v2468
  %v2470 = vpop.f32.mrf.mxu0
  %v2471 = vpop.f32.mrf.mxu0
  %v2472 = vadd.f32 0.0, %v2471
  %v2473 = vpop.f32.mrf.mxu0
  %2474 = vmatprep.mubr.bf16.mxu0 0
  %2475 = vmatmul.mubr.bf16.gmra.mxu0 %v2421
  %v2476 = vpop.f32.mrf.mxu0
  %v2477 = vadd.f32 0.0, %v2476
  %v2478 = vpop.f32.mrf.mxu0
  %v2479 = vpop.f32.mrf.mxu0
  %v2480 = vadd.f32 0.0, %v2479
  %v2481 = vpop.f32.mrf.mxu0
  %2482 = vmatprep.mubr.bf16.mxu0 0
  %2483 = vmatmul.mubr.bf16.gmra.mxu0 %v2424
  %v2484 = vpop.f32.mrf.mxu0
  %v2485 = vadd.f32 0.0, %v2484
  %v2486 = vpop.f32.mrf.mxu0
  %v2487 = vpop.f32.mrf.mxu0
  %v2488 = vadd.f32 0.0, %v2487
  %v2489 = vpop.f32.mrf.mxu0
  %2490 = vdwg.mxu0
  %2491 = vrot.lane.b32.xlu0 %v751, 112
  %v2492 = vpop.permute.xlu0 %2491
  %2493 = vrot.lane.b32.xlu0 %v752, 112
  %v2494 = vpop.permute.xlu0 %2493
  %2495 = vrot.lane.b32.xlu0 %v753, 112
  %v2496 = vpop.permute.xlu0 %2495
  %2497 = vrot.lane.b32.xlu0 %v754, 112
  %v2498 = vpop.permute.xlu0 %2497
  %v2504 = vsel %vm1584, %v2297, 0
  %v2507 = vsel %vm1584, %v2298, 0
  %v2510 = vsel %vm1584, %v2299, 0
  %v2513 = vsel %vm1584, %v2300, 0
  %2515 = vmatprep.subr.bf16.mxu0 0
  %2516 = vmatpush1.bf16.msra.mxu0 0
  %2517 = vmatprep.subr.bf16.mxu0 0
  %2518 = vmatpush1.bf16.msra.mxu0 0
  %2519 = vmatprep.subr.bf16.mxu0 0
  %2520 = vmatpush1.bf16.msra.mxu0 0
  %2521 = vmatprep.subr.bf16.mxu0 0
  %2522 = vmatpush1.bf16.msra.mxu0 0
  %2523 = vmatprep.subr.bf16.mxu0 0
  %2524 = vmatpush1.bf16.msra.mxu0 %v2498
  %2525 = vmatprep.subr.bf16.mxu0 0
  %2526 = vmatpush1.bf16.msra.mxu0 %v2496
  %2527 = vmatprep.subr.bf16.mxu0 0
  %2528 = vmatpush1.bf16.msra.mxu0 %v2494
  %2529 = vmatprep.subr.bf16.mxu0 0
  %2530 = vmatpush1.bf16.msra.mxu0 %v2492
  %2531 = vmatprep.subr.bf16.mxu0 0
  %2532 = vmatpush2.bf16.msra.mxu0 0
  %2533 = vmatprep.subr.bf16.mxu0 0
  %2534 = vmatpush2.bf16.msra.mxu0 0
  %2535 = vmatprep.subr.bf16.mxu0 0
  %2536 = vmatpush2.bf16.msra.mxu0 0
  %2537 = vmatprep.subr.bf16.mxu0 0
  %2538 = vmatpush2.bf16.msra.mxu0 0
  %2539 = vmatprep.subr.bf16.mxu0 0
  %2540 = vmatpush2.bf16.msra.mxu0 0
  %2541 = vmatprep.subr.bf16.mxu0 0
  %2542 = vmatpush2.bf16.msra.mxu0 0
  %2543 = vmatprep.subr.bf16.mxu0 0
  %2544 = vmatpush2.bf16.msra.mxu0 0
  %2545 = vmatprep.subr.bf16.mxu0 0
  %2546 = vmatpush2.bf16.msra.mxu0 0
  %2547 = vmatprep.mubr.bf16.mxu0 0
  %2548 = vmatmul.mubr.bf16.gmra.mxu0 %v2504
  %v2549 = vpop.f32.mrf.mxu0
  %v2550 = vadd.f32 0.0, %v2549
  %v2551 = vpop.f32.mrf.mxu0
  %v2552 = vpop.f32.mrf.mxu0
  %v2553 = vadd.f32 0.0, %v2552
  %v2554 = vpop.f32.mrf.mxu0
  %2555 = vmatprep.mubr.bf16.mxu0 0
  %2556 = vmatmul.mubr.bf16.gmra.mxu0 %v2507
  %v2557 = vpop.f32.mrf.mxu0
  %v2558 = vadd.f32 0.0, %v2557
  %v2559 = vpop.f32.mrf.mxu0
  %v2560 = vpop.f32.mrf.mxu0
  %v2561 = vadd.f32 0.0, %v2560
  %v2562 = vpop.f32.mrf.mxu0
  %2563 = vmatprep.mubr.bf16.mxu0 0
  %2564 = vmatmul.mubr.bf16.gmra.mxu0 %v2510
  %v2565 = vpop.f32.mrf.mxu0
  %v2566 = vadd.f32 0.0, %v2565
  %v2567 = vpop.f32.mrf.mxu0
  %v2568 = vpop.f32.mrf.mxu0
  %v2569 = vadd.f32 0.0, %v2568
  %v2570 = vpop.f32.mrf.mxu0
  %2571 = vmatprep.mubr.bf16.mxu0 0
  %2572 = vmatmul.mubr.bf16.gmra.mxu0 %v2513
  %v2573 = vpop.f32.mrf.mxu0
  %v2574 = vadd.f32 0.0, %v2573
  %v2575 = vpop.f32.mrf.mxu0
  %v2576 = vpop.f32.mrf.mxu0
  %v2577 = vadd.f32 0.0, %v2576
  %v2578 = vpop.f32.mrf.mxu0
  %2579 = vdwg.mxu0
  %2580 = vrot.lane.b32.xlu0 %v751, 104
  %v2581 = vpop.permute.xlu0 %2580
  %2582 = vrot.lane.b32.xlu0 %v752, 104
  %v2583 = vpop.permute.xlu0 %2582
  %2584 = vrot.lane.b32.xlu0 %v753, 104
  %v2585 = vpop.permute.xlu0 %2584
  %2586 = vrot.lane.b32.xlu0 %v754, 104
  %v2587 = vpop.permute.xlu0 %2586
  %v2593 = vsel %vm1584, %v2301, 0
  %v2596 = vsel %vm1584, %v2302, 0
  %v2599 = vsel %vm1584, %v2303, 0
  %v2602 = vsel %vm1584, %v2304, 0
  %2604 = vmatprep.subr.bf16.mxu0 0
  %2605 = vmatpush1.bf16.msra.mxu0 0
  %2606 = vmatprep.subr.bf16.mxu0 0
  %2607 = vmatpush1.bf16.msra.mxu0 0
  %2608 = vmatprep.subr.bf16.mxu0 0
  %2609 = vmatpush1.bf16.msra.mxu0 0
  %2610 = vmatprep.subr.bf16.mxu0 0
  %2611 = vmatpush1.bf16.msra.mxu0 0
  %2612 = vmatprep.subr.bf16.mxu0 0
  %2613 = vmatpush1.bf16.msra.mxu0 %v2587
  %2614 = vmatprep.subr.bf16.mxu0 0
  %2615 = vmatpush1.bf16.msra.mxu0 %v2585
  %2616 = vmatprep.subr.bf16.mxu0 0
  %2617 = vmatpush1.bf16.msra.mxu0 %v2583
  %2618 = vmatprep.subr.bf16.mxu0 0
  %2619 = vmatpush1.bf16.msra.mxu0 %v2581
  %2620 = vmatprep.subr.bf16.mxu0 0
  %2621 = vmatpush2.bf16.msra.mxu0 0
  %2622 = vmatprep.subr.bf16.mxu0 0
  %2623 = vmatpush2.bf16.msra.mxu0 0
  %2624 = vmatprep.subr.bf16.mxu0 0
  %2625 = vmatpush2.bf16.msra.mxu0 0
  %2626 = vmatprep.subr.bf16.mxu0 0
  %2627 = vmatpush2.bf16.msra.mxu0 0
  %2628 = vmatprep.subr.bf16.mxu0 0
  %2629 = vmatpush2.bf16.msra.mxu0 0
  %2630 = vmatprep.subr.bf16.mxu0 0
  %2631 = vmatpush2.bf16.msra.mxu0 0
  %2632 = vmatprep.subr.bf16.mxu0 0
  %2633 = vmatpush2.bf16.msra.mxu0 0
  %2634 = vmatprep.subr.bf16.mxu0 0
  %2635 = vmatpush2.bf16.msra.mxu0 0
  %2636 = vmatprep.mubr.bf16.mxu0 0
  %2637 = vmatmul.mubr.bf16.gmra.mxu0 %v2593
  %v2638 = vpop.f32.mrf.mxu0
  %v2639 = vadd.f32 0.0, %v2638
  %v2640 = vpop.f32.mrf.mxu0
  %v2641 = vpop.f32.mrf.mxu0
  %v2642 = vadd.f32 0.0, %v2641
  %v2643 = vpop.f32.mrf.mxu0
  %2644 = vmatprep.mubr.bf16.mxu0 0
  %2645 = vmatmul.mubr.bf16.gmra.mxu0 %v2596
  %v2646 = vpop.f32.mrf.mxu0
  %v2647 = vadd.f32 0.0, %v2646
  %v2648 = vpop.f32.mrf.mxu0
  %v2649 = vpop.f32.mrf.mxu0
  %v2650 = vadd.f32 0.0, %v2649
  %v2651 = vpop.f32.mrf.mxu0
  %2652 = vmatprep.mubr.bf16.mxu0 0
  %2653 = vmatmul.mubr.bf16.gmra.mxu0 %v2599
  %v2654 = vpop.f32.mrf.mxu0
  %v2655 = vadd.f32 0.0, %v2654
  %v2656 = vpop.f32.mrf.mxu0
  %v2657 = vpop.f32.mrf.mxu0
  %v2658 = vadd.f32 0.0, %v2657
  %v2659 = vpop.f32.mrf.mxu0
  %2660 = vmatprep.mubr.bf16.mxu0 0
  %2661 = vmatmul.mubr.bf16.gmra.mxu0 %v2602
  %v2662 = vpop.f32.mrf.mxu0
  %v2663 = vadd.f32 0.0, %v2662
  %v2664 = vpop.f32.mrf.mxu0
  %v2665 = vpop.f32.mrf.mxu0
  %v2666 = vadd.f32 0.0, %v2665
  %v2667 = vpop.f32.mrf.mxu0
  %2668 = vdwg.mxu0
  %2677 = vrot.lane.b32.xlu0 %v2461, 8
  %v2678 = vpop.permute.xlu0 %2677
  %2679 = vrot.lane.b32.xlu0 %v2464, 8
  %v2680 = vpop.permute.xlu0 %2679
  %2681 = vrot.lane.b32.xlu0 %v2469, 8
  %v2682 = vpop.permute.xlu0 %2681
  %2683 = vrot.lane.b32.xlu0 %v2472, 8
  %v2684 = vpop.permute.xlu0 %2683
  %2685 = vrot.lane.b32.xlu0 %v2477, 8
  %v2686 = vpop.permute.xlu0 %2685
  %2687 = vrot.lane.b32.xlu0 %v2480, 8
  %v2688 = vpop.permute.xlu0 %2687
  %2689 = vrot.lane.b32.xlu0 %v2485, 8
  %v2690 = vpop.permute.xlu0 %2689
  %2691 = vrot.lane.b32.xlu0 %v2488, 8
  %v2692 = vpop.permute.xlu0 %2691
  %2709 = vrot.lane.b32.xlu0 %v2550, 16
  %v2710 = vpop.permute.xlu0 %2709
  %2711 = vrot.lane.b32.xlu0 %v2553, 16
  %v2712 = vpop.permute.xlu0 %2711
  %2713 = vrot.lane.b32.xlu0 %v2558, 16
  %v2714 = vpop.permute.xlu0 %2713
  %2715 = vrot.lane.b32.xlu0 %v2561, 16
  %v2716 = vpop.permute.xlu0 %2715
  %2717 = vrot.lane.b32.xlu0 %v2566, 16
  %v2718 = vpop.permute.xlu0 %2717
  %2719 = vrot.lane.b32.xlu0 %v2569, 16
  %v2720 = vpop.permute.xlu0 %2719
  %2721 = vrot.lane.b32.xlu0 %v2574, 16
  %v2722 = vpop.permute.xlu0 %2721
  %2723 = vrot.lane.b32.xlu0 %v2577, 16
  %v2724 = vpop.permute.xlu0 %2723
  %2741 = vrot.lane.b32.xlu0 %v2639, 24
  %v2742 = vpop.permute.xlu0 %2741
  %2743 = vrot.lane.b32.xlu0 %v2642, 24
  %v2744 = vpop.permute.xlu0 %2743
  %2745 = vrot.lane.b32.xlu0 %v2647, 24
  %v2746 = vpop.permute.xlu0 %2745
  %2747 = vrot.lane.b32.xlu0 %v2650, 24
  %v2748 = vpop.permute.xlu0 %2747
  %2749 = vrot.lane.b32.xlu0 %v2655, 24
  %v2750 = vpop.permute.xlu0 %2749
  %2751 = vrot.lane.b32.xlu0 %v2658, 24
  %v2752 = vpop.permute.xlu0 %2751
  %2753 = vrot.lane.b32.xlu0 %v2663, 24
  %v2754 = vpop.permute.xlu0 %2753
  %2755 = vrot.lane.b32.xlu0 %v2666, 24
  %v2756 = vpop.permute.xlu0 %2755
  %v2765 = vsel %vm759, %v2368, %v2678
  %v2766 = vsel %vm759, %v2371, %v2680
  %v2767 = vsel %vm759, %v2376, %v2682
  %v2768 = vsel %vm759, %v2379, %v2684
  %v2769 = vsel %vm759, %v2384, %v2686
  %v2770 = vsel %vm759, %v2387, %v2688
  %v2771 = vsel %vm759, %v2392, %v2690
  %v2772 = vsel %vm759, %v2395, %v2692
  %vm2773 = vcmask 130048
  %v2774 = vsel %vm2773, %v2765, %v2710
  %v2775 = vsel %vm2773, %v2766, %v2712
  %v2776 = vsel %vm2773, %v2767, %v2714
  %v2777 = vsel %vm2773, %v2768, %v2716
  %v2778 = vsel %vm2773, %v2769, %v2718
  %v2779 = vsel %vm2773, %v2770, %v2720
  %v2780 = vsel %vm2773, %v2771, %v2722
  %v2781 = vsel %vm2773, %v2772, %v2724
  %vm2782 = vcmask 195584
  %v2783 = vsel %vm2782, %v2774, %v2742
  %v2784 = vsel %vm2782, %v2775, %v2744
  %v2785 = vsel %vm2782, %v2776, %v2746
  %v2786 = vsel %vm2782, %v2777, %v2748
  %v2787 = vsel %vm2782, %v2778, %v2750
  %v2788 = vsel %vm2782, %v2779, %v2752
  %v2789 = vsel %vm2782, %v2780, %v2754
  %v2790 = vsel %vm2782, %v2781, %v2756
  %v2792 = vsel %vm1584, %v2305, 0
  %v2795 = vsel %vm1584, %v2306, 0
  %v2798 = vsel %vm1584, %v2307, 0
  %v2801 = vsel %vm1584, %v2308, 0
  %2803 = vmatprep.subr.bf16.mxu0 0
  %2804 = vmatpush1.bf16.msra.mxu0 0
  %2805 = vmatprep.subr.bf16.mxu0 0
  %2806 = vmatpush1.bf16.msra.mxu0 0
  %2807 = vmatprep.subr.bf16.mxu0 0
  %2808 = vmatpush1.bf16.msra.mxu0 0
  %2809 = vmatprep.subr.bf16.mxu0 0
  %2810 = vmatpush1.bf16.msra.mxu0 0
  %2811 = vmatprep.subr.bf16.mxu0 0
  %2812 = vmatpush1.bf16.msra.mxu0 %v758
  %2813 = vmatprep.subr.bf16.mxu0 0
  %2814 = vmatpush1.bf16.msra.mxu0 %v757
  %2815 = vmatprep.subr.bf16.mxu0 0
  %2816 = vmatpush1.bf16.msra.mxu0 %v756
  %2817 = vmatprep.subr.bf16.mxu0 0
  %2818 = vmatpush1.bf16.msra.mxu0 %v755
  %2819 = vmatprep.subr.bf16.mxu0 0
  %2820 = vmatpush2.bf16.msra.mxu0 0
  %2821 = vmatprep.subr.bf16.mxu0 0
  %2822 = vmatpush2.bf16.msra.mxu0 0
  %2823 = vmatprep.subr.bf16.mxu0 0
  %2824 = vmatpush2.bf16.msra.mxu0 0
  %2825 = vmatprep.subr.bf16.mxu0 0
  %2826 = vmatpush2.bf16.msra.mxu0 0
  %2827 = vmatprep.subr.bf16.mxu0 0
  %2828 = vmatpush2.bf16.msra.mxu0 0
  %2829 = vmatprep.subr.bf16.mxu0 0
  %2830 = vmatpush2.bf16.msra.mxu0 0
  %2831 = vmatprep.subr.bf16.mxu0 0
  %2832 = vmatpush2.bf16.msra.mxu0 0
  %2833 = vmatprep.subr.bf16.mxu0 0
  %2834 = vmatpush2.bf16.msra.mxu0 0
  %2835 = vmatprep.mubr.bf16.mxu0 0
  %2836 = vmatmul.mubr.bf16.gmra.mxu0 %v2792
  %v2837 = vpop.f32.mrf.mxu0
  %v2838 = vadd.f32 0.0, %v2837
  %v2839 = vpop.f32.mrf.mxu0
  %v2840 = vpop.f32.mrf.mxu0
  %v2841 = vadd.f32 0.0, %v2840
  %v2842 = vpop.f32.mrf.mxu0
  %2843 = vmatprep.mubr.bf16.mxu0 0
  %2844 = vmatmul.mubr.bf16.gmra.mxu0 %v2795
  %v2845 = vpop.f32.mrf.mxu0
  %v2846 = vadd.f32 0.0, %v2845
  %v2847 = vpop.f32.mrf.mxu0
  %v2848 = vpop.f32.mrf.mxu0
  %v2849 = vadd.f32 0.0, %v2848
  %v2850 = vpop.f32.mrf.mxu0
  %2851 = vmatprep.mubr.bf16.mxu0 0
  %2852 = vmatmul.mubr.bf16.gmra.mxu0 %v2798
  %v2853 = vpop.f32.mrf.mxu0
  %v2854 = vadd.f32 0.0, %v2853
  %v2855 = vpop.f32.mrf.mxu0
  %v2856 = vpop.f32.mrf.mxu0
  %v2857 = vadd.f32 0.0, %v2856
  %v2858 = vpop.f32.mrf.mxu0
  %2859 = vmatprep.mubr.bf16.mxu0 0
  %2860 = vmatmul.mubr.bf16.gmra.mxu0 %v2801
  %v2861 = vpop.f32.mrf.mxu0
  %v2862 = vadd.f32 0.0, %v2861
  %v2863 = vpop.f32.mrf.mxu0
  %v2864 = vpop.f32.mrf.mxu0
  %v2865 = vadd.f32 0.0, %v2864
  %v2866 = vpop.f32.mrf.mxu0
  %2867 = vdwg.mxu0
  %2872 = vrot.lane.b32.xlu0 %v755, 120
  %v2873 = vpop.permute.xlu0 %2872
  %2874 = vrot.lane.b32.xlu0 %v756, 120
  %v2875 = vpop.permute.xlu0 %2874
  %2876 = vrot.lane.b32.xlu0 %v757, 120
  %v2877 = vpop.permute.xlu0 %2876
  %2878 = vrot.lane.b32.xlu0 %v758, 120
  %v2879 = vpop.permute.xlu0 %2878
  %v2885 = vsel %vm1584, %v2309, 0
  %v2888 = vsel %vm1584, %v2310, 0
  %v2891 = vsel %vm1584, %v2311, 0
  %v2894 = vsel %vm1584, %v2312, 0
  %2896 = vmatprep.subr.bf16.mxu0 0
  %2897 = vmatpush1.bf16.msra.mxu0 0
  %2898 = vmatprep.subr.bf16.mxu0 0
  %2899 = vmatpush1.bf16.msra.mxu0 0
  %2900 = vmatprep.subr.bf16.mxu0 0
  %2901 = vmatpush1.bf16.msra.mxu0 0
  %2902 = vmatprep.subr.bf16.mxu0 0
  %2903 = vmatpush1.bf16.msra.mxu0 0
  %2904 = vmatprep.subr.bf16.mxu0 0
  %2905 = vmatpush1.bf16.msra.mxu0 %v2879
  %2906 = vmatprep.subr.bf16.mxu0 0
  %2907 = vmatpush1.bf16.msra.mxu0 %v2877
  %2908 = vmatprep.subr.bf16.mxu0 0
  %2909 = vmatpush1.bf16.msra.mxu0 %v2875
  %2910 = vmatprep.subr.bf16.mxu0 0
  %2911 = vmatpush1.bf16.msra.mxu0 %v2873
  %2912 = vmatprep.subr.bf16.mxu0 0
  %2913 = vmatpush2.bf16.msra.mxu0 0
  %2914 = vmatprep.subr.bf16.mxu0 0
  %2915 = vmatpush2.bf16.msra.mxu0 0
  %2916 = vmatprep.subr.bf16.mxu0 0
  %2917 = vmatpush2.bf16.msra.mxu0 0
  %2918 = vmatprep.subr.bf16.mxu0 0
  %2919 = vmatpush2.bf16.msra.mxu0 0
  %2920 = vmatprep.subr.bf16.mxu0 0
  %2921 = vmatpush2.bf16.msra.mxu0 0
  %2922 = vmatprep.subr.bf16.mxu0 0
  %2923 = vmatpush2.bf16.msra.mxu0 0
  %2924 = vmatprep.subr.bf16.mxu0 0
  %2925 = vmatpush2.bf16.msra.mxu0 0
  %2926 = vmatprep.subr.bf16.mxu0 0
  %2927 = vmatpush2.bf16.msra.mxu0 0
  %2928 = vmatprep.mubr.bf16.mxu0 0
  %2929 = vmatmul.mubr.bf16.gmra.mxu0 %v2885
  %v2930 = vpop.f32.mrf.mxu0
  %v2931 = vadd.f32 0.0, %v2930
  %v2932 = vpop.f32.mrf.mxu0
  %v2933 = vpop.f32.mrf.mxu0
  %v2934 = vadd.f32 0.0, %v2933
  %v2935 = vpop.f32.mrf.mxu0
  %2936 = vmatprep.mubr.bf16.mxu0 0
  %2937 = vmatmul.mubr.bf16.gmra.mxu0 %v2888
  %v2938 = vpop.f32.mrf.mxu0
  %v2939 = vadd.f32 0.0, %v2938
  %v2940 = vpop.f32.mrf.mxu0
  %v2941 = vpop.f32.mrf.mxu0
  %v2942 = vadd.f32 0.0, %v2941
  %v2943 = vpop.f32.mrf.mxu0
  %2944 = vmatprep.mubr.bf16.mxu0 0
  %2945 = vmatmul.mubr.bf16.gmra.mxu0 %v2891
  %v2946 = vpop.f32.mrf.mxu0
  %v2947 = vadd.f32 0.0, %v2946
  %v2948 = vpop.f32.mrf.mxu0
  %v2949 = vpop.f32.mrf.mxu0
  %v2950 = vadd.f32 0.0, %v2949
  %v2951 = vpop.f32.mrf.mxu0
  %2952 = vmatprep.mubr.bf16.mxu0 0
  %2953 = vmatmul.mubr.bf16.gmra.mxu0 %v2894
  %v2954 = vpop.f32.mrf.mxu0
  %v2955 = vadd.f32 0.0, %v2954
  %v2956 = vpop.f32.mrf.mxu0
  %v2957 = vpop.f32.mrf.mxu0
  %v2958 = vadd.f32 0.0, %v2957
  %v2959 = vpop.f32.mrf.mxu0
  %2960 = vdwg.mxu0
  %2961 = vrot.lane.b32.xlu0 %v755, 112
  %v2962 = vpop.permute.xlu0 %2961
  %2963 = vrot.lane.b32.xlu0 %v756, 112
  %v2964 = vpop.permute.xlu0 %2963
  %2965 = vrot.lane.b32.xlu0 %v757, 112
  %v2966 = vpop.permute.xlu0 %2965
  %2967 = vrot.lane.b32.xlu0 %v758, 112
  %v2968 = vpop.permute.xlu0 %2967
  %v2974 = vsel %vm1584, %v2313, 0
  %v2977 = vsel %vm1584, %v2314, 0
  %v2980 = vsel %vm1584, %v2315, 0
  %v2983 = vsel %vm1584, %v2316, 0
  %2985 = vmatprep.subr.bf16.mxu0 0
  %2986 = vmatpush1.bf16.msra.mxu0 0
  %2987 = vmatprep.subr.bf16.mxu0 0
  %2988 = vmatpush1.bf16.msra.mxu0 0
  %2989 = vmatprep.subr.bf16.mxu0 0
  %2990 = vmatpush1.bf16.msra.mxu0 0
  %2991 = vmatprep.subr.bf16.mxu0 0
  %2992 = vmatpush1.bf16.msra.mxu0 0
  %2993 = vmatprep.subr.bf16.mxu0 0
  %2994 = vmatpush1.bf16.msra.mxu0 %v2968
  %2995 = vmatprep.subr.bf16.mxu0 0
  %2996 = vmatpush1.bf16.msra.mxu0 %v2966
  %2997 = vmatprep.subr.bf16.mxu0 0
  %2998 = vmatpush1.bf16.msra.mxu0 %v2964
  %2999 = vmatprep.subr.bf16.mxu0 0
  %3000 = vmatpush1.bf16.msra.mxu0 %v2962
  %3001 = vmatprep.subr.bf16.mxu0 0
  %3002 = vmatpush2.bf16.msra.mxu0 0
  %3003 = vmatprep.subr.bf16.mxu0 0
  %3004 = vmatpush2.bf16.msra.mxu0 0
  %3005 = vmatprep.subr.bf16.mxu0 0
  %3006 = vmatpush2.bf16.msra.mxu0 0
  %3007 = vmatprep.subr.bf16.mxu0 0
  %3008 = vmatpush2.bf16.msra.mxu0 0
  %3009 = vmatprep.subr.bf16.mxu0 0
  %3010 = vmatpush2.bf16.msra.mxu0 0
  %3011 = vmatprep.subr.bf16.mxu0 0
  %3012 = vmatpush2.bf16.msra.mxu0 0
  %3013 = vmatprep.subr.bf16.mxu0 0
  %3014 = vmatpush2.bf16.msra.mxu0 0
  %3015 = vmatprep.subr.bf16.mxu0 0
  %3016 = vmatpush2.bf16.msra.mxu0 0
  %3017 = vmatprep.mubr.bf16.mxu0 0
  %3018 = vmatmul.mubr.bf16.gmra.mxu0 %v2974
  %v3019 = vpop.f32.mrf.mxu0
  %v3020 = vadd.f32 0.0, %v3019
  %v3021 = vpop.f32.mrf.mxu0
  %v3022 = vpop.f32.mrf.mxu0
  %v3023 = vadd.f32 0.0, %v3022
  %v3024 = vpop.f32.mrf.mxu0
  %3025 = vmatprep.mubr.bf16.mxu0 0
  %3026 = vmatmul.mubr.bf16.gmra.mxu0 %v2977
  %v3027 = vpop.f32.mrf.mxu0
  %v3028 = vadd.f32 0.0, %v3027
  %v3029 = vpop.f32.mrf.mxu0
  %v3030 = vpop.f32.mrf.mxu0
  %v3031 = vadd.f32 0.0, %v3030
  %v3032 = vpop.f32.mrf.mxu0
  %3033 = vmatprep.mubr.bf16.mxu0 0
  %3034 = vmatmul.mubr.bf16.gmra.mxu0 %v2980
  %v3035 = vpop.f32.mrf.mxu0
  %v3036 = vadd.f32 0.0, %v3035
  %v3037 = vpop.f32.mrf.mxu0
  %v3038 = vpop.f32.mrf.mxu0
  %v3039 = vadd.f32 0.0, %v3038
  %v3040 = vpop.f32.mrf.mxu0
  %3041 = vmatprep.mubr.bf16.mxu0 0
  %3042 = vmatmul.mubr.bf16.gmra.mxu0 %v2983
  %v3043 = vpop.f32.mrf.mxu0
  %v3044 = vadd.f32 0.0, %v3043
  %v3045 = vpop.f32.mrf.mxu0
  %v3046 = vpop.f32.mrf.mxu0
  %v3047 = vadd.f32 0.0, %v3046
  %v3048 = vpop.f32.mrf.mxu0
  %3049 = vdwg.mxu0
  %3050 = vrot.lane.b32.xlu0 %v755, 104
  %v3051 = vpop.permute.xlu0 %3050
  %3052 = vrot.lane.b32.xlu0 %v756, 104
  %v3053 = vpop.permute.xlu0 %3052
  %3054 = vrot.lane.b32.xlu0 %v757, 104
  %v3055 = vpop.permute.xlu0 %3054
  %3056 = vrot.lane.b32.xlu0 %v758, 104
  %v3057 = vpop.permute.xlu0 %3056
  %v3063 = vsel %vm1584, %v2317, 0
  %v3066 = vsel %vm1584, %v2318, 0
  %v3069 = vsel %vm1584, %v2319, 0
  %v3072 = vsel %vm1584, %v2320, 0
  %3074 = vmatprep.subr.bf16.mxu0 0
  %3075 = vmatpush1.bf16.msra.mxu0 0
  %3076 = vmatprep.subr.bf16.mxu0 0
  %3077 = vmatpush1.bf16.msra.mxu0 0
  %3078 = vmatprep.subr.bf16.mxu0 0
  %3079 = vmatpush1.bf16.msra.mxu0 0
  %3080 = vmatprep.subr.bf16.mxu0 0
  %3081 = vmatpush1.bf16.msra.mxu0 0
  %3082 = vmatprep.subr.bf16.mxu0 0
  %3083 = vmatpush1.bf16.msra.mxu0 %v3057
  %3084 = vmatprep.subr.bf16.mxu0 0
  %3085 = vmatpush1.bf16.msra.mxu0 %v3055
  %3086 = vmatprep.subr.bf16.mxu0 0
  %3087 = vmatpush1.bf16.msra.mxu0 %v3053
  %3088 = vmatprep.subr.bf16.mxu0 0
  %3089 = vmatpush1.bf16.msra.mxu0 %v3051
  %3090 = vmatprep.subr.bf16.mxu0 0
  %3091 = vmatpush2.bf16.msra.mxu0 0
  %3092 = vmatprep.subr.bf16.mxu0 0
  %3093 = vmatpush2.bf16.msra.mxu0 0
  %3094 = vmatprep.subr.bf16.mxu0 0
  %3095 = vmatpush2.bf16.msra.mxu0 0
  %3096 = vmatprep.subr.bf16.mxu0 0
  %3097 = vmatpush2.bf16.msra.mxu0 0
  %3098 = vmatprep.subr.bf16.mxu0 0
  %3099 = vmatpush2.bf16.msra.mxu0 0
  %3100 = vmatprep.subr.bf16.mxu0 0
  %3101 = vmatpush2.bf16.msra.mxu0 0
  %3102 = vmatprep.subr.bf16.mxu0 0
  %3103 = vmatpush2.bf16.msra.mxu0 0
  %3104 = vmatprep.subr.bf16.mxu0 0
  %3105 = vmatpush2.bf16.msra.mxu0 0
  %3106 = vmatprep.mubr.bf16.mxu0 0
  %3107 = vmatmul.mubr.bf16.gmra.mxu0 %v3063
  %v3108 = vpop.f32.mrf.mxu0
  %v3109 = vadd.f32 0.0, %v3108
  %v3110 = vpop.f32.mrf.mxu0
  %v3111 = vpop.f32.mrf.mxu0
  %v3112 = vadd.f32 0.0, %v3111
  %v3113 = vpop.f32.mrf.mxu0
  %3114 = vmatprep.mubr.bf16.mxu0 0
  %3115 = vmatmul.mubr.bf16.gmra.mxu0 %v3066
  %v3116 = vpop.f32.mrf.mxu0
  %v3117 = vadd.f32 0.0, %v3116
  %v3118 = vpop.f32.mrf.mxu0
  %v3119 = vpop.f32.mrf.mxu0
  %v3120 = vadd.f32 0.0, %v3119
  %v3121 = vpop.f32.mrf.mxu0
  %3122 = vmatprep.mubr.bf16.mxu0 0
  %3123 = vmatmul.mubr.bf16.gmra.mxu0 %v3069
  %v3124 = vpop.f32.mrf.mxu0
  %v3125 = vadd.f32 0.0, %v3124
  %v3126 = vpop.f32.mrf.mxu0
  %v3127 = vpop.f32.mrf.mxu0
  %v3128 = vadd.f32 0.0, %v3127
  %v3129 = vpop.f32.mrf.mxu0
  %3130 = vmatprep.mubr.bf16.mxu0 0
  %3131 = vmatmul.mubr.bf16.gmra.mxu0 %v3072
  %v3132 = vpop.f32.mrf.mxu0
  %v3133 = vadd.f32 0.0, %v3132
  %v3134 = vpop.f32.mrf.mxu0
  %v3135 = vpop.f32.mrf.mxu0
  %v3136 = vadd.f32 0.0, %v3135
  %v3137 = vpop.f32.mrf.mxu0
  %3138 = vdwg.mxu0
  %3147 = vrot.lane.b32.xlu0 %v2931, 8
  %v3148 = vpop.permute.xlu0 %3147
  %3149 = vrot.lane.b32.xlu0 %v2934, 8
  %v3150 = vpop.permute.xlu0 %3149
  %3151 = vrot.lane.b32.xlu0 %v2939, 8
  %v3152 = vpop.permute.xlu0 %3151
  %3153 = vrot.lane.b32.xlu0 %v2942, 8
  %v3154 = vpop.permute.xlu0 %3153
  %3155 = vrot.lane.b32.xlu0 %v2947, 8
  %v3156 = vpop.permute.xlu0 %3155
  %3157 = vrot.lane.b32.xlu0 %v2950, 8
  %v3158 = vpop.permute.xlu0 %3157
  %3159 = vrot.lane.b32.xlu0 %v2955, 8
  %v3160 = vpop.permute.xlu0 %3159
  %3161 = vrot.lane.b32.xlu0 %v2958, 8
  %v3162 = vpop.permute.xlu0 %3161
  %3179 = vrot.lane.b32.xlu0 %v3020, 16
  %v3180 = vpop.permute.xlu0 %3179
  %3181 = vrot.lane.b32.xlu0 %v3023, 16
  %v3182 = vpop.permute.xlu0 %3181
  %3183 = vrot.lane.b32.xlu0 %v3028, 16
  %v3184 = vpop.permute.xlu0 %3183
  %3185 = vrot.lane.b32.xlu0 %v3031, 16
  %v3186 = vpop.permute.xlu0 %3185
  %3187 = vrot.lane.b32.xlu0 %v3036, 16
  %v3188 = vpop.permute.xlu0 %3187
  %3189 = vrot.lane.b32.xlu0 %v3039, 16
  %v3190 = vpop.permute.xlu0 %3189
  %3191 = vrot.lane.b32.xlu0 %v3044, 16
  %v3192 = vpop.permute.xlu0 %3191
  %3193 = vrot.lane.b32.xlu0 %v3047, 16
  %v3194 = vpop.permute.xlu0 %3193
  %3211 = vrot.lane.b32.xlu0 %v3109, 24
  %v3212 = vpop.permute.xlu0 %3211
  %3213 = vrot.lane.b32.xlu0 %v3112, 24
  %v3214 = vpop.permute.xlu0 %3213
  %3215 = vrot.lane.b32.xlu0 %v3117, 24
  %v3216 = vpop.permute.xlu0 %3215
  %3217 = vrot.lane.b32.xlu0 %v3120, 24
  %v3218 = vpop.permute.xlu0 %3217
  %3219 = vrot.lane.b32.xlu0 %v3125, 24
  %v3220 = vpop.permute.xlu0 %3219
  %3221 = vrot.lane.b32.xlu0 %v3128, 24
  %v3222 = vpop.permute.xlu0 %3221
  %3223 = vrot.lane.b32.xlu0 %v3133, 24
  %v3224 = vpop.permute.xlu0 %3223
  %3225 = vrot.lane.b32.xlu0 %v3136, 24
  %v3226 = vpop.permute.xlu0 %3225
  %v3235 = vsel %vm759, %v2838, %v3148
  %v3236 = vsel %vm759, %v2841, %v3150
  %v3237 = vsel %vm759, %v2846, %v3152
  %v3238 = vsel %vm759, %v2849, %v3154
  %v3239 = vsel %vm759, %v2854, %v3156
  %v3240 = vsel %vm759, %v2857, %v3158
  %v3241 = vsel %vm759, %v2862, %v3160
  %v3242 = vsel %vm759, %v2865, %v3162
  %v3243 = vsel %vm2773, %v3235, %v3180
  %v3244 = vsel %vm2773, %v3236, %v3182
  %v3245 = vsel %vm2773, %v3237, %v3184
  %v3246 = vsel %vm2773, %v3238, %v3186
  %v3247 = vsel %vm2773, %v3239, %v3188
  %v3248 = vsel %vm2773, %v3240, %v3190
  %v3249 = vsel %vm2773, %v3241, %v3192
  %v3250 = vsel %vm2773, %v3242, %v3194
  %v3251 = vsel %vm2782, %v3243, %v3212
  %v3252 = vsel %vm2782, %v3244, %v3214
  %v3253 = vsel %vm2782, %v3245, %v3216
  %v3254 = vsel %vm2782, %v3246, %v3218
  %v3255 = vsel %vm2782, %v3247, %v3220
  %v3256 = vsel %vm2782, %v3248, %v3222
  %v3257 = vsel %vm2782, %v3249, %v3224
  %v3258 = vsel %vm2782, %v3250, %v3226
  %v3259 = vpack.c.bf16 %v2784, %v2783
  %v3260 = vpack.c.bf16 %v2786, %v2785
  %v3261 = vpack.c.bf16 %v2788, %v2787
  %v3262 = vpack.c.bf16 %v2790, %v2789
  %v3263 = vpack.c.bf16 %v3252, %v3251
  %v3264 = vpack.c.bf16 %v3254, %v3253
  %v3265 = vpack.c.bf16 %v3256, %v3255
  %v3266 = vpack.c.bf16 %v3258, %v3257
  %v3267 = vld [vmem:[%s1 + $0x100] sm:$0xf]
  %v3268 = vld [vmem:[%s1 + $0x104] sm:$0xf]
  %v3269 = vld [vmem:[%s1 + $0x108] sm:$0xf]
  %v3270 = vld [vmem:[%s1 + $0x10c] sm:$0xf]
  %v3271 = vld [vmem:[%s2 + $0x4c] sm:$0x1]
  %v3272 = vlaneseq
  %v3273 = vshrl.u32 %v3272, 7
  %v3274 = vsub.s32 0, %v3273
  %v3275 = vrot.slane %v3271, %v3274
  %v3280 = vunpack.c.l.b16 %v3267
  %v3281 = vunpack.c.l.b16 %v3268
  %v3282 = vunpack.c.l.b16 %v3269
  %v3283 = vunpack.c.l.b16 %v3270
  %v3284 = vpack.c.b16 %v3281, %v3280
  %v3285 = vpack.c.b16 %v3283, %v3282
  %vm3288 = vcmask 261120
  %v3290 = vsel %vm3288, %v3259, 0
  %v3293 = vsel %vm3288, %v3260, 0
  %v3296 = vsel %vm3288, %v3261, 0
  %v3299 = vsel %vm3288, %v3262, 0
  %v3302 = vsel %vm3288, %v3263, 0
  %v3305 = vsel %vm3288, %v3264, 0
  %v3308 = vsel %vm3288, %v3265, 0
  %v3311 = vsel %vm3288, %v3266, 0
  %3313 = vmatprep.subr.bf16.mxu0 0
  %3314 = vmatpush1.bf16.msra.mxu0 0
  %3315 = vmatprep.subr.bf16.mxu0 0
  %3316 = vmatpush1.bf16.msra.mxu0 0
  %3317 = vmatprep.subr.bf16.mxu0 0
  %3318 = vmatpush1.bf16.msra.mxu0 0
  %3319 = vmatprep.subr.bf16.mxu0 0
  %3320 = vmatpush1.bf16.msra.mxu0 0
  %3321 = vmatprep.subr.bf16.mxu0 0
  %3322 = vmatpush1.bf16.msra.mxu0 0
  %3323 = vmatprep.subr.bf16.mxu0 0
  %3324 = vmatpush1.bf16.msra.mxu0 0
  %3325 = vmatprep.subr.bf16.mxu0 0
  %3326 = vmatpush1.bf16.msra.mxu0 %v3285
  %3327 = vmatprep.subr.bf16.mxu0 0
  %3328 = vmatpush1.bf16.msra.mxu0 %v3284
  %3329 = vmatprep.subr.bf16.mxu0 0
  %3330 = vmatpush2.bf16.msra.mxu0 0
  %3331 = vmatprep.subr.bf16.mxu0 0
  %3332 = vmatpush2.bf16.msra.mxu0 0
  %3333 = vmatprep.subr.bf16.mxu0 0
  %3334 = vmatpush2.bf16.msra.mxu0 0
  %3335 = vmatprep.subr.bf16.mxu0 0
  %3336 = vmatpush2.bf16.msra.mxu0 0
  %3337 = vmatprep.subr.bf16.mxu0 0
  %3338 = vmatpush2.bf16.msra.mxu0 0
  %3339 = vmatprep.subr.bf16.mxu0 0
  %3340 = vmatpush2.bf16.msra.mxu0 0
  %3341 = vmatprep.subr.bf16.mxu0 0
  %3342 = vmatpush2.bf16.msra.mxu0 0
  %3343 = vmatprep.subr.bf16.mxu0 0
  %3344 = vmatpush2.bf16.msra.mxu0 0
  %3345 = vmatprep.mubr.bf16.mxu0 0
  %3346 = vmatmul.mubr.bf16.gmra.mxu0 %v3290
  %v3347 = vpop.f32.mrf.mxu0
  %v3348 = vadd.f32 %v3275, %v3347
  %v3349 = vpop.f32.mrf.mxu0
  %v3350 = vpop.f32.mrf.mxu0
  %v3351 = vadd.f32 %v3275, %v3350
  %v3352 = vpop.f32.mrf.mxu0
  %3353 = vmatprep.mubr.bf16.mxu0 0
  %3354 = vmatmul.mubr.bf16.gmra.mxu0 %v3293
  %v3355 = vpop.f32.mrf.mxu0
  %v3356 = vadd.f32 %v3275, %v3355
  %v3357 = vpop.f32.mrf.mxu0
  %v3358 = vpop.f32.mrf.mxu0
  %v3359 = vadd.f32 %v3275, %v3358
  %v3360 = vpop.f32.mrf.mxu0
  %3361 = vmatprep.mubr.bf16.mxu0 0
  %3362 = vmatmul.mubr.bf16.gmra.mxu0 %v3296
  %v3363 = vpop.f32.mrf.mxu0
  %v3364 = vadd.f32 %v3275, %v3363
  %v3365 = vpop.f32.mrf.mxu0
  %v3366 = vpop.f32.mrf.mxu0
  %v3367 = vadd.f32 %v3275, %v3366
  %v3368 = vpop.f32.mrf.mxu0
  %3369 = vmatprep.mubr.bf16.mxu0 0
  %3370 = vmatmul.mubr.bf16.gmra.mxu0 %v3299
  %v3371 = vpop.f32.mrf.mxu0
  %v3372 = vadd.f32 %v3275, %v3371
  %v3373 = vpop.f32.mrf.mxu0
  %v3374 = vpop.f32.mrf.mxu0
  %v3375 = vadd.f32 %v3275, %v3374
  %v3376 = vpop.f32.mrf.mxu0
  %3377 = vmatprep.mubr.bf16.mxu0 0
  %3378 = vmatmul.mubr.bf16.gmra.mxu0 %v3302
  %v3379 = vpop.f32.mrf.mxu0
  %v3380 = vadd.f32 %v3275, %v3379
  %v3381 = vpop.f32.mrf.mxu0
  %v3382 = vpop.f32.mrf.mxu0
  %v3383 = vadd.f32 %v3275, %v3382
  %v3384 = vpop.f32.mrf.mxu0
  %3385 = vmatprep.mubr.bf16.mxu0 0
  %3386 = vmatmul.mubr.bf16.gmra.mxu0 %v3305
  %v3387 = vpop.f32.mrf.mxu0
  %v3388 = vadd.f32 %v3275, %v3387
  %v3389 = vpop.f32.mrf.mxu0
  %v3390 = vpop.f32.mrf.mxu0
  %v3391 = vadd.f32 %v3275, %v3390
  %v3392 = vpop.f32.mrf.mxu0
  %3393 = vmatprep.mubr.bf16.mxu0 0
  %3394 = vmatmul.mubr.bf16.gmra.mxu0 %v3308
  %v3395 = vpop.f32.mrf.mxu0
  %v3396 = vadd.f32 %v3275, %v3395
  %v3397 = vpop.f32.mrf.mxu0
  %v3398 = vpop.f32.mrf.mxu0
  %v3399 = vadd.f32 %v3275, %v3398
  %v3400 = vpop.f32.mrf.mxu0
  %3401 = vmatprep.mubr.bf16.mxu0 0
  %3402 = vmatmul.mubr.bf16.gmra.mxu0 %v3311
  %v3403 = vpop.f32.mrf.mxu0
  %v3404 = vadd.f32 %v3275, %v3403
  %v3405 = vpop.f32.mrf.mxu0
  %v3406 = vpop.f32.mrf.mxu0
  %v3407 = vadd.f32 %v3275, %v3406
  %v3408 = vpop.f32.mrf.mxu0
  %3409 = vdwg.mxu0
  %v3410 = vadd.f32 %v213, %v3348
  %v3411 = vadd.f32 %v214, %v3351
  %v3412 = vadd.f32 %v215, %v3356
  %v3413 = vadd.f32 %v216, %v3359
  %v3414 = vadd.f32 %v217, %v3364
  %v3415 = vadd.f32 %v218, %v3367
  %v3416 = vadd.f32 %v219, %v3372
  %v3417 = vadd.f32 %v220, %v3375
  %v3418 = vadd.f32 %v221, %v3380
  %v3419 = vadd.f32 %v222, %v3383
  %v3420 = vadd.f32 %v223, %v3388
  %v3421 = vadd.f32 %v224, %v3391
  %v3422 = vadd.f32 %v225, %v3396
  %v3423 = vadd.f32 %v226, %v3399
  %v3424 = vadd.f32 %v227, %v3404
  %v3425 = vadd.f32 %v228, %v3407
  %3426 = vadd.xlane.f32.xlu0 %v3410
  %v3427 = vpop.xlane.xlu0 %3426
  %3428 = vadd.xlane.f32.xlu0 %v3411
  %v3429 = vpop.xlane.xlu0 %3428
  %3430 = vadd.xlane.f32.xlu0 %v3412
  %v3431 = vpop.xlane.xlu0 %3430
  %3432 = vadd.xlane.f32.xlu0 %v3413
  %v3433 = vpop.xlane.xlu0 %3432
  %3434 = vadd.xlane.f32.xlu0 %v3414
  %v3435 = vpop.xlane.xlu0 %3434
  %3436 = vadd.xlane.f32.xlu0 %v3415
  %v3437 = vpop.xlane.xlu0 %3436
  %3438 = vadd.xlane.f32.xlu0 %v3416
  %v3439 = vpop.xlane.xlu0 %3438
  %3440 = vadd.xlane.f32.xlu0 %v3417
  %v3441 = vpop.xlane.xlu0 %3440
  %3442 = vadd.xlane.f32.xlu0 %v3418
  %v3443 = vpop.xlane.xlu0 %3442
  %3444 = vadd.xlane.f32.xlu0 %v3419
  %v3445 = vpop.xlane.xlu0 %3444
  %3446 = vadd.xlane.f32.xlu0 %v3420
  %v3447 = vpop.xlane.xlu0 %3446
  %3448 = vadd.xlane.f32.xlu0 %v3421
  %v3449 = vpop.xlane.xlu0 %3448
  %3450 = vadd.xlane.f32.xlu0 %v3422
  %v3451 = vpop.xlane.xlu0 %3450
  %3452 = vadd.xlane.f32.xlu0 %v3423
  %v3453 = vpop.xlane.xlu0 %3452
  %3454 = vadd.xlane.f32.xlu0 %v3424
  %v3455 = vpop.xlane.xlu0 %3454
  %3456 = vadd.xlane.f32.xlu0 %v3425
  %v3457 = vpop.xlane.xlu0 %3456
  %v3458 = vmul.f32 %v3427, 0.03125
  %v3459 = vmul.f32 %v3429, 0.03125
  %v3460 = vmul.f32 %v3431, 0.03125
  %v3461 = vmul.f32 %v3433, 0.03125
  %v3462 = vmul.f32 %v3435, 0.03125
  %v3463 = vmul.f32 %v3437, 0.03125
  %v3464 = vmul.f32 %v3439, 0.03125
  %v3465 = vmul.f32 %v3441, 0.03125
  %v3466 = vmul.f32 %v3443, 0.03125
  %v3467 = vmul.f32 %v3445, 0.03125
  %v3468 = vmul.f32 %v3447, 0.03125
  %v3469 = vmul.f32 %v3449, 0.03125
  %v3470 = vmul.f32 %v3451, 0.03125
  %v3471 = vmul.f32 %v3453, 0.03125
  %v3472 = vmul.f32 %v3455, 0.03125
  %v3473 = vmul.f32 %v3457, 0.03125
  %v3474 = vmul.f32 %v3410, %v3410
  %v3475 = vmul.f32 %v3411, %v3411
  %v3476 = vmul.f32 %v3412, %v3412
  %v3477 = vmul.f32 %v3413, %v3413
  %v3478 = vmul.f32 %v3414, %v3414
  %v3479 = vmul.f32 %v3415, %v3415
  %v3480 = vmul.f32 %v3416, %v3416
  %v3481 = vmul.f32 %v3417, %v3417
  %v3482 = vmul.f32 %v3418, %v3418
  %v3483 = vmul.f32 %v3419, %v3419
  %v3484 = vmul.f32 %v3420, %v3420
  %v3485 = vmul.f32 %v3421, %v3421
  %v3486 = vmul.f32 %v3422, %v3422
  %v3487 = vmul.f32 %v3423, %v3423
  %v3488 = vmul.f32 %v3424, %v3424
  %v3489 = vmul.f32 %v3425, %v3425
  %3490 = vadd.xlane.f32.xlu0 %v3474
  %v3491 = vpop.xlane.xlu0 %3490
  %3492 = vadd.xlane.f32.xlu0 %v3475
  %v3493 = vpop.xlane.xlu0 %3492
  %3494 = vadd.xlane.f32.xlu0 %v3476
  %v3495 = vpop.xlane.xlu0 %3494
  %3496 = vadd.xlane.f32.xlu0 %v3477
  %v3497 = vpop.xlane.xlu0 %3496
  %3498 = vadd.xlane.f32.xlu0 %v3478
  %v3499 = vpop.xlane.xlu0 %3498
  %3500 = vadd.xlane.f32.xlu0 %v3479
  %v3501 = vpop.xlane.xlu0 %3500
  %3502 = vadd.xlane.f32.xlu0 %v3480
  %v3503 = vpop.xlane.xlu0 %3502
  %3504 = vadd.xlane.f32.xlu0 %v3481
  %v3505 = vpop.xlane.xlu0 %3504
  %3506 = vadd.xlane.f32.xlu0 %v3482
  %v3507 = vpop.xlane.xlu0 %3506
  %3508 = vadd.xlane.f32.xlu0 %v3483
  %v3509 = vpop.xlane.xlu0 %3508
  %3510 = vadd.xlane.f32.xlu0 %v3484
  %v3511 = vpop.xlane.xlu0 %3510
  %3512 = vadd.xlane.f32.xlu0 %v3485
  %v3513 = vpop.xlane.xlu0 %3512
  %3514 = vadd.xlane.f32.xlu0 %v3486
  %v3515 = vpop.xlane.xlu0 %3514
  %3516 = vadd.xlane.f32.xlu0 %v3487
  %v3517 = vpop.xlane.xlu0 %3516
  %3518 = vadd.xlane.f32.xlu0 %v3488
  %v3519 = vpop.xlane.xlu0 %3518
  %3520 = vadd.xlane.f32.xlu0 %v3489
  %v3521 = vpop.xlane.xlu0 %3520
  %v3522 = vmul.f32 %v3491, 0.03125
  %v3523 = vmul.f32 %v3493, 0.03125
  %v3524 = vmul.f32 %v3495, 0.03125
  %v3525 = vmul.f32 %v3497, 0.03125
  %v3526 = vmul.f32 %v3499, 0.03125
  %v3527 = vmul.f32 %v3501, 0.03125
  %v3528 = vmul.f32 %v3503, 0.03125
  %v3529 = vmul.f32 %v3505, 0.03125
  %v3530 = vmul.f32 %v3507, 0.03125
  %v3531 = vmul.f32 %v3509, 0.03125
  %v3532 = vmul.f32 %v3511, 0.03125
  %v3533 = vmul.f32 %v3513, 0.03125
  %v3534 = vmul.f32 %v3515, 0.03125
  %v3535 = vmul.f32 %v3517, 0.03125
  %v3536 = vmul.f32 %v3519, 0.03125
  %v3537 = vmul.f32 %v3521, 0.03125
  %v3538 = vmul.f32 %v3458, %v3458
  %v3539 = vmul.f32 %v3459, %v3459
  %v3540 = vmul.f32 %v3460, %v3460
  %v3541 = vmul.f32 %v3461, %v3461
  %v3542 = vmul.f32 %v3462, %v3462
  %v3543 = vmul.f32 %v3463, %v3463
  %v3544 = vmul.f32 %v3464, %v3464
  %v3545 = vmul.f32 %v3465, %v3465
  %v3546 = vmul.f32 %v3466, %v3466
  %v3547 = vmul.f32 %v3467, %v3467
  %v3548 = vmul.f32 %v3468, %v3468
  %v3549 = vmul.f32 %v3469, %v3469
  %v3550 = vmul.f32 %v3470, %v3470
  %v3551 = vmul.f32 %v3471, %v3471
  %v3552 = vmul.f32 %v3472, %v3472
  %v3553 = vmul.f32 %v3473, %v3473
  %v3554 = vsub.f32 %v3522, %v3538
  %v3555 = vsub.f32 %v3523, %v3539
  %v3556 = vsub.f32 %v3524, %v3540
  %v3557 = vsub.f32 %v3525, %v3541
  %v3558 = vsub.f32 %v3526, %v3542
  %v3559 = vsub.f32 %v3527, %v3543
  %v3560 = vsub.f32 %v3528, %v3544
  %v3561 = vsub.f32 %v3529, %v3545
  %v3562 = vsub.f32 %v3530, %v3546
  %v3563 = vsub.f32 %v3531, %v3547
  %v3564 = vsub.f32 %v3532, %v3548
  %v3565 = vsub.f32 %v3533, %v3549
  %v3566 = vsub.f32 %v3534, %v3550
  %v3567 = vsub.f32 %v3535, %v3551
  %v3568 = vsub.f32 %v3536, %v3552
  %v3569 = vsub.f32 %v3537, %v3553
  %v3570 = vsub.f32 %v3410, %v3458
  %v3571 = vsub.f32 %v3411, %v3459
  %v3572 = vsub.f32 %v3412, %v3460
  %v3573 = vsub.f32 %v3413, %v3461
  %v3574 = vsub.f32 %v3414, %v3462
  %v3575 = vsub.f32 %v3415, %v3463
  %v3576 = vsub.f32 %v3416, %v3464
  %v3577 = vsub.f32 %v3417, %v3465
  %v3578 = vsub.f32 %v3418, %v3466
  %v3579 = vsub.f32 %v3419, %v3467
  %v3580 = vsub.f32 %v3420, %v3468
  %v3581 = vsub.f32 %v3421, %v3469
  %v3582 = vsub.f32 %v3422, %v3470
  %v3583 = vsub.f32 %v3423, %v3471
  %v3584 = vsub.f32 %v3424, %v3472
  %v3585 = vsub.f32 %v3425, %v3473
  %v3586 = vadd.f32 %v3554, 1e-05
  %v3587 = vadd.f32 %v3555, 1e-05
  %v3588 = vadd.f32 %v3556, 1e-05
  %v3589 = vadd.f32 %v3557, 1e-05
  %v3590 = vadd.f32 %v3558, 1e-05
  %v3591 = vadd.f32 %v3559, 1e-05
  %v3592 = vadd.f32 %v3560, 1e-05
  %v3593 = vadd.f32 %v3561, 1e-05
  %v3594 = vadd.f32 %v3562, 1e-05
  %v3595 = vadd.f32 %v3563, 1e-05
  %v3596 = vadd.f32 %v3564, 1e-05
  %v3597 = vadd.f32 %v3565, 1e-05
  %v3598 = vadd.f32 %v3566, 1e-05
  %v3599 = vadd.f32 %v3567, 1e-05
  %v3600 = vadd.f32 %v3568, 1e-05
  %v3601 = vadd.f32 %v3569, 1e-05
  %v3602 = vrsqrt.pop %v3586
  %v3603 = vrsqrt.pop %v3587
  %v3604 = vrsqrt.pop %v3588
  %v3605 = vrsqrt.pop %v3589
  %v3606 = vrsqrt.pop %v3590
  %v3607 = vrsqrt.pop %v3591
  %v3608 = vrsqrt.pop %v3592
  %v3609 = vrsqrt.pop %v3593
  %v3610 = vrsqrt.pop %v3594
  %v3611 = vrsqrt.pop %v3595
  %v3612 = vrsqrt.pop %v3596
  %v3613 = vrsqrt.pop %v3597
  %v3614 = vrsqrt.pop %v3598
  %v3615 = vrsqrt.pop %v3599
  %v3616 = vrsqrt.pop %v3600
  %v3617 = vrsqrt.pop %v3601
  %v3618 = vmul.f32 %v3570, %v3602
  %v3619 = vmul.f32 %v3571, %v3603
  %v3620 = vmul.f32 %v3572, %v3604
  %v3621 = vmul.f32 %v3573, %v3605
  %v3622 = vmul.f32 %v3574, %v3606
  %v3623 = vmul.f32 %v3575, %v3607
  %v3624 = vmul.f32 %v3576, %v3608
  %v3625 = vmul.f32 %v3577, %v3609
  %v3626 = vmul.f32 %v3578, %v3610
  %v3627 = vmul.f32 %v3579, %v3611
  %v3628 = vmul.f32 %v3580, %v3612
  %v3629 = vmul.f32 %v3581, %v3613
  %v3630 = vmul.f32 %v3582, %v3614
  %v3631 = vmul.f32 %v3583, %v3615
  %v3632 = vmul.f32 %v3584, %v3616
  %v3633 = vmul.f32 %v3585, %v3617
  %v3634 = vld [vmem:[%s2 + $0x4d] sm:$0x1]
  %v3635 = vlaneseq
  %v3636 = vshrl.u32 %v3635, 7
  %v3637 = vsub.s32 0, %v3636
  %v3638 = vrot.slane %v3634, %v3637
  %v3639 = vmul.f32 %v3618, %v3638
  %v3640 = vmul.f32 %v3619, %v3638
  %v3641 = vmul.f32 %v3620, %v3638
  %v3642 = vmul.f32 %v3621, %v3638
  %v3643 = vmul.f32 %v3622, %v3638
  %v3644 = vmul.f32 %v3623, %v3638
  %v3645 = vmul.f32 %v3624, %v3638
  %v3646 = vmul.f32 %v3625, %v3638
  %v3647 = vmul.f32 %v3626, %v3638
  %v3648 = vmul.f32 %v3627, %v3638
  %v3649 = vmul.f32 %v3628, %v3638
  %v3650 = vmul.f32 %v3629, %v3638
  %v3651 = vmul.f32 %v3630, %v3638
  %v3652 = vmul.f32 %v3631, %v3638
  %v3653 = vmul.f32 %v3632, %v3638
  %v3654 = vmul.f32 %v3633, %v3638
  %v3655 = vld [vmem:[%s2 + $0x4e] sm:$0x1]
  %v3656 = vlaneseq
  %v3657 = vshrl.u32 %v3656, 7
  %v3658 = vsub.s32 0, %v3657
  %v3659 = vrot.slane %v3655, %v3658
  %v3660 = vadd.f32 %v3639, %v3659
  %v3661 = vadd.f32 %v3640, %v3659
  %v3662 = vadd.f32 %v3641, %v3659
  %v3663 = vadd.f32 %v3642, %v3659
  %v3664 = vadd.f32 %v3643, %v3659
  %v3665 = vadd.f32 %v3644, %v3659
  %v3666 = vadd.f32 %v3645, %v3659
  %v3667 = vadd.f32 %v3646, %v3659
  %v3668 = vadd.f32 %v3647, %v3659
  %v3669 = vadd.f32 %v3648, %v3659
  %v3670 = vadd.f32 %v3649, %v3659
  %v3671 = vadd.f32 %v3650, %v3659
  %v3672 = vadd.f32 %v3651, %v3659
  %v3673 = vadd.f32 %v3652, %v3659
  %v3674 = vadd.f32 %v3653, %v3659
  %v3675 = vadd.f32 %v3654, %v3659
  %v3676 = vpack.c.bf16 %v3661, %v3660
  %v3677 = vpack.c.bf16 %v3663, %v3662
  %v3678 = vpack.c.bf16 %v3665, %v3664
  %v3679 = vpack.c.bf16 %v3667, %v3666
  %v3680 = vpack.c.bf16 %v3669, %v3668
  %v3681 = vpack.c.bf16 %v3671, %v3670
  %v3682 = vpack.c.bf16 %v3673, %v3672
  %v3683 = vpack.c.bf16 %v3675, %v3674
  %v3684 = vld [vmem:[%s1 + $0x140] sm:$0xf]
  %v3685 = vld [vmem:[%s1 + $0x144] sm:$0xf]
  %v3686 = vld [vmem:[%s1 + $0x148] sm:$0xf]
  %v3687 = vld [vmem:[%s1 + $0x14c] sm:$0xf]
  %v3688 = vld [vmem:[%s1 + $0x150] sm:$0xf]
  %v3689 = vld [vmem:[%s1 + $0x154] sm:$0xf]
  %v3690 = vld [vmem:[%s1 + $0x158] sm:$0xf]
  %v3691 = vld [vmem:[%s1 + $0x15c] sm:$0xf]
  %v3692 = vld [vmem:[%s1 + $0x160] sm:$0xf]
  %v3693 = vld [vmem:[%s1 + $0x164] sm:$0xf]
  %v3694 = vld [vmem:[%s1 + $0x168] sm:$0xf]
  %v3695 = vld [vmem:[%s1 + $0x16c] sm:$0xf]
  %v3696 = vld [vmem:[%s1 + $0x170] sm:$0xf]
  %v3697 = vld [vmem:[%s1 + $0x174] sm:$0xf]
  %v3698 = vld [vmem:[%s1 + $0x178] sm:$0xf]
  %v3699 = vld [vmem:[%s1 + $0x17c] sm:$0xf]
  %v3700 = vld [vmem:[%s2 + $0x4f] sm:$0x1]
  %v3701 = vlaneseq
  %v3702 = vshrl.u32 %v3701, 7
  %v3703 = vsub.s32 0, %v3702
  %v3704 = vrot.slane %v3700, %v3703
  %v3721 = vunpack.c.l.b16 %v3684
  %v3722 = vunpack.c.l.b16 %v3685
  %v3723 = vunpack.c.l.b16 %v3686
  %v3724 = vunpack.c.l.b16 %v3687
  %v3725 = vunpack.c.l.b16 %v3688
  %v3726 = vunpack.c.l.b16 %v3689
  %v3727 = vunpack.c.l.b16 %v3690
  %v3728 = vunpack.c.l.b16 %v3691
  %v3729 = vunpack.c.l.b16 %v3692
  %v3730 = vunpack.c.l.b16 %v3693
  %v3731 = vunpack.c.l.b16 %v3694
  %v3732 = vunpack.c.l.b16 %v3695
  %v3733 = vunpack.c.l.b16 %v3696
  %v3734 = vunpack.c.l.b16 %v3697
  %v3735 = vunpack.c.l.b16 %v3698
  %v3736 = vunpack.c.l.b16 %v3699
  %v3737 = vpack.c.b16 %v3722, %v3721
  %v3738 = vpack.c.b16 %v3724, %v3723
  %v3739 = vpack.c.b16 %v3726, %v3725
  %v3740 = vpack.c.b16 %v3728, %v3727
  %v3741 = vpack.c.b16 %v3730, %v3729
  %v3742 = vpack.c.b16 %v3732, %v3731
  %v3743 = vpack.c.b16 %v3734, %v3733
  %v3744 = vpack.c.b16 %v3736, %v3735
  %3753 = vmatprep.subr.bf16.mxu0 0
  %3754 = vmatpush1.bf16.msra.mxu0 %v3744
  %3755 = vmatprep.subr.bf16.mxu0 0
  %3756 = vmatpush1.bf16.msra.mxu0 %v3743
  %3757 = vmatprep.subr.bf16.mxu0 0
  %3758 = vmatpush1.bf16.msra.mxu0 %v3742
  %3759 = vmatprep.subr.bf16.mxu0 0
  %3760 = vmatpush1.bf16.msra.mxu0 %v3741
  %3761 = vmatprep.subr.bf16.mxu0 0
  %3762 = vmatpush1.bf16.msra.mxu0 %v3740
  %3763 = vmatprep.subr.bf16.mxu0 0
  %3764 = vmatpush1.bf16.msra.mxu0 %v3739
  %3765 = vmatprep.subr.bf16.mxu0 0
  %3766 = vmatpush1.bf16.msra.mxu0 %v3738
  %3767 = vmatprep.subr.bf16.mxu0 0
  %3768 = vmatpush1.bf16.msra.mxu0 %v3737
  %3769 = vmatprep.subr.bf16.mxu0 0
  %3770 = vmatpush2.bf16.msra.mxu0 0
  %3771 = vmatprep.subr.bf16.mxu0 0
  %3772 = vmatpush2.bf16.msra.mxu0 0
  %3773 = vmatprep.subr.bf16.mxu0 0
  %3774 = vmatpush2.bf16.msra.mxu0 0
  %3775 = vmatprep.subr.bf16.mxu0 0
  %3776 = vmatpush2.bf16.msra.mxu0 0
  %3777 = vmatprep.subr.bf16.mxu0 0
  %3778 = vmatpush2.bf16.msra.mxu0 0
  %3779 = vmatprep.subr.bf16.mxu0 0
  %3780 = vmatpush2.bf16.msra.mxu0 0
  %3781 = vmatprep.subr.bf16.mxu0 0
  %3782 = vmatpush2.bf16.msra.mxu0 0
  %3783 = vmatprep.subr.bf16.mxu0 0
  %3784 = vmatpush2.bf16.msra.mxu0 0
  %3785 = vmatprep.mubr.bf16.mxu0 0
  %3786 = vmatmul.mubr.bf16.gmra.mxu0 %v3676
  %v3787 = vpop.f32.mrf.mxu0
  %v3788 = vadd.f32 %v3704, %v3787
  %v3789 = vpop.f32.mrf.mxu0
  %v3790 = vpop.f32.mrf.mxu0
  %v3791 = vadd.f32 %v3704, %v3790
  %v3792 = vpop.f32.mrf.mxu0
  %3793 = vmatprep.mubr.bf16.mxu0 0
  %3794 = vmatmul.mubr.bf16.gmra.mxu0 %v3677
  %v3795 = vpop.f32.mrf.mxu0
  %v3796 = vadd.f32 %v3704, %v3795
  %v3797 = vpop.f32.mrf.mxu0
  %v3798 = vpop.f32.mrf.mxu0
  %v3799 = vadd.f32 %v3704, %v3798
  %v3800 = vpop.f32.mrf.mxu0
  %3801 = vmatprep.mubr.bf16.mxu0 0
  %3802 = vmatmul.mubr.bf16.gmra.mxu0 %v3678
  %v3803 = vpop.f32.mrf.mxu0
  %v3804 = vadd.f32 %v3704, %v3803
  %v3805 = vpop.f32.mrf.mxu0
  %v3806 = vpop.f32.mrf.mxu0
  %v3807 = vadd.f32 %v3704, %v3806
  %v3808 = vpop.f32.mrf.mxu0
  %3809 = vmatprep.mubr.bf16.mxu0 0
  %3810 = vmatmul.mubr.bf16.gmra.mxu0 %v3679
  %v3811 = vpop.f32.mrf.mxu0
  %v3812 = vadd.f32 %v3704, %v3811
  %v3813 = vpop.f32.mrf.mxu0
  %v3814 = vpop.f32.mrf.mxu0
  %v3815 = vadd.f32 %v3704, %v3814
  %v3816 = vpop.f32.mrf.mxu0
  %3817 = vmatprep.mubr.bf16.mxu0 0
  %3818 = vmatmul.mubr.bf16.gmra.mxu0 %v3680
  %v3819 = vpop.f32.mrf.mxu0
  %v3820 = vadd.f32 %v3704, %v3819
  %v3821 = vpop.f32.mrf.mxu0
  %v3822 = vpop.f32.mrf.mxu0
  %v3823 = vadd.f32 %v3704, %v3822
  %v3824 = vpop.f32.mrf.mxu0
  %3825 = vmatprep.mubr.bf16.mxu0 0
  %3826 = vmatmul.mubr.bf16.gmra.mxu0 %v3681
  %v3827 = vpop.f32.mrf.mxu0
  %v3828 = vadd.f32 %v3704, %v3827
  %v3829 = vpop.f32.mrf.mxu0
  %v3830 = vpop.f32.mrf.mxu0
  %v3831 = vadd.f32 %v3704, %v3830
  %v3832 = vpop.f32.mrf.mxu0
  %3833 = vmatprep.mubr.bf16.mxu0 0
  %3834 = vmatmul.mubr.bf16.gmra.mxu0 %v3682
  %v3835 = vpop.f32.mrf.mxu0
  %v3836 = vadd.f32 %v3704, %v3835
  %v3837 = vpop.f32.mrf.mxu0
  %v3838 = vpop.f32.mrf.mxu0
  %v3839 = vadd.f32 %v3704, %v3838
  %v3840 = vpop.f32.mrf.mxu0
  %3841 = vmatprep.mubr.bf16.mxu0 0
  %3842 = vmatmul.mubr.bf16.gmra.mxu0 %v3683
  %v3843 = vpop.f32.mrf.mxu0
  %v3844 = vadd.f32 %v3704, %v3843
  %v3845 = vpop.f32.mrf.mxu0
  %v3846 = vpop.f32.mrf.mxu0
  %v3847 = vadd.f32 %v3704, %v3846
  %v3848 = vpop.f32.mrf.mxu0
  %3849 = vdwg.mxu0
  %v3850 = vmax.f32 %v3788, 0.0
  %v3851 = vmax.f32 %v3791, 0.0
  %v3852 = vmax.f32 %v3796, 0.0
  %v3853 = vmax.f32 %v3799, 0.0
  %v3854 = vmax.f32 %v3804, 0.0
  %v3855 = vmax.f32 %v3807, 0.0
  %v3856 = vmax.f32 %v3812, 0.0
  %v3857 = vmax.f32 %v3815, 0.0
  %v3858 = vmax.f32 %v3820, 0.0
  %v3859 = vmax.f32 %v3823, 0.0
  %v3860 = vmax.f32 %v3828, 0.0
  %v3861 = vmax.f32 %v3831, 0.0
  %v3862 = vmax.f32 %v3836, 0.0
  %v3863 = vmax.f32 %v3839, 0.0
  %v3864 = vmax.f32 %v3844, 0.0
  %v3865 = vmax.f32 %v3847, 0.0
  %v3866 = vpack.c.bf16 %v3851, %v3850
  %v3867 = vpack.c.bf16 %v3853, %v3852
  %v3868 = vpack.c.bf16 %v3855, %v3854
  %v3869 = vpack.c.bf16 %v3857, %v3856
  %v3870 = vpack.c.bf16 %v3859, %v3858
  %v3871 = vpack.c.bf16 %v3861, %v3860
  %v3872 = vpack.c.bf16 %v3863, %v3862
  %v3873 = vpack.c.bf16 %v3865, %v3864
  %v3874 = vld [vmem:[%s1 + $0x180] sm:$0xf]
  %v3875 = vld [vmem:[%s1 + $0x184] sm:$0xf]
  %v3876 = vld [vmem:[%s1 + $0x188] sm:$0xf]
  %v3877 = vld [vmem:[%s1 + $0x18c] sm:$0xf]
  %v3878 = vld [vmem:[%s1 + $0x190] sm:$0xf]
  %v3879 = vld [vmem:[%s1 + $0x194] sm:$0xf]
  %v3880 = vld [vmem:[%s1 + $0x198] sm:$0xf]
  %v3881 = vld [vmem:[%s1 + $0x19c] sm:$0xf]
  %v3882 = vld [vmem:[%s1 + $0x1a0] sm:$0xf]
  %v3883 = vld [vmem:[%s1 + $0x1a4] sm:$0xf]
  %v3884 = vld [vmem:[%s1 + $0x1a8] sm:$0xf]
  %v3885 = vld [vmem:[%s1 + $0x1ac] sm:$0xf]
  %v3886 = vld [vmem:[%s1 + $0x1b0] sm:$0xf]
  %v3887 = vld [vmem:[%s1 + $0x1b4] sm:$0xf]
  %v3888 = vld [vmem:[%s1 + $0x1b8] sm:$0xf]
  %v3889 = vld [vmem:[%s1 + $0x1bc] sm:$0xf]
  %v3890 = vld [vmem:[%s2 + $0x50] sm:$0x1]
  %v3891 = vlaneseq
  %v3892 = vshrl.u32 %v3891, 7
  %v3893 = vsub.s32 0, %v3892
  %v3894 = vrot.slane %v3890, %v3893
  %v3911 = vunpack.c.l.b16 %v3874
  %v3912 = vunpack.c.l.b16 %v3875
  %v3913 = vunpack.c.l.b16 %v3876
  %v3914 = vunpack.c.l.b16 %v3877
  %v3915 = vunpack.c.l.b16 %v3878
  %v3916 = vunpack.c.l.b16 %v3879
  %v3917 = vunpack.c.l.b16 %v3880
  %v3918 = vunpack.c.l.b16 %v3881
  %v3919 = vunpack.c.l.b16 %v3882
  %v3920 = vunpack.c.l.b16 %v3883
  %v3921 = vunpack.c.l.b16 %v3884
  %v3922 = vunpack.c.l.b16 %v3885
  %v3923 = vunpack.c.l.b16 %v3886
  %v3924 = vunpack.c.l.b16 %v3887
  %v3925 = vunpack.c.l.b16 %v3888
  %v3926 = vunpack.c.l.b16 %v3889
  %v3927 = vpack.c.b16 %v3912, %v3911
  %v3928 = vpack.c.b16 %v3914, %v3913
  %v3929 = vpack.c.b16 %v3916, %v3915
  %v3930 = vpack.c.b16 %v3918, %v3917
  %v3931 = vpack.c.b16 %v3920, %v3919
  %v3932 = vpack.c.b16 %v3922, %v3921
  %v3933 = vpack.c.b16 %v3924, %v3923
  %v3934 = vpack.c.b16 %v3926, %v3925
  %3943 = vmatprep.subr.bf16.mxu0 0
  %3944 = vmatpush1.bf16.msra.mxu0 %v3934
  %3945 = vmatprep.subr.bf16.mxu0 0
  %3946 = vmatpush1.bf16.msra.mxu0 %v3933
  %3947 = vmatprep.subr.bf16.mxu0 0
  %3948 = vmatpush1.bf16.msra.mxu0 %v3932
  %3949 = vmatprep.subr.bf16.mxu0 0
  %3950 = vmatpush1.bf16.msra.mxu0 %v3931
  %3951 = vmatprep.subr.bf16.mxu0 0
  %3952 = vmatpush1.bf16.msra.mxu0 %v3930
  %3953 = vmatprep.subr.bf16.mxu0 0
  %3954 = vmatpush1.bf16.msra.mxu0 %v3929
  %3955 = vmatprep.subr.bf16.mxu0 0
  %3956 = vmatpush1.bf16.msra.mxu0 %v3928
  %3957 = vmatprep.subr.bf16.mxu0 0
  %3958 = vmatpush1.bf16.msra.mxu0 %v3927
  %3959 = vmatprep.subr.bf16.mxu0 0
  %3960 = vmatpush2.bf16.msra.mxu0 0
  %3961 = vmatprep.subr.bf16.mxu0 0
  %3962 = vmatpush2.bf16.msra.mxu0 0
  %3963 = vmatprep.subr.bf16.mxu0 0
  %3964 = vmatpush2.bf16.msra.mxu0 0
  %3965 = vmatprep.subr.bf16.mxu0 0
  %3966 = vmatpush2.bf16.msra.mxu0 0
  %3967 = vmatprep.subr.bf16.mxu0 0
  %3968 = vmatpush2.bf16.msra.mxu0 0
  %3969 = vmatprep.subr.bf16.mxu0 0
  %3970 = vmatpush2.bf16.msra.mxu0 0
  %3971 = vmatprep.subr.bf16.mxu0 0
  %3972 = vmatpush2.bf16.msra.mxu0 0
  %3973 = vmatprep.subr.bf16.mxu0 0
  %3974 = vmatpush2.bf16.msra.mxu0 0
  %3975 = vmatprep.mubr.bf16.mxu0 0
  %3976 = vmatmul.mubr.bf16.gmra.mxu0 %v3866
  %v3977 = vpop.f32.mrf.mxu0
  %v3978 = vadd.f32 %v3894, %v3977
  %v3979 = vpop.f32.mrf.mxu0
  %v3980 = vpop.f32.mrf.mxu0
  %v3981 = vadd.f32 %v3894, %v3980
  %v3982 = vpop.f32.mrf.mxu0
  %3983 = vmatprep.mubr.bf16.mxu0 0
  %3984 = vmatmul.mubr.bf16.gmra.mxu0 %v3867
  %v3985 = vpop.f32.mrf.mxu0
  %v3986 = vadd.f32 %v3894, %v3985
  %v3987 = vpop.f32.mrf.mxu0
  %v3988 = vpop.f32.mrf.mxu0
  %v3989 = vadd.f32 %v3894, %v3988
  %v3990 = vpop.f32.mrf.mxu0
  %3991 = vmatprep.mubr.bf16.mxu0 0
  %3992 = vmatmul.mubr.bf16.gmra.mxu0 %v3868
  %v3993 = vpop.f32.mrf.mxu0
  %v3994 = vadd.f32 %v3894, %v3993
  %v3995 = vpop.f32.mrf.mxu0
  %v3996 = vpop.f32.mrf.mxu0
  %v3997 = vadd.f32 %v3894, %v3996
  %v3998 = vpop.f32.mrf.mxu0
  %3999 = vmatprep.mubr.bf16.mxu0 0
  %4000 = vmatmul.mubr.bf16.gmra.mxu0 %v3869
  %v4001 = vpop.f32.mrf.mxu0
  %v4002 = vadd.f32 %v3894, %v4001
  %v4003 = vpop.f32.mrf.mxu0
  %v4004 = vpop.f32.mrf.mxu0
  %v4005 = vadd.f32 %v3894, %v4004
  %v4006 = vpop.f32.mrf.mxu0
  %4007 = vmatprep.mubr.bf16.mxu0 0
  %4008 = vmatmul.mubr.bf16.gmra.mxu0 %v3870
  %v4009 = vpop.f32.mrf.mxu0
  %v4010 = vadd.f32 %v3894, %v4009
  %v4011 = vpop.f32.mrf.mxu0
  %v4012 = vpop.f32.mrf.mxu0
  %v4013 = vadd.f32 %v3894, %v4012
  %v4014 = vpop.f32.mrf.mxu0
  %4015 = vmatprep.mubr.bf16.mxu0 0
  %4016 = vmatmul.mubr.bf16.gmra.mxu0 %v3871
  %v4017 = vpop.f32.mrf.mxu0
  %v4018 = vadd.f32 %v3894, %v4017
  %v4019 = vpop.f32.mrf.mxu0
  %v4020 = vpop.f32.mrf.mxu0
  %v4021 = vadd.f32 %v3894, %v4020
  %v4022 = vpop.f32.mrf.mxu0
  %4023 = vmatprep.mubr.bf16.mxu0 0
  %4024 = vmatmul.mubr.bf16.gmra.mxu0 %v3872
  %v4025 = vpop.f32.mrf.mxu0
  %v4026 = vadd.f32 %v3894, %v4025
  %v4027 = vpop.f32.mrf.mxu0
  %v4028 = vpop.f32.mrf.mxu0
  %v4029 = vadd.f32 %v3894, %v4028
  %v4030 = vpop.f32.mrf.mxu0
  %4031 = vmatprep.mubr.bf16.mxu0 0
  %4032 = vmatmul.mubr.bf16.gmra.mxu0 %v3873
  %v4033 = vpop.f32.mrf.mxu0
  %v4034 = vadd.f32 %v3894, %v4033
  %v4035 = vpop.f32.mrf.mxu0
  %v4036 = vpop.f32.mrf.mxu0
  %v4037 = vadd.f32 %v3894, %v4036
  %v4038 = vpop.f32.mrf.mxu0
  %4039 = vdwg.mxu0
  %v4040 = vadd.f32 %v3660, %v3978
  %v4041 = vadd.f32 %v3661, %v3981
  %v4042 = vadd.f32 %v3662, %v3986
  %v4043 = vadd.f32 %v3663, %v3989
  %v4044 = vadd.f32 %v3664, %v3994
  %v4045 = vadd.f32 %v3665, %v3997
  %v4046 = vadd.f32 %v3666, %v4002
  %v4047 = vadd.f32 %v3667, %v4005
  %v4048 = vadd.f32 %v3668, %v4010
  %v4049 = vadd.f32 %v3669, %v4013
  %v4050 = vadd.f32 %v3670, %v4018
  %v4051 = vadd.f32 %v3671, %v4021
  %v4052 = vadd.f32 %v3672, %v4026
  %v4053 = vadd.f32 %v3673, %v4029
  %v4054 = vadd.f32 %v3674, %v4034
  %v4055 = vadd.f32 %v3675, %v4037
  %4056 = vadd.xlane.f32.xlu0 %v4040
  %v4057 = vpop.xlane.xlu0 %4056
  %4058 = vadd.xlane.f32.xlu0 %v4041
  %v4059 = vpop.xlane.xlu0 %4058
  %4060 = vadd.xlane.f32.xlu0 %v4042
  %v4061 = vpop.xlane.xlu0 %4060
  %4062 = vadd.xlane.f32.xlu0 %v4043
  %v4063 = vpop.xlane.xlu0 %4062
  %4064 = vadd.xlane.f32.xlu0 %v4044
  %v4065 = vpop.xlane.xlu0 %4064
  %4066 = vadd.xlane.f32.xlu0 %v4045
  %v4067 = vpop.xlane.xlu0 %4066
  %4068 = vadd.xlane.f32.xlu0 %v4046
  %v4069 = vpop.xlane.xlu0 %4068
  %4070 = vadd.xlane.f32.xlu0 %v4047
  %v4071 = vpop.xlane.xlu0 %4070
  %4072 = vadd.xlane.f32.xlu0 %v4048
  %v4073 = vpop.xlane.xlu0 %4072
  %4074 = vadd.xlane.f32.xlu0 %v4049
  %v4075 = vpop.xlane.xlu0 %4074
  %4076 = vadd.xlane.f32.xlu0 %v4050
  %v4077 = vpop.xlane.xlu0 %4076
  %4078 = vadd.xlane.f32.xlu0 %v4051
  %v4079 = vpop.xlane.xlu0 %4078
  %4080 = vadd.xlane.f32.xlu0 %v4052
  %v4081 = vpop.xlane.xlu0 %4080
  %4082 = vadd.xlane.f32.xlu0 %v4053
  %v4083 = vpop.xlane.xlu0 %4082
  %4084 = vadd.xlane.f32.xlu0 %v4054
  %v4085 = vpop.xlane.xlu0 %4084
  %4086 = vadd.xlane.f32.xlu0 %v4055
  %v4087 = vpop.xlane.xlu0 %4086
  %v4088 = vmul.f32 %v4057, 0.03125
  %v4089 = vmul.f32 %v4059, 0.03125
  %v4090 = vmul.f32 %v4061, 0.03125
  %v4091 = vmul.f32 %v4063, 0.03125
  %v4092 = vmul.f32 %v4065, 0.03125
  %v4093 = vmul.f32 %v4067, 0.03125
  %v4094 = vmul.f32 %v4069, 0.03125
  %v4095 = vmul.f32 %v4071, 0.03125
  %v4096 = vmul.f32 %v4073, 0.03125
  %v4097 = vmul.f32 %v4075, 0.03125
  %v4098 = vmul.f32 %v4077, 0.03125
  %v4099 = vmul.f32 %v4079, 0.03125
  %v4100 = vmul.f32 %v4081, 0.03125
  %v4101 = vmul.f32 %v4083, 0.03125
  %v4102 = vmul.f32 %v4085, 0.03125
  %v4103 = vmul.f32 %v4087, 0.03125
  %v4104 = vmul.f32 %v4040, %v4040
  %v4105 = vmul.f32 %v4041, %v4041
  %v4106 = vmul.f32 %v4042, %v4042
  %v4107 = vmul.f32 %v4043, %v4043
  %v4108 = vmul.f32 %v4044, %v4044
  %v4109 = vmul.f32 %v4045, %v4045
  %v4110 = vmul.f32 %v4046, %v4046
  %v4111 = vmul.f32 %v4047, %v4047
  %v4112 = vmul.f32 %v4048, %v4048
  %v4113 = vmul.f32 %v4049, %v4049
  %v4114 = vmul.f32 %v4050, %v4050
  %v4115 = vmul.f32 %v4051, %v4051
  %v4116 = vmul.f32 %v4052, %v4052
  %v4117 = vmul.f32 %v4053, %v4053
  %v4118 = vmul.f32 %v4054, %v4054
  %v4119 = vmul.f32 %v4055, %v4055
  %4120 = vadd.xlane.f32.xlu0 %v4104
  %v4121 = vpop.xlane.xlu0 %4120
  %4122 = vadd.xlane.f32.xlu0 %v4105
  %v4123 = vpop.xlane.xlu0 %4122
  %4124 = vadd.xlane.f32.xlu0 %v4106
  %v4125 = vpop.xlane.xlu0 %4124
  %4126 = vadd.xlane.f32.xlu0 %v4107
  %v4127 = vpop.xlane.xlu0 %4126
  %4128 = vadd.xlane.f32.xlu0 %v4108
  %v4129 = vpop.xlane.xlu0 %4128
  %4130 = vadd.xlane.f32.xlu0 %v4109
  %v4131 = vpop.xlane.xlu0 %4130
  %4132 = vadd.xlane.f32.xlu0 %v4110
  %v4133 = vpop.xlane.xlu0 %4132
  %4134 = vadd.xlane.f32.xlu0 %v4111
  %v4135 = vpop.xlane.xlu0 %4134
  %4136 = vadd.xlane.f32.xlu0 %v4112
  %v4137 = vpop.xlane.xlu0 %4136
  %4138 = vadd.xlane.f32.xlu0 %v4113
  %v4139 = vpop.xlane.xlu0 %4138
  %4140 = vadd.xlane.f32.xlu0 %v4114
  %v4141 = vpop.xlane.xlu0 %4140
  %4142 = vadd.xlane.f32.xlu0 %v4115
  %v4143 = vpop.xlane.xlu0 %4142
  %4144 = vadd.xlane.f32.xlu0 %v4116
  %v4145 = vpop.xlane.xlu0 %4144
  %4146 = vadd.xlane.f32.xlu0 %v4117
  %v4147 = vpop.xlane.xlu0 %4146
  %4148 = vadd.xlane.f32.xlu0 %v4118
  %v4149 = vpop.xlane.xlu0 %4148
  %4150 = vadd.xlane.f32.xlu0 %v4119
  %v4151 = vpop.xlane.xlu0 %4150
  %v4152 = vmul.f32 %v4121, 0.03125
  %v4153 = vmul.f32 %v4123, 0.03125
  %v4154 = vmul.f32 %v4125, 0.03125
  %v4155 = vmul.f32 %v4127, 0.03125
  %v4156 = vmul.f32 %v4129, 0.03125
  %v4157 = vmul.f32 %v4131, 0.03125
  %v4158 = vmul.f32 %v4133, 0.03125
  %v4159 = vmul.f32 %v4135, 0.03125
  %v4160 = vmul.f32 %v4137, 0.03125
  %v4161 = vmul.f32 %v4139, 0.03125
  %v4162 = vmul.f32 %v4141, 0.03125
  %v4163 = vmul.f32 %v4143, 0.03125
  %v4164 = vmul.f32 %v4145, 0.03125
  %v4165 = vmul.f32 %v4147, 0.03125
  %v4166 = vmul.f32 %v4149, 0.03125
  %v4167 = vmul.f32 %v4151, 0.03125
  %v4168 = vmul.f32 %v4088, %v4088
  %v4169 = vmul.f32 %v4089, %v4089
  %v4170 = vmul.f32 %v4090, %v4090
  %v4171 = vmul.f32 %v4091, %v4091
  %v4172 = vmul.f32 %v4092, %v4092
  %v4173 = vmul.f32 %v4093, %v4093
  %v4174 = vmul.f32 %v4094, %v4094
  %v4175 = vmul.f32 %v4095, %v4095
  %v4176 = vmul.f32 %v4096, %v4096
  %v4177 = vmul.f32 %v4097, %v4097
  %v4178 = vmul.f32 %v4098, %v4098
  %v4179 = vmul.f32 %v4099, %v4099
  %v4180 = vmul.f32 %v4100, %v4100
  %v4181 = vmul.f32 %v4101, %v4101
  %v4182 = vmul.f32 %v4102, %v4102
  %v4183 = vmul.f32 %v4103, %v4103
  %v4184 = vsub.f32 %v4152, %v4168
  %v4185 = vsub.f32 %v4153, %v4169
  %v4186 = vsub.f32 %v4154, %v4170
  %v4187 = vsub.f32 %v4155, %v4171
  %v4188 = vsub.f32 %v4156, %v4172
  %v4189 = vsub.f32 %v4157, %v4173
  %v4190 = vsub.f32 %v4158, %v4174
  %v4191 = vsub.f32 %v4159, %v4175
  %v4192 = vsub.f32 %v4160, %v4176
  %v4193 = vsub.f32 %v4161, %v4177
  %v4194 = vsub.f32 %v4162, %v4178
  %v4195 = vsub.f32 %v4163, %v4179
  %v4196 = vsub.f32 %v4164, %v4180
  %v4197 = vsub.f32 %v4165, %v4181
  %v4198 = vsub.f32 %v4166, %v4182
  %v4199 = vsub.f32 %v4167, %v4183
  %v4200 = vsub.f32 %v4040, %v4088
  %v4201 = vsub.f32 %v4041, %v4089
  %v4202 = vsub.f32 %v4042, %v4090
  %v4203 = vsub.f32 %v4043, %v4091
  %v4204 = vsub.f32 %v4044, %v4092
  %v4205 = vsub.f32 %v4045, %v4093
  %v4206 = vsub.f32 %v4046, %v4094
  %v4207 = vsub.f32 %v4047, %v4095
  %v4208 = vsub.f32 %v4048, %v4096
  %v4209 = vsub.f32 %v4049, %v4097
  %v4210 = vsub.f32 %v4050, %v4098
  %v4211 = vsub.f32 %v4051, %v4099
  %v4212 = vsub.f32 %v4052, %v4100
  %v4213 = vsub.f32 %v4053, %v4101
  %v4214 = vsub.f32 %v4054, %v4102
  %v4215 = vsub.f32 %v4055, %v4103
  %v4216 = vadd.f32 %v4184, 1e-05
  %v4217 = vadd.f32 %v4185, 1e-05
  %v4218 = vadd.f32 %v4186, 1e-05
  %v4219 = vadd.f32 %v4187, 1e-05
  %v4220 = vadd.f32 %v4188, 1e-05
  %v4221 = vadd.f32 %v4189, 1e-05
  %v4222 = vadd.f32 %v4190, 1e-05
  %v4223 = vadd.f32 %v4191, 1e-05
  %v4224 = vadd.f32 %v4192, 1e-05
  %v4225 = vadd.f32 %v4193, 1e-05
  %v4226 = vadd.f32 %v4194, 1e-05
  %v4227 = vadd.f32 %v4195, 1e-05
  %v4228 = vadd.f32 %v4196, 1e-05
  %v4229 = vadd.f32 %v4197, 1e-05
  %v4230 = vadd.f32 %v4198, 1e-05
  %v4231 = vadd.f32 %v4199, 1e-05
  %v4232 = vrsqrt.pop %v4216
  %v4233 = vrsqrt.pop %v4217
  %v4234 = vrsqrt.pop %v4218
  %v4235 = vrsqrt.pop %v4219
  %v4236 = vrsqrt.pop %v4220
  %v4237 = vrsqrt.pop %v4221
  %v4238 = vrsqrt.pop %v4222
  %v4239 = vrsqrt.pop %v4223
  %v4240 = vrsqrt.pop %v4224
  %v4241 = vrsqrt.pop %v4225
  %v4242 = vrsqrt.pop %v4226
  %v4243 = vrsqrt.pop %v4227
  %v4244 = vrsqrt.pop %v4228
  %v4245 = vrsqrt.pop %v4229
  %v4246 = vrsqrt.pop %v4230
  %v4247 = vrsqrt.pop %v4231
  %v4248 = vmul.f32 %v4200, %v4232
  %v4249 = vmul.f32 %v4201, %v4233
  %v4250 = vmul.f32 %v4202, %v4234
  %v4251 = vmul.f32 %v4203, %v4235
  %v4252 = vmul.f32 %v4204, %v4236
  %v4253 = vmul.f32 %v4205, %v4237
  %v4254 = vmul.f32 %v4206, %v4238
  %v4255 = vmul.f32 %v4207, %v4239
  %v4256 = vmul.f32 %v4208, %v4240
  %v4257 = vmul.f32 %v4209, %v4241
  %v4258 = vmul.f32 %v4210, %v4242
  %v4259 = vmul.f32 %v4211, %v4243
  %v4260 = vmul.f32 %v4212, %v4244
  %v4261 = vmul.f32 %v4213, %v4245
  %v4262 = vmul.f32 %v4214, %v4246
  %v4263 = vmul.f32 %v4215, %v4247
  %v4264 = vld [vmem:[%s2 + $0x51] sm:$0x1]
  %v4265 = vlaneseq
  %v4266 = vshrl.u32 %v4265, 7
  %v4267 = vsub.s32 0, %v4266
  %v4268 = vrot.slane %v4264, %v4267
  %v4269 = vmul.f32 %v4248, %v4268
  %v4270 = vmul.f32 %v4249, %v4268
  %v4271 = vmul.f32 %v4250, %v4268
  %v4272 = vmul.f32 %v4251, %v4268
  %v4273 = vmul.f32 %v4252, %v4268
  %v4274 = vmul.f32 %v4253, %v4268
  %v4275 = vmul.f32 %v4254, %v4268
  %v4276 = vmul.f32 %v4255, %v4268
  %v4277 = vmul.f32 %v4256, %v4268
  %v4278 = vmul.f32 %v4257, %v4268
  %v4279 = vmul.f32 %v4258, %v4268
  %v4280 = vmul.f32 %v4259, %v4268
  %v4281 = vmul.f32 %v4260, %v4268
  %v4282 = vmul.f32 %v4261, %v4268
  %v4283 = vmul.f32 %v4262, %v4268
  %v4284 = vmul.f32 %v4263, %v4268
  %v4285 = vld [vmem:[%s2 + $0x52] sm:$0x1]
  %v4286 = vlaneseq
  %v4287 = vshrl.u32 %v4286, 7
  %v4288 = vsub.s32 0, %v4287
  %v4289 = vrot.slane %v4285, %v4288
  %v4290 = vadd.f32 %v4269, %v4289
  %v4291 = vadd.f32 %v4270, %v4289
  %v4292 = vadd.f32 %v4271, %v4289
  %v4293 = vadd.f32 %v4272, %v4289
  %v4294 = vadd.f32 %v4273, %v4289
  %v4295 = vadd.f32 %v4274, %v4289
  %v4296 = vadd.f32 %v4275, %v4289
  %v4297 = vadd.f32 %v4276, %v4289
  %v4298 = vadd.f32 %v4277, %v4289
  %v4299 = vadd.f32 %v4278, %v4289
  %v4300 = vadd.f32 %v4279, %v4289
  %v4301 = vadd.f32 %v4280, %v4289
  %v4302 = vadd.f32 %v4281, %v4289
  %v4303 = vadd.f32 %v4282, %v4289
  %v4304 = vadd.f32 %v4283, %v4289
  %v4305 = vadd.f32 %v4284, %v4289
  %v4306 = vld [vmem:[%s2 + $0x40] sm:$0xff]
  %v4307 = vpack.c.bf16 %v4306, %v4306
  %v4308 = vld [vmem:[%s1 + $0x1c0] sm:$0xf]
  %v4309 = vld [vmem:[%s1 + $0x1c4] sm:$0xf]
  %v4310 = vld [vmem:[%s1 + $0x1c8] sm:$0xf]
  %v4311 = vld [vmem:[%s1 + $0x1cc] sm:$0xf]
  %v4312 = vld [vmem:[%s1 + $0x1d0] sm:$0xf]
  %v4313 = vld [vmem:[%s1 + $0x1d4] sm:$0xf]
  %v4314 = vld [vmem:[%s1 + $0x1d8] sm:$0xf]
  %v4315 = vld [vmem:[%s1 + $0x1dc] sm:$0xf]
  %v4316 = vld [vmem:[%s1 + $0x1e0] sm:$0xf]
  %v4317 = vld [vmem:[%s1 + $0x1e4] sm:$0xf]
  %v4318 = vld [vmem:[%s1 + $0x1e8] sm:$0xf]
  %v4319 = vld [vmem:[%s1 + $0x1ec] sm:$0xf]
  %v4320 = vld [vmem:[%s1 + $0x1f0] sm:$0xf]
  %v4321 = vld [vmem:[%s1 + $0x1f4] sm:$0xf]
  %v4322 = vld [vmem:[%s1 + $0x1f8] sm:$0xf]
  %v4323 = vld [vmem:[%s1 + $0x1fc] sm:$0xf]
  %v4324 = vld [vmem:[%s2 + $0x53] sm:$0x1]
  %v4325 = vlaneseq
  %v4326 = vshrl.u32 %v4325, 7
  %v4327 = vsub.s32 0, %v4326
  %v4328 = vrot.slane %v4324, %v4327
  %v4345 = vunpack.c.l.b16 %v4308
  %v4346 = vunpack.c.l.b16 %v4309
  %v4347 = vunpack.c.l.b16 %v4310
  %v4348 = vunpack.c.l.b16 %v4311
  %v4349 = vunpack.c.l.b16 %v4312
  %v4350 = vunpack.c.l.b16 %v4313
  %v4351 = vunpack.c.l.b16 %v4314
  %v4352 = vunpack.c.l.b16 %v4315
  %v4353 = vunpack.c.l.b16 %v4316
  %v4354 = vunpack.c.l.b16 %v4317
  %v4355 = vunpack.c.l.b16 %v4318
  %v4356 = vunpack.c.l.b16 %v4319
  %v4357 = vunpack.c.l.b16 %v4320
  %v4358 = vunpack.c.l.b16 %v4321
  %v4359 = vunpack.c.l.b16 %v4322
  %v4360 = vunpack.c.l.b16 %v4323
  %v4361 = vpack.c.b16 %v4346, %v4345
  %v4362 = vpack.c.b16 %v4348, %v4347
  %v4363 = vpack.c.b16 %v4350, %v4349
  %v4364 = vpack.c.b16 %v4352, %v4351
  %v4365 = vpack.c.b16 %v4354, %v4353
  %v4366 = vpack.c.b16 %v4356, %v4355
  %v4367 = vpack.c.b16 %v4358, %v4357
  %v4368 = vpack.c.b16 %v4360, %v4359
  %4377 = vmatprep.subr.bf16.mxu0 0
  %4378 = vmatpush1.bf16.msra.mxu0 %v4368
  %4379 = vmatprep.subr.bf16.mxu0 0
  %4380 = vmatpush1.bf16.msra.mxu0 %v4367
  %4381 = vmatprep.subr.bf16.mxu0 0
  %4382 = vmatpush1.bf16.msra.mxu0 %v4366
  %4383 = vmatprep.subr.bf16.mxu0 0
  %4384 = vmatpush1.bf16.msra.mxu0 %v4365
  %4385 = vmatprep.subr.bf16.mxu0 0
  %4386 = vmatpush1.bf16.msra.mxu0 %v4364
  %4387 = vmatprep.subr.bf16.mxu0 0
  %4388 = vmatpush1.bf16.msra.mxu0 %v4363
  %4389 = vmatprep.subr.bf16.mxu0 0
  %4390 = vmatpush1.bf16.msra.mxu0 %v4362
  %4391 = vmatprep.subr.bf16.mxu0 0
  %4392 = vmatpush1.bf16.msra.mxu0 %v4361
  %4393 = vmatprep.subr.bf16.mxu0 0
  %4394 = vmatpush2.bf16.msra.mxu0 0
  %4395 = vmatprep.subr.bf16.mxu0 0
  %4396 = vmatpush2.bf16.msra.mxu0 0
  %4397 = vmatprep.subr.bf16.mxu0 0
  %4398 = vmatpush2.bf16.msra.mxu0 0
  %4399 = vmatprep.subr.bf16.mxu0 0
  %4400 = vmatpush2.bf16.msra.mxu0 0
  %4401 = vmatprep.subr.bf16.mxu0 0
  %4402 = vmatpush2.bf16.msra.mxu0 0
  %4403 = vmatprep.subr.bf16.mxu0 0
  %4404 = vmatpush2.bf16.msra.mxu0 0
  %4405 = vmatprep.subr.bf16.mxu0 0
  %4406 = vmatpush2.bf16.msra.mxu0 0
  %4407 = vmatprep.subr.bf16.mxu0 0
  %4408 = vmatpush2.bf16.msra.mxu0 0
  %4409 = vmatprep.mubr.bf16.mxu0 0
  %4410 = vmatmul.mubr.bf16.gmra.mxu0 %v4307
  %v4411 = vpop.f32.mrf.mxu0
  %v4412 = vadd.f32 %v4328, %v4411
  %v4413 = vpop.f32.mrf.mxu0
  %v4414 = vpop.f32.mrf.mxu0
  %v4415 = vadd.f32 %v4328, %v4414
  %v4416 = vpop.f32.mrf.mxu0
  %4417 = vdwg.mxu0
  %v4418 = vld [vmem:[%s1 + $0x200] sm:$0xf]
  %v4419 = vld [vmem:[%s1 + $0x204] sm:$0xf]
  %v4420 = vld [vmem:[%s1 + $0x208] sm:$0xf]
  %v4421 = vld [vmem:[%s1 + $0x20c] sm:$0xf]
  %v4422 = vld [vmem:[%s1 + $0x210] sm:$0xf]
  %v4423 = vld [vmem:[%s1 + $0x214] sm:$0xf]
  %v4424 = vld [vmem:[%s1 + $0x218] sm:$0xf]
  %v4425 = vld [vmem:[%s1 + $0x21c] sm:$0xf]
  %v4426 = vld [vmem:[%s1 + $0x220] sm:$0xf]
  %v4427 = vld [vmem:[%s1 + $0x224] sm:$0xf]
  %v4428 = vld [vmem:[%s1 + $0x228] sm:$0xf]
  %v4429 = vld [vmem:[%s1 + $0x22c] sm:$0xf]
  %v4430 = vld [vmem:[%s1 + $0x230] sm:$0xf]
  %v4431 = vld [vmem:[%s1 + $0x234] sm:$0xf]
  %v4432 = vld [vmem:[%s1 + $0x238] sm:$0xf]
  %v4433 = vld [vmem:[%s1 + $0x23c] sm:$0xf]
  %v4434 = vld [vmem:[%s2 + $0x54] sm:$0x1]
  %v4435 = vlaneseq
  %v4436 = vshrl.u32 %v4435, 7
  %v4437 = vsub.s32 0, %v4436
  %v4438 = vrot.slane %v4434, %v4437
  %v4455 = vunpack.c.l.b16 %v4418
  %v4456 = vunpack.c.l.b16 %v4419
  %v4457 = vunpack.c.l.b16 %v4420
  %v4458 = vunpack.c.l.b16 %v4421
  %v4459 = vunpack.c.l.b16 %v4422
  %v4460 = vunpack.c.l.b16 %v4423
  %v4461 = vunpack.c.l.b16 %v4424
  %v4462 = vunpack.c.l.b16 %v4425
  %v4463 = vunpack.c.l.b16 %v4426
  %v4464 = vunpack.c.l.b16 %v4427
  %v4465 = vunpack.c.l.b16 %v4428
  %v4466 = vunpack.c.l.b16 %v4429
  %v4467 = vunpack.c.l.b16 %v4430
  %v4468 = vunpack.c.l.b16 %v4431
  %v4469 = vunpack.c.l.b16 %v4432
  %v4470 = vunpack.c.l.b16 %v4433
  %v4471 = vpack.c.b16 %v4456, %v4455
  %v4472 = vpack.c.b16 %v4458, %v4457
  %v4473 = vpack.c.b16 %v4460, %v4459
  %v4474 = vpack.c.b16 %v4462, %v4461
  %v4475 = vpack.c.b16 %v4464, %v4463
  %v4476 = vpack.c.b16 %v4466, %v4465
  %v4477 = vpack.c.b16 %v4468, %v4467
  %v4478 = vpack.c.b16 %v4470, %v4469
  %4487 = vmatprep.subr.bf16.mxu0 0
  %4488 = vmatpush1.bf16.msra.mxu0 %v4478
  %4489 = vmatprep.subr.bf16.mxu0 0
  %4490 = vmatpush1.bf16.msra.mxu0 %v4477
  %4491 = vmatprep.subr.bf16.mxu0 0
  %4492 = vmatpush1.bf16.msra.mxu0 %v4476
  %4493 = vmatprep.subr.bf16.mxu0 0
  %4494 = vmatpush1.bf16.msra.mxu0 %v4475
  %4495 = vmatprep.subr.bf16.mxu0 0
  %4496 = vmatpush1.bf16.msra.mxu0 %v4474
  %4497 = vmatprep.subr.bf16.mxu0 0
  %4498 = vmatpush1.bf16.msra.mxu0 %v4473
  %4499 = vmatprep.subr.bf16.mxu0 0
  %4500 = vmatpush1.bf16.msra.mxu0 %v4472
  %4501 = vmatprep.subr.bf16.mxu0 0
  %4502 = vmatpush1.bf16.msra.mxu0 %v4471
  %4503 = vmatprep.subr.bf16.mxu0 0
  %4504 = vmatpush2.bf16.msra.mxu0 0
  %4505 = vmatprep.subr.bf16.mxu0 0
  %4506 = vmatpush2.bf16.msra.mxu0 0
  %4507 = vmatprep.subr.bf16.mxu0 0
  %4508 = vmatpush2.bf16.msra.mxu0 0
  %4509 = vmatprep.subr.bf16.mxu0 0
  %4510 = vmatpush2.bf16.msra.mxu0 0
  %4511 = vmatprep.subr.bf16.mxu0 0
  %4512 = vmatpush2.bf16.msra.mxu0 0
  %4513 = vmatprep.subr.bf16.mxu0 0
  %4514 = vmatpush2.bf16.msra.mxu0 0
  %4515 = vmatprep.subr.bf16.mxu0 0
  %4516 = vmatpush2.bf16.msra.mxu0 0
  %4517 = vmatprep.subr.bf16.mxu0 0
  %4518 = vmatpush2.bf16.msra.mxu0 0
  %4519 = vmatprep.mubr.bf16.mxu0 0
  %4520 = vmatmul.mubr.bf16.gmra.mxu0 %v4307
  %v4521 = vpop.f32.mrf.mxu0
  %v4522 = vadd.f32 %v4438, %v4521
  %v4523 = vpop.f32.mrf.mxu0
  %v4524 = vpop.f32.mrf.mxu0
  %v4525 = vadd.f32 %v4438, %v4524
  %v4526 = vpop.f32.mrf.mxu0
  %4527 = vdwg.mxu0
  %v4528 = vld [vmem:[%s1 + $0x240] sm:$0xf]
  %v4529 = vld [vmem:[%s1 + $0x244] sm:$0xf]
  %v4530 = vld [vmem:[%s1 + $0x248] sm:$0xf]
  %v4531 = vld [vmem:[%s1 + $0x24c] sm:$0xf]
  %v4532 = vld [vmem:[%s1 + $0x250] sm:$0xf]
  %v4533 = vld [vmem:[%s1 + $0x254] sm:$0xf]
  %v4534 = vld [vmem:[%s1 + $0x258] sm:$0xf]
  %v4535 = vld [vmem:[%s1 + $0x25c] sm:$0xf]
  %v4536 = vld [vmem:[%s1 + $0x260] sm:$0xf]
  %v4537 = vld [vmem:[%s1 + $0x264] sm:$0xf]
  %v4538 = vld [vmem:[%s1 + $0x268] sm:$0xf]
  %v4539 = vld [vmem:[%s1 + $0x26c] sm:$0xf]
  %v4540 = vld [vmem:[%s1 + $0x270] sm:$0xf]
  %v4541 = vld [vmem:[%s1 + $0x274] sm:$0xf]
  %v4542 = vld [vmem:[%s1 + $0x278] sm:$0xf]
  %v4543 = vld [vmem:[%s1 + $0x27c] sm:$0xf]
  %v4544 = vld [vmem:[%s2 + $0x55] sm:$0x1]
  %v4545 = vlaneseq
  %v4546 = vshrl.u32 %v4545, 7
  %v4547 = vsub.s32 0, %v4546
  %v4548 = vrot.slane %v4544, %v4547
  %v4565 = vunpack.c.l.b16 %v4528
  %v4566 = vunpack.c.l.b16 %v4529
  %v4567 = vunpack.c.l.b16 %v4530
  %v4568 = vunpack.c.l.b16 %v4531
  %v4569 = vunpack.c.l.b16 %v4532
  %v4570 = vunpack.c.l.b16 %v4533
  %v4571 = vunpack.c.l.b16 %v4534
  %v4572 = vunpack.c.l.b16 %v4535
  %v4573 = vunpack.c.l.b16 %v4536
  %v4574 = vunpack.c.l.b16 %v4537
  %v4575 = vunpack.c.l.b16 %v4538
  %v4576 = vunpack.c.l.b16 %v4539
  %v4577 = vunpack.c.l.b16 %v4540
  %v4578 = vunpack.c.l.b16 %v4541
  %v4579 = vunpack.c.l.b16 %v4542
  %v4580 = vunpack.c.l.b16 %v4543
  %v4581 = vpack.c.b16 %v4566, %v4565
  %v4582 = vpack.c.b16 %v4568, %v4567
  %v4583 = vpack.c.b16 %v4570, %v4569
  %v4584 = vpack.c.b16 %v4572, %v4571
  %v4585 = vpack.c.b16 %v4574, %v4573
  %v4586 = vpack.c.b16 %v4576, %v4575
  %v4587 = vpack.c.b16 %v4578, %v4577
  %v4588 = vpack.c.b16 %v4580, %v4579
  %4597 = vmatprep.subr.bf16.mxu0 0
  %4598 = vmatpush1.bf16.msra.mxu0 %v4588
  %4599 = vmatprep.subr.bf16.mxu0 0
  %4600 = vmatpush1.bf16.msra.mxu0 %v4587
  %4601 = vmatprep.subr.bf16.mxu0 0
  %4602 = vmatpush1.bf16.msra.mxu0 %v4586
  %4603 = vmatprep.subr.bf16.mxu0 0
  %4604 = vmatpush1.bf16.msra.mxu0 %v4585
  %4605 = vmatprep.subr.bf16.mxu0 0
  %4606 = vmatpush1.bf16.msra.mxu0 %v4584
  %4607 = vmatprep.subr.bf16.mxu0 0
  %4608 = vmatpush1.bf16.msra.mxu0 %v4583
  %4609 = vmatprep.subr.bf16.mxu0 0
  %4610 = vmatpush1.bf16.msra.mxu0 %v4582
  %4611 = vmatprep.subr.bf16.mxu0 0
  %4612 = vmatpush1.bf16.msra.mxu0 %v4581
  %4613 = vmatprep.subr.bf16.mxu0 0
  %4614 = vmatpush2.bf16.msra.mxu0 0
  %4615 = vmatprep.subr.bf16.mxu0 0
  %4616 = vmatpush2.bf16.msra.mxu0 0
  %4617 = vmatprep.subr.bf16.mxu0 0
  %4618 = vmatpush2.bf16.msra.mxu0 0
  %4619 = vmatprep.subr.bf16.mxu0 0
  %4620 = vmatpush2.bf16.msra.mxu0 0
  %4621 = vmatprep.subr.bf16.mxu0 0
  %4622 = vmatpush2.bf16.msra.mxu0 0
  %4623 = vmatprep.subr.bf16.mxu0 0
  %4624 = vmatpush2.bf16.msra.mxu0 0
  %4625 = vmatprep.subr.bf16.mxu0 0
  %4626 = vmatpush2.bf16.msra.mxu0 0
  %4627 = vmatprep.subr.bf16.mxu0 0
  %4628 = vmatpush2.bf16.msra.mxu0 0
  %4629 = vmatprep.mubr.bf16.mxu0 0
  %4630 = vmatmul.mubr.bf16.gmra.mxu0 %v4307
  %v4631 = vpop.f32.mrf.mxu0
  %v4632 = vadd.f32 %v4548, %v4631
  %v4633 = vpop.f32.mrf.mxu0
  %v4634 = vpop.f32.mrf.mxu0
  %v4635 = vadd.f32 %v4548, %v4634
  %v4636 = vpop.f32.mrf.mxu0
  %4637 = vdwg.mxu0
  %v4638 = vpack.c.bf16 %v4415, %v4412
  %v4639 = vpack.c.bf16 %v4525, %v4522
  %v4640 = vpack.c.bf16 %v4635, %v4632
  %v4642 = vsel %vm759, %v4638, 0
  %v4645 = vsel %vm759, %v4639, 0
  %4647 = vmatprep.subr.bf16.mxu0 0
  %4648 = vmatpush1.bf16.xpose.msra.mxu0 0
  %4649 = vmatprep.subr.bf16.mxu0 0
  %4650 = vmatpush1.bf16.xpose.msra.mxu0 0
  %4651 = vmatprep.subr.bf16.mxu0 0
  %4652 = vmatpush1.bf16.xpose.msra.mxu0 0
  %4653 = vmatprep.subr.bf16.mxu0 0
  %4654 = vmatpush1.bf16.xpose.msra.mxu0 0
  %4655 = vmatprep.subr.bf16.mxu0 0
  %4656 = vmatpush1.bf16.xpose.msra.mxu0 0
  %4657 = vmatprep.subr.bf16.mxu0 0
  %4658 = vmatpush1.bf16.xpose.msra.mxu0 0
  %4659 = vmatprep.subr.bf16.mxu0 0
  %4660 = vmatpush1.bf16.xpose.msra.mxu0 0
  %4661 = vmatprep.subr.bf16.mxu0 0
  %4662 = vmatpush1.bf16.xpose.msra.mxu0 %v4645
  %4663 = vmatprep.subr.bf16.mxu0 0
  %4664 = vmatpush2.bf16.xpose.msra.mxu0 0
  %4665 = vmatprep.subr.bf16.mxu0 0
  %4666 = vmatpush2.bf16.xpose.msra.mxu0 0
  %4667 = vmatprep.subr.bf16.mxu0 0
  %4668 = vmatpush2.bf16.xpose.msra.mxu0 0
  %4669 = vmatprep.subr.bf16.mxu0 0
  %4670 = vmatpush2.bf16.xpose.msra.mxu0 0
  %4671 = vmatprep.subr.bf16.mxu0 0
  %4672 = vmatpush2.bf16.xpose.msra.mxu0 0
  %4673 = vmatprep.subr.bf16.mxu0 0
  %4674 = vmatpush2.bf16.xpose.msra.mxu0 0
  %4675 = vmatprep.subr.bf16.mxu0 0
  %4676 = vmatpush2.bf16.xpose.msra.mxu0 0
  %4677 = vmatprep.subr.bf16.mxu0 0
  %4678 = vmatpush2.bf16.xpose.msra.mxu0 0
  %4679 = vmatprep.mubr.bf16.mxu0 0
  %4680 = vmatmul.mubr.bf16.gmra.mxu0 %v4642
  %v4681 = vpop.f32.mrf.mxu0
  %v4682 = vadd.f32 0.0, %v4681
  %v4683 = vpop.f32.mrf.mxu0
  %v4684 = vpop.f32.mrf.mxu0
  %v4685 = vpop.f32.mrf.mxu0
  %4686 = vdwg.mxu0
  %4688 = vrot.lane.b32.xlu0 %v4638, 120
  %v4689 = vpop.permute.xlu0 %4688
  %4691 = vrot.lane.b32.xlu0 %v4639, 120
  %v4692 = vpop.permute.xlu0 %4691
  %v4694 = vsel %vm759, %v4689, 0
  %v4697 = vsel %vm759, %v4692, 0
  %4699 = vmatprep.subr.bf16.mxu0 0
  %4700 = vmatpush1.bf16.xpose.msra.mxu0 0
  %4701 = vmatprep.subr.bf16.mxu0 0
  %4702 = vmatpush1.bf16.xpose.msra.mxu0 0
  %4703 = vmatprep.subr.bf16.mxu0 0
  %4704 = vmatpush1.bf16.xpose.msra.mxu0 0
  %4705 = vmatprep.subr.bf16.mxu0 0
  %4706 = vmatpush1.bf16.xpose.msra.mxu0 0
  %4707 = vmatprep.subr.bf16.mxu0 0
  %4708 = vmatpush1.bf16.xpose.msra.mxu0 0
  %4709 = vmatprep.subr.bf16.mxu0 0
  %4710 = vmatpush1.bf16.xpose.msra.mxu0 0
  %4711 = vmatprep.subr.bf16.mxu0 0
  %4712 = vmatpush1.bf16.xpose.msra.mxu0 0
  %4713 = vmatprep.subr.bf16.mxu0 0
  %4714 = vmatpush1.bf16.xpose.msra.mxu0 %v4697
  %4715 = vmatprep.subr.bf16.mxu0 0
  %4716 = vmatpush2.bf16.xpose.msra.mxu0 0
  %4717 = vmatprep.subr.bf16.mxu0 0
  %4718 = vmatpush2.bf16.xpose.msra.mxu0 0
  %4719 = vmatprep.subr.bf16.mxu0 0
  %4720 = vmatpush2.bf16.xpose.msra.mxu0 0
  %4721 = vmatprep.subr.bf16.mxu0 0
  %4722 = vmatpush2.bf16.xpose.msra.mxu0 0
  %4723 = vmatprep.subr.bf16.mxu0 0
  %4724 = vmatpush2.bf16.xpose.msra.mxu0 0
  %4725 = vmatprep.subr.bf16.mxu0 0
  %4726 = vmatpush2.bf16.xpose.msra.mxu0 0
  %4727 = vmatprep.subr.bf16.mxu0 0
  %4728 = vmatpush2.bf16.xpose.msra.mxu0 0
  %4729 = vmatprep.subr.bf16.mxu0 0
  %4730 = vmatpush2.bf16.xpose.msra.mxu0 0
  %4731 = vmatprep.mubr.bf16.mxu0 0
  %4732 = vmatmul.mubr.bf16.gmra.mxu0 %v4694
  %v4733 = vpop.f32.mrf.mxu0
  %v4734 = vadd.f32 0.0, %v4733
  %v4735 = vpop.f32.mrf.mxu0
  %v4736 = vpop.f32.mrf.mxu0
  %v4737 = vpop.f32.mrf.mxu0
  %4738 = vdwg.mxu0
  %4739 = vrot.lane.b32.xlu0 %v4638, 112
  %v4740 = vpop.permute.xlu0 %4739
  %4741 = vrot.lane.b32.xlu0 %v4639, 112
  %v4742 = vpop.permute.xlu0 %4741
  %v4744 = vsel %vm759, %v4740, 0
  %v4747 = vsel %vm759, %v4742, 0
  %4749 = vmatprep.subr.bf16.mxu0 0
  %4750 = vmatpush1.bf16.xpose.msra.mxu0 0
  %4751 = vmatprep.subr.bf16.mxu0 0
  %4752 = vmatpush1.bf16.xpose.msra.mxu0 0
  %4753 = vmatprep.subr.bf16.mxu0 0
  %4754 = vmatpush1.bf16.xpose.msra.mxu0 0
  %4755 = vmatprep.subr.bf16.mxu0 0
  %4756 = vmatpush1.bf16.xpose.msra.mxu0 0
  %4757 = vmatprep.subr.bf16.mxu0 0
  %4758 = vmatpush1.bf16.xpose.msra.mxu0 0
  %4759 = vmatprep.subr.bf16.mxu0 0
  %4760 = vmatpush1.bf16.xpose.msra.mxu0 0
  %4761 = vmatprep.subr.bf16.mxu0 0
  %4762 = vmatpush1.bf16.xpose.msra.mxu0 0
  %4763 = vmatprep.subr.bf16.mxu0 0
  %4764 = vmatpush1.bf16.xpose.msra.mxu0 %v4747
  %4765 = vmatprep.subr.bf16.mxu0 0
  %4766 = vmatpush2.bf16.xpose.msra.mxu0 0
  %4767 = vmatprep.subr.bf16.mxu0 0
  %4768 = vmatpush2.bf16.xpose.msra.mxu0 0
  %4769 = vmatprep.subr.bf16.mxu0 0
  %4770 = vmatpush2.bf16.xpose.msra.mxu0 0
  %4771 = vmatprep.subr.bf16.mxu0 0
  %4772 = vmatpush2.bf16.xpose.msra.mxu0 0
  %4773 = vmatprep.subr.bf16.mxu0 0
  %4774 = vmatpush2.bf16.xpose.msra.mxu0 0
  %4775 = vmatprep.subr.bf16.mxu0 0
  %4776 = vmatpush2.bf16.xpose.msra.mxu0 0
  %4777 = vmatprep.subr.bf16.mxu0 0
  %4778 = vmatpush2.bf16.xpose.msra.mxu0 0
  %4779 = vmatprep.subr.bf16.mxu0 0
  %4780 = vmatpush2.bf16.xpose.msra.mxu0 0
  %4781 = vmatprep.mubr.bf16.mxu0 0
  %4782 = vmatmul.mubr.bf16.gmra.mxu0 %v4744
  %v4783 = vpop.f32.mrf.mxu0
  %v4784 = vadd.f32 0.0, %v4783
  %v4785 = vpop.f32.mrf.mxu0
  %v4786 = vpop.f32.mrf.mxu0
  %v4787 = vpop.f32.mrf.mxu0
  %4788 = vdwg.mxu0
  %4789 = vrot.lane.b32.xlu0 %v4638, 104
  %v4790 = vpop.permute.xlu0 %4789
  %4791 = vrot.lane.b32.xlu0 %v4639, 104
  %v4792 = vpop.permute.xlu0 %4791
  %v4794 = vsel %vm759, %v4790, 0
  %v4797 = vsel %vm759, %v4792, 0
  %4799 = vmatprep.subr.bf16.mxu0 0
  %4800 = vmatpush1.bf16.xpose.msra.mxu0 0
  %4801 = vmatprep.subr.bf16.mxu0 0
  %4802 = vmatpush1.bf16.xpose.msra.mxu0 0
  %4803 = vmatprep.subr.bf16.mxu0 0
  %4804 = vmatpush1.bf16.xpose.msra.mxu0 0
  %4805 = vmatprep.subr.bf16.mxu0 0
  %4806 = vmatpush1.bf16.xpose.msra.mxu0 0
  %4807 = vmatprep.subr.bf16.mxu0 0
  %4808 = vmatpush1.bf16.xpose.msra.mxu0 0
  %4809 = vmatprep.subr.bf16.mxu0 0
  %4810 = vmatpush1.bf16.xpose.msra.mxu0 0
  %4811 = vmatprep.subr.bf16.mxu0 0
  %4812 = vmatpush1.bf16.xpose.msra.mxu0 0
  %4813 = vmatprep.subr.bf16.mxu0 0
  %4814 = vmatpush1.bf16.xpose.msra.mxu0 %v4797
  %4815 = vmatprep.subr.bf16.mxu0 0
  %4816 = vmatpush2.bf16.xpose.msra.mxu0 0
  %4817 = vmatprep.subr.bf16.mxu0 0
  %4818 = vmatpush2.bf16.xpose.msra.mxu0 0
  %4819 = vmatprep.subr.bf16.mxu0 0
  %4820 = vmatpush2.bf16.xpose.msra.mxu0 0
  %4821 = vmatprep.subr.bf16.mxu0 0
  %4822 = vmatpush2.bf16.xpose.msra.mxu0 0
  %4823 = vmatprep.subr.bf16.mxu0 0
  %4824 = vmatpush2.bf16.xpose.msra.mxu0 0
  %4825 = vmatprep.subr.bf16.mxu0 0
  %4826 = vmatpush2.bf16.xpose.msra.mxu0 0
  %4827 = vmatprep.subr.bf16.mxu0 0
  %4828 = vmatpush2.bf16.xpose.msra.mxu0 0
  %4829 = vmatprep.subr.bf16.mxu0 0
  %4830 = vmatpush2.bf16.xpose.msra.mxu0 0
  %4831 = vmatprep.mubr.bf16.mxu0 0
  %4832 = vmatmul.mubr.bf16.gmra.mxu0 %v4794
  %v4833 = vpop.f32.mrf.mxu0
  %v4834 = vadd.f32 0.0, %v4833
  %v4835 = vpop.f32.mrf.mxu0
  %v4836 = vpop.f32.mrf.mxu0
  %v4837 = vpop.f32.mrf.mxu0
  %4838 = vdwg.mxu0
  %v4839 = vrot.slane %v4638, 4
  %v4840 = vrot.slane %v4639, 4
  %v4842 = vsel %vm759, %v4839, 0
  %v4845 = vsel %vm759, %v4840, 0
  %4847 = vmatprep.subr.bf16.mxu0 0
  %4848 = vmatpush1.bf16.xpose.msra.mxu0 0
  %4849 = vmatprep.subr.bf16.mxu0 0
  %4850 = vmatpush1.bf16.xpose.msra.mxu0 0
  %4851 = vmatprep.subr.bf16.mxu0 0
  %4852 = vmatpush1.bf16.xpose.msra.mxu0 0
  %4853 = vmatprep.subr.bf16.mxu0 0
  %4854 = vmatpush1.bf16.xpose.msra.mxu0 0
  %4855 = vmatprep.subr.bf16.mxu0 0
  %4856 = vmatpush1.bf16.xpose.msra.mxu0 0
  %4857 = vmatprep.subr.bf16.mxu0 0
  %4858 = vmatpush1.bf16.xpose.msra.mxu0 0
  %4859 = vmatprep.subr.bf16.mxu0 0
  %4860 = vmatpush1.bf16.xpose.msra.mxu0 0
  %4861 = vmatprep.subr.bf16.mxu0 0
  %4862 = vmatpush1.bf16.xpose.msra.mxu0 %v4845
  %4863 = vmatprep.subr.bf16.mxu0 0
  %4864 = vmatpush2.bf16.xpose.msra.mxu0 0
  %4865 = vmatprep.subr.bf16.mxu0 0
  %4866 = vmatpush2.bf16.xpose.msra.mxu0 0
  %4867 = vmatprep.subr.bf16.mxu0 0
  %4868 = vmatpush2.bf16.xpose.msra.mxu0 0
  %4869 = vmatprep.subr.bf16.mxu0 0
  %4870 = vmatpush2.bf16.xpose.msra.mxu0 0
  %4871 = vmatprep.subr.bf16.mxu0 0
  %4872 = vmatpush2.bf16.xpose.msra.mxu0 0
  %4873 = vmatprep.subr.bf16.mxu0 0
  %4874 = vmatpush2.bf16.xpose.msra.mxu0 0
  %4875 = vmatprep.subr.bf16.mxu0 0
  %4876 = vmatpush2.bf16.xpose.msra.mxu0 0
  %4877 = vmatprep.subr.bf16.mxu0 0
  %4878 = vmatpush2.bf16.xpose.msra.mxu0 0
  %4879 = vmatprep.mubr.bf16.mxu0 0
  %4880 = vmatmul.mubr.bf16.gmra.mxu0 %v4842
  %v4881 = vpop.f32.mrf.mxu0
  %v4882 = vadd.f32 0.0, %v4881
  %v4883 = vpop.f32.mrf.mxu0
  %v4884 = vpop.f32.mrf.mxu0
  %v4885 = vpop.f32.mrf.mxu0
  %4886 = vdwg.mxu0
  %4887 = vrot.lane.b32.xlu0 %v4839, 120
  %v4888 = vpop.permute.xlu0 %4887
  %4889 = vrot.lane.b32.xlu0 %v4840, 120
  %v4890 = vpop.permute.xlu0 %4889
  %v4892 = vsel %vm759, %v4888, 0
  %v4895 = vsel %vm759, %v4890, 0
  %4897 = vmatprep.subr.bf16.mxu0 0
  %4898 = vmatpush1.bf16.xpose.msra.mxu0 0
  %4899 = vmatprep.subr.bf16.mxu0 0
  %4900 = vmatpush1.bf16.xpose.msra.mxu0 0
  %4901 = vmatprep.subr.bf16.mxu0 0
  %4902 = vmatpush1.bf16.xpose.msra.mxu0 0
  %4903 = vmatprep.subr.bf16.mxu0 0
  %4904 = vmatpush1.bf16.xpose.msra.mxu0 0
  %4905 = vmatprep.subr.bf16.mxu0 0
  %4906 = vmatpush1.bf16.xpose.msra.mxu0 0
  %4907 = vmatprep.subr.bf16.mxu0 0
  %4908 = vmatpush1.bf16.xpose.msra.mxu0 0
  %4909 = vmatprep.subr.bf16.mxu0 0
  %4910 = vmatpush1.bf16.xpose.msra.mxu0 0
  %4911 = vmatprep.subr.bf16.mxu0 0
  %4912 = vmatpush1.bf16.xpose.msra.mxu0 %v4895
  %4913 = vmatprep.subr.bf16.mxu0 0
  %4914 = vmatpush2.bf16.xpose.msra.mxu0 0
  %4915 = vmatprep.subr.bf16.mxu0 0
  %4916 = vmatpush2.bf16.xpose.msra.mxu0 0
  %4917 = vmatprep.subr.bf16.mxu0 0
  %4918 = vmatpush2.bf16.xpose.msra.mxu0 0
  %4919 = vmatprep.subr.bf16.mxu0 0
  %4920 = vmatpush2.bf16.xpose.msra.mxu0 0
  %4921 = vmatprep.subr.bf16.mxu0 0
  %4922 = vmatpush2.bf16.xpose.msra.mxu0 0
  %4923 = vmatprep.subr.bf16.mxu0 0
  %4924 = vmatpush2.bf16.xpose.msra.mxu0 0
  %4925 = vmatprep.subr.bf16.mxu0 0
  %4926 = vmatpush2.bf16.xpose.msra.mxu0 0
  %4927 = vmatprep.subr.bf16.mxu0 0
  %4928 = vmatpush2.bf16.xpose.msra.mxu0 0
  %4929 = vmatprep.mubr.bf16.mxu0 0
  %4930 = vmatmul.mubr.bf16.gmra.mxu0 %v4892
  %v4931 = vpop.f32.mrf.mxu0
  %v4932 = vadd.f32 0.0, %v4931
  %v4933 = vpop.f32.mrf.mxu0
  %v4934 = vpop.f32.mrf.mxu0
  %v4935 = vpop.f32.mrf.mxu0
  %4936 = vdwg.mxu0
  %4937 = vrot.lane.b32.xlu0 %v4839, 112
  %v4938 = vpop.permute.xlu0 %4937
  %4939 = vrot.lane.b32.xlu0 %v4840, 112
  %v4940 = vpop.permute.xlu0 %4939
  %v4942 = vsel %vm759, %v4938, 0
  %v4945 = vsel %vm759, %v4940, 0
  %4947 = vmatprep.subr.bf16.mxu0 0
  %4948 = vmatpush1.bf16.xpose.msra.mxu0 0
  %4949 = vmatprep.subr.bf16.mxu0 0
  %4950 = vmatpush1.bf16.xpose.msra.mxu0 0
  %4951 = vmatprep.subr.bf16.mxu0 0
  %4952 = vmatpush1.bf16.xpose.msra.mxu0 0
  %4953 = vmatprep.subr.bf16.mxu0 0
  %4954 = vmatpush1.bf16.xpose.msra.mxu0 0
  %4955 = vmatprep.subr.bf16.mxu0 0
  %4956 = vmatpush1.bf16.xpose.msra.mxu0 0
  %4957 = vmatprep.subr.bf16.mxu0 0
  %4958 = vmatpush1.bf16.xpose.msra.mxu0 0
  %4959 = vmatprep.subr.bf16.mxu0 0
  %4960 = vmatpush1.bf16.xpose.msra.mxu0 0
  %4961 = vmatprep.subr.bf16.mxu0 0
  %4962 = vmatpush1.bf16.xpose.msra.mxu0 %v4945
  %4963 = vmatprep.subr.bf16.mxu0 0
  %4964 = vmatpush2.bf16.xpose.msra.mxu0 0
  %4965 = vmatprep.subr.bf16.mxu0 0
  %4966 = vmatpush2.bf16.xpose.msra.mxu0 0
  %4967 = vmatprep.subr.bf16.mxu0 0
  %4968 = vmatpush2.bf16.xpose.msra.mxu0 0
  %4969 = vmatprep.subr.bf16.mxu0 0
  %4970 = vmatpush2.bf16.xpose.msra.mxu0 0
  %4971 = vmatprep.subr.bf16.mxu0 0
  %4972 = vmatpush2.bf16.xpose.msra.mxu0 0
  %4973 = vmatprep.subr.bf16.mxu0 0
  %4974 = vmatpush2.bf16.xpose.msra.mxu0 0
  %4975 = vmatprep.subr.bf16.mxu0 0
  %4976 = vmatpush2.bf16.xpose.msra.mxu0 0
  %4977 = vmatprep.subr.bf16.mxu0 0
  %4978 = vmatpush2.bf16.xpose.msra.mxu0 0
  %4979 = vmatprep.mubr.bf16.mxu0 0
  %4980 = vmatmul.mubr.bf16.gmra.mxu0 %v4942
  %v4981 = vpop.f32.mrf.mxu0
  %v4982 = vadd.f32 0.0, %v4981
  %v4983 = vpop.f32.mrf.mxu0
  %v4984 = vpop.f32.mrf.mxu0
  %v4985 = vpop.f32.mrf.mxu0
  %4986 = vdwg.mxu0
  %4987 = vrot.lane.b32.xlu0 %v4839, 104
  %v4988 = vpop.permute.xlu0 %4987
  %4989 = vrot.lane.b32.xlu0 %v4840, 104
  %v4990 = vpop.permute.xlu0 %4989
  %v4992 = vsel %vm759, %v4988, 0
  %v4995 = vsel %vm759, %v4990, 0
  %4997 = vmatprep.subr.bf16.mxu0 0
  %4998 = vmatpush1.bf16.xpose.msra.mxu0 0
  %4999 = vmatprep.subr.bf16.mxu0 0
  %5000 = vmatpush1.bf16.xpose.msra.mxu0 0
  %5001 = vmatprep.subr.bf16.mxu0 0
  %5002 = vmatpush1.bf16.xpose.msra.mxu0 0
  %5003 = vmatprep.subr.bf16.mxu0 0
  %5004 = vmatpush1.bf16.xpose.msra.mxu0 0
  %5005 = vmatprep.subr.bf16.mxu0 0
  %5006 = vmatpush1.bf16.xpose.msra.mxu0 0
  %5007 = vmatprep.subr.bf16.mxu0 0
  %5008 = vmatpush1.bf16.xpose.msra.mxu0 0
  %5009 = vmatprep.subr.bf16.mxu0 0
  %5010 = vmatpush1.bf16.xpose.msra.mxu0 0
  %5011 = vmatprep.subr.bf16.mxu0 0
  %5012 = vmatpush1.bf16.xpose.msra.mxu0 %v4995
  %5013 = vmatprep.subr.bf16.mxu0 0
  %5014 = vmatpush2.bf16.xpose.msra.mxu0 0
  %5015 = vmatprep.subr.bf16.mxu0 0
  %5016 = vmatpush2.bf16.xpose.msra.mxu0 0
  %5017 = vmatprep.subr.bf16.mxu0 0
  %5018 = vmatpush2.bf16.xpose.msra.mxu0 0
  %5019 = vmatprep.subr.bf16.mxu0 0
  %5020 = vmatpush2.bf16.xpose.msra.mxu0 0
  %5021 = vmatprep.subr.bf16.mxu0 0
  %5022 = vmatpush2.bf16.xpose.msra.mxu0 0
  %5023 = vmatprep.subr.bf16.mxu0 0
  %5024 = vmatpush2.bf16.xpose.msra.mxu0 0
  %5025 = vmatprep.subr.bf16.mxu0 0
  %5026 = vmatpush2.bf16.xpose.msra.mxu0 0
  %5027 = vmatprep.subr.bf16.mxu0 0
  %5028 = vmatpush2.bf16.xpose.msra.mxu0 0
  %5029 = vmatprep.mubr.bf16.mxu0 0
  %5030 = vmatmul.mubr.bf16.gmra.mxu0 %v4992
  %v5031 = vpop.f32.mrf.mxu0
  %v5032 = vadd.f32 0.0, %v5031
  %v5033 = vpop.f32.mrf.mxu0
  %v5034 = vpop.f32.mrf.mxu0
  %v5035 = vpop.f32.mrf.mxu0
  %5036 = vdwg.mxu0
  %v5037 = vsel %vm759, %v4682, -inf
  %5038 = vmax.xlane.f32.xlu0 %v5037
  %v5039 = vpop.xlane.xlu0 %5038
  %v5040 = vsel %vm759, %v4734, -inf
  %5041 = vmax.xlane.f32.xlu0 %v5040
  %v5042 = vpop.xlane.xlu0 %5041
  %v5043 = vsel %vm759, %v4784, -inf
  %5044 = vmax.xlane.f32.xlu0 %v5043
  %v5045 = vpop.xlane.xlu0 %5044
  %v5046 = vsel %vm759, %v4834, -inf
  %5047 = vmax.xlane.f32.xlu0 %v5046
  %v5048 = vpop.xlane.xlu0 %5047
  %v5049 = vsel %vm759, %v4882, -inf
  %5050 = vmax.xlane.f32.xlu0 %v5049
  %v5051 = vpop.xlane.xlu0 %5050
  %v5052 = vsel %vm759, %v4932, -inf
  %5053 = vmax.xlane.f32.xlu0 %v5052
  %v5054 = vpop.xlane.xlu0 %5053
  %v5055 = vsel %vm759, %v4982, -inf
  %5056 = vmax.xlane.f32.xlu0 %v5055
  %v5057 = vpop.xlane.xlu0 %5056
  %v5058 = vsel %vm759, %v5032, -inf
  %5059 = vmax.xlane.f32.xlu0 %v5058
  %v5060 = vpop.xlane.xlu0 %5059
  %v5061 = vsub.f32 %v4682, %v5039
  %v5062 = vsub.f32 %v4734, %v5042
  %v5063 = vsub.f32 %v4784, %v5045
  %v5064 = vsub.f32 %v4834, %v5048
  %v5065 = vsub.f32 %v4882, %v5051
  %v5066 = vsub.f32 %v4932, %v5054
  %v5067 = vsub.f32 %v4982, %v5057
  %v5068 = vsub.f32 %v5032, %v5060
  %v5069 = vmul.f32 %v5061, 1.442695
  %v5070 = vpow.pop %v5069
  %v5071 = vmul.f32 %v5062, 1.442695
  %v5072 = vpow.pop %v5071
  %v5073 = vmul.f32 %v5063, 1.442695
  %v5074 = vpow.pop %v5073
  %v5075 = vmul.f32 %v5064, 1.442695
  %v5076 = vpow.pop %v5075
  %v5077 = vmul.f32 %v5065, 1.442695
  %v5078 = vpow.pop %v5077
  %v5079 = vmul.f32 %v5066, 1.442695
  %v5080 = vpow.pop %v5079
  %v5081 = vmul.f32 %v5067, 1.442695
  %v5082 = vpow.pop %v5081
  %v5083 = vmul.f32 %v5068, 1.442695
  %v5084 = vpow.pop %v5083
  %v5085 = vsel %vm759, %v5070, 0.0
  %5086 = vadd.xlane.f32.xlu0 %v5085
  %v5087 = vpop.xlane.xlu0 %5086
  %v5088 = vsel %vm759, %v5072, 0.0
  %5089 = vadd.xlane.f32.xlu0 %v5088
  %v5090 = vpop.xlane.xlu0 %5089
  %v5091 = vsel %vm759, %v5074, 0.0
  %5092 = vadd.xlane.f32.xlu0 %v5091
  %v5093 = vpop.xlane.xlu0 %5092
  %v5094 = vsel %vm759, %v5076, 0.0
  %5095 = vadd.xlane.f32.xlu0 %v5094
  %v5096 = vpop.xlane.xlu0 %5095
  %v5097 = vsel %vm759, %v5078, 0.0
  %5098 = vadd.xlane.f32.xlu0 %v5097
  %v5099 = vpop.xlane.xlu0 %5098
  %v5100 = vsel %vm759, %v5080, 0.0
  %5101 = vadd.xlane.f32.xlu0 %v5100
  %v5102 = vpop.xlane.xlu0 %5101
  %v5103 = vsel %vm759, %v5082, 0.0
  %5104 = vadd.xlane.f32.xlu0 %v5103
  %v5105 = vpop.xlane.xlu0 %5104
  %v5106 = vsel %vm759, %v5084, 0.0
  %5107 = vadd.xlane.f32.xlu0 %v5106
  %v5108 = vpop.xlane.xlu0 %5107
  %v5109 = vrcp.pop %v5087
  %v5110 = vrcp.pop %v5090
  %v5111 = vrcp.pop %v5093
  %v5112 = vrcp.pop %v5096
  %v5113 = vrcp.pop %v5099
  %v5114 = vrcp.pop %v5102
  %v5115 = vrcp.pop %v5105
  %v5116 = vrcp.pop %v5108
  %v5117 = vmul.f32 %v5070, %v5109
  %v5118 = vmul.f32 %v5072, %v5110
  %v5119 = vmul.f32 %v5074, %v5111
  %v5120 = vmul.f32 %v5076, %v5112
  %v5121 = vmul.f32 %v5078, %v5113
  %v5122 = vmul.f32 %v5080, %v5114
  %v5123 = vmul.f32 %v5082, %v5115
  %v5124 = vmul.f32 %v5084, %v5116
  %v5125 = vpack.c.bf16 %v5118, %v5117
  %v5126 = vpack.c.bf16 %v5120, %v5119
  %v5127 = vpack.c.bf16 %v5122, %v5121
  %v5128 = vpack.c.bf16 %v5124, %v5123
  %v5130 = vsel %vm759, %v5125, 0
  %vm5132 = vcmask 1043456
  %v5134 = vsel %vm5132, %v4640, 0
  %5136 = vmatprep.subr.bf16.mxu0 0
  %5137 = vmatpush1.bf16.msra.mxu0 0
  %5138 = vmatprep.subr.bf16.mxu0 0
  %5139 = vmatpush1.bf16.msra.mxu0 0
  %5140 = vmatprep.subr.bf16.mxu0 0
  %5141 = vmatpush1.bf16.msra.mxu0 0
  %5142 = vmatprep.subr.bf16.mxu0 0
  %5143 = vmatpush1.bf16.msra.mxu0 0
  %5144 = vmatprep.subr.bf16.mxu0 0
  %5145 = vmatpush1.bf16.msra.mxu0 0
  %5146 = vmatprep.subr.bf16.mxu0 0
  %5147 = vmatpush1.bf16.msra.mxu0 0
  %5148 = vmatprep.subr.bf16.mxu0 0
  %5149 = vmatpush1.bf16.msra.mxu0 0
  %5150 = vmatprep.subr.bf16.mxu0 0
  %5151 = vmatpush1.bf16.msra.mxu0 %v5134
  %5152 = vmatprep.subr.bf16.mxu0 0
  %5153 = vmatpush2.bf16.msra.mxu0 0
  %5154 = vmatprep.subr.bf16.mxu0 0
  %5155 = vmatpush2.bf16.msra.mxu0 0
  %5156 = vmatprep.subr.bf16.mxu0 0
  %5157 = vmatpush2.bf16.msra.mxu0 0
  %5158 = vmatprep.subr.bf16.mxu0 0
  %5159 = vmatpush2.bf16.msra.mxu0 0
  %5160 = vmatprep.subr.bf16.mxu0 0
  %5161 = vmatpush2.bf16.msra.mxu0 0
  %5162 = vmatprep.subr.bf16.mxu0 0
  %5163 = vmatpush2.bf16.msra.mxu0 0
  %5164 = vmatprep.subr.bf16.mxu0 0
  %5165 = vmatpush2.bf16.msra.mxu0 0
  %5166 = vmatprep.subr.bf16.mxu0 0
  %5167 = vmatpush2.bf16.msra.mxu0 0
  %5168 = vmatprep.mubr.bf16.mxu0 0
  %5169 = vmatmul.mubr.bf16.gmra.mxu0 %v5130
  %v5170 = vpop.f32.mrf.mxu0
  %v5171 = vadd.f32 0.0, %v5170
  %v5172 = vpop.f32.mrf.mxu0
  %v5173 = vpop.f32.mrf.mxu0
  %v5174 = vpop.f32.mrf.mxu0
  %5175 = vdwg.mxu0
  %v5177 = vrot.slane %v5125, 4
  %5179 = vrot.lane.b32.xlu0 %v4640, 120
  %v5180 = vpop.permute.xlu0 %5179
  %v5182 = vsel %vm759, %v5177, 0
  %v5185 = vsel %vm5132, %v5180, 0
  %5187 = vmatprep.subr.bf16.mxu0 0
  %5188 = vmatpush1.bf16.msra.mxu0 0
  %5189 = vmatprep.subr.bf16.mxu0 0
  %5190 = vmatpush1.bf16.msra.mxu0 0
  %5191 = vmatprep.subr.bf16.mxu0 0
  %5192 = vmatpush1.bf16.msra.mxu0 0
  %5193 = vmatprep.subr.bf16.mxu0 0
  %5194 = vmatpush1.bf16.msra.mxu0 0
  %5195 = vmatprep.subr.bf16.mxu0 0
  %5196 = vmatpush1.bf16.msra.mxu0 0
  %5197 = vmatprep.subr.bf16.mxu0 0
  %5198 = vmatpush1.bf16.msra.mxu0 0
  %5199 = vmatprep.subr.bf16.mxu0 0
  %5200 = vmatpush1.bf16.msra.mxu0 0
  %5201 = vmatprep.subr.bf16.mxu0 0
  %5202 = vmatpush1.bf16.msra.mxu0 %v5185
  %5203 = vmatprep.subr.bf16.mxu0 0
  %5204 = vmatpush2.bf16.msra.mxu0 0
  %5205 = vmatprep.subr.bf16.mxu0 0
  %5206 = vmatpush2.bf16.msra.mxu0 0
  %5207 = vmatprep.subr.bf16.mxu0 0
  %5208 = vmatpush2.bf16.msra.mxu0 0
  %5209 = vmatprep.subr.bf16.mxu0 0
  %5210 = vmatpush2.bf16.msra.mxu0 0
  %5211 = vmatprep.subr.bf16.mxu0 0
  %5212 = vmatpush2.bf16.msra.mxu0 0
  %5213 = vmatprep.subr.bf16.mxu0 0
  %5214 = vmatpush2.bf16.msra.mxu0 0
  %5215 = vmatprep.subr.bf16.mxu0 0
  %5216 = vmatpush2.bf16.msra.mxu0 0
  %5217 = vmatprep.subr.bf16.mxu0 0
  %5218 = vmatpush2.bf16.msra.mxu0 0
  %5219 = vmatprep.mubr.bf16.mxu0 0
  %5220 = vmatmul.mubr.bf16.gmra.mxu0 %v5182
  %v5221 = vpop.f32.mrf.mxu0
  %v5222 = vadd.f32 0.0, %v5221
  %v5223 = vpop.f32.mrf.mxu0
  %v5224 = vpop.f32.mrf.mxu0
  %v5225 = vpop.f32.mrf.mxu0
  %5226 = vdwg.mxu0
  %5227 = vrot.lane.b32.xlu0 %v4640, 112
  %v5228 = vpop.permute.xlu0 %5227
  %v5230 = vsel %vm759, %v5126, 0
  %v5233 = vsel %vm5132, %v5228, 0
  %5235 = vmatprep.subr.bf16.mxu0 0
  %5236 = vmatpush1.bf16.msra.mxu0 0
  %5237 = vmatprep.subr.bf16.mxu0 0
  %5238 = vmatpush1.bf16.msra.mxu0 0
  %5239 = vmatprep.subr.bf16.mxu0 0
  %5240 = vmatpush1.bf16.msra.mxu0 0
  %5241 = vmatprep.subr.bf16.mxu0 0
  %5242 = vmatpush1.bf16.msra.mxu0 0
  %5243 = vmatprep.subr.bf16.mxu0 0
  %5244 = vmatpush1.bf16.msra.mxu0 0
  %5245 = vmatprep.subr.bf16.mxu0 0
  %5246 = vmatpush1.bf16.msra.mxu0 0
  %5247 = vmatprep.subr.bf16.mxu0 0
  %5248 = vmatpush1.bf16.msra.mxu0 0
  %5249 = vmatprep.subr.bf16.mxu0 0
  %5250 = vmatpush1.bf16.msra.mxu0 %v5233
  %5251 = vmatprep.subr.bf16.mxu0 0
  %5252 = vmatpush2.bf16.msra.mxu0 0
  %5253 = vmatprep.subr.bf16.mxu0 0
  %5254 = vmatpush2.bf16.msra.mxu0 0
  %5255 = vmatprep.subr.bf16.mxu0 0
  %5256 = vmatpush2.bf16.msra.mxu0 0
  %5257 = vmatprep.subr.bf16.mxu0 0
  %5258 = vmatpush2.bf16.msra.mxu0 0
  %5259 = vmatprep.subr.bf16.mxu0 0
  %5260 = vmatpush2.bf16.msra.mxu0 0
  %5261 = vmatprep.subr.bf16.mxu0 0
  %5262 = vmatpush2.bf16.msra.mxu0 0
  %5263 = vmatprep.subr.bf16.mxu0 0
  %5264 = vmatpush2.bf16.msra.mxu0 0
  %5265 = vmatprep.subr.bf16.mxu0 0
  %5266 = vmatpush2.bf16.msra.mxu0 0
  %5267 = vmatprep.mubr.bf16.mxu0 0
  %5268 = vmatmul.mubr.bf16.gmra.mxu0 %v5230
  %v5269 = vpop.f32.mrf.mxu0
  %v5270 = vadd.f32 0.0, %v5269
  %v5271 = vpop.f32.mrf.mxu0
  %v5272 = vpop.f32.mrf.mxu0
  %v5273 = vpop.f32.mrf.mxu0
  %5274 = vdwg.mxu0
  %v5276 = vrot.slane %v5126, 4
  %5277 = vrot.lane.b32.xlu0 %v4640, 104
  %v5278 = vpop.permute.xlu0 %5277
  %v5280 = vsel %vm759, %v5276, 0
  %v5283 = vsel %vm5132, %v5278, 0
  %5285 = vmatprep.subr.bf16.mxu0 0
  %5286 = vmatpush1.bf16.msra.mxu0 0
  %5287 = vmatprep.subr.bf16.mxu0 0
  %5288 = vmatpush1.bf16.msra.mxu0 0
  %5289 = vmatprep.subr.bf16.mxu0 0
  %5290 = vmatpush1.bf16.msra.mxu0 0
  %5291 = vmatprep.subr.bf16.mxu0 0
  %5292 = vmatpush1.bf16.msra.mxu0 0
  %5293 = vmatprep.subr.bf16.mxu0 0
  %5294 = vmatpush1.bf16.msra.mxu0 0
  %5295 = vmatprep.subr.bf16.mxu0 0
  %5296 = vmatpush1.bf16.msra.mxu0 0
  %5297 = vmatprep.subr.bf16.mxu0 0
  %5298 = vmatpush1.bf16.msra.mxu0 0
  %5299 = vmatprep.subr.bf16.mxu0 0
  %5300 = vmatpush1.bf16.msra.mxu0 %v5283
  %5301 = vmatprep.subr.bf16.mxu0 0
  %5302 = vmatpush2.bf16.msra.mxu0 0
  %5303 = vmatprep.subr.bf16.mxu0 0
  %5304 = vmatpush2.bf16.msra.mxu0 0
  %5305 = vmatprep.subr.bf16.mxu0 0
  %5306 = vmatpush2.bf16.msra.mxu0 0
  %5307 = vmatprep.subr.bf16.mxu0 0
  %5308 = vmatpush2.bf16.msra.mxu0 0
  %5309 = vmatprep.subr.bf16.mxu0 0
  %5310 = vmatpush2.bf16.msra.mxu0 0
  %5311 = vmatprep.subr.bf16.mxu0 0
  %5312 = vmatpush2.bf16.msra.mxu0 0
  %5313 = vmatprep.subr.bf16.mxu0 0
  %5314 = vmatpush2.bf16.msra.mxu0 0
  %5315 = vmatprep.subr.bf16.mxu0 0
  %5316 = vmatpush2.bf16.msra.mxu0 0
  %5317 = vmatprep.mubr.bf16.mxu0 0
  %5318 = vmatmul.mubr.bf16.gmra.mxu0 %v5280
  %v5319 = vpop.f32.mrf.mxu0
  %v5320 = vadd.f32 0.0, %v5319
  %v5321 = vpop.f32.mrf.mxu0
  %v5322 = vpop.f32.mrf.mxu0
  %v5323 = vpop.f32.mrf.mxu0
  %5324 = vdwg.mxu0
  %5326 = vrot.lane.b32.xlu0 %v5222, 8
  %v5327 = vpop.permute.xlu0 %5326
  %5330 = vrot.lane.b32.xlu0 %v5270, 16
  %v5331 = vpop.permute.xlu0 %5330
  %5334 = vrot.lane.b32.xlu0 %v5320, 24
  %v5335 = vpop.permute.xlu0 %5334
  %v5337 = vsel %vm759, %v5171, %v5327
  %v5338 = vsel %vm2773, %v5337, %v5331
  %v5339 = vsel %vm2782, %v5338, %v5335
  %v5340 = vrot.slane %v4640, 4
  %v5342 = vsel %vm759, %v5127, 0
  %v5345 = vsel %vm5132, %v5340, 0
  %5347 = vmatprep.subr.bf16.mxu0 0
  %5348 = vmatpush1.bf16.msra.mxu0 0
  %5349 = vmatprep.subr.bf16.mxu0 0
  %5350 = vmatpush1.bf16.msra.mxu0 0
  %5351 = vmatprep.subr.bf16.mxu0 0
  %5352 = vmatpush1.bf16.msra.mxu0 0
  %5353 = vmatprep.subr.bf16.mxu0 0
  %5354 = vmatpush1.bf16.msra.mxu0 0
  %5355 = vmatprep.subr.bf16.mxu0 0
  %5356 = vmatpush1.bf16.msra.mxu0 0
  %5357 = vmatprep.subr.bf16.mxu0 0
  %5358 = vmatpush1.bf16.msra.mxu0 0
  %5359 = vmatprep.subr.bf16.mxu0 0
  %5360 = vmatpush1.bf16.msra.mxu0 0
  %5361 = vmatprep.subr.bf16.mxu0 0
  %5362 = vmatpush1.bf16.msra.mxu0 %v5345
  %5363 = vmatprep.subr.bf16.mxu0 0
  %5364 = vmatpush2.bf16.msra.mxu0 0
  %5365 = vmatprep.subr.bf16.mxu0 0
  %5366 = vmatpush2.bf16.msra.mxu0 0
  %5367 = vmatprep.subr.bf16.mxu0 0
  %5368 = vmatpush2.bf16.msra.mxu0 0
  %5369 = vmatprep.subr.bf16.mxu0 0
  %5370 = vmatpush2.bf16.msra.mxu0 0
  %5371 = vmatprep.subr.bf16.mxu0 0
  %5372 = vmatpush2.bf16.msra.mxu0 0
  %5373 = vmatprep.subr.bf16.mxu0 0
  %5374 = vmatpush2.bf16.msra.mxu0 0
  %5375 = vmatprep.subr.bf16.mxu0 0
  %5376 = vmatpush2.bf16.msra.mxu0 0
  %5377 = vmatprep.subr.bf16.mxu0 0
  %5378 = vmatpush2.bf16.msra.mxu0 0
  %5379 = vmatprep.mubr.bf16.mxu0 0
  %5380 = vmatmul.mubr.bf16.gmra.mxu0 %v5342
  %v5381 = vpop.f32.mrf.mxu0
  %v5382 = vadd.f32 0.0, %v5381
  %v5383 = vpop.f32.mrf.mxu0
  %v5384 = vpop.f32.mrf.mxu0
  %v5385 = vpop.f32.mrf.mxu0
  %5386 = vdwg.mxu0
  %v5388 = vrot.slane %v5127, 4
  %5389 = vrot.lane.b32.xlu0 %v5340, 120
  %v5390 = vpop.permute.xlu0 %5389
  %v5392 = vsel %vm759, %v5388, 0
  %v5395 = vsel %vm5132, %v5390, 0
  %5397 = vmatprep.subr.bf16.mxu0 0
  %5398 = vmatpush1.bf16.msra.mxu0 0
  %5399 = vmatprep.subr.bf16.mxu0 0
  %5400 = vmatpush1.bf16.msra.mxu0 0
  %5401 = vmatprep.subr.bf16.mxu0 0
  %5402 = vmatpush1.bf16.msra.mxu0 0
  %5403 = vmatprep.subr.bf16.mxu0 0
  %5404 = vmatpush1.bf16.msra.mxu0 0
  %5405 = vmatprep.subr.bf16.mxu0 0
  %5406 = vmatpush1.bf16.msra.mxu0 0
  %5407 = vmatprep.subr.bf16.mxu0 0
  %5408 = vmatpush1.bf16.msra.mxu0 0
  %5409 = vmatprep.subr.bf16.mxu0 0
  %5410 = vmatpush1.bf16.msra.mxu0 0
  %5411 = vmatprep.subr.bf16.mxu0 0
  %5412 = vmatpush1.bf16.msra.mxu0 %v5395
  %5413 = vmatprep.subr.bf16.mxu0 0
  %5414 = vmatpush2.bf16.msra.mxu0 0
  %5415 = vmatprep.subr.bf16.mxu0 0
  %5416 = vmatpush2.bf16.msra.mxu0 0
  %5417 = vmatprep.subr.bf16.mxu0 0
  %5418 = vmatpush2.bf16.msra.mxu0 0
  %5419 = vmatprep.subr.bf16.mxu0 0
  %5420 = vmatpush2.bf16.msra.mxu0 0
  %5421 = vmatprep.subr.bf16.mxu0 0
  %5422 = vmatpush2.bf16.msra.mxu0 0
  %5423 = vmatprep.subr.bf16.mxu0 0
  %5424 = vmatpush2.bf16.msra.mxu0 0
  %5425 = vmatprep.subr.bf16.mxu0 0
  %5426 = vmatpush2.bf16.msra.mxu0 0
  %5427 = vmatprep.subr.bf16.mxu0 0
  %5428 = vmatpush2.bf16.msra.mxu0 0
  %5429 = vmatprep.mubr.bf16.mxu0 0
  %5430 = vmatmul.mubr.bf16.gmra.mxu0 %v5392
  %v5431 = vpop.f32.mrf.mxu0
  %v5432 = vadd.f32 0.0, %v5431
  %v5433 = vpop.f32.mrf.mxu0
  %v5434 = vpop.f32.mrf.mxu0
  %v5435 = vpop.f32.mrf.mxu0
  %5436 = vdwg.mxu0
  %5437 = vrot.lane.b32.xlu0 %v5340, 112
  %v5438 = vpop.permute.xlu0 %5437
  %v5440 = vsel %vm759, %v5128, 0
  %v5443 = vsel %vm5132, %v5438, 0
  %5445 = vmatprep.subr.bf16.mxu0 0
  %5446 = vmatpush1.bf16.msra.mxu0 0
  %5447 = vmatprep.subr.bf16.mxu0 0
  %5448 = vmatpush1.bf16.msra.mxu0 0
  %5449 = vmatprep.subr.bf16.mxu0 0
  %5450 = vmatpush1.bf16.msra.mxu0 0
  %5451 = vmatprep.subr.bf16.mxu0 0
  %5452 = vmatpush1.bf16.msra.mxu0 0
  %5453 = vmatprep.subr.bf16.mxu0 0
  %5454 = vmatpush1.bf16.msra.mxu0 0
  %5455 = vmatprep.subr.bf16.mxu0 0
  %5456 = vmatpush1.bf16.msra.mxu0 0
  %5457 = vmatprep.subr.bf16.mxu0 0
  %5458 = vmatpush1.bf16.msra.mxu0 0
  %5459 = vmatprep.subr.bf16.mxu0 0
  %5460 = vmatpush1.bf16.msra.mxu0 %v5443
  %5461 = vmatprep.subr.bf16.mxu0 0
  %5462 = vmatpush2.bf16.msra.mxu0 0
  %5463 = vmatprep.subr.bf16.mxu0 0
  %5464 = vmatpush2.bf16.msra.mxu0 0
  %5465 = vmatprep.subr.bf16.mxu0 0
  %5466 = vmatpush2.bf16.msra.mxu0 0
  %5467 = vmatprep.subr.bf16.mxu0 0
  %5468 = vmatpush2.bf16.msra.mxu0 0
  %5469 = vmatprep.subr.bf16.mxu0 0
  %5470 = vmatpush2.bf16.msra.mxu0 0
  %5471 = vmatprep.subr.bf16.mxu0 0
  %5472 = vmatpush2.bf16.msra.mxu0 0
  %5473 = vmatprep.subr.bf16.mxu0 0
  %5474 = vmatpush2.bf16.msra.mxu0 0
  %5475 = vmatprep.subr.bf16.mxu0 0
  %5476 = vmatpush2.bf16.msra.mxu0 0
  %5477 = vmatprep.mubr.bf16.mxu0 0
  %5478 = vmatmul.mubr.bf16.gmra.mxu0 %v5440
  %v5479 = vpop.f32.mrf.mxu0
  %v5480 = vadd.f32 0.0, %v5479
  %v5481 = vpop.f32.mrf.mxu0
  %v5482 = vpop.f32.mrf.mxu0
  %v5483 = vpop.f32.mrf.mxu0
  %5484 = vdwg.mxu0
  %v5486 = vrot.slane %v5128, 4
  %5487 = vrot.lane.b32.xlu0 %v5340, 104
  %v5488 = vpop.permute.xlu0 %5487
  %v5490 = vsel %vm759, %v5486, 0
  %v5493 = vsel %vm5132, %v5488, 0
  %5495 = vmatprep.subr.bf16.mxu0 0
  %5496 = vmatpush1.bf16.msra.mxu0 0
  %5497 = vmatprep.subr.bf16.mxu0 0
  %5498 = vmatpush1.bf16.msra.mxu0 0
  %5499 = vmatprep.subr.bf16.mxu0 0
  %5500 = vmatpush1.bf16.msra.mxu0 0
  %5501 = vmatprep.subr.bf16.mxu0 0
  %5502 = vmatpush1.bf16.msra.mxu0 0
  %5503 = vmatprep.subr.bf16.mxu0 0
  %5504 = vmatpush1.bf16.msra.mxu0 0
  %5505 = vmatprep.subr.bf16.mxu0 0
  %5506 = vmatpush1.bf16.msra.mxu0 0
  %5507 = vmatprep.subr.bf16.mxu0 0
  %5508 = vmatpush1.bf16.msra.mxu0 0
  %5509 = vmatprep.subr.bf16.mxu0 0
  %5510 = vmatpush1.bf16.msra.mxu0 %v5493
  %5511 = vmatprep.subr.bf16.mxu0 0
  %5512 = vmatpush2.bf16.msra.mxu0 0
  %5513 = vmatprep.subr.bf16.mxu0 0
  %5514 = vmatpush2.bf16.msra.mxu0 0
  %5515 = vmatprep.subr.bf16.mxu0 0
  %5516 = vmatpush2.bf16.msra.mxu0 0
  %5517 = vmatprep.subr.bf16.mxu0 0
  %5518 = vmatpush2.bf16.msra.mxu0 0
  %5519 = vmatprep.subr.bf16.mxu0 0
  %5520 = vmatpush2.bf16.msra.mxu0 0
  %5521 = vmatprep.subr.bf16.mxu0 0
  %5522 = vmatpush2.bf16.msra.mxu0 0
  %5523 = vmatprep.subr.bf16.mxu0 0
  %5524 = vmatpush2.bf16.msra.mxu0 0
  %5525 = vmatprep.subr.bf16.mxu0 0
  %5526 = vmatpush2.bf16.msra.mxu0 0
  %5527 = vmatprep.mubr.bf16.mxu0 0
  %5528 = vmatmul.mubr.bf16.gmra.mxu0 %v5490
  %v5529 = vpop.f32.mrf.mxu0
  %v5530 = vadd.f32 0.0, %v5529
  %v5531 = vpop.f32.mrf.mxu0
  %v5532 = vpop.f32.mrf.mxu0
  %v5533 = vpop.f32.mrf.mxu0
  %5534 = vdwg.mxu0
  %5536 = vrot.lane.b32.xlu0 %v5432, 8
  %v5537 = vpop.permute.xlu0 %5536
  %5540 = vrot.lane.b32.xlu0 %v5480, 16
  %v5541 = vpop.permute.xlu0 %5540
  %5544 = vrot.lane.b32.xlu0 %v5530, 24
  %v5545 = vpop.permute.xlu0 %5544
  %v5547 = vsel %vm759, %v5382, %v5537
  %v5548 = vsel %vm2773, %v5547, %v5541
  %v5549 = vsel %vm2782, %v5548, %v5545
  %v5550 = vpack.c.bf16 %v5549, %v5339
  %v5551 = vld [vmem:[%s1 + $0x280] sm:$0xf]
  %v5552 = vld [vmem:[%s1 + $0x284] sm:$0xf]
  %v5553 = vld [vmem:[%s1 + $0x288] sm:$0xf]
  %v5554 = vld [vmem:[%s1 + $0x28c] sm:$0xf]
  %v5555 = vld [vmem:[%s2 + $0x56] sm:$0x1]
  %v5556 = vlaneseq
  %v5557 = vshrl.u32 %v5556, 7
  %v5558 = vsub.s32 0, %v5557
  %v5559 = vrot.slane %v5555, %v5558
  %v5564 = vunpack.c.l.b16 %v5551
  %v5565 = vunpack.c.l.b16 %v5552
  %v5566 = vunpack.c.l.b16 %v5553
  %v5567 = vunpack.c.l.b16 %v5554
  %v5568 = vpack.c.b16 %v5565, %v5564
  %v5569 = vpack.c.b16 %v5567, %v5566
  %v5573 = vsel %vm3288, %v5550, 0
  %5575 = vmatprep.subr.bf16.mxu0 0
  %5576 = vmatpush1.bf16.msra.mxu0 0
  %5577 = vmatprep.subr.bf16.mxu0 0
  %5578 = vmatpush1.bf16.msra.mxu0 0
  %5579 = vmatprep.subr.bf16.mxu0 0
  %5580 = vmatpush1.bf16.msra.mxu0 0
  %5581 = vmatprep.subr.bf16.mxu0 0
  %5582 = vmatpush1.bf16.msra.mxu0 0
  %5583 = vmatprep.subr.bf16.mxu0 0
  %5584 = vmatpush1.bf16.msra.mxu0 0
  %5585 = vmatprep.subr.bf16.mxu0 0
  %5586 = vmatpush1.bf16.msra.mxu0 0
  %5587 = vmatprep.subr.bf16.mxu0 0
  %5588 = vmatpush1.bf16.msra.mxu0 %v5569
  %5589 = vmatprep.subr.bf16.mxu0 0
  %5590 = vmatpush1.bf16.msra.mxu0 %v5568
  %5591 = vmatprep.subr.bf16.mxu0 0
  %5592 = vmatpush2.bf16.msra.mxu0 0
  %5593 = vmatprep.subr.bf16.mxu0 0
  %5594 = vmatpush2.bf16.msra.mxu0 0
  %5595 = vmatprep.subr.bf16.mxu0 0
  %5596 = vmatpush2.bf16.msra.mxu0 0
  %5597 = vmatprep.subr.bf16.mxu0 0
  %5598 = vmatpush2.bf16.msra.mxu0 0
  %5599 = vmatprep.subr.bf16.mxu0 0
  %5600 = vmatpush2.bf16.msra.mxu0 0
  %5601 = vmatprep.subr.bf16.mxu0 0
  %5602 = vmatpush2.bf16.msra.mxu0 0
  %5603 = vmatprep.subr.bf16.mxu0 0
  %5604 = vmatpush2.bf16.msra.mxu0 0
  %5605 = vmatprep.subr.bf16.mxu0 0
  %5606 = vmatpush2.bf16.msra.mxu0 0
  %5607 = vmatprep.mubr.bf16.mxu0 0
  %5608 = vmatmul.mubr.bf16.gmra.mxu0 %v5573
  %v5609 = vpop.f32.mrf.mxu0
  %v5610 = vadd.f32 %v5559, %v5609
  %v5611 = vpop.f32.mrf.mxu0
  %v5612 = vpop.f32.mrf.mxu0
  %v5613 = vadd.f32 %v5559, %v5612
  %v5614 = vpop.f32.mrf.mxu0
  %5615 = vdwg.mxu0
  %v5616 = vadd.f32 %v4306, %v5610
  %v5617 = vadd.f32 %v4306, %v5613
  %5618 = vadd.xlane.f32.xlu0 %v5616
  %v5619 = vpop.xlane.xlu0 %5618
  %5620 = vadd.xlane.f32.xlu0 %v5617
  %v5621 = vpop.xlane.xlu0 %5620
  %v5622 = vmul.f32 %v5619, 0.03125
  %v5623 = vmul.f32 %v5621, 0.03125
  %v5624 = vmul.f32 %v5616, %v5616
  %v5625 = vmul.f32 %v5617, %v5617
  %5626 = vadd.xlane.f32.xlu0 %v5624
  %v5627 = vpop.xlane.xlu0 %5626
  %5628 = vadd.xlane.f32.xlu0 %v5625
  %v5629 = vpop.xlane.xlu0 %5628
  %v5630 = vmul.f32 %v5627, 0.03125
  %v5631 = vmul.f32 %v5629, 0.03125
  %v5632 = vmul.f32 %v5622, %v5622
  %v5633 = vmul.f32 %v5623, %v5623
  %v5634 = vsub.f32 %v5630, %v5632
  %v5635 = vsub.f32 %v5631, %v5633
  %v5636 = vsub.f32 %v5616, %v5622
  %v5637 = vsub.f32 %v5617, %v5623
  %v5638 = vadd.f32 %v5634, 1e-05
  %v5639 = vadd.f32 %v5635, 1e-05
  %v5640 = vrsqrt.pop %v5638
  %v5641 = vrsqrt.pop %v5639
  %v5642 = vmul.f32 %v5636, %v5640
  %v5643 = vmul.f32 %v5637, %v5641
  %v5644 = vld [vmem:[%s2 + $0x57] sm:$0x1]
  %v5645 = vlaneseq
  %v5646 = vshrl.u32 %v5645, 7
  %v5647 = vsub.s32 0, %v5646
  %v5648 = vrot.slane %v5644, %v5647
  %v5649 = vmul.f32 %v5642, %v5648
  %v5650 = vmul.f32 %v5643, %v5648
  %v5651 = vld [vmem:[%s2 + $0x58] sm:$0x1]
  %v5652 = vlaneseq
  %v5653 = vshrl.u32 %v5652, 7
  %v5654 = vsub.s32 0, %v5653
  %v5655 = vrot.slane %v5651, %v5654
  %v5656 = vadd.f32 %v5649, %v5655
  %v5657 = vadd.f32 %v5650, %v5655
  %v5658 = vpack.c.bf16 %v5657, %v5656
  %v5659 = vld [vmem:[%s1 + $0x2c0] sm:$0xf]
  %v5660 = vld [vmem:[%s1 + $0x2c4] sm:$0xf]
  %v5661 = vld [vmem:[%s1 + $0x2c8] sm:$0xf]
  %v5662 = vld [vmem:[%s1 + $0x2cc] sm:$0xf]
  %v5663 = vld [vmem:[%s1 + $0x2d0] sm:$0xf]
  %v5664 = vld [vmem:[%s1 + $0x2d4] sm:$0xf]
  %v5665 = vld [vmem:[%s1 + $0x2d8] sm:$0xf]
  %v5666 = vld [vmem:[%s1 + $0x2dc] sm:$0xf]
  %v5667 = vld [vmem:[%s1 + $0x2e0] sm:$0xf]
  %v5668 = vld [vmem:[%s1 + $0x2e4] sm:$0xf]
  %v5669 = vld [vmem:[%s1 + $0x2e8] sm:$0xf]
  %v5670 = vld [vmem:[%s1 + $0x2ec] sm:$0xf]
  %v5671 = vld [vmem:[%s1 + $0x2f0] sm:$0xf]
  %v5672 = vld [vmem:[%s1 + $0x2f4] sm:$0xf]
  %v5673 = vld [vmem:[%s1 + $0x2f8] sm:$0xf]
  %v5674 = vld [vmem:[%s1 + $0x2fc] sm:$0xf]
  %v5675 = vld [vmem:[%s2 + $0x59] sm:$0x1]
  %v5676 = vlaneseq
  %v5677 = vshrl.u32 %v5676, 7
  %v5678 = vsub.s32 0, %v5677
  %v5679 = vrot.slane %v5675, %v5678
  %v5696 = vunpack.c.l.b16 %v5659
  %v5697 = vunpack.c.l.b16 %v5660
  %v5698 = vunpack.c.l.b16 %v5661
  %v5699 = vunpack.c.l.b16 %v5662
  %v5700 = vunpack.c.l.b16 %v5663
  %v5701 = vunpack.c.l.b16 %v5664
  %v5702 = vunpack.c.l.b16 %v5665
  %v5703 = vunpack.c.l.b16 %v5666
  %v5704 = vunpack.c.l.b16 %v5667
  %v5705 = vunpack.c.l.b16 %v5668
  %v5706 = vunpack.c.l.b16 %v5669
  %v5707 = vunpack.c.l.b16 %v5670
  %v5708 = vunpack.c.l.b16 %v5671
  %v5709 = vunpack.c.l.b16 %v5672
  %v5710 = vunpack.c.l.b16 %v5673
  %v5711 = vunpack.c.l.b16 %v5674
  %v5712 = vpack.c.b16 %v5697, %v5696
  %v5713 = vpack.c.b16 %v5699, %v5698
  %v5714 = vpack.c.b16 %v5701, %v5700
  %v5715 = vpack.c.b16 %v5703, %v5702
  %v5716 = vpack.c.b16 %v5705, %v5704
  %v5717 = vpack.c.b16 %v5707, %v5706
  %v5718 = vpack.c.b16 %v5709, %v5708
  %v5719 = vpack.c.b16 %v5711, %v5710
  %5728 = vmatprep.subr.bf16.mxu0 0
  %5729 = vmatpush1.bf16.msra.mxu0 %v5719
  %5730 = vmatprep.subr.bf16.mxu0 0
  %5731 = vmatpush1.bf16.msra.mxu0 %v5718
  %5732 = vmatprep.subr.bf16.mxu0 0
  %5733 = vmatpush1.bf16.msra.mxu0 %v5717
  %5734 = vmatprep.subr.bf16.mxu0 0
  %5735 = vmatpush1.bf16.msra.mxu0 %v5716
  %5736 = vmatprep.subr.bf16.mxu0 0
  %5737 = vmatpush1.bf16.msra.mxu0 %v5715
  %5738 = vmatprep.subr.bf16.mxu0 0
  %5739 = vmatpush1.bf16.msra.mxu0 %v5714
  %5740 = vmatprep.subr.bf16.mxu0 0
  %5741 = vmatpush1.bf16.msra.mxu0 %v5713
  %5742 = vmatprep.subr.bf16.mxu0 0
  %5743 = vmatpush1.bf16.msra.mxu0 %v5712
  %5744 = vmatprep.subr.bf16.mxu0 0
  %5745 = vmatpush2.bf16.msra.mxu0 0
  %5746 = vmatprep.subr.bf16.mxu0 0
  %5747 = vmatpush2.bf16.msra.mxu0 0
  %5748 = vmatprep.subr.bf16.mxu0 0
  %5749 = vmatpush2.bf16.msra.mxu0 0
  %5750 = vmatprep.subr.bf16.mxu0 0
  %5751 = vmatpush2.bf16.msra.mxu0 0
  %5752 = vmatprep.subr.bf16.mxu0 0
  %5753 = vmatpush2.bf16.msra.mxu0 0
  %5754 = vmatprep.subr.bf16.mxu0 0
  %5755 = vmatpush2.bf16.msra.mxu0 0
  %5756 = vmatprep.subr.bf16.mxu0 0
  %5757 = vmatpush2.bf16.msra.mxu0 0
  %5758 = vmatprep.subr.bf16.mxu0 0
  %5759 = vmatpush2.bf16.msra.mxu0 0
  %5760 = vmatprep.mubr.bf16.mxu0 0
  %5761 = vmatmul.mubr.bf16.gmra.mxu0 %v5658
  %v5762 = vpop.f32.mrf.mxu0
  %v5763 = vadd.f32 %v5679, %v5762
  %v5764 = vpop.f32.mrf.mxu0
  %v5765 = vpop.f32.mrf.mxu0
  %v5766 = vadd.f32 %v5679, %v5765
  %v5767 = vpop.f32.mrf.mxu0
  %5768 = vdwg.mxu0
  %v5769 = vpack.c.bf16 %v4291, %v4290
  %v5770 = vpack.c.bf16 %v4293, %v4292
  %v5771 = vpack.c.bf16 %v4295, %v4294
  %v5772 = vpack.c.bf16 %v4297, %v4296
  %v5773 = vpack.c.bf16 %v4299, %v4298
  %v5774 = vpack.c.bf16 %v4301, %v4300
  %v5775 = vpack.c.bf16 %v4303, %v4302
  %v5776 = vpack.c.bf16 %v4305, %v4304
  %v5777 = vld [vmem:[%s1 + $0x300] sm:$0xf]
  %v5778 = vld [vmem:[%s1 + $0x304] sm:$0xf]
  %v5779 = vld [vmem:[%s1 + $0x308] sm:$0xf]
  %v5780 = vld [vmem:[%s1 + $0x30c] sm:$0xf]
  %v5781 = vld [vmem:[%s1 + $0x310] sm:$0xf]
  %v5782 = vld [vmem:[%s1 + $0x314] sm:$0xf]
  %v5783 = vld [vmem:[%s1 + $0x318] sm:$0xf]
  %v5784 = vld [vmem:[%s1 + $0x31c] sm:$0xf]
  %v5785 = vld [vmem:[%s1 + $0x320] sm:$0xf]
  %v5786 = vld [vmem:[%s1 + $0x324] sm:$0xf]
  %v5787 = vld [vmem:[%s1 + $0x328] sm:$0xf]
  %v5788 = vld [vmem:[%s1 + $0x32c] sm:$0xf]
  %v5789 = vld [vmem:[%s1 + $0x330] sm:$0xf]
  %v5790 = vld [vmem:[%s1 + $0x334] sm:$0xf]
  %v5791 = vld [vmem:[%s1 + $0x338] sm:$0xf]
  %v5792 = vld [vmem:[%s1 + $0x33c] sm:$0xf]
  %v5793 = vld [vmem:[%s2 + $0x5a] sm:$0x1]
  %v5794 = vlaneseq
  %v5795 = vshrl.u32 %v5794, 7
  %v5796 = vsub.s32 0, %v5795
  %v5797 = vrot.slane %v5793, %v5796
  %v5814 = vunpack.c.l.b16 %v5777
  %v5815 = vunpack.c.l.b16 %v5778
  %v5816 = vunpack.c.l.b16 %v5779
  %v5817 = vunpack.c.l.b16 %v5780
  %v5818 = vunpack.c.l.b16 %v5781
  %v5819 = vunpack.c.l.b16 %v5782
  %v5820 = vunpack.c.l.b16 %v5783
  %v5821 = vunpack.c.l.b16 %v5784
  %v5822 = vunpack.c.l.b16 %v5785
  %v5823 = vunpack.c.l.b16 %v5786
  %v5824 = vunpack.c.l.b16 %v5787
  %v5825 = vunpack.c.l.b16 %v5788
  %v5826 = vunpack.c.l.b16 %v5789
  %v5827 = vunpack.c.l.b16 %v5790
  %v5828 = vunpack.c.l.b16 %v5791
  %v5829 = vunpack.c.l.b16 %v5792
  %v5830 = vpack.c.b16 %v5815, %v5814
  %v5831 = vpack.c.b16 %v5817, %v5816
  %v5832 = vpack.c.b16 %v5819, %v5818
  %v5833 = vpack.c.b16 %v5821, %v5820
  %v5834 = vpack.c.b16 %v5823, %v5822
  %v5835 = vpack.c.b16 %v5825, %v5824
  %v5836 = vpack.c.b16 %v5827, %v5826
  %v5837 = vpack.c.b16 %v5829, %v5828
  %5846 = vmatprep.subr.bf16.mxu0 0
  %5847 = vmatpush1.bf16.msra.mxu0 %v5837
  %5848 = vmatprep.subr.bf16.mxu0 0
  %5849 = vmatpush1.bf16.msra.mxu0 %v5836
  %5850 = vmatprep.subr.bf16.mxu0 0
  %5851 = vmatpush1.bf16.msra.mxu0 %v5835
  %5852 = vmatprep.subr.bf16.mxu0 0
  %5853 = vmatpush1.bf16.msra.mxu0 %v5834
  %5854 = vmatprep.subr.bf16.mxu0 0
  %5855 = vmatpush1.bf16.msra.mxu0 %v5833
  %5856 = vmatprep.subr.bf16.mxu0 0
  %5857 = vmatpush1.bf16.msra.mxu0 %v5832
  %5858 = vmatprep.subr.bf16.mxu0 0
  %5859 = vmatpush1.bf16.msra.mxu0 %v5831
  %5860 = vmatprep.subr.bf16.mxu0 0
  %5861 = vmatpush1.bf16.msra.mxu0 %v5830
  %5862 = vmatprep.subr.bf16.mxu0 0
  %5863 = vmatpush2.bf16.msra.mxu0 0
  %5864 = vmatprep.subr.bf16.mxu0 0
  %5865 = vmatpush2.bf16.msra.mxu0 0
  %5866 = vmatprep.subr.bf16.mxu0 0
  %5867 = vmatpush2.bf16.msra.mxu0 0
  %5868 = vmatprep.subr.bf16.mxu0 0
  %5869 = vmatpush2.bf16.msra.mxu0 0
  %5870 = vmatprep.subr.bf16.mxu0 0
  %5871 = vmatpush2.bf16.msra.mxu0 0
  %5872 = vmatprep.subr.bf16.mxu0 0
  %5873 = vmatpush2.bf16.msra.mxu0 0
  %5874 = vmatprep.subr.bf16.mxu0 0
  %5875 = vmatpush2.bf16.msra.mxu0 0
  %5876 = vmatprep.subr.bf16.mxu0 0
  %5877 = vmatpush2.bf16.msra.mxu0 0
  %5878 = vmatprep.mubr.bf16.mxu0 0
  %5879 = vmatmul.mubr.bf16.gmra.mxu0 %v5769
  %v5880 = vpop.f32.mrf.mxu0
  %v5881 = vadd.f32 %v5797, %v5880
  %v5882 = vpop.f32.mrf.mxu0
  %v5883 = vpop.f32.mrf.mxu0
  %v5884 = vadd.f32 %v5797, %v5883
  %v5885 = vpop.f32.mrf.mxu0
  %5886 = vmatprep.mubr.bf16.mxu0 0
  %5887 = vmatmul.mubr.bf16.gmra.mxu0 %v5770
  %v5888 = vpop.f32.mrf.mxu0
  %v5889 = vadd.f32 %v5797, %v5888
  %v5890 = vpop.f32.mrf.mxu0
  %v5891 = vpop.f32.mrf.mxu0
  %v5892 = vadd.f32 %v5797, %v5891
  %v5893 = vpop.f32.mrf.mxu0
  %5894 = vmatprep.mubr.bf16.mxu0 0
  %5895 = vmatmul.mubr.bf16.gmra.mxu0 %v5771
  %v5896 = vpop.f32.mrf.mxu0
  %v5897 = vadd.f32 %v5797, %v5896
  %v5898 = vpop.f32.mrf.mxu0
  %v5899 = vpop.f32.mrf.mxu0
  %v5900 = vadd.f32 %v5797, %v5899
  %v5901 = vpop.f32.mrf.mxu0
  %5902 = vmatprep.mubr.bf16.mxu0 0
  %5903 = vmatmul.mubr.bf16.gmra.mxu0 %v5772
  %v5904 = vpop.f32.mrf.mxu0
  %v5905 = vadd.f32 %v5797, %v5904
  %v5906 = vpop.f32.mrf.mxu0
  %v5907 = vpop.f32.mrf.mxu0
  %v5908 = vadd.f32 %v5797, %v5907
  %v5909 = vpop.f32.mrf.mxu0
  %5910 = vmatprep.mubr.bf16.mxu0 0
  %5911 = vmatmul.mubr.bf16.gmra.mxu0 %v5773
  %v5912 = vpop.f32.mrf.mxu0
  %v5913 = vadd.f32 %v5797, %v5912
  %v5914 = vpop.f32.mrf.mxu0
  %v5915 = vpop.f32.mrf.mxu0
  %v5916 = vadd.f32 %v5797, %v5915
  %v5917 = vpop.f32.mrf.mxu0
  %5918 = vmatprep.mubr.bf16.mxu0 0
  %5919 = vmatmul.mubr.bf16.gmra.mxu0 %v5774
  %v5920 = vpop.f32.mrf.mxu0
  %v5921 = vadd.f32 %v5797, %v5920
  %v5922 = vpop.f32.mrf.mxu0
  %v5923 = vpop.f32.mrf.mxu0
  %v5924 = vadd.f32 %v5797, %v5923
  %v5925 = vpop.f32.mrf.mxu0
  %5926 = vmatprep.mubr.bf16.mxu0 0
  %5927 = vmatmul.mubr.bf16.gmra.mxu0 %v5775
  %v5928 = vpop.f32.mrf.mxu0
  %v5929 = vadd.f32 %v5797, %v5928
  %v5930 = vpop.f32.mrf.mxu0
  %v5931 = vpop.f32.mrf.mxu0
  %v5932 = vadd.f32 %v5797, %v5931
  %v5933 = vpop.f32.mrf.mxu0
  %5934 = vmatprep.mubr.bf16.mxu0 0
  %5935 = vmatmul.mubr.bf16.gmra.mxu0 %v5776
  %v5936 = vpop.f32.mrf.mxu0
  %v5937 = vadd.f32 %v5797, %v5936
  %v5938 = vpop.f32.mrf.mxu0
  %v5939 = vpop.f32.mrf.mxu0
  %v5940 = vadd.f32 %v5797, %v5939
  %v5941 = vpop.f32.mrf.mxu0
  %5942 = vdwg.mxu0
  %v5943 = vld [vmem:[%s1 + $0x340] sm:$0xf]
  %v5944 = vld [vmem:[%s1 + $0x344] sm:$0xf]
  %v5945 = vld [vmem:[%s1 + $0x348] sm:$0xf]
  %v5946 = vld [vmem:[%s1 + $0x34c] sm:$0xf]
  %v5947 = vld [vmem:[%s1 + $0x350] sm:$0xf]
  %v5948 = vld [vmem:[%s1 + $0x354] sm:$0xf]
  %v5949 = vld [vmem:[%s1 + $0x358] sm:$0xf]
  %v5950 = vld [vmem:[%s1 + $0x35c] sm:$0xf]
  %v5951 = vld [vmem:[%s1 + $0x360] sm:$0xf]
  %v5952 = vld [vmem:[%s1 + $0x364] sm:$0xf]
  %v5953 = vld [vmem:[%s1 + $0x368] sm:$0xf]
  %v5954 = vld [vmem:[%s1 + $0x36c] sm:$0xf]
  %v5955 = vld [vmem:[%s1 + $0x370] sm:$0xf]
  %v5956 = vld [vmem:[%s1 + $0x374] sm:$0xf]
  %v5957 = vld [vmem:[%s1 + $0x378] sm:$0xf]
  %v5958 = vld [vmem:[%s1 + $0x37c] sm:$0xf]
  %v5959 = vld [vmem:[%s2 + $0x5b] sm:$0x1]
  %v5960 = vlaneseq
  %v5961 = vshrl.u32 %v5960, 7
  %v5962 = vsub.s32 0, %v5961
  %v5963 = vrot.slane %v5959, %v5962
  %v5980 = vunpack.c.l.b16 %v5943
  %v5981 = vunpack.c.l.b16 %v5944
  %v5982 = vunpack.c.l.b16 %v5945
  %v5983 = vunpack.c.l.b16 %v5946
  %v5984 = vunpack.c.l.b16 %v5947
  %v5985 = vunpack.c.l.b16 %v5948
  %v5986 = vunpack.c.l.b16 %v5949
  %v5987 = vunpack.c.l.b16 %v5950
  %v5988 = vunpack.c.l.b16 %v5951
  %v5989 = vunpack.c.l.b16 %v5952
  %v5990 = vunpack.c.l.b16 %v5953
  %v5991 = vunpack.c.l.b16 %v5954
  %v5992 = vunpack.c.l.b16 %v5955
  %v5993 = vunpack.c.l.b16 %v5956
  %v5994 = vunpack.c.l.b16 %v5957
  %v5995 = vunpack.c.l.b16 %v5958
  %v5996 = vpack.c.b16 %v5981, %v5980
  %v5997 = vpack.c.b16 %v5983, %v5982
  %v5998 = vpack.c.b16 %v5985, %v5984
  %v5999 = vpack.c.b16 %v5987, %v5986
  %v6000 = vpack.c.b16 %v5989, %v5988
  %v6001 = vpack.c.b16 %v5991, %v5990
  %v6002 = vpack.c.b16 %v5993, %v5992
  %v6003 = vpack.c.b16 %v5995, %v5994
  %6012 = vmatprep.subr.bf16.mxu0 0
  %6013 = vmatpush1.bf16.msra.mxu0 %v6003
  %6014 = vmatprep.subr.bf16.mxu0 0
  %6015 = vmatpush1.bf16.msra.mxu0 %v6002
  %6016 = vmatprep.subr.bf16.mxu0 0
  %6017 = vmatpush1.bf16.msra.mxu0 %v6001
  %6018 = vmatprep.subr.bf16.mxu0 0
  %6019 = vmatpush1.bf16.msra.mxu0 %v6000
  %6020 = vmatprep.subr.bf16.mxu0 0
  %6021 = vmatpush1.bf16.msra.mxu0 %v5999
  %6022 = vmatprep.subr.bf16.mxu0 0
  %6023 = vmatpush1.bf16.msra.mxu0 %v5998
  %6024 = vmatprep.subr.bf16.mxu0 0
  %6025 = vmatpush1.bf16.msra.mxu0 %v5997
  %6026 = vmatprep.subr.bf16.mxu0 0
  %6027 = vmatpush1.bf16.msra.mxu0 %v5996
  %6028 = vmatprep.subr.bf16.mxu0 0
  %6029 = vmatpush2.bf16.msra.mxu0 0
  %6030 = vmatprep.subr.bf16.mxu0 0
  %6031 = vmatpush2.bf16.msra.mxu0 0
  %6032 = vmatprep.subr.bf16.mxu0 0
  %6033 = vmatpush2.bf16.msra.mxu0 0
  %6034 = vmatprep.subr.bf16.mxu0 0
  %6035 = vmatpush2.bf16.msra.mxu0 0
  %6036 = vmatprep.subr.bf16.mxu0 0
  %6037 = vmatpush2.bf16.msra.mxu0 0
  %6038 = vmatprep.subr.bf16.mxu0 0
  %6039 = vmatpush2.bf16.msra.mxu0 0
  %6040 = vmatprep.subr.bf16.mxu0 0
  %6041 = vmatpush2.bf16.msra.mxu0 0
  %6042 = vmatprep.subr.bf16.mxu0 0
  %6043 = vmatpush2.bf16.msra.mxu0 0
  %6044 = vmatprep.mubr.bf16.mxu0 0
  %6045 = vmatmul.mubr.bf16.gmra.mxu0 %v5769
  %v6046 = vpop.f32.mrf.mxu0
  %v6047 = vadd.f32 %v5963, %v6046
  %v6048 = vpop.f32.mrf.mxu0
  %v6049 = vpop.f32.mrf.mxu0
  %v6050 = vadd.f32 %v5963, %v6049
  %v6051 = vpop.f32.mrf.mxu0
  %6052 = vmatprep.mubr.bf16.mxu0 0
  %6053 = vmatmul.mubr.bf16.gmra.mxu0 %v5770
  %v6054 = vpop.f32.mrf.mxu0
  %v6055 = vadd.f32 %v5963, %v6054
  %v6056 = vpop.f32.mrf.mxu0
  %v6057 = vpop.f32.mrf.mxu0
  %v6058 = vadd.f32 %v5963, %v6057
  %v6059 = vpop.f32.mrf.mxu0
  %6060 = vmatprep.mubr.bf16.mxu0 0
  %6061 = vmatmul.mubr.bf16.gmra.mxu0 %v5771
  %v6062 = vpop.f32.mrf.mxu0
  %v6063 = vadd.f32 %v5963, %v6062
  %v6064 = vpop.f32.mrf.mxu0
  %v6065 = vpop.f32.mrf.mxu0
  %v6066 = vadd.f32 %v5963, %v6065
  %v6067 = vpop.f32.mrf.mxu0
  %6068 = vmatprep.mubr.bf16.mxu0 0
  %6069 = vmatmul.mubr.bf16.gmra.mxu0 %v5772
  %v6070 = vpop.f32.mrf.mxu0
  %v6071 = vadd.f32 %v5963, %v6070
  %v6072 = vpop.f32.mrf.mxu0
  %v6073 = vpop.f32.mrf.mxu0
  %v6074 = vadd.f32 %v5963, %v6073
  %v6075 = vpop.f32.mrf.mxu0
  %6076 = vmatprep.mubr.bf16.mxu0 0
  %6077 = vmatmul.mubr.bf16.gmra.mxu0 %v5773
  %v6078 = vpop.f32.mrf.mxu0
  %v6079 = vadd.f32 %v5963, %v6078
  %v6080 = vpop.f32.mrf.mxu0
  %v6081 = vpop.f32.mrf.mxu0
  %v6082 = vadd.f32 %v5963, %v6081
  %v6083 = vpop.f32.mrf.mxu0
  %6084 = vmatprep.mubr.bf16.mxu0 0
  %6085 = vmatmul.mubr.bf16.gmra.mxu0 %v5774
  %v6086 = vpop.f32.mrf.mxu0
  %v6087 = vadd.f32 %v5963, %v6086
  %v6088 = vpop.f32.mrf.mxu0
  %v6089 = vpop.f32.mrf.mxu0
  %v6090 = vadd.f32 %v5963, %v6089
  %v6091 = vpop.f32.mrf.mxu0
  %6092 = vmatprep.mubr.bf16.mxu0 0
  %6093 = vmatmul.mubr.bf16.gmra.mxu0 %v5775
  %v6094 = vpop.f32.mrf.mxu0
  %v6095 = vadd.f32 %v5963, %v6094
  %v6096 = vpop.f32.mrf.mxu0
  %v6097 = vpop.f32.mrf.mxu0
  %v6098 = vadd.f32 %v5963, %v6097
  %v6099 = vpop.f32.mrf.mxu0
  %6100 = vmatprep.mubr.bf16.mxu0 0
  %6101 = vmatmul.mubr.bf16.gmra.mxu0 %v5776
  %v6102 = vpop.f32.mrf.mxu0
  %v6103 = vadd.f32 %v5963, %v6102
  %v6104 = vpop.f32.mrf.mxu0
  %v6105 = vpop.f32.mrf.mxu0
  %v6106 = vadd.f32 %v5963, %v6105
  %v6107 = vpop.f32.mrf.mxu0
  %6108 = vdwg.mxu0
  %v6109 = vpack.c.bf16 %v5766, %v5763
  %v6110 = vpack.c.bf16 %v5884, %v5881
  %v6111 = vpack.c.bf16 %v5892, %v5889
  %v6112 = vpack.c.bf16 %v5900, %v5897
  %v6113 = vpack.c.bf16 %v5908, %v5905
  %v6114 = vpack.c.bf16 %v5916, %v5913
  %v6115 = vpack.c.bf16 %v5924, %v5921
  %v6116 = vpack.c.bf16 %v5932, %v5929
  %v6117 = vpack.c.bf16 %v5940, %v5937
  %v6118 = vpack.c.bf16 %v6050, %v6047
  %v6119 = vpack.c.bf16 %v6058, %v6055
  %v6120 = vpack.c.bf16 %v6066, %v6063
  %v6121 = vpack.c.bf16 %v6074, %v6071
  %v6122 = vpack.c.bf16 %v6082, %v6079
  %v6123 = vpack.c.bf16 %v6090, %v6087
  %v6124 = vpack.c.bf16 %v6098, %v6095
  %v6125 = vpack.c.bf16 %v6106, %v6103
  %v6127 = vsel %vm759, %v6109, 0
  %v6130 = vsel %vm759, %v6110, 0
  %v6133 = vsel %vm759, %v6111, 0
  %v6136 = vsel %vm759, %v6112, 0
  %v6139 = vsel %vm759, %v6113, 0
  %6141 = vmatprep.subr.bf16.mxu0 0
  %6142 = vmatpush1.bf16.xpose.msra.mxu0 0
  %6143 = vmatprep.subr.bf16.mxu0 0
  %6144 = vmatpush1.bf16.xpose.msra.mxu0 0
  %6145 = vmatprep.subr.bf16.mxu0 0
  %6146 = vmatpush1.bf16.xpose.msra.mxu0 0
  %6147 = vmatprep.subr.bf16.mxu0 0
  %6148 = vmatpush1.bf16.xpose.msra.mxu0 0
  %6149 = vmatprep.subr.bf16.mxu0 0
  %6150 = vmatpush1.bf16.xpose.msra.mxu0 %v6139
  %6151 = vmatprep.subr.bf16.mxu0 0
  %6152 = vmatpush1.bf16.xpose.msra.mxu0 %v6136
  %6153 = vmatprep.subr.bf16.mxu0 0
  %6154 = vmatpush1.bf16.xpose.msra.mxu0 %v6133
  %6155 = vmatprep.subr.bf16.mxu0 0
  %6156 = vmatpush1.bf16.xpose.msra.mxu0 %v6130
  %6157 = vmatprep.subr.bf16.mxu0 0
  %6158 = vmatpush2.bf16.xpose.msra.mxu0 0
  %6159 = vmatprep.subr.bf16.mxu0 0
  %6160 = vmatpush2.bf16.xpose.msra.mxu0 0
  %6161 = vmatprep.subr.bf16.mxu0 0
  %6162 = vmatpush2.bf16.xpose.msra.mxu0 0
  %6163 = vmatprep.subr.bf16.mxu0 0
  %6164 = vmatpush2.bf16.xpose.msra.mxu0 0
  %6165 = vmatprep.subr.bf16.mxu0 0
  %6166 = vmatpush2.bf16.xpose.msra.mxu0 0
  %6167 = vmatprep.subr.bf16.mxu0 0
  %6168 = vmatpush2.bf16.xpose.msra.mxu0 0
  %6169 = vmatprep.subr.bf16.mxu0 0
  %6170 = vmatpush2.bf16.xpose.msra.mxu0 0
  %6171 = vmatprep.subr.bf16.mxu0 0
  %6172 = vmatpush2.bf16.xpose.msra.mxu0 0
  %6173 = vmatprep.mubr.bf16.mxu0 0
  %6174 = vmatmul.mubr.bf16.gmra.mxu0 %v6127
  %v6175 = vpop.f32.mrf.mxu0
  %v6176 = vadd.f32 0.0, %v6175
  %v6177 = vpop.f32.mrf.mxu0
  %v6178 = vpop.f32.mrf.mxu0
  %v6179 = vpop.f32.mrf.mxu0
  %6180 = vdwg.mxu0
  %6182 = vrot.lane.b32.xlu0 %v6109, 120
  %v6183 = vpop.permute.xlu0 %6182
  %6188 = vrot.lane.b32.xlu0 %v6110, 120
  %v6189 = vpop.permute.xlu0 %6188
  %6190 = vrot.lane.b32.xlu0 %v6111, 120
  %v6191 = vpop.permute.xlu0 %6190
  %6192 = vrot.lane.b32.xlu0 %v6112, 120
  %v6193 = vpop.permute.xlu0 %6192
  %6194 = vrot.lane.b32.xlu0 %v6113, 120
  %v6195 = vpop.permute.xlu0 %6194
  %v6197 = vsel %vm759, %v6183, 0
  %v6200 = vsel %vm759, %v6189, 0
  %v6203 = vsel %vm759, %v6191, 0
  %v6206 = vsel %vm759, %v6193, 0
  %v6209 = vsel %vm759, %v6195, 0
  %6211 = vmatprep.subr.bf16.mxu0 0
  %6212 = vmatpush1.bf16.xpose.msra.mxu0 0
  %6213 = vmatprep.subr.bf16.mxu0 0
  %6214 = vmatpush1.bf16.xpose.msra.mxu0 0
  %6215 = vmatprep.subr.bf16.mxu0 0
  %6216 = vmatpush1.bf16.xpose.msra.mxu0 0
  %6217 = vmatprep.subr.bf16.mxu0 0
  %6218 = vmatpush1.bf16.xpose.msra.mxu0 0
  %6219 = vmatprep.subr.bf16.mxu0 0
  %6220 = vmatpush1.bf16.xpose.msra.mxu0 %v6209
  %6221 = vmatprep.subr.bf16.mxu0 0
  %6222 = vmatpush1.bf16.xpose.msra.mxu0 %v6206
  %6223 = vmatprep.subr.bf16.mxu0 0
  %6224 = vmatpush1.bf16.xpose.msra.mxu0 %v6203
  %6225 = vmatprep.subr.bf16.mxu0 0
  %6226 = vmatpush1.bf16.xpose.msra.mxu0 %v6200
  %6227 = vmatprep.subr.bf16.mxu0 0
  %6228 = vmatpush2.bf16.xpose.msra.mxu0 0
  %6229 = vmatprep.subr.bf16.mxu0 0
  %6230 = vmatpush2.bf16.xpose.msra.mxu0 0
  %6231 = vmatprep.subr.bf16.mxu0 0
  %6232 = vmatpush2.bf16.xpose.msra.mxu0 0
  %6233 = vmatprep.subr.bf16.mxu0 0
  %6234 = vmatpush2.bf16.xpose.msra.mxu0 0
  %6235 = vmatprep.subr.bf16.mxu0 0
  %6236 = vmatpush2.bf16.xpose.msra.mxu0 0
  %6237 = vmatprep.subr.bf16.mxu0 0
  %6238 = vmatpush2.bf16.xpose.msra.mxu0 0
  %6239 = vmatprep.subr.bf16.mxu0 0
  %6240 = vmatpush2.bf16.xpose.msra.mxu0 0
  %6241 = vmatprep.subr.bf16.mxu0 0
  %6242 = vmatpush2.bf16.xpose.msra.mxu0 0
  %6243 = vmatprep.mubr.bf16.mxu0 0
  %6244 = vmatmul.mubr.bf16.gmra.mxu0 %v6197
  %v6245 = vpop.f32.mrf.mxu0
  %v6246 = vadd.f32 0.0, %v6245
  %v6247 = vpop.f32.mrf.mxu0
  %v6248 = vpop.f32.mrf.mxu0
  %v6249 = vpop.f32.mrf.mxu0
  %6250 = vdwg.mxu0
  %6251 = vrot.lane.b32.xlu0 %v6109, 112
  %v6252 = vpop.permute.xlu0 %6251
  %6253 = vrot.lane.b32.xlu0 %v6110, 112
  %v6254 = vpop.permute.xlu0 %6253
  %6255 = vrot.lane.b32.xlu0 %v6111, 112
  %v6256 = vpop.permute.xlu0 %6255
  %6257 = vrot.lane.b32.xlu0 %v6112, 112
  %v6258 = vpop.permute.xlu0 %6257
  %6259 = vrot.lane.b32.xlu0 %v6113, 112
  %v6260 = vpop.permute.xlu0 %6259
  %v6262 = vsel %vm759, %v6252, 0
  %v6265 = vsel %vm759, %v6254, 0
  %v6268 = vsel %vm759, %v6256, 0
  %v6271 = vsel %vm759, %v6258, 0
  %v6274 = vsel %vm759, %v6260, 0
  %6276 = vmatprep.subr.bf16.mxu0 0
  %6277 = vmatpush1.bf16.xpose.msra.mxu0 0
  %6278 = vmatprep.subr.bf16.mxu0 0
  %6279 = vmatpush1.bf16.xpose.msra.mxu0 0
  %6280 = vmatprep.subr.bf16.mxu0 0
  %6281 = vmatpush1.bf16.xpose.msra.mxu0 0
  %6282 = vmatprep.subr.bf16.mxu0 0
  %6283 = vmatpush1.bf16.xpose.msra.mxu0 0
  %6284 = vmatprep.subr.bf16.mxu0 0
  %6285 = vmatpush1.bf16.xpose.msra.mxu0 %v6274
  %6286 = vmatprep.subr.bf16.mxu0 0
  %6287 = vmatpush1.bf16.xpose.msra.mxu0 %v6271
  %6288 = vmatprep.subr.bf16.mxu0 0
  %6289 = vmatpush1.bf16.xpose.msra.mxu0 %v6268
  %6290 = vmatprep.subr.bf16.mxu0 0
  %6291 = vmatpush1.bf16.xpose.msra.mxu0 %v6265
  %6292 = vmatprep.subr.bf16.mxu0 0
  %6293 = vmatpush2.bf16.xpose.msra.mxu0 0
  %6294 = vmatprep.subr.bf16.mxu0 0
  %6295 = vmatpush2.bf16.xpose.msra.mxu0 0
  %6296 = vmatprep.subr.bf16.mxu0 0
  %6297 = vmatpush2.bf16.xpose.msra.mxu0 0
  %6298 = vmatprep.subr.bf16.mxu0 0
  %6299 = vmatpush2.bf16.xpose.msra.mxu0 0
  %6300 = vmatprep.subr.bf16.mxu0 0
  %6301 = vmatpush2.bf16.xpose.msra.mxu0 0
  %6302 = vmatprep.subr.bf16.mxu0 0
  %6303 = vmatpush2.bf16.xpose.msra.mxu0 0
  %6304 = vmatprep.subr.bf16.mxu0 0
  %6305 = vmatpush2.bf16.xpose.msra.mxu0 0
  %6306 = vmatprep.subr.bf16.mxu0 0
  %6307 = vmatpush2.bf16.xpose.msra.mxu0 0
  %6308 = vmatprep.mubr.bf16.mxu0 0
  %6309 = vmatmul.mubr.bf16.gmra.mxu0 %v6262
  %v6310 = vpop.f32.mrf.mxu0
  %v6311 = vadd.f32 0.0, %v6310
  %v6312 = vpop.f32.mrf.mxu0
  %v6313 = vpop.f32.mrf.mxu0
  %v6314 = vpop.f32.mrf.mxu0
  %6315 = vdwg.mxu0
  %6316 = vrot.lane.b32.xlu0 %v6109, 104
  %v6317 = vpop.permute.xlu0 %6316
  %6318 = vrot.lane.b32.xlu0 %v6110, 104
  %v6319 = vpop.permute.xlu0 %6318
  %6320 = vrot.lane.b32.xlu0 %v6111, 104
  %v6321 = vpop.permute.xlu0 %6320
  %6322 = vrot.lane.b32.xlu0 %v6112, 104
  %v6323 = vpop.permute.xlu0 %6322
  %6324 = vrot.lane.b32.xlu0 %v6113, 104
  %v6325 = vpop.permute.xlu0 %6324
  %v6327 = vsel %vm759, %v6317, 0
  %v6330 = vsel %vm759, %v6319, 0
  %v6333 = vsel %vm759, %v6321, 0
  %v6336 = vsel %vm759, %v6323, 0
  %v6339 = vsel %vm759, %v6325, 0
  %6341 = vmatprep.subr.bf16.mxu0 0
  %6342 = vmatpush1.bf16.xpose.msra.mxu0 0
  %6343 = vmatprep.subr.bf16.mxu0 0
  %6344 = vmatpush1.bf16.xpose.msra.mxu0 0
  %6345 = vmatprep.subr.bf16.mxu0 0
  %6346 = vmatpush1.bf16.xpose.msra.mxu0 0
  %6347 = vmatprep.subr.bf16.mxu0 0
  %6348 = vmatpush1.bf16.xpose.msra.mxu0 0
  %6349 = vmatprep.subr.bf16.mxu0 0
  %6350 = vmatpush1.bf16.xpose.msra.mxu0 %v6339
  %6351 = vmatprep.subr.bf16.mxu0 0
  %6352 = vmatpush1.bf16.xpose.msra.mxu0 %v6336
  %6353 = vmatprep.subr.bf16.mxu0 0
  %6354 = vmatpush1.bf16.xpose.msra.mxu0 %v6333
  %6355 = vmatprep.subr.bf16.mxu0 0
  %6356 = vmatpush1.bf16.xpose.msra.mxu0 %v6330
  %6357 = vmatprep.subr.bf16.mxu0 0
  %6358 = vmatpush2.bf16.xpose.msra.mxu0 0
  %6359 = vmatprep.subr.bf16.mxu0 0
  %6360 = vmatpush2.bf16.xpose.msra.mxu0 0
  %6361 = vmatprep.subr.bf16.mxu0 0
  %6362 = vmatpush2.bf16.xpose.msra.mxu0 0
  %6363 = vmatprep.subr.bf16.mxu0 0
  %6364 = vmatpush2.bf16.xpose.msra.mxu0 0
  %6365 = vmatprep.subr.bf16.mxu0 0
  %6366 = vmatpush2.bf16.xpose.msra.mxu0 0
  %6367 = vmatprep.subr.bf16.mxu0 0
  %6368 = vmatpush2.bf16.xpose.msra.mxu0 0
  %6369 = vmatprep.subr.bf16.mxu0 0
  %6370 = vmatpush2.bf16.xpose.msra.mxu0 0
  %6371 = vmatprep.subr.bf16.mxu0 0
  %6372 = vmatpush2.bf16.xpose.msra.mxu0 0
  %6373 = vmatprep.mubr.bf16.mxu0 0
  %6374 = vmatmul.mubr.bf16.gmra.mxu0 %v6327
  %v6375 = vpop.f32.mrf.mxu0
  %v6376 = vadd.f32 0.0, %v6375
  %v6377 = vpop.f32.mrf.mxu0
  %v6378 = vpop.f32.mrf.mxu0
  %v6379 = vpop.f32.mrf.mxu0
  %6380 = vdwg.mxu0
  %v6381 = vrot.slane %v6109, 4
  %v6383 = vsel %vm759, %v6381, 0
  %v6386 = vsel %vm759, %v6114, 0
  %v6389 = vsel %vm759, %v6115, 0
  %v6392 = vsel %vm759, %v6116, 0
  %v6395 = vsel %vm759, %v6117, 0
  %6397 = vmatprep.subr.bf16.mxu0 0
  %6398 = vmatpush1.bf16.xpose.msra.mxu0 0
  %6399 = vmatprep.subr.bf16.mxu0 0
  %6400 = vmatpush1.bf16.xpose.msra.mxu0 0
  %6401 = vmatprep.subr.bf16.mxu0 0
  %6402 = vmatpush1.bf16.xpose.msra.mxu0 0
  %6403 = vmatprep.subr.bf16.mxu0 0
  %6404 = vmatpush1.bf16.xpose.msra.mxu0 0
  %6405 = vmatprep.subr.bf16.mxu0 0
  %6406 = vmatpush1.bf16.xpose.msra.mxu0 %v6395
  %6407 = vmatprep.subr.bf16.mxu0 0
  %6408 = vmatpush1.bf16.xpose.msra.mxu0 %v6392
  %6409 = vmatprep.subr.bf16.mxu0 0
  %6410 = vmatpush1.bf16.xpose.msra.mxu0 %v6389
  %6411 = vmatprep.subr.bf16.mxu0 0
  %6412 = vmatpush1.bf16.xpose.msra.mxu0 %v6386
  %6413 = vmatprep.subr.bf16.mxu0 0
  %6414 = vmatpush2.bf16.xpose.msra.mxu0 0
  %6415 = vmatprep.subr.bf16.mxu0 0
  %6416 = vmatpush2.bf16.xpose.msra.mxu0 0
  %6417 = vmatprep.subr.bf16.mxu0 0
  %6418 = vmatpush2.bf16.xpose.msra.mxu0 0
  %6419 = vmatprep.subr.bf16.mxu0 0
  %6420 = vmatpush2.bf16.xpose.msra.mxu0 0
  %6421 = vmatprep.subr.bf16.mxu0 0
  %6422 = vmatpush2.bf16.xpose.msra.mxu0 0
  %6423 = vmatprep.subr.bf16.mxu0 0
  %6424 = vmatpush2.bf16.xpose.msra.mxu0 0
  %6425 = vmatprep.subr.bf16.mxu0 0
  %6426 = vmatpush2.bf16.xpose.msra.mxu0 0
  %6427 = vmatprep.subr.bf16.mxu0 0
  %6428 = vmatpush2.bf16.xpose.msra.mxu0 0
  %6429 = vmatprep.mubr.bf16.mxu0 0
  %6430 = vmatmul.mubr.bf16.gmra.mxu0 %v6383
  %v6431 = vpop.f32.mrf.mxu0
  %v6432 = vadd.f32 0.0, %v6431
  %v6433 = vpop.f32.mrf.mxu0
  %v6434 = vpop.f32.mrf.mxu0
  %v6435 = vpop.f32.mrf.mxu0
  %6436 = vdwg.mxu0
  %6437 = vrot.lane.b32.xlu0 %v6381, 120
  %v6438 = vpop.permute.xlu0 %6437
  %6443 = vrot.lane.b32.xlu0 %v6114, 120
  %v6444 = vpop.permute.xlu0 %6443
  %6445 = vrot.lane.b32.xlu0 %v6115, 120
  %v6446 = vpop.permute.xlu0 %6445
  %6447 = vrot.lane.b32.xlu0 %v6116, 120
  %v6448 = vpop.permute.xlu0 %6447
  %6449 = vrot.lane.b32.xlu0 %v6117, 120
  %v6450 = vpop.permute.xlu0 %6449
  %v6452 = vsel %vm759, %v6438, 0
  %v6455 = vsel %vm759, %v6444, 0
  %v6458 = vsel %vm759, %v6446, 0
  %v6461 = vsel %vm759, %v6448, 0
  %v6464 = vsel %vm759, %v6450, 0
  %6466 = vmatprep.subr.bf16.mxu0 0
  %6467 = vmatpush1.bf16.xpose.msra.mxu0 0
  %6468 = vmatprep.subr.bf16.mxu0 0
  %6469 = vmatpush1.bf16.xpose.msra.mxu0 0
  %6470 = vmatprep.subr.bf16.mxu0 0
  %6471 = vmatpush1.bf16.xpose.msra.mxu0 0
  %6472 = vmatprep.subr.bf16.mxu0 0
  %6473 = vmatpush1.bf16.xpose.msra.mxu0 0
  %6474 = vmatprep.subr.bf16.mxu0 0
  %6475 = vmatpush1.bf16.xpose.msra.mxu0 %v6464
  %6476 = vmatprep.subr.bf16.mxu0 0
  %6477 = vmatpush1.bf16.xpose.msra.mxu0 %v6461
  %6478 = vmatprep.subr.bf16.mxu0 0
  %6479 = vmatpush1.bf16.xpose.msra.mxu0 %v6458
  %6480 = vmatprep.subr.bf16.mxu0 0
  %6481 = vmatpush1.bf16.xpose.msra.mxu0 %v6455
  %6482 = vmatprep.subr.bf16.mxu0 0
  %6483 = vmatpush2.bf16.xpose.msra.mxu0 0
  %6484 = vmatprep.subr.bf16.mxu0 0
  %6485 = vmatpush2.bf16.xpose.msra.mxu0 0
  %6486 = vmatprep.subr.bf16.mxu0 0
  %6487 = vmatpush2.bf16.xpose.msra.mxu0 0
  %6488 = vmatprep.subr.bf16.mxu0 0
  %6489 = vmatpush2.bf16.xpose.msra.mxu0 0
  %6490 = vmatprep.subr.bf16.mxu0 0
  %6491 = vmatpush2.bf16.xpose.msra.mxu0 0
  %6492 = vmatprep.subr.bf16.mxu0 0
  %6493 = vmatpush2.bf16.xpose.msra.mxu0 0
  %6494 = vmatprep.subr.bf16.mxu0 0
  %6495 = vmatpush2.bf16.xpose.msra.mxu0 0
  %6496 = vmatprep.subr.bf16.mxu0 0
  %6497 = vmatpush2.bf16.xpose.msra.mxu0 0
  %6498 = vmatprep.mubr.bf16.mxu0 0
  %6499 = vmatmul.mubr.bf16.gmra.mxu0 %v6452
  %v6500 = vpop.f32.mrf.mxu0
  %v6501 = vadd.f32 0.0, %v6500
  %v6502 = vpop.f32.mrf.mxu0
  %v6503 = vpop.f32.mrf.mxu0
  %v6504 = vpop.f32.mrf.mxu0
  %6505 = vdwg.mxu0
  %6506 = vrot.lane.b32.xlu0 %v6381, 112
  %v6507 = vpop.permute.xlu0 %6506
  %6508 = vrot.lane.b32.xlu0 %v6114, 112
  %v6509 = vpop.permute.xlu0 %6508
  %6510 = vrot.lane.b32.xlu0 %v6115, 112
  %v6511 = vpop.permute.xlu0 %6510
  %6512 = vrot.lane.b32.xlu0 %v6116, 112
  %v6513 = vpop.permute.xlu0 %6512
  %6514 = vrot.lane.b32.xlu0 %v6117, 112
  %v6515 = vpop.permute.xlu0 %6514
  %v6517 = vsel %vm759, %v6507, 0
  %v6520 = vsel %vm759, %v6509, 0
  %v6523 = vsel %vm759, %v6511, 0
  %v6526 = vsel %vm759, %v6513, 0
  %v6529 = vsel %vm759, %v6515, 0
  %6531 = vmatprep.subr.bf16.mxu0 0
  %6532 = vmatpush1.bf16.xpose.msra.mxu0 0
  %6533 = vmatprep.subr.bf16.mxu0 0
  %6534 = vmatpush1.bf16.xpose.msra.mxu0 0
  %6535 = vmatprep.subr.bf16.mxu0 0
  %6536 = vmatpush1.bf16.xpose.msra.mxu0 0
  %6537 = vmatprep.subr.bf16.mxu0 0
  %6538 = vmatpush1.bf16.xpose.msra.mxu0 0
  %6539 = vmatprep.subr.bf16.mxu0 0
  %6540 = vmatpush1.bf16.xpose.msra.mxu0 %v6529
  %6541 = vmatprep.subr.bf16.mxu0 0
  %6542 = vmatpush1.bf16.xpose.msra.mxu0 %v6526
  %6543 = vmatprep.subr.bf16.mxu0 0
  %6544 = vmatpush1.bf16.xpose.msra.mxu0 %v6523
  %6545 = vmatprep.subr.bf16.mxu0 0
  %6546 = vmatpush1.bf16.xpose.msra.mxu0 %v6520
  %6547 = vmatprep.subr.bf16.mxu0 0
  %6548 = vmatpush2.bf16.xpose.msra.mxu0 0
  %6549 = vmatprep.subr.bf16.mxu0 0
  %6550 = vmatpush2.bf16.xpose.msra.mxu0 0
  %6551 = vmatprep.subr.bf16.mxu0 0
  %6552 = vmatpush2.bf16.xpose.msra.mxu0 0
  %6553 = vmatprep.subr.bf16.mxu0 0
  %6554 = vmatpush2.bf16.xpose.msra.mxu0 0
  %6555 = vmatprep.subr.bf16.mxu0 0
  %6556 = vmatpush2.bf16.xpose.msra.mxu0 0
  %6557 = vmatprep.subr.bf16.mxu0 0
  %6558 = vmatpush2.bf16.xpose.msra.mxu0 0
  %6559 = vmatprep.subr.bf16.mxu0 0
  %6560 = vmatpush2.bf16.xpose.msra.mxu0 0
  %6561 = vmatprep.subr.bf16.mxu0 0
  %6562 = vmatpush2.bf16.xpose.msra.mxu0 0
  %6563 = vmatprep.mubr.bf16.mxu0 0
  %6564 = vmatmul.mubr.bf16.gmra.mxu0 %v6517
  %v6565 = vpop.f32.mrf.mxu0
  %v6566 = vadd.f32 0.0, %v6565
  %v6567 = vpop.f32.mrf.mxu0
  %v6568 = vpop.f32.mrf.mxu0
  %v6569 = vpop.f32.mrf.mxu0
  %6570 = vdwg.mxu0
  %6571 = vrot.lane.b32.xlu0 %v6381, 104
  %v6572 = vpop.permute.xlu0 %6571
  %6573 = vrot.lane.b32.xlu0 %v6114, 104
  %v6574 = vpop.permute.xlu0 %6573
  %6575 = vrot.lane.b32.xlu0 %v6115, 104
  %v6576 = vpop.permute.xlu0 %6575
  %6577 = vrot.lane.b32.xlu0 %v6116, 104
  %v6578 = vpop.permute.xlu0 %6577
  %6579 = vrot.lane.b32.xlu0 %v6117, 104
  %v6580 = vpop.permute.xlu0 %6579
  %v6582 = vsel %vm759, %v6572, 0
  %v6585 = vsel %vm759, %v6574, 0
  %v6588 = vsel %vm759, %v6576, 0
  %v6591 = vsel %vm759, %v6578, 0
  %v6594 = vsel %vm759, %v6580, 0
  %6596 = vmatprep.subr.bf16.mxu0 0
  %6597 = vmatpush1.bf16.xpose.msra.mxu0 0
  %6598 = vmatprep.subr.bf16.mxu0 0
  %6599 = vmatpush1.bf16.xpose.msra.mxu0 0
  %6600 = vmatprep.subr.bf16.mxu0 0
  %6601 = vmatpush1.bf16.xpose.msra.mxu0 0
  %6602 = vmatprep.subr.bf16.mxu0 0
  %6603 = vmatpush1.bf16.xpose.msra.mxu0 0
  %6604 = vmatprep.subr.bf16.mxu0 0
  %6605 = vmatpush1.bf16.xpose.msra.mxu0 %v6594
  %6606 = vmatprep.subr.bf16.mxu0 0
  %6607 = vmatpush1.bf16.xpose.msra.mxu0 %v6591
  %6608 = vmatprep.subr.bf16.mxu0 0
  %6609 = vmatpush1.bf16.xpose.msra.mxu0 %v6588
  %6610 = vmatprep.subr.bf16.mxu0 0
  %6611 = vmatpush1.bf16.xpose.msra.mxu0 %v6585
  %6612 = vmatprep.subr.bf16.mxu0 0
  %6613 = vmatpush2.bf16.xpose.msra.mxu0 0
  %6614 = vmatprep.subr.bf16.mxu0 0
  %6615 = vmatpush2.bf16.xpose.msra.mxu0 0
  %6616 = vmatprep.subr.bf16.mxu0 0
  %6617 = vmatpush2.bf16.xpose.msra.mxu0 0
  %6618 = vmatprep.subr.bf16.mxu0 0
  %6619 = vmatpush2.bf16.xpose.msra.mxu0 0
  %6620 = vmatprep.subr.bf16.mxu0 0
  %6621 = vmatpush2.bf16.xpose.msra.mxu0 0
  %6622 = vmatprep.subr.bf16.mxu0 0
  %6623 = vmatpush2.bf16.xpose.msra.mxu0 0
  %6624 = vmatprep.subr.bf16.mxu0 0
  %6625 = vmatpush2.bf16.xpose.msra.mxu0 0
  %6626 = vmatprep.subr.bf16.mxu0 0
  %6627 = vmatpush2.bf16.xpose.msra.mxu0 0
  %6628 = vmatprep.mubr.bf16.mxu0 0
  %6629 = vmatmul.mubr.bf16.gmra.mxu0 %v6582
  %v6630 = vpop.f32.mrf.mxu0
  %v6631 = vadd.f32 0.0, %v6630
  %v6632 = vpop.f32.mrf.mxu0
  %v6633 = vpop.f32.mrf.mxu0
  %v6634 = vpop.f32.mrf.mxu0
  %6635 = vdwg.mxu0
  %v6636 = vsel %vm1584, %v6176, -inf
  %6637 = vmax.xlane.f32.xlu0 %v6636
  %v6638 = vpop.xlane.xlu0 %6637
  %v6639 = vsel %vm1584, %v6246, -inf
  %6640 = vmax.xlane.f32.xlu0 %v6639
  %v6641 = vpop.xlane.xlu0 %6640
  %v6642 = vsel %vm1584, %v6311, -inf
  %6643 = vmax.xlane.f32.xlu0 %v6642
  %v6644 = vpop.xlane.xlu0 %6643
  %v6645 = vsel %vm1584, %v6376, -inf
  %6646 = vmax.xlane.f32.xlu0 %v6645
  %v6647 = vpop.xlane.xlu0 %6646
  %v6648 = vsel %vm1584, %v6432, -inf
  %6649 = vmax.xlane.f32.xlu0 %v6648
  %v6650 = vpop.xlane.xlu0 %6649
  %v6651 = vsel %vm1584, %v6501, -inf
  %6652 = vmax.xlane.f32.xlu0 %v6651
  %v6653 = vpop.xlane.xlu0 %6652
  %v6654 = vsel %vm1584, %v6566, -inf
  %6655 = vmax.xlane.f32.xlu0 %v6654
  %v6656 = vpop.xlane.xlu0 %6655
  %v6657 = vsel %vm1584, %v6631, -inf
  %6658 = vmax.xlane.f32.xlu0 %v6657
  %v6659 = vpop.xlane.xlu0 %6658
  %v6660 = vsub.f32 %v6176, %v6638
  %v6661 = vsub.f32 %v6246, %v6641
  %v6662 = vsub.f32 %v6311, %v6644
  %v6663 = vsub.f32 %v6376, %v6647
  %v6664 = vsub.f32 %v6432, %v6650
  %v6665 = vsub.f32 %v6501, %v6653
  %v6666 = vsub.f32 %v6566, %v6656
  %v6667 = vsub.f32 %v6631, %v6659
  %v6668 = vmul.f32 %v6660, 1.442695
  %v6669 = vpow.pop %v6668
  %v6670 = vmul.f32 %v6661, 1.442695
  %v6671 = vpow.pop %v6670
  %v6672 = vmul.f32 %v6662, 1.442695
  %v6673 = vpow.pop %v6672
  %v6674 = vmul.f32 %v6663, 1.442695
  %v6675 = vpow.pop %v6674
  %v6676 = vmul.f32 %v6664, 1.442695
  %v6677 = vpow.pop %v6676
  %v6678 = vmul.f32 %v6665, 1.442695
  %v6679 = vpow.pop %v6678
  %v6680 = vmul.f32 %v6666, 1.442695
  %v6681 = vpow.pop %v6680
  %v6682 = vmul.f32 %v6667, 1.442695
  %v6683 = vpow.pop %v6682
  %v6684 = vsel %vm1584, %v6669, 0.0
  %6685 = vadd.xlane.f32.xlu0 %v6684
  %v6686 = vpop.xlane.xlu0 %6685
  %v6687 = vsel %vm1584, %v6671, 0.0
  %6688 = vadd.xlane.f32.xlu0 %v6687
  %v6689 = vpop.xlane.xlu0 %6688
  %v6690 = vsel %vm1584, %v6673, 0.0
  %6691 = vadd.xlane.f32.xlu0 %v6690
  %v6692 = vpop.xlane.xlu0 %6691
  %v6693 = vsel %vm1584, %v6675, 0.0
  %6694 = vadd.xlane.f32.xlu0 %v6693
  %v6695 = vpop.xlane.xlu0 %6694
  %v6696 = vsel %vm1584, %v6677, 0.0
  %6697 = vadd.xlane.f32.xlu0 %v6696
  %v6698 = vpop.xlane.xlu0 %6697
  %v6699 = vsel %vm1584, %v6679, 0.0
  %6700 = vadd.xlane.f32.xlu0 %v6699
  %v6701 = vpop.xlane.xlu0 %6700
  %v6702 = vsel %vm1584, %v6681, 0.0
  %6703 = vadd.xlane.f32.xlu0 %v6702
  %v6704 = vpop.xlane.xlu0 %6703
  %v6705 = vsel %vm1584, %v6683, 0.0
  %6706 = vadd.xlane.f32.xlu0 %v6705
  %v6707 = vpop.xlane.xlu0 %6706
  %v6708 = vrcp.pop %v6686
  %v6709 = vrcp.pop %v6689
  %v6710 = vrcp.pop %v6692
  %v6711 = vrcp.pop %v6695
  %v6712 = vrcp.pop %v6698
  %v6713 = vrcp.pop %v6701
  %v6714 = vrcp.pop %v6704
  %v6715 = vrcp.pop %v6707
  %v6716 = vmul.f32 %v6669, %v6708
  %v6717 = vmul.f32 %v6671, %v6709
  %v6718 = vmul.f32 %v6673, %v6710
  %v6719 = vmul.f32 %v6675, %v6711
  %v6720 = vmul.f32 %v6677, %v6712
  %v6721 = vmul.f32 %v6679, %v6713
  %v6722 = vmul.f32 %v6681, %v6714
  %v6723 = vmul.f32 %v6683, %v6715
  %v6724 = vpack.c.bf16 %v6717, %v6716
  %v6725 = vpack.c.bf16 %v6719, %v6718
  %v6726 = vpack.c.bf16 %v6721, %v6720
  %v6727 = vpack.c.bf16 %v6723, %v6722
  %v6729 = vsel %vm1584, %v6724, 0
  %6731 = vmatprep.subr.bf16.mxu0 0
  %6732 = vmatpush1.bf16.msra.mxu0 0
  %6733 = vmatprep.subr.bf16.mxu0 0
  %6734 = vmatpush1.bf16.msra.mxu0 0
  %6735 = vmatprep.subr.bf16.mxu0 0
  %6736 = vmatpush1.bf16.msra.mxu0 0
  %6737 = vmatprep.subr.bf16.mxu0 0
  %6738 = vmatpush1.bf16.msra.mxu0 0
  %6739 = vmatprep.subr.bf16.mxu0 0
  %6740 = vmatpush1.bf16.msra.mxu0 %v6121
  %6741 = vmatprep.subr.bf16.mxu0 0
  %6742 = vmatpush1.bf16.msra.mxu0 %v6120
  %6743 = vmatprep.subr.bf16.mxu0 0
  %6744 = vmatpush1.bf16.msra.mxu0 %v6119
  %6745 = vmatprep.subr.bf16.mxu0 0
  %6746 = vmatpush1.bf16.msra.mxu0 %v6118
  %6747 = vmatprep.subr.bf16.mxu0 0
  %6748 = vmatpush2.bf16.msra.mxu0 0
  %6749 = vmatprep.subr.bf16.mxu0 0
  %6750 = vmatpush2.bf16.msra.mxu0 0
  %6751 = vmatprep.subr.bf16.mxu0 0
  %6752 = vmatpush2.bf16.msra.mxu0 0
  %6753 = vmatprep.subr.bf16.mxu0 0
  %6754 = vmatpush2.bf16.msra.mxu0 0
  %6755 = vmatprep.subr.bf16.mxu0 0
  %6756 = vmatpush2.bf16.msra.mxu0 0
  %6757 = vmatprep.subr.bf16.mxu0 0
  %6758 = vmatpush2.bf16.msra.mxu0 0
  %6759 = vmatprep.subr.bf16.mxu0 0
  %6760 = vmatpush2.bf16.msra.mxu0 0
  %6761 = vmatprep.subr.bf16.mxu0 0
  %6762 = vmatpush2.bf16.msra.mxu0 0
  %6763 = vmatprep.mubr.bf16.mxu0 0
  %6764 = vmatmul.mubr.bf16.gmra.mxu0 %v6729
  %v6765 = vpop.f32.mrf.mxu0
  %v6766 = vadd.f32 0.0, %v6765
  %v6767 = vpop.f32.mrf.mxu0
  %v6768 = vpop.f32.mrf.mxu0
  %v6769 = vpop.f32.mrf.mxu0
  %6770 = vdwg.mxu0
  %v6772 = vrot.slane %v6724, 4
  %6777 = vrot.lane.b32.xlu0 %v6118, 120
  %v6778 = vpop.permute.xlu0 %6777
  %6779 = vrot.lane.b32.xlu0 %v6119, 120
  %v6780 = vpop.permute.xlu0 %6779
  %6781 = vrot.lane.b32.xlu0 %v6120, 120
  %v6782 = vpop.permute.xlu0 %6781
  %6783 = vrot.lane.b32.xlu0 %v6121, 120
  %v6784 = vpop.permute.xlu0 %6783
  %v6790 = vsel %vm1584, %v6772, 0
  %6792 = vmatprep.subr.bf16.mxu0 0
  %6793 = vmatpush1.bf16.msra.mxu0 0
  %6794 = vmatprep.subr.bf16.mxu0 0
  %6795 = vmatpush1.bf16.msra.mxu0 0
  %6796 = vmatprep.subr.bf16.mxu0 0
  %6797 = vmatpush1.bf16.msra.mxu0 0
  %6798 = vmatprep.subr.bf16.mxu0 0
  %6799 = vmatpush1.bf16.msra.mxu0 0
  %6800 = vmatprep.subr.bf16.mxu0 0
  %6801 = vmatpush1.bf16.msra.mxu0 %v6784
  %6802 = vmatprep.subr.bf16.mxu0 0
  %6803 = vmatpush1.bf16.msra.mxu0 %v6782
  %6804 = vmatprep.subr.bf16.mxu0 0
  %6805 = vmatpush1.bf16.msra.mxu0 %v6780
  %6806 = vmatprep.subr.bf16.mxu0 0
  %6807 = vmatpush1.bf16.msra.mxu0 %v6778
  %6808 = vmatprep.subr.bf16.mxu0 0
  %6809 = vmatpush2.bf16.msra.mxu0 0
  %6810 = vmatprep.subr.bf16.mxu0 0
  %6811 = vmatpush2.bf16.msra.mxu0 0
  %6812 = vmatprep.subr.bf16.mxu0 0
  %6813 = vmatpush2.bf16.msra.mxu0 0
  %6814 = vmatprep.subr.bf16.mxu0 0
  %6815 = vmatpush2.bf16.msra.mxu0 0
  %6816 = vmatprep.subr.bf16.mxu0 0
  %6817 = vmatpush2.bf16.msra.mxu0 0
  %6818 = vmatprep.subr.bf16.mxu0 0
  %6819 = vmatpush2.bf16.msra.mxu0 0
  %6820 = vmatprep.subr.bf16.mxu0 0
  %6821 = vmatpush2.bf16.msra.mxu0 0
  %6822 = vmatprep.subr.bf16.mxu0 0
  %6823 = vmatpush2.bf16.msra.mxu0 0
  %6824 = vmatprep.mubr.bf16.mxu0 0
  %6825 = vmatmul.mubr.bf16.gmra.mxu0 %v6790
  %v6826 = vpop.f32.mrf.mxu0
  %v6827 = vadd.f32 0.0, %v6826
  %v6828 = vpop.f32.mrf.mxu0
  %v6829 = vpop.f32.mrf.mxu0
  %v6830 = vpop.f32.mrf.mxu0
  %6831 = vdwg.mxu0
  %6832 = vrot.lane.b32.xlu0 %v6118, 112
  %v6833 = vpop.permute.xlu0 %6832
  %6834 = vrot.lane.b32.xlu0 %v6119, 112
  %v6835 = vpop.permute.xlu0 %6834
  %6836 = vrot.lane.b32.xlu0 %v6120, 112
  %v6837 = vpop.permute.xlu0 %6836
  %6838 = vrot.lane.b32.xlu0 %v6121, 112
  %v6839 = vpop.permute.xlu0 %6838
  %v6845 = vsel %vm1584, %v6725, 0
  %6847 = vmatprep.subr.bf16.mxu0 0
  %6848 = vmatpush1.bf16.msra.mxu0 0
  %6849 = vmatprep.subr.bf16.mxu0 0
  %6850 = vmatpush1.bf16.msra.mxu0 0
  %6851 = vmatprep.subr.bf16.mxu0 0
  %6852 = vmatpush1.bf16.msra.mxu0 0
  %6853 = vmatprep.subr.bf16.mxu0 0
  %6854 = vmatpush1.bf16.msra.mxu0 0
  %6855 = vmatprep.subr.bf16.mxu0 0
  %6856 = vmatpush1.bf16.msra.mxu0 %v6839
  %6857 = vmatprep.subr.bf16.mxu0 0
  %6858 = vmatpush1.bf16.msra.mxu0 %v6837
  %6859 = vmatprep.subr.bf16.mxu0 0
  %6860 = vmatpush1.bf16.msra.mxu0 %v6835
  %6861 = vmatprep.subr.bf16.mxu0 0
  %6862 = vmatpush1.bf16.msra.mxu0 %v6833
  %6863 = vmatprep.subr.bf16.mxu0 0
  %6864 = vmatpush2.bf16.msra.mxu0 0
  %6865 = vmatprep.subr.bf16.mxu0 0
  %6866 = vmatpush2.bf16.msra.mxu0 0
  %6867 = vmatprep.subr.bf16.mxu0 0
  %6868 = vmatpush2.bf16.msra.mxu0 0
  %6869 = vmatprep.subr.bf16.mxu0 0
  %6870 = vmatpush2.bf16.msra.mxu0 0
  %6871 = vmatprep.subr.bf16.mxu0 0
  %6872 = vmatpush2.bf16.msra.mxu0 0
  %6873 = vmatprep.subr.bf16.mxu0 0
  %6874 = vmatpush2.bf16.msra.mxu0 0
  %6875 = vmatprep.subr.bf16.mxu0 0
  %6876 = vmatpush2.bf16.msra.mxu0 0
  %6877 = vmatprep.subr.bf16.mxu0 0
  %6878 = vmatpush2.bf16.msra.mxu0 0
  %6879 = vmatprep.mubr.bf16.mxu0 0
  %6880 = vmatmul.mubr.bf16.gmra.mxu0 %v6845
  %v6881 = vpop.f32.mrf.mxu0
  %v6882 = vadd.f32 0.0, %v6881
  %v6883 = vpop.f32.mrf.mxu0
  %v6884 = vpop.f32.mrf.mxu0
  %v6885 = vpop.f32.mrf.mxu0
  %6886 = vdwg.mxu0
  %v6888 = vrot.slane %v6725, 4
  %6889 = vrot.lane.b32.xlu0 %v6118, 104
  %v6890 = vpop.permute.xlu0 %6889
  %6891 = vrot.lane.b32.xlu0 %v6119, 104
  %v6892 = vpop.permute.xlu0 %6891
  %6893 = vrot.lane.b32.xlu0 %v6120, 104
  %v6894 = vpop.permute.xlu0 %6893
  %6895 = vrot.lane.b32.xlu0 %v6121, 104
  %v6896 = vpop.permute.xlu0 %6895
  %v6902 = vsel %vm1584, %v6888, 0
  %6904 = vmatprep.subr.bf16.mxu0 0
  %6905 = vmatpush1.bf16.msra.mxu0 0
  %6906 = vmatprep.subr.bf16.mxu0 0
  %6907 = vmatpush1.bf16.msra.mxu0 0
  %6908 = vmatprep.subr.bf16.mxu0 0
  %6909 = vmatpush1.bf16.msra.mxu0 0
  %6910 = vmatprep.subr.bf16.mxu0 0
  %6911 = vmatpush1.bf16.msra.mxu0 0
  %6912 = vmatprep.subr.bf16.mxu0 0
  %6913 = vmatpush1.bf16.msra.mxu0 %v6896
  %6914 = vmatprep.subr.bf16.mxu0 0
  %6915 = vmatpush1.bf16.msra.mxu0 %v6894
  %6916 = vmatprep.subr.bf16.mxu0 0
  %6917 = vmatpush1.bf16.msra.mxu0 %v6892
  %6918 = vmatprep.subr.bf16.mxu0 0
  %6919 = vmatpush1.bf16.msra.mxu0 %v6890
  %6920 = vmatprep.subr.bf16.mxu0 0
  %6921 = vmatpush2.bf16.msra.mxu0 0
  %6922 = vmatprep.subr.bf16.mxu0 0
  %6923 = vmatpush2.bf16.msra.mxu0 0
  %6924 = vmatprep.subr.bf16.mxu0 0
  %6925 = vmatpush2.bf16.msra.mxu0 0
  %6926 = vmatprep.subr.bf16.mxu0 0
  %6927 = vmatpush2.bf16.msra.mxu0 0
  %6928 = vmatprep.subr.bf16.mxu0 0
  %6929 = vmatpush2.bf16.msra.mxu0 0
  %6930 = vmatprep.subr.bf16.mxu0 0
  %6931 = vmatpush2.bf16.msra.mxu0 0
  %6932 = vmatprep.subr.bf16.mxu0 0
  %6933 = vmatpush2.bf16.msra.mxu0 0
  %6934 = vmatprep.subr.bf16.mxu0 0
  %6935 = vmatpush2.bf16.msra.mxu0 0
  %6936 = vmatprep.mubr.bf16.mxu0 0
  %6937 = vmatmul.mubr.bf16.gmra.mxu0 %v6902
  %v6938 = vpop.f32.mrf.mxu0
  %v6939 = vadd.f32 0.0, %v6938
  %v6940 = vpop.f32.mrf.mxu0
  %v6941 = vpop.f32.mrf.mxu0
  %v6942 = vpop.f32.mrf.mxu0
  %6943 = vdwg.mxu0
  %6945 = vrot.lane.b32.xlu0 %v6827, 8
  %v6946 = vpop.permute.xlu0 %6945
  %6949 = vrot.lane.b32.xlu0 %v6882, 16
  %v6950 = vpop.permute.xlu0 %6949
  %6953 = vrot.lane.b32.xlu0 %v6939, 24
  %v6954 = vpop.permute.xlu0 %6953
  %v6956 = vsel %vm759, %v6766, %v6946
  %v6957 = vsel %vm2773, %v6956, %v6950
  %v6958 = vsel %vm2782, %v6957, %v6954
  %v6960 = vsel %vm1584, %v6726, 0
  %6962 = vmatprep.subr.bf16.mxu0 0
  %6963 = vmatpush1.bf16.msra.mxu0 0
  %6964 = vmatprep.subr.bf16.mxu0 0
  %6965 = vmatpush1.bf16.msra.mxu0 0
  %6966 = vmatprep.subr.bf16.mxu0 0
  %6967 = vmatpush1.bf16.msra.mxu0 0
  %6968 = vmatprep.subr.bf16.mxu0 0
  %6969 = vmatpush1.bf16.msra.mxu0 0
  %6970 = vmatprep.subr.bf16.mxu0 0
  %6971 = vmatpush1.bf16.msra.mxu0 %v6125
  %6972 = vmatprep.subr.bf16.mxu0 0
  %6973 = vmatpush1.bf16.msra.mxu0 %v6124
  %6974 = vmatprep.subr.bf16.mxu0 0
  %6975 = vmatpush1.bf16.msra.mxu0 %v6123
  %6976 = vmatprep.subr.bf16.mxu0 0
  %6977 = vmatpush1.bf16.msra.mxu0 %v6122
  %6978 = vmatprep.subr.bf16.mxu0 0
  %6979 = vmatpush2.bf16.msra.mxu0 0
  %6980 = vmatprep.subr.bf16.mxu0 0
  %6981 = vmatpush2.bf16.msra.mxu0 0
  %6982 = vmatprep.subr.bf16.mxu0 0
  %6983 = vmatpush2.bf16.msra.mxu0 0
  %6984 = vmatprep.subr.bf16.mxu0 0
  %6985 = vmatpush2.bf16.msra.mxu0 0
  %6986 = vmatprep.subr.bf16.mxu0 0
  %6987 = vmatpush2.bf16.msra.mxu0 0
  %6988 = vmatprep.subr.bf16.mxu0 0
  %6989 = vmatpush2.bf16.msra.mxu0 0
  %6990 = vmatprep.subr.bf16.mxu0 0
  %6991 = vmatpush2.bf16.msra.mxu0 0
  %6992 = vmatprep.subr.bf16.mxu0 0
  %6993 = vmatpush2.bf16.msra.mxu0 0
  %6994 = vmatprep.mubr.bf16.mxu0 0
  %6995 = vmatmul.mubr.bf16.gmra.mxu0 %v6960
  %v6996 = vpop.f32.mrf.mxu0
  %v6997 = vadd.f32 0.0, %v6996
  %v6998 = vpop.f32.mrf.mxu0
  %v6999 = vpop.f32.mrf.mxu0
  %v7000 = vpop.f32.mrf.mxu0
  %7001 = vdwg.mxu0
  %v7003 = vrot.slane %v6726, 4
  %7008 = vrot.lane.b32.xlu0 %v6122, 120
  %v7009 = vpop.permute.xlu0 %7008
  %7010 = vrot.lane.b32.xlu0 %v6123, 120
  %v7011 = vpop.permute.xlu0 %7010
  %7012 = vrot.lane.b32.xlu0 %v6124, 120
  %v7013 = vpop.permute.xlu0 %7012
  %7014 = vrot.lane.b32.xlu0 %v6125, 120
  %v7015 = vpop.permute.xlu0 %7014
  %v7021 = vsel %vm1584, %v7003, 0
  %7023 = vmatprep.subr.bf16.mxu0 0
  %7024 = vmatpush1.bf16.msra.mxu0 0
  %7025 = vmatprep.subr.bf16.mxu0 0
  %7026 = vmatpush1.bf16.msra.mxu0 0
  %7027 = vmatprep.subr.bf16.mxu0 0
  %7028 = vmatpush1.bf16.msra.mxu0 0
  %7029 = vmatprep.subr.bf16.mxu0 0
  %7030 = vmatpush1.bf16.msra.mxu0 0
  %7031 = vmatprep.subr.bf16.mxu0 0
  %7032 = vmatpush1.bf16.msra.mxu0 %v7015
  %7033 = vmatprep.subr.bf16.mxu0 0
  %7034 = vmatpush1.bf16.msra.mxu0 %v7013
  %7035 = vmatprep.subr.bf16.mxu0 0
  %7036 = vmatpush1.bf16.msra.mxu0 %v7011
  %7037 = vmatprep.subr.bf16.mxu0 0
  %7038 = vmatpush1.bf16.msra.mxu0 %v7009
  %7039 = vmatprep.subr.bf16.mxu0 0
  %7040 = vmatpush2.bf16.msra.mxu0 0
  %7041 = vmatprep.subr.bf16.mxu0 0
  %7042 = vmatpush2.bf16.msra.mxu0 0
  %7043 = vmatprep.subr.bf16.mxu0 0
  %7044 = vmatpush2.bf16.msra.mxu0 0
  %7045 = vmatprep.subr.bf16.mxu0 0
  %7046 = vmatpush2.bf16.msra.mxu0 0
  %7047 = vmatprep.subr.bf16.mxu0 0
  %7048 = vmatpush2.bf16.msra.mxu0 0
  %7049 = vmatprep.subr.bf16.mxu0 0
  %7050 = vmatpush2.bf16.msra.mxu0 0
  %7051 = vmatprep.subr.bf16.mxu0 0
  %7052 = vmatpush2.bf16.msra.mxu0 0
  %7053 = vmatprep.subr.bf16.mxu0 0
  %7054 = vmatpush2.bf16.msra.mxu0 0
  %7055 = vmatprep.mubr.bf16.mxu0 0
  %7056 = vmatmul.mubr.bf16.gmra.mxu0 %v7021
  %v7057 = vpop.f32.mrf.mxu0
  %v7058 = vadd.f32 0.0, %v7057
  %v7059 = vpop.f32.mrf.mxu0
  %v7060 = vpop.f32.mrf.mxu0
  %v7061 = vpop.f32.mrf.mxu0
  %7062 = vdwg.mxu0
  %7063 = vrot.lane.b32.xlu0 %v6122, 112
  %v7064 = vpop.permute.xlu0 %7063
  %7065 = vrot.lane.b32.xlu0 %v6123, 112
  %v7066 = vpop.permute.xlu0 %7065
  %7067 = vrot.lane.b32.xlu0 %v6124, 112
  %v7068 = vpop.permute.xlu0 %7067
  %7069 = vrot.lane.b32.xlu0 %v6125, 112
  %v7070 = vpop.permute.xlu0 %7069
  %v7076 = vsel %vm1584, %v6727, 0
  %7078 = vmatprep.subr.bf16.mxu0 0
  %7079 = vmatpush1.bf16.msra.mxu0 0
  %7080 = vmatprep.subr.bf16.mxu0 0
  %7081 = vmatpush1.bf16.msra.mxu0 0
  %7082 = vmatprep.subr.bf16.mxu0 0
  %7083 = vmatpush1.bf16.msra.mxu0 0
  %7084 = vmatprep.subr.bf16.mxu0 0
  %7085 = vmatpush1.bf16.msra.mxu0 0
  %7086 = vmatprep.subr.bf16.mxu0 0
  %7087 = vmatpush1.bf16.msra.mxu0 %v7070
  %7088 = vmatprep.subr.bf16.mxu0 0
  %7089 = vmatpush1.bf16.msra.mxu0 %v7068
  %7090 = vmatprep.subr.bf16.mxu0 0
  %7091 = vmatpush1.bf16.msra.mxu0 %v7066
  %7092 = vmatprep.subr.bf16.mxu0 0
  %7093 = vmatpush1.bf16.msra.mxu0 %v7064
  %7094 = vmatprep.subr.bf16.mxu0 0
  %7095 = vmatpush2.bf16.msra.mxu0 0
  %7096 = vmatprep.subr.bf16.mxu0 0
  %7097 = vmatpush2.bf16.msra.mxu0 0
  %7098 = vmatprep.subr.bf16.mxu0 0
  %7099 = vmatpush2.bf16.msra.mxu0 0
  %7100 = vmatprep.subr.bf16.mxu0 0
  %7101 = vmatpush2.bf16.msra.mxu0 0
  %7102 = vmatprep.subr.bf16.mxu0 0
  %7103 = vmatpush2.bf16.msra.mxu0 0
  %7104 = vmatprep.subr.bf16.mxu0 0
  %7105 = vmatpush2.bf16.msra.mxu0 0
  %7106 = vmatprep.subr.bf16.mxu0 0
  %7107 = vmatpush2.bf16.msra.mxu0 0
  %7108 = vmatprep.subr.bf16.mxu0 0
  %7109 = vmatpush2.bf16.msra.mxu0 0
  %7110 = vmatprep.mubr.bf16.mxu0 0
  %7111 = vmatmul.mubr.bf16.gmra.mxu0 %v7076
  %v7112 = vpop.f32.mrf.mxu0
  %v7113 = vadd.f32 0.0, %v7112
  %v7114 = vpop.f32.mrf.mxu0
  %v7115 = vpop.f32.mrf.mxu0
  %v7116 = vpop.f32.mrf.mxu0
  %7117 = vdwg.mxu0
  %v7119 = vrot.slane %v6727, 4
  %7120 = vrot.lane.b32.xlu0 %v6122, 104
  %v7121 = vpop.permute.xlu0 %7120
  %7122 = vrot.lane.b32.xlu0 %v6123, 104
  %v7123 = vpop.permute.xlu0 %7122
  %7124 = vrot.lane.b32.xlu0 %v6124, 104
  %v7125 = vpop.permute.xlu0 %7124
  %7126 = vrot.lane.b32.xlu0 %v6125, 104
  %v7127 = vpop.permute.xlu0 %7126
  %v7133 = vsel %vm1584, %v7119, 0
  %7135 = vmatprep.subr.bf16.mxu0 0
  %7136 = vmatpush1.bf16.msra.mxu0 0
  %7137 = vmatprep.subr.bf16.mxu0 0
  %7138 = vmatpush1.bf16.msra.mxu0 0
  %7139 = vmatprep.subr.bf16.mxu0 0
  %7140 = vmatpush1.bf16.msra.mxu0 0
  %7141 = vmatprep.subr.bf16.mxu0 0
  %7142 = vmatpush1.bf16.msra.mxu0 0
  %7143 = vmatprep.subr.bf16.mxu0 0
  %7144 = vmatpush1.bf16.msra.mxu0 %v7127
  %7145 = vmatprep.subr.bf16.mxu0 0
  %7146 = vmatpush1.bf16.msra.mxu0 %v7125
  %7147 = vmatprep.subr.bf16.mxu0 0
  %7148 = vmatpush1.bf16.msra.mxu0 %v7123
  %7149 = vmatprep.subr.bf16.mxu0 0
  %7150 = vmatpush1.bf16.msra.mxu0 %v7121
  %7151 = vmatprep.subr.bf16.mxu0 0
  %7152 = vmatpush2.bf16.msra.mxu0 0
  %7153 = vmatprep.subr.bf16.mxu0 0
  %7154 = vmatpush2.bf16.msra.mxu0 0
  %7155 = vmatprep.subr.bf16.mxu0 0
  %7156 = vmatpush2.bf16.msra.mxu0 0
  %7157 = vmatprep.subr.bf16.mxu0 0
  %7158 = vmatpush2.bf16.msra.mxu0 0
  %7159 = vmatprep.subr.bf16.mxu0 0
  %7160 = vmatpush2.bf16.msra.mxu0 0
  %7161 = vmatprep.subr.bf16.mxu0 0
  %7162 = vmatpush2.bf16.msra.mxu0 0
  %7163 = vmatprep.subr.bf16.mxu0 0
  %7164 = vmatpush2.bf16.msra.mxu0 0
  %7165 = vmatprep.subr.bf16.mxu0 0
  %7166 = vmatpush2.bf16.msra.mxu0 0
  %7167 = vmatprep.mubr.bf16.mxu0 0
  %7168 = vmatmul.mubr.bf16.gmra.mxu0 %v7133
  %v7169 = vpop.f32.mrf.mxu0
  %v7170 = vadd.f32 0.0, %v7169
  %v7171 = vpop.f32.mrf.mxu0
  %v7172 = vpop.f32.mrf.mxu0
  %v7173 = vpop.f32.mrf.mxu0
  %7174 = vdwg.mxu0
  %7176 = vrot.lane.b32.xlu0 %v7058, 8
  %v7177 = vpop.permute.xlu0 %7176
  %7180 = vrot.lane.b32.xlu0 %v7113, 16
  %v7181 = vpop.permute.xlu0 %7180
  %7184 = vrot.lane.b32.xlu0 %v7170, 24
  %v7185 = vpop.permute.xlu0 %7184
  %v7187 = vsel %vm759, %v6997, %v7177
  %v7188 = vsel %vm2773, %v7187, %v7181
  %v7189 = vsel %vm2782, %v7188, %v7185
  %v7190 = vpack.c.bf16 %v7189, %v6958
  %v7191 = vld [vmem:[%s1 + $0x380] sm:$0xf]
  %v7192 = vld [vmem:[%s1 + $0x384] sm:$0xf]
  %v7193 = vld [vmem:[%s1 + $0x388] sm:$0xf]
  %v7194 = vld [vmem:[%s1 + $0x38c] sm:$0xf]
  %v7195 = vld [vmem:[%s2 + $0x5c] sm:$0x1]
  %v7196 = vlaneseq
  %v7197 = vshrl.u32 %v7196, 7
  %v7198 = vsub.s32 0, %v7197
  %v7199 = vrot.slane %v7195, %v7198
  %v7204 = vunpack.c.l.b16 %v7191
  %v7205 = vunpack.c.l.b16 %v7192
  %v7206 = vunpack.c.l.b16 %v7193
  %v7207 = vunpack.c.l.b16 %v7194
  %v7208 = vpack.c.b16 %v7205, %v7204
  %v7209 = vpack.c.b16 %v7207, %v7206
  %v7213 = vsel %vm3288, %v7190, 0
  %7215 = vmatprep.subr.bf16.mxu0 0
  %7216 = vmatpush1.bf16.msra.mxu0 0
  %7217 = vmatprep.subr.bf16.mxu0 0
  %7218 = vmatpush1.bf16.msra.mxu0 0
  %7219 = vmatprep.subr.bf16.mxu0 0
  %7220 = vmatpush1.bf16.msra.mxu0 0
  %7221 = vmatprep.subr.bf16.mxu0 0
  %7222 = vmatpush1.bf16.msra.mxu0 0
  %7223 = vmatprep.subr.bf16.mxu0 0
  %7224 = vmatpush1.bf16.msra.mxu0 0
  %7225 = vmatprep.subr.bf16.mxu0 0
  %7226 = vmatpush1.bf16.msra.mxu0 0
  %7227 = vmatprep.subr.bf16.mxu0 0
  %7228 = vmatpush1.bf16.msra.mxu0 %v7209
  %7229 = vmatprep.subr.bf16.mxu0 0
  %7230 = vmatpush1.bf16.msra.mxu0 %v7208
  %7231 = vmatprep.subr.bf16.mxu0 0
  %7232 = vmatpush2.bf16.msra.mxu0 0
  %7233 = vmatprep.subr.bf16.mxu0 0
  %7234 = vmatpush2.bf16.msra.mxu0 0
  %7235 = vmatprep.subr.bf16.mxu0 0
  %7236 = vmatpush2.bf16.msra.mxu0 0
  %7237 = vmatprep.subr.bf16.mxu0 0
  %7238 = vmatpush2.bf16.msra.mxu0 0
  %7239 = vmatprep.subr.bf16.mxu0 0
  %7240 = vmatpush2.bf16.msra.mxu0 0
  %7241 = vmatprep.subr.bf16.mxu0 0
  %7242 = vmatpush2.bf16.msra.mxu0 0
  %7243 = vmatprep.subr.bf16.mxu0 0
  %7244 = vmatpush2.bf16.msra.mxu0 0
  %7245 = vmatprep.subr.bf16.mxu0 0
  %7246 = vmatpush2.bf16.msra.mxu0 0
  %7247 = vmatprep.mubr.bf16.mxu0 0
  %7248 = vmatmul.mubr.bf16.gmra.mxu0 %v7213
  %v7249 = vpop.f32.mrf.mxu0
  %v7250 = vadd.f32 %v7199, %v7249
  %v7251 = vpop.f32.mrf.mxu0
  %v7252 = vpop.f32.mrf.mxu0
  %v7253 = vadd.f32 %v7199, %v7252
  %v7254 = vpop.f32.mrf.mxu0
  %7255 = vdwg.mxu0
  %v7256 = vadd.f32 %v5656, %v7250
  %v7257 = vadd.f32 %v5657, %v7253
  %7258 = vadd.xlane.f32.xlu0 %v7256
  %v7259 = vpop.xlane.xlu0 %7258
  %7260 = vadd.xlane.f32.xlu0 %v7257
  %v7261 = vpop.xlane.xlu0 %7260
  %v7262 = vmul.f32 %v7259, 0.03125
  %v7263 = vmul.f32 %v7261, 0.03125
  %v7264 = vmul.f32 %v7256, %v7256
  %v7265 = vmul.f32 %v7257, %v7257
  %7266 = vadd.xlane.f32.xlu0 %v7264
  %v7267 = vpop.xlane.xlu0 %7266
  %7268 = vadd.xlane.f32.xlu0 %v7265
  %v7269 = vpop.xlane.xlu0 %7268
  %v7270 = vmul.f32 %v7267, 0.03125
  %v7271 = vmul.f32 %v7269, 0.03125
  %v7272 = vmul.f32 %v7262, %v7262
  %v7273 = vmul.f32 %v7263, %v7263
  %v7274 = vsub.f32 %v7270, %v7272
  %v7275 = vsub.f32 %v7271, %v7273
  %v7276 = vsub.f32 %v7256, %v7262
  %v7277 = vsub.f32 %v7257, %v7263
  %v7278 = vadd.f32 %v7274, 1e-05
  %v7279 = vadd.f32 %v7275, 1e-05
  %v7280 = vrsqrt.pop %v7278
  %v7281 = vrsqrt.pop %v7279
  %v7282 = vmul.f32 %v7276, %v7280
  %v7283 = vmul.f32 %v7277, %v7281
  %v7284 = vld [vmem:[%s2 + $0x5d] sm:$0x1]
  %v7285 = vlaneseq
  %v7286 = vshrl.u32 %v7285, 7
  %v7287 = vsub.s32 0, %v7286
  %v7288 = vrot.slane %v7284, %v7287
  %v7289 = vmul.f32 %v7282, %v7288
  %v7290 = vmul.f32 %v7283, %v7288
  %v7291 = vld [vmem:[%s2 + $0x5e] sm:$0x1]
  %v7292 = vlaneseq
  %v7293 = vshrl.u32 %v7292, 7
  %v7294 = vsub.s32 0, %v7293
  %v7295 = vrot.slane %v7291, %v7294
  %v7296 = vadd.f32 %v7289, %v7295
  %v7297 = vadd.f32 %v7290, %v7295
  %v7298 = vpack.c.bf16 %v7297, %v7296
  %v7299 = vld [vmem:[%s1 + $0x3c0] sm:$0xf]
  %v7300 = vld [vmem:[%s1 + $0x3c4] sm:$0xf]
  %v7301 = vld [vmem:[%s1 + $0x3c8] sm:$0xf]
  %v7302 = vld [vmem:[%s1 + $0x3cc] sm:$0xf]
  %v7303 = vld [vmem:[%s1 + $0x3d0] sm:$0xf]
  %v7304 = vld [vmem:[%s1 + $0x3d4] sm:$0xf]
  %v7305 = vld [vmem:[%s1 + $0x3d8] sm:$0xf]
  %v7306 = vld [vmem:[%s1 + $0x3dc] sm:$0xf]
  %v7307 = vld [vmem:[%s1 + $0x3e0] sm:$0xf]
  %v7308 = vld [vmem:[%s1 + $0x3e4] sm:$0xf]
  %v7309 = vld [vmem:[%s1 + $0x3e8] sm:$0xf]
  %v7310 = vld [vmem:[%s1 + $0x3ec] sm:$0xf]
  %v7311 = vld [vmem:[%s1 + $0x3f0] sm:$0xf]
  %v7312 = vld [vmem:[%s1 + $0x3f4] sm:$0xf]
  %v7313 = vld [vmem:[%s1 + $0x3f8] sm:$0xf]
  %v7314 = vld [vmem:[%s1 + $0x3fc] sm:$0xf]
  %v7315 = vld [vmem:[%s2 + $0x5f] sm:$0x1]
  %v7316 = vlaneseq
  %v7317 = vshrl.u32 %v7316, 7
  %v7318 = vsub.s32 0, %v7317
  %v7319 = vrot.slane %v7315, %v7318
  %v7336 = vunpack.c.l.b16 %v7299
  %v7337 = vunpack.c.l.b16 %v7300
  %v7338 = vunpack.c.l.b16 %v7301
  %v7339 = vunpack.c.l.b16 %v7302
  %v7340 = vunpack.c.l.b16 %v7303
  %v7341 = vunpack.c.l.b16 %v7304
  %v7342 = vunpack.c.l.b16 %v7305
  %v7343 = vunpack.c.l.b16 %v7306
  %v7344 = vunpack.c.l.b16 %v7307
  %v7345 = vunpack.c.l.b16 %v7308
  %v7346 = vunpack.c.l.b16 %v7309
  %v7347 = vunpack.c.l.b16 %v7310
  %v7348 = vunpack.c.l.b16 %v7311
  %v7349 = vunpack.c.l.b16 %v7312
  %v7350 = vunpack.c.l.b16 %v7313
  %v7351 = vunpack.c.l.b16 %v7314
  %v7352 = vpack.c.b16 %v7337, %v7336
  %v7353 = vpack.c.b16 %v7339, %v7338
  %v7354 = vpack.c.b16 %v7341, %v7340
  %v7355 = vpack.c.b16 %v7343, %v7342
  %v7356 = vpack.c.b16 %v7345, %v7344
  %v7357 = vpack.c.b16 %v7347, %v7346
  %v7358 = vpack.c.b16 %v7349, %v7348
  %v7359 = vpack.c.b16 %v7351, %v7350
  %7368 = vmatprep.subr.bf16.mxu0 0
  %7369 = vmatpush1.bf16.msra.mxu0 %v7359
  %7370 = vmatprep.subr.bf16.mxu0 0
  %7371 = vmatpush1.bf16.msra.mxu0 %v7358
  %7372 = vmatprep.subr.bf16.mxu0 0
  %7373 = vmatpush1.bf16.msra.mxu0 %v7357
  %7374 = vmatprep.subr.bf16.mxu0 0
  %7375 = vmatpush1.bf16.msra.mxu0 %v7356
  %7376 = vmatprep.subr.bf16.mxu0 0
  %7377 = vmatpush1.bf16.msra.mxu0 %v7355
  %7378 = vmatprep.subr.bf16.mxu0 0
  %7379 = vmatpush1.bf16.msra.mxu0 %v7354
  %7380 = vmatprep.subr.bf16.mxu0 0
  %7381 = vmatpush1.bf16.msra.mxu0 %v7353
  %7382 = vmatprep.subr.bf16.mxu0 0
  %7383 = vmatpush1.bf16.msra.mxu0 %v7352
  %7384 = vmatprep.subr.bf16.mxu0 0
  %7385 = vmatpush2.bf16.msra.mxu0 0
  %7386 = vmatprep.subr.bf16.mxu0 0
  %7387 = vmatpush2.bf16.msra.mxu0 0
  %7388 = vmatprep.subr.bf16.mxu0 0
  %7389 = vmatpush2.bf16.msra.mxu0 0
  %7390 = vmatprep.subr.bf16.mxu0 0
  %7391 = vmatpush2.bf16.msra.mxu0 0
  %7392 = vmatprep.subr.bf16.mxu0 0
  %7393 = vmatpush2.bf16.msra.mxu0 0
  %7394 = vmatprep.subr.bf16.mxu0 0
  %7395 = vmatpush2.bf16.msra.mxu0 0
  %7396 = vmatprep.subr.bf16.mxu0 0
  %7397 = vmatpush2.bf16.msra.mxu0 0
  %7398 = vmatprep.subr.bf16.mxu0 0
  %7399 = vmatpush2.bf16.msra.mxu0 0
  %7400 = vmatprep.mubr.bf16.mxu0 0
  %7401 = vmatmul.mubr.bf16.gmra.mxu0 %v7298
  %v7402 = vpop.f32.mrf.mxu0
  %v7403 = vadd.f32 %v7319, %v7402
  %v7404 = vpop.f32.mrf.mxu0
  %v7405 = vpop.f32.mrf.mxu0
  %v7406 = vadd.f32 %v7319, %v7405
  %v7407 = vpop.f32.mrf.mxu0
  %7408 = vdwg.mxu0
  %v7409 = vmax.f32 %v7403, 0.0
  %v7410 = vmax.f32 %v7406, 0.0
  %v7411 = vpack.c.bf16 %v7410, %v7409
  %v7412 = vld [vmem:[%s1 + $0x400] sm:$0xf]
  %v7413 = vld [vmem:[%s1 + $0x404] sm:$0xf]
  %v7414 = vld [vmem:[%s1 + $0x408] sm:$0xf]
  %v7415 = vld [vmem:[%s1 + $0x40c] sm:$0xf]
  %v7416 = vld [vmem:[%s1 + $0x410] sm:$0xf]
  %v7417 = vld [vmem:[%s1 + $0x414] sm:$0xf]
  %v7418 = vld [vmem:[%s1 + $0x418] sm:$0xf]
  %v7419 = vld [vmem:[%s1 + $0x41c] sm:$0xf]
  %v7420 = vld [vmem:[%s1 + $0x420] sm:$0xf]
  %v7421 = vld [vmem:[%s1 + $0x424] sm:$0xf]
  %v7422 = vld [vmem:[%s1 + $0x428] sm:$0xf]
  %v7423 = vld [vmem:[%s1 + $0x42c] sm:$0xf]
  %v7424 = vld [vmem:[%s1 + $0x430] sm:$0xf]
  %v7425 = vld [vmem:[%s1 + $0x434] sm:$0xf]
  %v7426 = vld [vmem:[%s1 + $0x438] sm:$0xf]
  %v7427 = vld [vmem:[%s1 + $0x43c] sm:$0xf]
  %v7428 = vld [vmem:[%s2 + $0x60] sm:$0x1]
  %v7429 = vlaneseq
  %v7430 = vshrl.u32 %v7429, 7
  %v7431 = vsub.s32 0, %v7430
  %v7432 = vrot.slane %v7428, %v7431
  %v7449 = vunpack.c.l.b16 %v7412
  %v7450 = vunpack.c.l.b16 %v7413
  %v7451 = vunpack.c.l.b16 %v7414
  %v7452 = vunpack.c.l.b16 %v7415
  %v7453 = vunpack.c.l.b16 %v7416
  %v7454 = vunpack.c.l.b16 %v7417
  %v7455 = vunpack.c.l.b16 %v7418
  %v7456 = vunpack.c.l.b16 %v7419
  %v7457 = vunpack.c.l.b16 %v7420
  %v7458 = vunpack.c.l.b16 %v7421
  %v7459 = vunpack.c.l.b16 %v7422
  %v7460 = vunpack.c.l.b16 %v7423
  %v7461 = vunpack.c.l.b16 %v7424
  %v7462 = vunpack.c.l.b16 %v7425
  %v7463 = vunpack.c.l.b16 %v7426
  %v7464 = vunpack.c.l.b16 %v7427
  %v7465 = vpack.c.b16 %v7450, %v7449
  %v7466 = vpack.c.b16 %v7452, %v7451
  %v7467 = vpack.c.b16 %v7454, %v7453
  %v7468 = vpack.c.b16 %v7456, %v7455
  %v7469 = vpack.c.b16 %v7458, %v7457
  %v7470 = vpack.c.b16 %v7460, %v7459
  %v7471 = vpack.c.b16 %v7462, %v7461
  %v7472 = vpack.c.b16 %v7464, %v7463
  %7481 = vmatprep.subr.bf16.mxu0 0
  %7482 = vmatpush1.bf16.msra.mxu0 %v7472
  %7483 = vmatprep.subr.bf16.mxu0 0
  %7484 = vmatpush1.bf16.msra.mxu0 %v7471
  %7485 = vmatprep.subr.bf16.mxu0 0
  %7486 = vmatpush1.bf16.msra.mxu0 %v7470
  %7487 = vmatprep.subr.bf16.mxu0 0
  %7488 = vmatpush1.bf16.msra.mxu0 %v7469
  %7489 = vmatprep.subr.bf16.mxu0 0
  %7490 = vmatpush1.bf16.msra.mxu0 %v7468
  %7491 = vmatprep.subr.bf16.mxu0 0
  %7492 = vmatpush1.bf16.msra.mxu0 %v7467
  %7493 = vmatprep.subr.bf16.mxu0 0
  %7494 = vmatpush1.bf16.msra.mxu0 %v7466
  %7495 = vmatprep.subr.bf16.mxu0 0
  %7496 = vmatpush1.bf16.msra.mxu0 %v7465
  %7497 = vmatprep.subr.bf16.mxu0 0
  %7498 = vmatpush2.bf16.msra.mxu0 0
  %7499 = vmatprep.subr.bf16.mxu0 0
  %7500 = vmatpush2.bf16.msra.mxu0 0
  %7501 = vmatprep.subr.bf16.mxu0 0
  %7502 = vmatpush2.bf16.msra.mxu0 0
  %7503 = vmatprep.subr.bf16.mxu0 0
  %7504 = vmatpush2.bf16.msra.mxu0 0
  %7505 = vmatprep.subr.bf16.mxu0 0
  %7506 = vmatpush2.bf16.msra.mxu0 0
  %7507 = vmatprep.subr.bf16.mxu0 0
  %7508 = vmatpush2.bf16.msra.mxu0 0
  %7509 = vmatprep.subr.bf16.mxu0 0
  %7510 = vmatpush2.bf16.msra.mxu0 0
  %7511 = vmatprep.subr.bf16.mxu0 0
  %7512 = vmatpush2.bf16.msra.mxu0 0
  %7513 = vmatprep.mubr.bf16.mxu0 0
  %7514 = vmatmul.mubr.bf16.gmra.mxu0 %v7411
  %v7515 = vpop.f32.mrf.mxu0
  %v7516 = vadd.f32 %v7432, %v7515
  %v7517 = vpop.f32.mrf.mxu0
  %v7518 = vpop.f32.mrf.mxu0
  %v7519 = vadd.f32 %v7432, %v7518
  %v7520 = vpop.f32.mrf.mxu0
  %7521 = vdwg.mxu0
  %v7522 = vadd.f32 %v7296, %v7516
  %v7523 = vadd.f32 %v7297, %v7519
  %7524 = vadd.xlane.f32.xlu0 %v7522
  %v7525 = vpop.xlane.xlu0 %7524
  %7526 = vadd.xlane.f32.xlu0 %v7523
  %v7527 = vpop.xlane.xlu0 %7526
  %v7528 = vmul.f32 %v7525, 0.03125
  %v7529 = vmul.f32 %v7527, 0.03125
  %v7530 = vmul.f32 %v7522, %v7522
  %v7531 = vmul.f32 %v7523, %v7523
  %7532 = vadd.xlane.f32.xlu0 %v7530
  %v7533 = vpop.xlane.xlu0 %7532
  %7534 = vadd.xlane.f32.xlu0 %v7531
  %v7535 = vpop.xlane.xlu0 %7534
  %v7536 = vmul.f32 %v7533, 0.03125
  %v7537 = vmul.f32 %v7535, 0.03125
  %v7538 = vmul.f32 %v7528, %v7528
  %v7539 = vmul.f32 %v7529, %v7529
  %v7540 = vsub.f32 %v7536, %v7538
  %v7541 = vsub.f32 %v7537, %v7539
  %v7542 = vsub.f32 %v7522, %v7528
  %v7543 = vsub.f32 %v7523, %v7529
  %v7544 = vadd.f32 %v7540, 1e-05
  %v7545 = vadd.f32 %v7541, 1e-05
  %v7546 = vrsqrt.pop %v7544
  %v7547 = vrsqrt.pop %v7545
  %v7548 = vmul.f32 %v7542, %v7546
  %v7549 = vmul.f32 %v7543, %v7547
  %v7550 = vld [vmem:[%s2 + $0x61] sm:$0x1]
  %v7551 = vlaneseq
  %v7552 = vshrl.u32 %v7551, 7
  %v7553 = vsub.s32 0, %v7552
  %v7554 = vrot.slane %v7550, %v7553
  %v7555 = vmul.f32 %v7548, %v7554
  %v7556 = vmul.f32 %v7549, %v7554
  %v7557 = vld [vmem:[%s2 + $0x62] sm:$0x1]
  %v7558 = vlaneseq
  %v7559 = vshrl.u32 %v7558, 7
  %v7560 = vsub.s32 0, %v7559
  %v7561 = vrot.slane %v7557, %v7560
  %v7562 = vadd.f32 %v7555, %v7561
  %v7563 = vadd.f32 %v7556, %v7561
  %v7564 = vpack.c.bf16 %v7563, %v7562
  %v7565 = vld [vmem:[%s1 + $0x440] sm:$0xf]
  %v7566 = vld [vmem:[%s1 + $0x444] sm:$0xf]
  %v7567 = vld [vmem:[%s1 + $0x448] sm:$0xf]
  %v7568 = vld [vmem:[%s1 + $0x44c] sm:$0xf]
  %v7569 = vld [vmem:[%s1 + $0x450] sm:$0xf]
  %v7570 = vld [vmem:[%s1 + $0x454] sm:$0xf]
  %v7571 = vld [vmem:[%s1 + $0x458] sm:$0xf]
  %v7572 = vld [vmem:[%s1 + $0x45c] sm:$0xf]
  %v7573 = vld [vmem:[%s1 + $0x460] sm:$0xf]
  %v7574 = vld [vmem:[%s1 + $0x464] sm:$0xf]
  %v7575 = vld [vmem:[%s1 + $0x468] sm:$0xf]
  %v7576 = vld [vmem:[%s1 + $0x46c] sm:$0xf]
  %v7577 = vld [vmem:[%s1 + $0x470] sm:$0xf]
  %v7578 = vld [vmem:[%s1 + $0x474] sm:$0xf]
  %v7579 = vld [vmem:[%s1 + $0x478] sm:$0xf]
  %v7580 = vld [vmem:[%s1 + $0x47c] sm:$0xf]
  %v7581 = vld [vmem:[%s2 + $0x63] sm:$0x1]
  %v7582 = vlaneseq
  %v7583 = vshrl.u32 %v7582, 7
  %v7584 = vsub.s32 0, %v7583
  %v7585 = vrot.slane %v7581, %v7584
  %v7602 = vunpack.c.l.b16 %v7565
  %v7603 = vunpack.c.l.b16 %v7566
  %v7604 = vunpack.c.l.b16 %v7567
  %v7605 = vunpack.c.l.b16 %v7568
  %v7606 = vunpack.c.l.b16 %v7569
  %v7607 = vunpack.c.l.b16 %v7570
  %v7608 = vunpack.c.l.b16 %v7571
  %v7609 = vunpack.c.l.b16 %v7572
  %v7610 = vunpack.c.l.b16 %v7573
  %v7611 = vunpack.c.l.b16 %v7574
  %v7612 = vunpack.c.l.b16 %v7575
  %v7613 = vunpack.c.l.b16 %v7576
  %v7614 = vunpack.c.l.b16 %v7577
  %v7615 = vunpack.c.l.b16 %v7578
  %v7616 = vunpack.c.l.b16 %v7579
  %v7617 = vunpack.c.l.b16 %v7580
  %v7618 = vpack.c.b16 %v7603, %v7602
  %v7619 = vpack.c.b16 %v7605, %v7604
  %v7620 = vpack.c.b16 %v7607, %v7606
  %v7621 = vpack.c.b16 %v7609, %v7608
  %v7622 = vpack.c.b16 %v7611, %v7610
  %v7623 = vpack.c.b16 %v7613, %v7612
  %v7624 = vpack.c.b16 %v7615, %v7614
  %v7625 = vpack.c.b16 %v7617, %v7616
  %7634 = vmatprep.subr.bf16.mxu0 0
  %7635 = vmatpush1.bf16.msra.mxu0 %v7625
  %7636 = vmatprep.subr.bf16.mxu0 0
  %7637 = vmatpush1.bf16.msra.mxu0 %v7624
  %7638 = vmatprep.subr.bf16.mxu0 0
  %7639 = vmatpush1.bf16.msra.mxu0 %v7623
  %7640 = vmatprep.subr.bf16.mxu0 0
  %7641 = vmatpush1.bf16.msra.mxu0 %v7622
  %7642 = vmatprep.subr.bf16.mxu0 0
  %7643 = vmatpush1.bf16.msra.mxu0 %v7621
  %7644 = vmatprep.subr.bf16.mxu0 0
  %7645 = vmatpush1.bf16.msra.mxu0 %v7620
  %7646 = vmatprep.subr.bf16.mxu0 0
  %7647 = vmatpush1.bf16.msra.mxu0 %v7619
  %7648 = vmatprep.subr.bf16.mxu0 0
  %7649 = vmatpush1.bf16.msra.mxu0 %v7618
  %7650 = vmatprep.subr.bf16.mxu0 0
  %7651 = vmatpush2.bf16.msra.mxu0 0
  %7652 = vmatprep.subr.bf16.mxu0 0
  %7653 = vmatpush2.bf16.msra.mxu0 0
  %7654 = vmatprep.subr.bf16.mxu0 0
  %7655 = vmatpush2.bf16.msra.mxu0 0
  %7656 = vmatprep.subr.bf16.mxu0 0
  %7657 = vmatpush2.bf16.msra.mxu0 0
  %7658 = vmatprep.subr.bf16.mxu0 0
  %7659 = vmatpush2.bf16.msra.mxu0 0
  %7660 = vmatprep.subr.bf16.mxu0 0
  %7661 = vmatpush2.bf16.msra.mxu0 0
  %7662 = vmatprep.subr.bf16.mxu0 0
  %7663 = vmatpush2.bf16.msra.mxu0 0
  %7664 = vmatprep.subr.bf16.mxu0 0
  %7665 = vmatpush2.bf16.msra.mxu0 0
  %7666 = vmatprep.mubr.bf16.mxu0 0
  %7667 = vmatmul.mubr.bf16.gmra.mxu0 %v7564
  %v7668 = vpop.f32.mrf.mxu0
  %v7669 = vadd.f32 %v7585, %v7668
  %v7670 = vpop.f32.mrf.mxu0
  %v7671 = vpop.f32.mrf.mxu0
  %v7672 = vadd.f32 %v7585, %v7671
  %v7673 = vpop.f32.mrf.mxu0
  %7674 = vdwg.mxu0
  %v7675 = vld [vmem:[%s1 + $0x480] sm:$0xf]
  %v7676 = vld [vmem:[%s1 + $0x484] sm:$0xf]
  %v7677 = vld [vmem:[%s1 + $0x488] sm:$0xf]
  %v7678 = vld [vmem:[%s1 + $0x48c] sm:$0xf]
  %v7679 = vld [vmem:[%s1 + $0x490] sm:$0xf]
  %v7680 = vld [vmem:[%s1 + $0x494] sm:$0xf]
  %v7681 = vld [vmem:[%s1 + $0x498] sm:$0xf]
  %v7682 = vld [vmem:[%s1 + $0x49c] sm:$0xf]
  %v7683 = vld [vmem:[%s1 + $0x4a0] sm:$0xf]
  %v7684 = vld [vmem:[%s1 + $0x4a4] sm:$0xf]
  %v7685 = vld [vmem:[%s1 + $0x4a8] sm:$0xf]
  %v7686 = vld [vmem:[%s1 + $0x4ac] sm:$0xf]
  %v7687 = vld [vmem:[%s1 + $0x4b0] sm:$0xf]
  %v7688 = vld [vmem:[%s1 + $0x4b4] sm:$0xf]
  %v7689 = vld [vmem:[%s1 + $0x4b8] sm:$0xf]
  %v7690 = vld [vmem:[%s1 + $0x4bc] sm:$0xf]
  %v7691 = vld [vmem:[%s2 + $0x64] sm:$0x1]
  %v7692 = vlaneseq
  %v7693 = vshrl.u32 %v7692, 7
  %v7694 = vsub.s32 0, %v7693
  %v7695 = vrot.slane %v7691, %v7694
  %v7712 = vunpack.c.l.b16 %v7675
  %v7713 = vunpack.c.l.b16 %v7676
  %v7714 = vunpack.c.l.b16 %v7677
  %v7715 = vunpack.c.l.b16 %v7678
  %v7716 = vunpack.c.l.b16 %v7679
  %v7717 = vunpack.c.l.b16 %v7680
  %v7718 = vunpack.c.l.b16 %v7681
  %v7719 = vunpack.c.l.b16 %v7682
  %v7720 = vunpack.c.l.b16 %v7683
  %v7721 = vunpack.c.l.b16 %v7684
  %v7722 = vunpack.c.l.b16 %v7685
  %v7723 = vunpack.c.l.b16 %v7686
  %v7724 = vunpack.c.l.b16 %v7687
  %v7725 = vunpack.c.l.b16 %v7688
  %v7726 = vunpack.c.l.b16 %v7689
  %v7727 = vunpack.c.l.b16 %v7690
  %v7728 = vpack.c.b16 %v7713, %v7712
  %v7729 = vpack.c.b16 %v7715, %v7714
  %v7730 = vpack.c.b16 %v7717, %v7716
  %v7731 = vpack.c.b16 %v7719, %v7718
  %v7732 = vpack.c.b16 %v7721, %v7720
  %v7733 = vpack.c.b16 %v7723, %v7722
  %v7734 = vpack.c.b16 %v7725, %v7724
  %v7735 = vpack.c.b16 %v7727, %v7726
  %7744 = vmatprep.subr.bf16.mxu0 0
  %7745 = vmatpush1.bf16.msra.mxu0 %v7735
  %7746 = vmatprep.subr.bf16.mxu0 0
  %7747 = vmatpush1.bf16.msra.mxu0 %v7734
  %7748 = vmatprep.subr.bf16.mxu0 0
  %7749 = vmatpush1.bf16.msra.mxu0 %v7733
  %7750 = vmatprep.subr.bf16.mxu0 0
  %7751 = vmatpush1.bf16.msra.mxu0 %v7732
  %7752 = vmatprep.subr.bf16.mxu0 0
  %7753 = vmatpush1.bf16.msra.mxu0 %v7731
  %7754 = vmatprep.subr.bf16.mxu0 0
  %7755 = vmatpush1.bf16.msra.mxu0 %v7730
  %7756 = vmatprep.subr.bf16.mxu0 0
  %7757 = vmatpush1.bf16.msra.mxu0 %v7729
  %7758 = vmatprep.subr.bf16.mxu0 0
  %7759 = vmatpush1.bf16.msra.mxu0 %v7728
  %7760 = vmatprep.subr.bf16.mxu0 0
  %7761 = vmatpush2.bf16.msra.mxu0 0
  %7762 = vmatprep.subr.bf16.mxu0 0
  %7763 = vmatpush2.bf16.msra.mxu0 0
  %7764 = vmatprep.subr.bf16.mxu0 0
  %7765 = vmatpush2.bf16.msra.mxu0 0
  %7766 = vmatprep.subr.bf16.mxu0 0
  %7767 = vmatpush2.bf16.msra.mxu0 0
  %7768 = vmatprep.subr.bf16.mxu0 0
  %7769 = vmatpush2.bf16.msra.mxu0 0
  %7770 = vmatprep.subr.bf16.mxu0 0
  %7771 = vmatpush2.bf16.msra.mxu0 0
  %7772 = vmatprep.subr.bf16.mxu0 0
  %7773 = vmatpush2.bf16.msra.mxu0 0
  %7774 = vmatprep.subr.bf16.mxu0 0
  %7775 = vmatpush2.bf16.msra.mxu0 0
  %7776 = vmatprep.mubr.bf16.mxu0 0
  %7777 = vmatmul.mubr.bf16.gmra.mxu0 %v7564
  %v7778 = vpop.f32.mrf.mxu0
  %v7779 = vadd.f32 %v7695, %v7778
  %v7780 = vpop.f32.mrf.mxu0
  %v7781 = vpop.f32.mrf.mxu0
  %v7782 = vadd.f32 %v7695, %v7781
  %v7783 = vpop.f32.mrf.mxu0
  %7784 = vdwg.mxu0
  %v7785 = vmax.f32 %v7779, 0.0
  %v7786 = vmax.f32 %v7782, 0.0
  %v7787 = vpack.c.bf16 %v7786, %v7785
  %v7788 = vld [vmem:[%s1 + $0x4c0] sm:$0xf]
  %v7789 = vld [vmem:[%s1 + $0x4c4] sm:$0xf]
  %v7790 = vld [vmem:[%s1 + $0x4c8] sm:$0xf]
  %v7791 = vld [vmem:[%s1 + $0x4cc] sm:$0xf]
  %v7792 = vld [vmem:[%s1 + $0x4d0] sm:$0xf]
  %v7793 = vld [vmem:[%s1 + $0x4d4] sm:$0xf]
  %v7794 = vld [vmem:[%s1 + $0x4d8] sm:$0xf]
  %v7795 = vld [vmem:[%s1 + $0x4dc] sm:$0xf]
  %v7796 = vld [vmem:[%s1 + $0x4e0] sm:$0xf]
  %v7797 = vld [vmem:[%s1 + $0x4e4] sm:$0xf]
  %v7798 = vld [vmem:[%s1 + $0x4e8] sm:$0xf]
  %v7799 = vld [vmem:[%s1 + $0x4ec] sm:$0xf]
  %v7800 = vld [vmem:[%s1 + $0x4f0] sm:$0xf]
  %v7801 = vld [vmem:[%s1 + $0x4f4] sm:$0xf]
  %v7802 = vld [vmem:[%s1 + $0x4f8] sm:$0xf]
  %v7803 = vld [vmem:[%s1 + $0x4fc] sm:$0xf]
  %v7804 = vld [vmem:[%s2 + $0x65] sm:$0x1]
  %v7805 = vlaneseq
  %v7806 = vshrl.u32 %v7805, 7
  %v7807 = vsub.s32 0, %v7806
  %v7808 = vrot.slane %v7804, %v7807
  %v7825 = vunpack.c.l.b16 %v7788
  %v7826 = vunpack.c.l.b16 %v7789
  %v7827 = vunpack.c.l.b16 %v7790
  %v7828 = vunpack.c.l.b16 %v7791
  %v7829 = vunpack.c.l.b16 %v7792
  %v7830 = vunpack.c.l.b16 %v7793
  %v7831 = vunpack.c.l.b16 %v7794
  %v7832 = vunpack.c.l.b16 %v7795
  %v7833 = vunpack.c.l.b16 %v7796
  %v7834 = vunpack.c.l.b16 %v7797
  %v7835 = vunpack.c.l.b16 %v7798
  %v7836 = vunpack.c.l.b16 %v7799
  %v7837 = vunpack.c.l.b16 %v7800
  %v7838 = vunpack.c.l.b16 %v7801
  %v7839 = vunpack.c.l.b16 %v7802
  %v7840 = vunpack.c.l.b16 %v7803
  %v7841 = vpack.c.b16 %v7826, %v7825
  %v7842 = vpack.c.b16 %v7828, %v7827
  %v7843 = vpack.c.b16 %v7830, %v7829
  %v7844 = vpack.c.b16 %v7832, %v7831
  %v7845 = vpack.c.b16 %v7834, %v7833
  %v7846 = vpack.c.b16 %v7836, %v7835
  %v7847 = vpack.c.b16 %v7838, %v7837
  %v7848 = vpack.c.b16 %v7840, %v7839
  %7857 = vmatprep.subr.bf16.mxu0 0
  %7858 = vmatpush1.bf16.msra.mxu0 %v7848
  %7859 = vmatprep.subr.bf16.mxu0 0
  %7860 = vmatpush1.bf16.msra.mxu0 %v7847
  %7861 = vmatprep.subr.bf16.mxu0 0
  %7862 = vmatpush1.bf16.msra.mxu0 %v7846
  %7863 = vmatprep.subr.bf16.mxu0 0
  %7864 = vmatpush1.bf16.msra.mxu0 %v7845
  %7865 = vmatprep.subr.bf16.mxu0 0
  %7866 = vmatpush1.bf16.msra.mxu0 %v7844
  %7867 = vmatprep.subr.bf16.mxu0 0
  %7868 = vmatpush1.bf16.msra.mxu0 %v7843
  %7869 = vmatprep.subr.bf16.mxu0 0
  %7870 = vmatpush1.bf16.msra.mxu0 %v7842
  %7871 = vmatprep.subr.bf16.mxu0 0
  %7872 = vmatpush1.bf16.msra.mxu0 %v7841
  %7873 = vmatprep.subr.bf16.mxu0 0
  %7874 = vmatpush2.bf16.msra.mxu0 0
  %7875 = vmatprep.subr.bf16.mxu0 0
  %7876 = vmatpush2.bf16.msra.mxu0 0
  %7877 = vmatprep.subr.bf16.mxu0 0
  %7878 = vmatpush2.bf16.msra.mxu0 0
  %7879 = vmatprep.subr.bf16.mxu0 0
  %7880 = vmatpush2.bf16.msra.mxu0 0
  %7881 = vmatprep.subr.bf16.mxu0 0
  %7882 = vmatpush2.bf16.msra.mxu0 0
  %7883 = vmatprep.subr.bf16.mxu0 0
  %7884 = vmatpush2.bf16.msra.mxu0 0
  %7885 = vmatprep.subr.bf16.mxu0 0
  %7886 = vmatpush2.bf16.msra.mxu0 0
  %7887 = vmatprep.subr.bf16.mxu0 0
  %7888 = vmatpush2.bf16.msra.mxu0 0
  %7889 = vmatprep.mubr.bf16.mxu0 0
  %7890 = vmatmul.mubr.bf16.gmra.mxu0 %v7787
  %v7891 = vpop.f32.mrf.mxu0
  %v7892 = vadd.f32 %v7808, %v7891
  %v7893 = vpop.f32.mrf.mxu0
  %v7894 = vpop.f32.mrf.mxu0
  %v7895 = vadd.f32 %v7808, %v7894
  %v7896 = vpop.f32.mrf.mxu0
  %7897 = vdwg.mxu0
  %v7898 = vmax.f32 %v7892, 0.0
  %v7899 = vmax.f32 %v7895, 0.0
  %v7900 = vpack.c.bf16 %v7899, %v7898
  %v7901 = vld [vmem:[%s1 + $0x500] sm:$0xf]
  %v7902 = vld [vmem:[%s1 + $0x504] sm:$0xf]
  %v7903 = vld [vmem:[%s1 + $0x508] sm:$0xf]
  %v7904 = vld [vmem:[%s1 + $0x50c] sm:$0xf]
  %v7905 = vld [vmem:[%s1 + $0x510] sm:$0xf]
  %v7906 = vld [vmem:[%s1 + $0x514] sm:$0xf]
  %v7907 = vld [vmem:[%s1 + $0x518] sm:$0xf]
  %v7908 = vld [vmem:[%s1 + $0x51c] sm:$0xf]
  %v7909 = vld [vmem:[%s1 + $0x520] sm:$0xf]
  %v7910 = vld [vmem:[%s1 + $0x524] sm:$0xf]
  %v7911 = vld [vmem:[%s1 + $0x528] sm:$0xf]
  %v7912 = vld [vmem:[%s1 + $0x52c] sm:$0xf]
  %v7913 = vld [vmem:[%s1 + $0x530] sm:$0xf]
  %v7914 = vld [vmem:[%s1 + $0x534] sm:$0xf]
  %v7915 = vld [vmem:[%s1 + $0x538] sm:$0xf]
  %v7916 = vld [vmem:[%s1 + $0x53c] sm:$0xf]
  %v7917 = vld [vmem:[%s2 + $0x66] sm:$0x1]
  %v7918 = vlaneseq
  %v7919 = vshrl.u32 %v7918, 7
  %v7920 = vsub.s32 0, %v7919
  %v7921 = vrot.slane %v7917, %v7920
  %v7938 = vunpack.c.l.b16 %v7901
  %v7939 = vunpack.c.l.b16 %v7902
  %v7940 = vunpack.c.l.b16 %v7903
  %v7941 = vunpack.c.l.b16 %v7904
  %v7942 = vunpack.c.l.b16 %v7905
  %v7943 = vunpack.c.l.b16 %v7906
  %v7944 = vunpack.c.l.b16 %v7907
  %v7945 = vunpack.c.l.b16 %v7908
  %v7946 = vunpack.c.l.b16 %v7909
  %v7947 = vunpack.c.l.b16 %v7910
  %v7948 = vunpack.c.l.b16 %v7911
  %v7949 = vunpack.c.l.b16 %v7912
  %v7950 = vunpack.c.l.b16 %v7913
  %v7951 = vunpack.c.l.b16 %v7914
  %v7952 = vunpack.c.l.b16 %v7915
  %v7953 = vunpack.c.l.b16 %v7916
  %v7954 = vpack.c.b16 %v7939, %v7938
  %v7955 = vpack.c.b16 %v7941, %v7940
  %v7956 = vpack.c.b16 %v7943, %v7942
  %v7957 = vpack.c.b16 %v7945, %v7944
  %v7958 = vpack.c.b16 %v7947, %v7946
  %v7959 = vpack.c.b16 %v7949, %v7948
  %v7960 = vpack.c.b16 %v7951, %v7950
  %v7961 = vpack.c.b16 %v7953, %v7952
  %7970 = vmatprep.subr.bf16.mxu0 0
  %7971 = vmatpush1.bf16.msra.mxu0 %v7961
  %7972 = vmatprep.subr.bf16.mxu0 0
  %7973 = vmatpush1.bf16.msra.mxu0 %v7960
  %7974 = vmatprep.subr.bf16.mxu0 0
  %7975 = vmatpush1.bf16.msra.mxu0 %v7959
  %7976 = vmatprep.subr.bf16.mxu0 0
  %7977 = vmatpush1.bf16.msra.mxu0 %v7958
  %7978 = vmatprep.subr.bf16.mxu0 0
  %7979 = vmatpush1.bf16.msra.mxu0 %v7957
  %7980 = vmatprep.subr.bf16.mxu0 0
  %7981 = vmatpush1.bf16.msra.mxu0 %v7956
  %7982 = vmatprep.subr.bf16.mxu0 0
  %7983 = vmatpush1.bf16.msra.mxu0 %v7955
  %7984 = vmatprep.subr.bf16.mxu0 0
  %7985 = vmatpush1.bf16.msra.mxu0 %v7954
  %7986 = vmatprep.subr.bf16.mxu0 0
  %7987 = vmatpush2.bf16.msra.mxu0 0
  %7988 = vmatprep.subr.bf16.mxu0 0
  %7989 = vmatpush2.bf16.msra.mxu0 0
  %7990 = vmatprep.subr.bf16.mxu0 0
  %7991 = vmatpush2.bf16.msra.mxu0 0
  %7992 = vmatprep.subr.bf16.mxu0 0
  %7993 = vmatpush2.bf16.msra.mxu0 0
  %7994 = vmatprep.subr.bf16.mxu0 0
  %7995 = vmatpush2.bf16.msra.mxu0 0
  %7996 = vmatprep.subr.bf16.mxu0 0
  %7997 = vmatpush2.bf16.msra.mxu0 0
  %7998 = vmatprep.subr.bf16.mxu0 0
  %7999 = vmatpush2.bf16.msra.mxu0 0
  %8000 = vmatprep.subr.bf16.mxu0 0
  %8001 = vmatpush2.bf16.msra.mxu0 0
  %8002 = vmatprep.mubr.bf16.mxu0 0
  %8003 = vmatmul.mubr.bf16.gmra.mxu0 %v7900
  %v8004 = vpop.f32.mrf.mxu0
  %v8005 = vadd.f32 %v7921, %v8004
  %v8006 = vpop.f32.mrf.mxu0
  %v8007 = vpop.f32.mrf.mxu0
  %v8008 = vadd.f32 %v7921, %v8007
  %v8009 = vpop.f32.mrf.mxu0
  %8010 = vdwg.mxu0
  %v8011 = vxor.u32 %v8005, 2147483648
  %v8012 = vxor.u32 %v8008, 2147483648
  %v8013 = vmul.f32 %v8011, 1.442695
  %v8014 = vpow.pop %v8013
  %v8015 = vmul.f32 %v8012, 1.442695
  %v8016 = vpow.pop %v8015
  %v8017 = vadd.f32 %v8014, 1.0
  %v8018 = vadd.f32 %v8016, 1.0
  %v8019 = vrcp.pop %v8017
  %v8020 = vmul.f32 1.0, %v8019
  %v8021 = vrcp.pop %v8018
  %v8022 = vmul.f32 1.0, %v8021
  %8023 = vst [vmem:[%s3] sm:$0xff] %v7669
  %8024 = vst [vmem:[%s3 + $0x8] sm:$0xff] %v7672
  %s8025 = scalar_lea.vmem %s3, 16
  %8026 = vst [vmem:[%s8025] sm:$0xff] %v8020
  %8027 = vst [vmem:[%s8025 + $0x8] sm:$0xff] %v8022
  // Predicated region
  $region14: #{_lambda_.1} parent=0 // pred_check
    _
  $region15: #{_lambda_.1} parent=0 // pred_check_branch
    %8029 = sbr.rel (0) target = $region17
  $region16: #{_lambda_.1} parent=0 // pred_region
    _
  $region17: #{_lambda_.1} parent=0 // pred_fallthru
    _
  // Predicated region
  $region18: #{_lambda_.1} parent=0 // pred_check
    _
  $region19: #{_lambda_.1} parent=0 // pred_check_branch
    %8031 = sbr.rel (0) target = $region21
  $region20: #{_lambda_.1} parent=0 // pred_region
    _
  $region21: #{_lambda_.1} parent=0 // pred_fallthru
    _

</llo_original>
